<compile_context>
chip_gen: v5e
topology: v5e:2x2
jax: 0.10.0
libtpu: 0.0.40
codegen_flags: <defaults>
</compile_context>

<pallas_src>
import jax
import jax.numpy as jnp
from jax.experimental import pallas as pl
from jax.experimental.pallas import tpu as pltpu

LEAKY_SLOPE = 0.2


def _make_rrdb_kernel(H, W, C):
    """Fused RRDB kernel for one batch element.

    Refs (in order):
      x_ref   : (1, H, W, C)        block input (NHWC)
      w_ref   : (3, 9*C, C)         im2col weights for conv1..conv3, rows = (ky, kx, cin)
      b_ref   : (3, 1, C)           biases
      o_ref   : (1, H, W, C)        block output
      pad_ref : (H+2, W+2, C) VMEM  zero-padded activation (halo kept in VMEM)
      col_ref : (H*W, 9*C)   VMEM   im2col patch matrix
    """
    HW = H * W

    def kernel(x_ref, w_ref, b_ref, o_ref, pad_ref, col_ref):
        # Zero the halo; the interior is fully overwritten every layer.
        pad_ref[...] = jnp.zeros_like(pad_ref)

        act = x_ref[0].astype(jnp.float32)                       # (H, W, C)

        for layer in range(3):
            # Current activation -> interior of the padded VMEM scratch.
            pad_ref[1:H + 1, 1:W + 1, :] = act

            # im2col: 9 shifted (H, W, C) views packed into (HW, 9*C) once.
            for k in range(9):
                dy, dx = divmod(k, 3)
                col_ref[:, k * C:(k + 1) * C] = (
                    pad_ref[dy:dy + H, dx:dx + W, :].reshape(HW, C))

            # One fat MXU matmul per conv: (HW, 9C) x (9C, C), f32 accumulation.
            acc = jnp.dot(col_ref[...], w_ref[layer],
                          preferred_element_type=jnp.float32)     # (HW, C)
            acc = acc + b_ref[layer]                               # (1, C) broadcast
            if layer < 2:                                          # LeakyReLU after conv1/conv2
                acc = jnp.where(acc >= 0, acc, LEAKY_SLOPE * acc)
            act = acc.reshape(H, W, C)

        # conv3 output + residual; single HBM store for the whole block.
        o_ref[0] = (act + x_ref[0].astype(jnp.float32)).astype(o_ref.dtype)

    return kernel


@jax.jit
def rrdb_forward(x_nchw, params):
    """RRDB forward.  x_nchw: (N, C, H, W);  params: [(w_oihw, b)] * 3 (PyTorch layout)."""
    N, C, H, W = x_nchw.shape
    x = jnp.transpose(x_nchw, (0, 2, 3, 1))                       # NCHW -> NHWC

    # OIHW -> (kH, kW, Cin, Cout) -> (9*Cin, Cout); rows ordered (ky, kx, cin),
    # matching the kernel's im2col column order.
    w_stack = jnp.stack([jnp.transpose(w, (2, 3, 1, 0)).reshape(9 * C, C)
                         for (w, _) in params])                   # (3, 9C, C)
    b_stack = jnp.stack([b.reshape(1, C) for (_, b) in params])   # (3, 1, C)

    out = pl.pallas_call(
        _make_rrdb_kernel(H, W, C),
        out_shape=jax.ShapeDtypeStruct((N, H, W, C), x.dtype),
        grid_spec=pltpu.PrefetchScalarGridSpec(
            num_scalar_prefetch=0,
            grid=(N,),
            in_specs=[
                pl.BlockSpec((1, H, W, C), lambda n: (n, 0, 0, 0)),
                pl.BlockSpec((3, 9 * C, C), lambda n: (0, 0, 0)),
                pl.BlockSpec((3, 1, C), lambda n: (0, 0, 0)),
            ],
            out_specs=pl.BlockSpec((1, H, W, C), lambda n: (n, 0, 0, 0)),
            scratch_shapes=[
                pltpu.VMEM((H + 2, W + 2, C), jnp.float32),       # padded activation
                pltpu.VMEM((H * W, 9 * C), jnp.float32),          # im2col patches
            ],
        ),
        compiler_params=pltpu.CompilerParams(dimension_semantics=("parallel",)),
    )(x, w_stack, b_stack)

    return jnp.transpose(out, (0, 3, 1, 2))                       # NHWC -> NCHW


# ---------------------------------------------------------------------------
# Deterministic synthetic parameters (PyTorch OIHW layout) and a pure-JAX
# reference (lax.conv_general_dilated) used only to validate the kernel.
# ---------------------------------------------------------------------------
def init_rrdb_params(key, channels, scale=0.05):
    keys = jax.random.split(key, 6)
    params = []
    for i in range(3):
        w = jax.random.normal(keys[2 * i], (channels, channels, 3, 3), jnp.float32) * scale
        b = jax.random.normal(keys[2 * i + 1], (channels,), jnp.float32) * scale
        params.append((w, b))
    return params


def rrdb_reference(x_nchw, params):
    def conv(x, w, b):
        y = jax.lax.conv_general_dilated(
            x, w, window_strides=(1, 1), padding=((1, 1), (1, 1)),
            dimension_numbers=("NCHW", "OIHW", "NCHW"),
            precision=jax.lax.Precision.HIGHEST)
        return y + b[None, :, None, None]

    (w1, b1), (w2, b2), (w3, b3) = params
    h = conv(x_nchw, w1, b1)
    h = jnp.where(h >= 0, h, LEAKY_SLOPE * h)
    h = conv(h, w2, b2)
    h = jnp.where(h >= 0, h, LEAKY_SLOPE * h)
    h = conv(h, w3, b3)
    return h + x_nchw


if __name__ == "__main__":
    key = jax.random.PRNGKey(0)
    k_x, k_p = jax.random.split(key)

    # Small shapes consistent with the module (RRDB is used with 64 channels).
    N, C, H, W = 2, 64, 16, 16
    x = jax.random.normal(k_x, (N, C, H, W), jnp.float32)
    params = init_rrdb_params(k_p, C)

    out = jax.block_until_ready(rrdb_forward(x, params))
    assert out.shape == (N, C, H, W), out.shape
    assert bool(jnp.all(jnp.isfinite(out)))

    ref = jax.block_until_ready(rrdb_reference(x, params))
    max_err = float(jnp.max(jnp.abs(out - ref)))
    assert max_err < 5e-2, f"kernel/reference mismatch: max abs err {max_err}"

    print("KERNEL_OK")
</pallas_src>

<mosaic_0001>
module attributes {stable_mosaic.version = 11 : i64} {
  func.func @kernel(%arg0: i32, %arg1: memref<1x16x16x64xf32, #tpu.memory_space<vmem>>, %arg2: memref<3x576x64xf32, #tpu.memory_space<vmem>>, %arg3: memref<3x1x64xf32, #tpu.memory_space<vmem>>, %arg4: memref<1x16x16x64xf32, #tpu.memory_space<vmem>>, %arg5: memref<18x18x64xf32, #tpu.memory_space<vmem>>, %arg6: memref<256x576xf32, #tpu.memory_space<vmem>>) attributes {dimension_semantics = [#tpu.dimension_semantics<parallel>], iteration_bounds = array<i64: 2>, scalar_prefetch = 0 : i64, scratch_operands = 2 : i64, tpu.core_type = #tpu.core_type<tc>, window_params = [{transform_indices = @transform_0, window_bounds = array<i64: 1, 16, 16, 64>}, {pipeline_mode = #tpu.pipeline_mode<synchronous>, transform_indices = @transform_1, window_bounds = array<i64: 3, 576, 64>}, {pipeline_mode = #tpu.pipeline_mode<synchronous>, transform_indices = @transform_2, window_bounds = array<i64: 3, 1, 64>}, {transform_indices = @transform_3, window_bounds = array<i64: 1, 16, 16, 64>}]} {
    %cst = arith.constant 0.000000e+00 : f32
    %0 = vector.broadcast %cst : f32 to vector<18x18x64xf32>
    %c0 = arith.constant 0 : index
    %c0_0 = arith.constant 0 : index
    %c0_1 = arith.constant 0 : index
    %1 = vector.load %arg5[%c0, %c0_0, %c0_1] : memref<18x18x64xf32, #tpu.memory_space<vmem>>, vector<18x18x64xf32>
    tpu.vector_store %arg5[%c0, %c0_0, %c0_1], %0 {strides = array<i32>} : memref<18x18x64xf32, #tpu.memory_space<vmem>>, vector<18x18x64xf32>,
    %c0_2 = arith.constant 0 : index
    %c0_3 = arith.constant 0 : index
    %c0_4 = arith.constant 0 : index
    %c0_5 = arith.constant 0 : index
    %2 = vector.load %arg1[%c0_2, %c0_3, %c0_4, %c0_5] : memref<1x16x16x64xf32, #tpu.memory_space<vmem>>, vector<1x16x16x64xf32>
    %3 = vector.shape_cast %2 : vector<1x16x16x64xf32> to vector<16x16x64xf32>
    %c1 = arith.constant 1 : index
    %c1_6 = arith.constant 1 : index
    %c0_7 = arith.constant 0 : index
    %4 = vector.load %arg5[%c1, %c1_6, %c0_7] : memref<18x18x64xf32, #tpu.memory_space<vmem>>, vector<16x16x64xf32>
    tpu.vector_store %arg5[%c1, %c1_6, %c0_7], %3 {strides = array<i32>} : memref<18x18x64xf32, #tpu.memory_space<vmem>>, vector<16x16x64xf32>,
    %c0_8 = arith.constant 0 : index
    %c0_9 = arith.constant 0 : index
    %c0_10 = arith.constant 0 : index
    %5 = vector.load %arg5[%c0_8, %c0_9, %c0_10] : memref<18x18x64xf32, #tpu.memory_space<vmem>>, vector<16x16x64xf32>
    %6 = vector.shape_cast %5 : vector<16x16x64xf32> to vector<256x64xf32>
    %c0_11 = arith.constant 0 : index
    %c0_12 = arith.constant 0 : index
    %7 = vector.load %arg6[%c0_11, %c0_12] : memref<256x576xf32, #tpu.memory_space<vmem>>, vector<256x64xf32>
    tpu.vector_store %arg6[%c0_11, %c0_12], %6 {strides = array<i32>} : memref<256x576xf32, #tpu.memory_space<vmem>>, vector<256x64xf32>,
    %c0_13 = arith.constant 0 : index
    %c1_14 = arith.constant 1 : index
    %c0_15 = arith.constant 0 : index
    %8 = vector.load %arg5[%c0_13, %c1_14, %c0_15] : memref<18x18x64xf32, #tpu.memory_space<vmem>>, vector<16x16x64xf32>
    %9 = vector.shape_cast %8 : vector<16x16x64xf32> to vector<256x64xf32>
    %c0_16 = arith.constant 0 : index
    %c64 = arith.constant 64 : index
    %10 = vector.load %arg6[%c0_16, %c64] : memref<256x576xf32, #tpu.memory_space<vmem>>, vector<256x64xf32>
    tpu.vector_store %arg6[%c0_16, %c64], %9 {strides = array<i32>} : memref<256x576xf32, #tpu.memory_space<vmem>>, vector<256x64xf32>,
    %c0_17 = arith.constant 0 : index
    %c2 = arith.constant 2 : index
    %c0_18 = arith.constant 0 : index
    %11 = vector.load %arg5[%c0_17, %c2, %c0_18] : memref<18x18x64xf32, #tpu.memory_space<vmem>>, vector<16x16x64xf32>
    %12 = vector.shape_cast %11 : vector<16x16x64xf32> to vector<256x64xf32>
    %c0_19 = arith.constant 0 : index
    %c128 = arith.constant 128 : index
    %13 = vector.load %arg6[%c0_19, %c128] : memref<256x576xf32, #tpu.memory_space<vmem>>, vector<256x64xf32>
    tpu.vector_store %arg6[%c0_19, %c128], %12 {strides = array<i32>} : memref<256x576xf32, #tpu.memory_space<vmem>>, vector<256x64xf32>,
    %c1_20 = arith.constant 1 : index
    %c0_21 = arith.constant 0 : index
    %c0_22 = arith.constant 0 : index
    %14 = vector.load %arg5[%c1_20, %c0_21, %c0_22] : memref<18x18x64xf32, #tpu.memory_space<vmem>>, vector<16x16x64xf32>
    %15 = vector.shape_cast %14 : vector<16x16x64xf32> to vector<256x64xf32>
    %c0_23 = arith.constant 0 : index
    %c192 = arith.constant 192 : index
    %16 = vector.load %arg6[%c0_23, %c192] : memref<256x576xf32, #tpu.memory_space<vmem>>, vector<256x64xf32>
    tpu.vector_store %arg6[%c0_23, %c192], %15 {strides = array<i32>} : memref<256x576xf32, #tpu.memory_space<vmem>>, vector<256x64xf32>,
    %c1_24 = arith.constant 1 : index
    %c1_25 = arith.constant 1 : index
    %c0_26 = arith.constant 0 : index
    %17 = vector.load %arg5[%c1_24, %c1_25, %c0_26] : memref<18x18x64xf32, #tpu.memory_space<vmem>>, vector<16x16x64xf32>
    %18 = vector.shape_cast %17 : vector<16x16x64xf32> to vector<256x64xf32>
    %c0_27 = arith.constant 0 : index
    %c256 = arith.constant 256 : index
    %19 = vector.load %arg6[%c0_27, %c256] : memref<256x576xf32, #tpu.memory_space<vmem>>, vector<256x64xf32>
    tpu.vector_store %arg6[%c0_27, %c256], %18 {strides = array<i32>} : memref<256x576xf32, #tpu.memory_space<vmem>>, vector<256x64xf32>,
    %c1_28 = arith.constant 1 : index
    %c2_29 = arith.constant 2 : index
    %c0_30 = arith.constant 0 : index
    %20 = vector.load %arg5[%c1_28, %c2_29, %c0_30] : memref<18x18x64xf32, #tpu.memory_space<vmem>>, vector<16x16x64xf32>
    %21 = vector.shape_cast %20 : vector<16x16x64xf32> to vector<256x64xf32>
    %c0_31 = arith.constant 0 : index
    %c320 = arith.constant 320 : index
    %22 = vector.load %arg6[%c0_31, %c320] : memref<256x576xf32, #tpu.memory_space<vmem>>, vector<256x64xf32>
    tpu.vector_store %arg6[%c0_31, %c320], %21 {strides = array<i32>} : memref<256x576xf32, #tpu.memory_space<vmem>>, vector<256x64xf32>,
    %c2_32 = arith.constant 2 : index
    %c0_33 = arith.constant 0 : index
    %c0_34 = arith.constant 0 : index
    %23 = vector.load %arg5[%c2_32, %c0_33, %c0_34] : memref<18x18x64xf32, #tpu.memory_space<vmem>>, vector<16x16x64xf32>
    %24 = vector.shape_cast %23 : vector<16x16x64xf32> to vector<256x64xf32>
    %c0_35 = arith.constant 0 : index
    %c384 = arith.constant 384 : index
    %25 = vector.load %arg6[%c0_35, %c384] : memref<256x576xf32, #tpu.memory_space<vmem>>, vector<256x64xf32>
    tpu.vector_store %arg6[%c0_35, %c384], %24 {strides = array<i32>} : memref<256x576xf32, #tpu.memory_space<vmem>>, vector<256x64xf32>,
    %c2_36 = arith.constant 2 : index
    %c1_37 = arith.constant 1 : index
    %c0_38 = arith.constant 0 : index
    %26 = vector.load %arg5[%c2_36, %c1_37, %c0_38] : memref<18x18x64xf32, #tpu.memory_space<vmem>>, vector<16x16x64xf32>
    %27 = vector.shape_cast %26 : vector<16x16x64xf32> to vector<256x64xf32>
    %c0_39 = arith.constant 0 : index
    %c448 = arith.constant 448 : index
    %28 = vector.load %arg6[%c0_39, %c448] : memref<256x576xf32, #tpu.memory_space<vmem>>, vector<256x64xf32>
    tpu.vector_store %arg6[%c0_39, %c448], %27 {strides = array<i32>} : memref<256x576xf32, #tpu.memory_space<vmem>>, vector<256x64xf32>,
    %c2_40 = arith.constant 2 : index
    %c2_41 = arith.constant 2 : index
    %c0_42 = arith.constant 0 : index
    %29 = vector.load %arg5[%c2_40, %c2_41, %c0_42] : memref<18x18x64xf32, #tpu.memory_space<vmem>>, vector<16x16x64xf32>
    %30 = vector.shape_cast %29 : vector<16x16x64xf32> to vector<256x64xf32>
    %c0_43 = arith.constant 0 : index
    %c512 = arith.constant 512 : index
    %31 = vector.load %arg6[%c0_43, %c512] : memref<256x576xf32, #tpu.memory_space<vmem>>, vector<256x64xf32>
    tpu.vector_store %arg6[%c0_43, %c512], %30 {strides = array<i32>} : memref<256x576xf32, #tpu.memory_space<vmem>>, vector<256x64xf32>,
    %c0_44 = arith.constant 0 : index
    %c0_45 = arith.constant 0 : index
    %32 = vector.load %arg6[%c0_44, %c0_45] : memref<256x576xf32, #tpu.memory_space<vmem>>, vector<256x576xf32>
    %c0_46 = arith.constant 0 : index
    %c0_47 = arith.constant 0 : index
    %c0_48 = arith.constant 0 : index
    %33 = vector.load %arg2[%c0_46, %c0_47, %c0_48] : memref<3x576x64xf32, #tpu.memory_space<vmem>>, vector<1x576x64xf32>
    %34 = vector.shape_cast %33 : vector<1x576x64xf32> to vector<576x64xf32>
    %cst_49 = arith.constant dense<0.000000e+00> : vector<256x64xf32>
    %35 = tpu.matmul %32, %34, %cst_49 {dimension_numbers = #tpu.dot_dimension_numbers<[1], [0], [0], [1], [0, 0, 1, 1], [], []>} : vector<256x576xf32>, vector<576x64xf32>, vector<256x64xf32> -> vector<256x64xf32>
    %c0_50 = arith.constant 0 : index
    %c0_51 = arith.constant 0 : index
    %c0_52 = arith.constant 0 : index
    %36 = vector.load %arg3[%c0_50, %c0_51, %c0_52] : memref<3x1x64xf32, #tpu.memory_space<vmem>>, vector<1x1x64xf32>
    %37 = vector.shape_cast %36 : vector<1x1x64xf32> to vector<1x64xf32>
    %38 = vector.broadcast %37 : vector<1x64xf32> to vector<256x64xf32>
    %39 = arith.addf %35, %38 : vector<256x64xf32>
    %cst_53 = arith.constant 0.000000e+00 : f32
    %40 = vector.broadcast %cst_53 : f32 to vector<256x64xf32>
    %41 = arith.cmpf oge, %39, %40 : vector<256x64xf32>
    %cst_54 = arith.constant 2.000000e-01 : f32
    %42 = vector.broadcast %cst_54 : f32 to vector<256x64xf32>
    %43 = arith.mulf %42, %39 : vector<256x64xf32>
    %44 = arith.select %41, %39, %43 : vector<256x64xi1>, vector<256x64xf32>
    %45 = vector.shape_cast %44 : vector<256x64xf32> to vector<16x16x64xf32>
    %c1_55 = arith.constant 1 : index
    %c1_56 = arith.constant 1 : index
    %c0_57 = arith.constant 0 : index
    %46 = vector.load %arg5[%c1_55, %c1_56, %c0_57] : memref<18x18x64xf32, #tpu.memory_space<vmem>>, vector<16x16x64xf32>
    tpu.vector_store %arg5[%c1_55, %c1_56, %c0_57], %45 {strides = array<i32>} : memref<18x18x64xf32, #tpu.memory_space<vmem>>, vector<16x16x64xf32>,
    %c0_58 = arith.constant 0 : index
    %c0_59 = arith.constant 0 : index
    %c0_60 = arith.constant 0 : index
    %47 = vector.load %arg5[%c0_58, %c0_59, %c0_60] : memref<18x18x64xf32, #tpu.memory_space<vmem>>, vector<16x16x64xf32>
    %48 = vector.shape_cast %47 : vector<16x16x64xf32> to vector<256x64xf32>
    %c0_61 = arith.constant 0 : index
    %c0_62 = arith.constant 0 : index
    %49 = vector.load %arg6[%c0_61, %c0_62] : memref<256x576xf32, #tpu.memory_space<vmem>>, vector<256x64xf32>
    tpu.vector_store %arg6[%c0_61, %c0_62], %48 {strides = array<i32>} : memref<256x576xf32, #tpu.memory_space<vmem>>, vector<256x64xf32>,
    %c0_63 = arith.constant 0 : index
    %c1_64 = arith.constant 1 : index
    %c0_65 = arith.constant 0 : index
    %50 = vector.load %arg5[%c0_63, %c1_64, %c0_65] : memref<18x18x64xf32, #tpu.memory_space<vmem>>, vector<16x16x64xf32>
    %51 = vector.shape_cast %50 : vector<16x16x64xf32> to vector<256x64xf32>
    %c0_66 = arith.constant 0 : index
    %c64_67 = arith.constant 64 : index
    %52 = vector.load %arg6[%c0_66, %c64_67] : memref<256x576xf32, #tpu.memory_space<vmem>>, vector<256x64xf32>
    tpu.vector_store %arg6[%c0_66, %c64_67], %51 {strides = array<i32>} : memref<256x576xf32, #tpu.memory_space<vmem>>, vector<256x64xf32>,
    %c0_68 = arith.constant 0 : index
    %c2_69 = arith.constant 2 : index
    %c0_70 = arith.constant 0 : index
    %53 = vector.load %arg5[%c0_68, %c2_69, %c0_70] : memref<18x18x64xf32, #tpu.memory_space<vmem>>, vector<16x16x64xf32>
    %54 = vector.shape_cast %53 : vector<16x16x64xf32> to vector<256x64xf32>
    %c0_71 = arith.constant 0 : index
    %c128_72 = arith.constant 128 : index
    %55 = vector.load %arg6[%c0_71, %c128_72] : memref<256x576xf32, #tpu.memory_space<vmem>>, vector<256x64xf32>
    tpu.vector_store %arg6[%c0_71, %c128_72], %54 {strides = array<i32>} : memref<256x576xf32, #tpu.memory_space<vmem>>, vector<256x64xf32>,
    %c1_73 = arith.constant 1 : index
    %c0_74 = arith.constant 0 : index
    %c0_75 = arith.constant 0 : index
    %56 = vector.load %arg5[%c1_73, %c0_74, %c0_75] : memref<18x18x64xf32, #tpu.memory_space<vmem>>, vector<16x16x64xf32>
    %57 = vector.shape_cast %56 : vector<16x16x64xf32> to vector<256x64xf32>
    %c0_76 = arith.constant 0 : index
    %c192_77 = arith.constant 192 : index
    %58 = vector.load %arg6[%c0_76, %c192_77] : memref<256x576xf32, #tpu.memory_space<vmem>>, vector<256x64xf32>
    tpu.vector_store %arg6[%c0_76, %c192_77], %57 {strides = array<i32>} : memref<256x576xf32, #tpu.memory_space<vmem>>, vector<256x64xf32>,
    %c1_78 = arith.constant 1 : index
    %c1_79 = arith.constant 1 : index
    %c0_80 = arith.constant 0 : index
    %59 = vector.load %arg5[%c1_78, %c1_79, %c0_80] : memref<18x18x64xf32, #tpu.memory_space<vmem>>, vector<16x16x64xf32>
    %60 = vector.shape_cast %59 : vector<16x16x64xf32> to vector<256x64xf32>
    %c0_81 = arith.constant 0 : index
    %c256_82 = arith.constant 256 : index
    %61 = vector.load %arg6[%c0_81, %c256_82] : memref<256x576xf32, #tpu.memory_space<vmem>>, vector<256x64xf32>
    tpu.vector_store %arg6[%c0_81, %c256_82], %60 {strides = array<i32>} : memref<256x576xf32, #tpu.memory_space<vmem>>, vector<256x64xf32>,
    %c1_83 = arith.constant 1 : index
    %c2_84 = arith.constant 2 : index
    %c0_85 = arith.constant 0 : index
    %62 = vector.load %arg5[%c1_83, %c2_84, %c0_85] : memref<18x18x64xf32, #tpu.memory_space<vmem>>, vector<16x16x64xf32>
    %63 = vector.shape_cast %62 : vector<16x16x64xf32> to vector<256x64xf32>
    %c0_86 = arith.constant 0 : index
    %c320_87 = arith.constant 320 : index
    %64 = vector.load %arg6[%c0_86, %c320_87] : memref<256x576xf32, #tpu.memory_space<vmem>>, vector<256x64xf32>
    tpu.vector_store %arg6[%c0_86, %c320_87], %63 {strides = array<i32>} : memref<256x576xf32, #tpu.memory_space<vmem>>, vector<256x64xf32>,
    %c2_88 = arith.constant 2 : index
    %c0_89 = arith.constant 0 : index
    %c0_90 = arith.constant 0 : index
    %65 = vector.load %arg5[%c2_88, %c0_89, %c0_90] : memref<18x18x64xf32, #tpu.memory_space<vmem>>, vector<16x16x64xf32>
    %66 = vector.shape_cast %65 : vector<16x16x64xf32> to vector<256x64xf32>
    %c0_91 = arith.constant 0 : index
    %c384_92 = arith.constant 384 : index
    %67 = vector.load %arg6[%c0_91, %c384_92] : memref<256x576xf32, #tpu.memory_space<vmem>>, vector<256x64xf32>
    tpu.vector_store %arg6[%c0_91, %c384_92], %66 {strides = array<i32>} : memref<256x576xf32, #tpu.memory_space<vmem>>, vector<256x64xf32>,
    %c2_93 = arith.constant 2 : index
    %c1_94 = arith.constant 1 : index
    %c0_95 = arith.constant 0 : index
    %68 = vector.load %arg5[%c2_93, %c1_94, %c0_95] : memref<18x18x64xf32, #tpu.memory_space<vmem>>, vector<16x16x64xf32>
    %69 = vector.shape_cast %68 : vector<16x16x64xf32> to vector<256x64xf32>
    %c0_96 = arith.constant 0 : index
    %c448_97 = arith.constant 448 : index
    %70 = vector.load %arg6[%c0_96, %c448_97] : memref<256x576xf32, #tpu.memory_space<vmem>>, vector<256x64xf32>
    tpu.vector_store %arg6[%c0_96, %c448_97], %69 {strides = array<i32>} : memref<256x576xf32, #tpu.memory_space<vmem>>, vector<256x64xf32>,
    %c2_98 = arith.constant 2 : index
    %c2_99 = arith.constant 2 : index
    %c0_100 = arith.constant 0 : index
    %71 = vector.load %arg5[%c2_98, %c2_99, %c0_100] : memref<18x18x64xf32, #tpu.memory_space<vmem>>, vector<16x16x64xf32>
    %72 = vector.shape_cast %71 : vector<16x16x64xf32> to vector<256x64xf32>
    %c0_101 = arith.constant 0 : index
    %c512_102 = arith.constant 512 : index
    %73 = vector.load %arg6[%c0_101, %c512_102] : memref<256x576xf32, #tpu.memory_space<vmem>>, vector<256x64xf32>
    tpu.vector_store %arg6[%c0_101, %c512_102], %72 {strides = array<i32>} : memref<256x576xf32, #tpu.memory_space<vmem>>, vector<256x64xf32>,
    %c0_103 = arith.constant 0 : index
    %c0_104 = arith.constant 0 : index
    %74 = vector.load %arg6[%c0_103, %c0_104] : memref<256x576xf32, #tpu.memory_space<vmem>>, vector<256x576xf32>
    %c1_105 = arith.constant 1 : index
    %c0_106 = arith.constant 0 : index
    %c0_107 = arith.constant 0 : index
    %75 = vector.load %arg2[%c1_105, %c0_106, %c0_107] : memref<3x576x64xf32, #tpu.memory_space<vmem>>, vector<1x576x64xf32>
    %76 = vector.shape_cast %75 : vector<1x576x64xf32> to vector<576x64xf32>
    %cst_108 = arith.constant dense<0.000000e+00> : vector<256x64xf32>
    %77 = tpu.matmul %74, %76, %cst_108 {dimension_numbers = #tpu.dot_dimension_numbers<[1], [0], [0], [1], [0, 0, 1, 1], [], []>} : vector<256x576xf32>, vector<576x64xf32>, vector<256x64xf32> -> vector<256x64xf32>
    %c1_109 = arith.constant 1 : index
    %c0_110 = arith.constant 0 : index
    %c0_111 = arith.constant 0 : index
    %78 = vector.load %arg3[%c1_109, %c0_110, %c0_111] : memref<3x1x64xf32, #tpu.memory_space<vmem>>, vector<1x1x64xf32>
    %79 = vector.shape_cast %78 : vector<1x1x64xf32> to vector<1x64xf32>
    %80 = vector.broadcast %79 : vector<1x64xf32> to vector<256x64xf32>
    %81 = arith.addf %77, %80 : vector<256x64xf32>
    %cst_112 = arith.constant 0.000000e+00 : f32
    %82 = vector.broadcast %cst_112 : f32 to vector<256x64xf32>
    %83 = arith.cmpf oge, %81, %82 : vector<256x64xf32>
    %cst_113 = arith.constant 2.000000e-01 : f32
    %84 = vector.broadcast %cst_113 : f32 to vector<256x64xf32>
    %85 = arith.mulf %84, %81 : vector<256x64xf32>
    %86 = arith.select %83, %81, %85 : vector<256x64xi1>, vector<256x64xf32>
    %87 = vector.shape_cast %86 : vector<256x64xf32> to vector<16x16x64xf32>
    %c1_114 = arith.constant 1 : index
    %c1_115 = arith.constant 1 : index
    %c0_116 = arith.constant 0 : index
    %88 = vector.load %arg5[%c1_114, %c1_115, %c0_116] : memref<18x18x64xf32, #tpu.memory_space<vmem>>, vector<16x16x64xf32>
    tpu.vector_store %arg5[%c1_114, %c1_115, %c0_116], %87 {strides = array<i32>} : memref<18x18x64xf32, #tpu.memory_space<vmem>>, vector<16x16x64xf32>,
    %c0_117 = arith.constant 0 : index
    %c0_118 = arith.constant 0 : index
    %c0_119 = arith.constant 0 : index
    %89 = vector.load %arg5[%c0_117, %c0_118, %c0_119] : memref<18x18x64xf32, #tpu.memory_space<vmem>>, vector<16x16x64xf32>
    %90 = vector.shape_cast %89 : vector<16x16x64xf32> to vector<256x64xf32>
    %c0_120 = arith.constant 0 : index
    %c0_121 = arith.constant 0 : index
    %91 = vector.load %arg6[%c0_120, %c0_121] : memref<256x576xf32, #tpu.memory_space<vmem>>, vector<256x64xf32>
    tpu.vector_store %arg6[%c0_120, %c0_121], %90 {strides = array<i32>} : memref<256x576xf32, #tpu.memory_space<vmem>>, vector<256x64xf32>,
    %c0_122 = arith.constant 0 : index
    %c1_123 = arith.constant 1 : index
    %c0_124 = arith.constant 0 : index
    %92 = vector.load %arg5[%c0_122, %c1_123, %c0_124] : memref<18x18x64xf32, #tpu.memory_space<vmem>>, vector<16x16x64xf32>
    %93 = vector.shape_cast %92 : vector<16x16x64xf32> to vector<256x64xf32>
    %c0_125 = arith.constant 0 : index
    %c64_126 = arith.constant 64 : index
    %94 = vector.load %arg6[%c0_125, %c64_126] : memref<256x576xf32, #tpu.memory_space<vmem>>, vector<256x64xf32>
    tpu.vector_store %arg6[%c0_125, %c64_126], %93 {strides = array<i32>} : memref<256x576xf32, #tpu.memory_space<vmem>>, vector<256x64xf32>,
    %c0_127 = arith.constant 0 : index
    %c2_128 = arith.constant 2 : index
    %c0_129 = arith.constant 0 : index
    %95 = vector.load %arg5[%c0_127, %c2_128, %c0_129] : memref<18x18x64xf32, #tpu.memory_space<vmem>>, vector<16x16x64xf32>
    %96 = vector.shape_cast %95 : vector<16x16x64xf32> to vector<256x64xf32>
    %c0_130 = arith.constant 0 : index
    %c128_131 = arith.constant 128 : index
    %97 = vector.load %arg6[%c0_130, %c128_131] : memref<256x576xf32, #tpu.memory_space<vmem>>, vector<256x64xf32>
    tpu.vector_store %arg6[%c0_130, %c128_131], %96 {strides = array<i32>} : memref<256x576xf32, #tpu.memory_space<vmem>>, vector<256x64xf32>,
    %c1_132 = arith.constant 1 : index
    %c0_133 = arith.constant 0 : index
    %c0_134 = arith.constant 0 : index
    %98 = vector.load %arg5[%c1_132, %c0_133, %c0_134] : memref<18x18x64xf32, #tpu.memory_space<vmem>>, vector<16x16x64xf32>
    %99 = vector.shape_cast %98 : vector<16x16x64xf32> to vector<256x64xf32>
    %c0_135 = arith.constant 0 : index
    %c192_136 = arith.constant 192 : index
    %100 = vector.load %arg6[%c0_135, %c192_136] : memref<256x576xf32, #tpu.memory_space<vmem>>, vector<256x64xf32>
    tpu.vector_store %arg6[%c0_135, %c192_136], %99 {strides = array<i32>} : memref<256x576xf32, #tpu.memory_space<vmem>>, vector<256x64xf32>,
    %c1_137 = arith.constant 1 : index
    %c1_138 = arith.constant 1 : index
    %c0_139 = arith.constant 0 : index
    %101 = vector.load %arg5[%c1_137, %c1_138, %c0_139] : memref<18x18x64xf32, #tpu.memory_space<vmem>>, vector<16x16x64xf32>
    %102 = vector.shape_cast %101 : vector<16x16x64xf32> to vector<256x64xf32>
    %c0_140 = arith.constant 0 : index
    %c256_141 = arith.constant 256 : index
    %103 = vector.load %arg6[%c0_140, %c256_141] : memref<256x576xf32, #tpu.memory_space<vmem>>, vector<256x64xf32>
    tpu.vector_store %arg6[%c0_140, %c256_141], %102 {strides = array<i32>} : memref<256x576xf32, #tpu.memory_space<vmem>>, vector<256x64xf32>,
    %c1_142 = arith.constant 1 : index
    %c2_143 = arith.constant 2 : index
    %c0_144 = arith.constant 0 : index
    %104 = vector.load %arg5[%c1_142, %c2_143, %c0_144] : memref<18x18x64xf32, #tpu.memory_space<vmem>>, vector<16x16x64xf32>
    %105 = vector.shape_cast %104 : vector<16x16x64xf32> to vector<256x64xf32>
    %c0_145 = arith.constant 0 : index
    %c320_146 = arith.constant 320 : index
    %106 = vector.load %arg6[%c0_145, %c320_146] : memref<256x576xf32, #tpu.memory_space<vmem>>, vector<256x64xf32>
    tpu.vector_store %arg6[%c0_145, %c320_146], %105 {strides = array<i32>} : memref<256x576xf32, #tpu.memory_space<vmem>>, vector<256x64xf32>,
    %c2_147 = arith.constant 2 : index
    %c0_148 = arith.constant 0 : index
    %c0_149 = arith.constant 0 : index
    %107 = vector.load %arg5[%c2_147, %c0_148, %c0_149] : memref<18x18x64xf32, #tpu.memory_space<vmem>>, vector<16x16x64xf32>
    %108 = vector.shape_cast %107 : vector<16x16x64xf32> to vector<256x64xf32>
    %c0_150 = arith.constant 0 : index
    %c384_151 = arith.constant 384 : index
    %109 = vector.load %arg6[%c0_150, %c384_151] : memref<256x576xf32, #tpu.memory_space<vmem>>, vector<256x64xf32>
    tpu.vector_store %arg6[%c0_150, %c384_151], %108 {strides = array<i32>} : memref<256x576xf32, #tpu.memory_space<vmem>>, vector<256x64xf32>,
    %c2_152 = arith.constant 2 : index
    %c1_153 = arith.constant 1 : index
    %c0_154 = arith.constant 0 : index
    %110 = vector.load %arg5[%c2_152, %c1_153, %c0_154] : memref<18x18x64xf32, #tpu.memory_space<vmem>>, vector<16x16x64xf32>
    %111 = vector.shape_cast %110 : vector<16x16x64xf32> to vector<256x64xf32>
    %c0_155 = arith.constant 0 : index
    %c448_156 = arith.constant 448 : index
    %112 = vector.load %arg6[%c0_155, %c448_156] : memref<256x576xf32, #tpu.memory_space<vmem>>, vector<256x64xf32>
    tpu.vector_store %arg6[%c0_155, %c448_156], %111 {strides = array<i32>} : memref<256x576xf32, #tpu.memory_space<vmem>>, vector<256x64xf32>,
    %c2_157 = arith.constant 2 : index
    %c2_158 = arith.constant 2 : index
    %c0_159 = arith.constant 0 : index
    %113 = vector.load %arg5[%c2_157, %c2_158, %c0_159] : memref<18x18x64xf32, #tpu.memory_space<vmem>>, vector<16x16x64xf32>
    %114 = vector.shape_cast %113 : vector<16x16x64xf32> to vector<256x64xf32>
    %c0_160 = arith.constant 0 : index
    %c512_161 = arith.constant 512 : index
    %115 = vector.load %arg6[%c0_160, %c512_161] : memref<256x576xf32, #tpu.memory_space<vmem>>, vector<256x64xf32>
    tpu.vector_store %arg6[%c0_160, %c512_161], %114 {strides = array<i32>} : memref<256x576xf32, #tpu.memory_space<vmem>>, vector<256x64xf32>,
    %c0_162 = arith.constant 0 : index
    %c0_163 = arith.constant 0 : index
    %116 = vector.load %arg6[%c0_162, %c0_163] : memref<256x576xf32, #tpu.memory_space<vmem>>, vector<256x576xf32>
    %c2_164 = arith.constant 2 : index
    %c0_165 = arith.constant 0 : index
    %c0_166 = arith.constant 0 : index
    %117 = vector.load %arg2[%c2_164, %c0_165, %c0_166] : memref<3x576x64xf32, #tpu.memory_space<vmem>>, vector<1x576x64xf32>
    %118 = vector.shape_cast %117 : vector<1x576x64xf32> to vector<576x64xf32>
    %cst_167 = arith.constant dense<0.000000e+00> : vector<256x64xf32>
    %119 = tpu.matmul %116, %118, %cst_167 {dimension_numbers = #tpu.dot_dimension_numbers<[1], [0], [0], [1], [0, 0, 1, 1], [], []>} : vector<256x576xf32>, vector<576x64xf32>, vector<256x64xf32> -> vector<256x64xf32>
    %c2_168 = arith.constant 2 : index
    %c0_169 = arith.constant 0 : index
    %c0_170 = arith.constant 0 : index
    %120 = vector.load %arg3[%c2_168, %c0_169, %c0_170] : memref<3x1x64xf32, #tpu.memory_space<vmem>>, vector<1x1x64xf32>
    %121 = vector.shape_cast %120 : vector<1x1x64xf32> to vector<1x64xf32>
    %122 = vector.broadcast %121 : vector<1x64xf32> to vector<256x64xf32>
    %123 = arith.addf %119, %122 : vector<256x64xf32>
    %124 = vector.shape_cast %123 : vector<256x64xf32> to vector<16x16x64xf32>
    %c0_171 = arith.constant 0 : index
    %c0_172 = arith.constant 0 : index
    %c0_173 = arith.constant 0 : index
    %c0_174 = arith.constant 0 : index
    %125 = vector.load %arg1[%c0_171, %c0_172, %c0_173, %c0_174] : memref<1x16x16x64xf32, #tpu.memory_space<vmem>>, vector<1x16x16x64xf32>
    %126 = vector.shape_cast %125 : vector<1x16x16x64xf32> to vector<16x16x64xf32>
    %127 = arith.addf %124, %126 : vector<16x16x64xf32>
    %c0_175 = arith.constant 0 : index
    %c0_176 = arith.constant 0 : index
    %c0_177 = arith.constant 0 : index
    %c0_178 = arith.constant 0 : index
    %128 = vector.load %arg4[%c0_175, %c0_176, %c0_177, %c0_178] : memref<1x16x16x64xf32, #tpu.memory_space<vmem>>, vector<1x16x16x64xf32>
    %129 = vector.shape_cast %128 : vector<1x16x16x64xf32> to vector<16x16x64xf32>
    %130 = vector.shape_cast %127 : vector<16x16x64xf32> to vector<1x16x16x64xf32>
    tpu.vector_store %arg4[%c0_175, %c0_176, %c0_177, %c0_178], %130 {strides = array<i32>} : memref<1x16x16x64xf32, #tpu.memory_space<vmem>>, vector<1x16x16x64xf32>,
    return
  }
  func.func @transform_0(%arg0: i32) -> (i32, i32, i32, i32) {
    %c0_i32 = arith.constant 0 : i32
    %c0_i32_0 = arith.constant 0 : i32
    %c0_i32_1 = arith.constant 0 : i32
    %c0_i32_2 = arith.constant 0 : i32
    return %arg0, %c0_i32, %c0_i32_0, %c0_i32_1 : i32, i32, i32, i32
  }
  func.func @transform_1(%arg0: i32) -> (i32, i32, i32) {
    %c0_i32 = arith.constant 0 : i32
    %c0_i32_0 = arith.constant 0 : i32
    %c0_i32_1 = arith.constant 0 : i32
    %c0_i32_2 = arith.constant 0 : i32
    return %c0_i32, %c0_i32_0, %c0_i32_1 : i32, i32, i32
  }
  func.func @transform_2(%arg0: i32) -> (i32, i32, i32) {
    %c0_i32 = arith.constant 0 : i32
    %c0_i32_0 = arith.constant 0 : i32
    %c0_i32_1 = arith.constant 0 : i32
    %c0_i32_2 = arith.constant 0 : i32
    return %c0_i32, %c0_i32_0, %c0_i32_1 : i32, i32, i32
  }
  func.func @transform_3(%arg0: i32) -> (i32, i32, i32, i32) {
    %c0_i32 = arith.constant 0 : i32
    %c0_i32_0 = arith.constant 0 : i32
    %c0_i32_1 = arith.constant 0 : i32
    %c0_i32_2 = arith.constant 0 : i32
    return %arg0, %c0_i32, %c0_i32_0, %c0_i32_1 : i32, i32, i32, i32
  }
}

</mosaic_0001>

<llo_original>
// kernel: rrdb_forward.1
$region0: #{rrdb_forward.1}
  #allocation0 [shape = 'u32[]', space=smem, size = 0x4, offset = 0x4, fixed_abs, tag = 'smem constant byte address 0x4 - core index']
  #allocation1 [shape = 'u32[72,128]{1,0:T(1,128)}', space=vmem, size = 0x9000, scoped, tag = 'internal scratch']
  #allocation2 [shape = 'f32[18,18,64]{2,1,0:T(8,128)}', space=vmem, size = 0x36000, scoped, tag = 'scratch operand']
  #allocation3 [shape = 'f32[256,576]{1,0:T(8,128)}', space=vmem, size = 0xa0000, scoped, tag = 'scratch operand']
  %s0 = inlined_call_operand.vmem [shape: f32[2,16,16,64], index: 0, kind: input, shape index: {}]
  %s1 = inlined_call_operand.vmem [shape: f32[3,576,64], index: 1, kind: input, shape index: {}]
  %s2 = inlined_call_operand.vmem [shape: f32[3,1,64], index: 2, kind: input, shape index: {}]
  %s3 = inlined_call_operand.hbm [shape: f32[2,16,16,64], index: 3, kind: output, shape index: {}]
  %s4 = sld [smem:[#allocation0]]
  $region45: #{rrdb_forward.1} parent=0
    _
  %s6 = ssub.s32 1, %s4
  %s7 = scalar_select 0, %s6, %s4
  $region1: #{rrdb_forward.1} parent=0
    #allocation4 [shape = 'u8[262144]{0}', space=vmem, size = 0x40000, scoped, tag = 'output window, operand 0']
    #allocation5 [shape = 's32[2]{0}', space=sflag, size = 0x8, scoped, tag = 'scoped memory for rrdb_forward.1']
    %8 = vsyncpa [#allocation5], 0
    %s9 = scalar_lea.sflag [#allocation5], 1
    %10 = vsyncpa %s9, 0
    loop: start=0, step=1, limit=4
    $region2: #{rrdb_forward.1} parent=1 // loop_pre_header
      _
    $region3: #{rrdb_forward.1} parent=1 // loop_header
      %s12 = sphi 0, %s16
      %p13 = scmp.ge.s32.totalorder %s12, 4
      %s22 = sphi 0, %s24
      %s25 = sphi 0, %s22
      %s26 = sphi 0, %s25
      %s42 = sphi 0, %s26
      %s46 = sphi 0, %s46
      %s48 = sphi 0, %s46
      %s49 = sphi 0, %s48
      %s63 = sphi 0, %s49
      %s67 = sphi 0, %s67
      %s69 = sphi 0, %s67
      %s70 = sphi 0, %s69
      %s84 = sphi 0, %s70
      %s90 = sphi 0, %s92
      %s93 = sphi 0, %s90
      %s94 = sphi 0, %s93
      %s110 = sphi 0, %s94
    $region4: #{rrdb_forward.1} parent=1 // loop_header_branch
      %15 = sbr.rel (%p13) target = $region8
    $region5: #{rrdb_forward.1} parent=1 // loop_body
      %s17 = ssub.s32 %s12, 1
      %s18 = ssub.s32 %s12, 2
      %s19 = sadd.s32 %s12, 1
      %s20 = ssub.s32 %s12, %s19
      %p21 = scmp.eq.s32.totalorder %s20, 0
      %s23 = sadd.s32 %s22, 1
      %s24 = scalar_select %p21, %s22, %s23
      %p27 = pneg %p21
      %p28 = scmp.eq.s32.totalorder %s12, 1
      %p29 = por %p27, %p28
      %p30 = scmp.ne.s32.totalorder %s22, %s25
      %p31 = scmp.eq.s32.totalorder %s12, 0
      %p32 = por %p30, %p31
      %p33 = scmp.ne.s32.totalorder %s22, %s25
      %p34 = scmp.eq.s32.totalorder %s17, 1
      %p35 = por %p33, %p34
      %p36 = scmp.ne.s32.totalorder %s25, %s26
      %p37 = scmp.eq.s32.totalorder %s17, 0
      %p38 = por %p36, %p37
      %p39 = scmp.ne.s32.totalorder %s25, %s26
      %p40 = scmp.eq.s32.totalorder %s18, 1
      %p41 = por %p39, %p40
      %p43 = scmp.ne.s32.totalorder %s26, %s42
      %p44 = scmp.eq.s32.totalorder %s18, 0
      %p45 = por %p43, %p44
      %s47 = sadd.s32 %s46, 1
      %p50 = scmp.eq.s32.totalorder %s12, 1
      %p51 = scmp.ne.s32.totalorder %s46, %s48
      %p52 = scmp.eq.s32.totalorder %s12, 0
      %p53 = por %p51, %p52
      %p54 = scmp.ne.s32.totalorder %s46, %s48
      %p55 = scmp.eq.s32.totalorder %s17, 1
      %p56 = por %p54, %p55
      %p57 = scmp.ne.s32.totalorder %s48, %s49
      %p58 = scmp.eq.s32.totalorder %s17, 0
      %p59 = por %p57, %p58
      %p60 = scmp.ne.s32.totalorder %s48, %s49
      %p61 = scmp.eq.s32.totalorder %s18, 1
      %p62 = por %p60, %p61
      %p64 = scmp.ne.s32.totalorder %s49, %s63
      %p65 = scmp.eq.s32.totalorder %s18, 0
      %p66 = por %p64, %p65
      %s68 = sadd.s32 %s67, 1
      %p71 = scmp.eq.s32.totalorder %s12, 1
      %p72 = scmp.ne.s32.totalorder %s67, %s69
      %p73 = scmp.eq.s32.totalorder %s12, 0
      %p74 = por %p72, %p73
      %p75 = scmp.ne.s32.totalorder %s67, %s69
      %p76 = scmp.eq.s32.totalorder %s17, 1
      %p77 = por %p75, %p76
      %p78 = scmp.ne.s32.totalorder %s69, %s70
      %p79 = scmp.eq.s32.totalorder %s17, 0
      %p80 = por %p78, %p79
      %p81 = scmp.ne.s32.totalorder %s69, %s70
      %p82 = scmp.eq.s32.totalorder %s18, 1
      %p83 = por %p81, %p82
      %p85 = scmp.ne.s32.totalorder %s70, %s84
      %p86 = scmp.eq.s32.totalorder %s18, 0
      %p87 = por %p85, %p86
      %s88 = ssub.s32 %s12, %s19
      %p89 = scmp.eq.s32.totalorder %s88, 0
      %s91 = sadd.s32 %s90, 1
      %s92 = scalar_select %p89, %s90, %s91
      %p95 = pneg %p89
      %p96 = scmp.eq.s32.totalorder %s12, 1
      %p97 = por %p95, %p96
      %p98 = scmp.ne.s32.totalorder %s90, %s93
      %p99 = scmp.eq.s32.totalorder %s12, 0
      %p100 = por %p98, %p99
      %p101 = scmp.ne.s32.totalorder %s90, %s93
      %p102 = scmp.eq.s32.totalorder %s17, 1
      %p103 = por %p101, %p102
      %p104 = scmp.ne.s32.totalorder %s93, %s94
      %p105 = scmp.eq.s32.totalorder %s17, 0
      %p106 = por %p104, %p105
      %p107 = scmp.ne.s32.totalorder %s93, %s94
      %p108 = scmp.eq.s32.totalorder %s18, 1
      %p109 = por %p107, %p108
      %p111 = scmp.ne.s32.totalorder %s94, %s110
      %p112 = scmp.eq.s32.totalorder %s18, 0
      %p113 = por %p111, %p112
      %p114 = scmp.le.s32.totalorder 1, %s12
      %p115 = scmp.lt.s32.totalorder %s12, 3
      %p116 = pnand %p114, %p115
      %p117 = pneg %p116
      // Predicated region
      $region9: #{rrdb_forward.1} parent=5 // pred_check
        _
      $region10: #{rrdb_forward.1} parent=5 // pred_check_branch
        %119 = sbr.rel (%p116) target = $region12
      $region11: #{rrdb_forward.1} parent=5 // pred_region
        %s120 = ssub.s32 %s12, 1
        // Predicated region
        $region13: #{rrdb_forward.1} parent=11 // pred_check
          %p121 = pneg %p59
        $region14: #{rrdb_forward.1} parent=11 // pred_check_branch
          %123 = sbr.rel (%p121) target = $region16
        $region15: #{rrdb_forward.1} parent=11 // pred_region
          _
        $region16: #{rrdb_forward.1} parent=11 // pred_fallthru
          _
        // Predicated region
        $region17: #{rrdb_forward.1} parent=11 // pred_check
          %p124 = pneg %p80
        $region18: #{rrdb_forward.1} parent=11 // pred_check_branch
          %126 = sbr.rel (%p124) target = $region20
        $region19: #{rrdb_forward.1} parent=11 // pred_region
          _
        $region20: #{rrdb_forward.1} parent=11 // pred_fallthru
          _
      $region12: #{rrdb_forward.1} parent=5 // pred_fallthru
        _
      %p127 = scmp.lt.s32.totalorder %s12, 2
      // Predicated region
      $region21: #{rrdb_forward.1} parent=5 // pred_check
        %p128 = pneg %p127
      $region22: #{rrdb_forward.1} parent=5 // pred_check_branch
        %130 = sbr.rel (%p128) target = $region24
      $region23: #{rrdb_forward.1} parent=5 // pred_region
        // Predicated region
        $region25: #{rrdb_forward.1} parent=23 // pred_check
          %p131 = pneg %p32
        $region26: #{rrdb_forward.1} parent=23 // pred_check_branch
          %133 = sbr.rel (%p131) target = $region28
        $region27: #{rrdb_forward.1} parent=23 // pred_region
          %p134 = scmp.lt.s32.totalorder %s12, 1
          %s135 = scalar_select %p134, %s12, 1
          %s136 = smul.addr %s135, 32
          %s137 = smul.addr %s136, 8
          %s138 = scalar_lea.vmem %s0, %s137
        $region28: #{rrdb_forward.1} parent=23 // pred_fallthru
          _
      $region24: #{rrdb_forward.1} parent=5 // pred_fallthru
        _
      %p139 = scmp.le.s32.totalorder 1, %s12
      %p140 = scmp.lt.s32.totalorder %s12, 3
      %p141 = pnand %p139, %p140
      %p142 = pneg %p141
      // Predicated region
      $region29: #{rrdb_forward.1} parent=5 // pred_check
        _
      $region30: #{rrdb_forward.1} parent=5 // pred_check_branch
        %144 = sbr.rel (%p141) target = $region32
      $region31: #{rrdb_forward.1} parent=5 // pred_region
        %s145 = ssub.s32 %s12, 1
        %p146 = scmp.lt.s32.totalorder %s17, 1
        %s147 = scalar_select %p146, %s17, 1
        %s148 = smul.addr %s147, 32
        %s149 = smul.addr %s148, 8
        %s150 = scalar_lea.vmem %s0, %s149
        %p151 = pneg %p38
        %p152 = pneg %p35
        %p153 = pneg %p59
        %p154 = pneg %p56
        %p155 = pneg %p80
        %p156 = pneg %p77
        %p157 = pneg %p106
        %p158 = pneg %p103
        %s159 = sand.u32 %s93, 1
        %s160 = scalar_lea.sflag [#allocation5], %s159
        %s161 = sand.u32 %s93, 1
        %s162 = smul.addr %s161, 256
        %s163 = scalar_lea.vmem [#allocation4], %s162
        %p164 = scmp.lt.s32.totalorder %s17, 1
        %s165 = scalar_select %p164, %s17, 1
        %s166 = smul.addr %s165, 32
        %s167 = smul.addr %s166, 8
        %s168 = scalar_lea.vmem %s0, %s167
        %vm169 = vcmask 523264
        %170 = vst.msk [vmem:[#allocation2] sm:$0xff] %vm169, 0.0
        %171 = vst.msk [vmem:[#allocation2 + $0x8] sm:$0xff] %vm169, 0.0
        %vm172 = vcmask 517120
        %173 = vst.msk [vmem:[#allocation2 + $0x10] sm:$0x3] %vm172, 0.0
        %174 = vst.msk [vmem:[#allocation2 + $0x18] sm:$0xff] %vm169, 0.0
        %175 = vst.msk [vmem:[#allocation2 + $0x20] sm:$0xff] %vm169, 0.0
        %176 = vst.msk [vmem:[#allocation2 + $0x28] sm:$0x3] %vm172, 0.0
        %177 = vst.msk [vmem:[#allocation2 + $0x30] sm:$0xff] %vm169, 0.0
        %178 = vst.msk [vmem:[#allocation2 + $0x38] sm:$0xff] %vm169, 0.0
        %179 = vst.msk [vmem:[#allocation2 + $0x40] sm:$0x3] %vm172, 0.0
        %180 = vst.msk [vmem:[#allocation2 + $0x48] sm:$0xff] %vm169, 0.0
        %181 = vst.msk [vmem:[#allocation2 + $0x50] sm:$0xff] %vm169, 0.0
        %182 = vst.msk [vmem:[#allocation2 + $0x58] sm:$0x3] %vm172, 0.0
        %183 = vst.msk [vmem:[#allocation2 + $0x60] sm:$0xff] %vm169, 0.0
        %184 = vst.msk [vmem:[#allocation2 + $0x68] sm:$0xff] %vm169, 0.0
        %185 = vst.msk [vmem:[#allocation2 + $0x70] sm:$0x3] %vm172, 0.0
        %186 = vst.msk [vmem:[#allocation2 + $0x78] sm:$0xff] %vm169, 0.0
        %187 = vst.msk [vmem:[#allocation2 + $0x80] sm:$0xff] %vm169, 0.0
        %188 = vst.msk [vmem:[#allocation2 + $0x88] sm:$0x3] %vm172, 0.0
        %189 = vst.msk [vmem:[#allocation2 + $0x90] sm:$0xff] %vm169, 0.0
        %190 = vst.msk [vmem:[#allocation2 + $0x98] sm:$0xff] %vm169, 0.0
        %191 = vst.msk [vmem:[#allocation2 + $0xa0] sm:$0x3] %vm172, 0.0
        %192 = vst.msk [vmem:[#allocation2 + $0xa8] sm:$0xff] %vm169, 0.0
        %193 = vst.msk [vmem:[#allocation2 + $0xb0] sm:$0xff] %vm169, 0.0
        %194 = vst.msk [vmem:[#allocation2 + $0xb8] sm:$0x3] %vm172, 0.0
        %195 = vst.msk [vmem:[#allocation2 + $0xc0] sm:$0xff] %vm169, 0.0
        %196 = vst.msk [vmem:[#allocation2 + $0xc8] sm:$0xff] %vm169, 0.0
        %197 = vst.msk [vmem:[#allocation2 + $0xd0] sm:$0x3] %vm172, 0.0
        %198 = vst.msk [vmem:[#allocation2 + $0xd8] sm:$0xff] %vm169, 0.0
        %199 = vst.msk [vmem:[#allocation2 + $0xe0] sm:$0xff] %vm169, 0.0
        %200 = vst.msk [vmem:[#allocation2 + $0xe8] sm:$0x3] %vm172, 0.0
        %201 = vst.msk [vmem:[#allocation2 + $0xf0] sm:$0xff] %vm169, 0.0
        %202 = vst.msk [vmem:[#allocation2 + $0xf8] sm:$0xff] %vm169, 0.0
        %203 = vst.msk [vmem:[#allocation2 + $0x100] sm:$0x3] %vm172, 0.0
        %204 = vst.msk [vmem:[#allocation2 + $0x108] sm:$0xff] %vm169, 0.0
        %205 = vst.msk [vmem:[#allocation2 + $0x110] sm:$0xff] %vm169, 0.0
        %206 = vst.msk [vmem:[#allocation2 + $0x118] sm:$0x3] %vm172, 0.0
        %207 = vst.msk [vmem:[#allocation2 + $0x120] sm:$0xff] %vm169, 0.0
        %208 = vst.msk [vmem:[#allocation2 + $0x128] sm:$0xff] %vm169, 0.0
        %209 = vst.msk [vmem:[#allocation2 + $0x130] sm:$0x3] %vm172, 0.0
        %210 = vst.msk [vmem:[#allocation2 + $0x138] sm:$0xff] %vm169, 0.0
        %211 = vst.msk [vmem:[#allocation2 + $0x140] sm:$0xff] %vm169, 0.0
        %212 = vst.msk [vmem:[#allocation2 + $0x148] sm:$0x3] %vm172, 0.0
        %213 = vst.msk [vmem:[#allocation2 + $0x150] sm:$0xff] %vm169, 0.0
        %214 = vst.msk [vmem:[#allocation2 + $0x158] sm:$0xff] %vm169, 0.0
        %215 = vst.msk [vmem:[#allocation2 + $0x160] sm:$0x3] %vm172, 0.0
        %216 = vst.msk [vmem:[#allocation2 + $0x168] sm:$0xff] %vm169, 0.0
        %217 = vst.msk [vmem:[#allocation2 + $0x170] sm:$0xff] %vm169, 0.0
        %218 = vst.msk [vmem:[#allocation2 + $0x178] sm:$0x3] %vm172, 0.0
        %219 = vst.msk [vmem:[#allocation2 + $0x180] sm:$0xff] %vm169, 0.0
        %220 = vst.msk [vmem:[#allocation2 + $0x188] sm:$0xff] %vm169, 0.0
        %221 = vst.msk [vmem:[#allocation2 + $0x190] sm:$0x3] %vm172, 0.0
        %222 = vst.msk [vmem:[#allocation2 + $0x198] sm:$0xff] %vm169, 0.0
        %223 = vst.msk [vmem:[#allocation2 + $0x1a0] sm:$0xff] %vm169, 0.0
        %224 = vst.msk [vmem:[#allocation2 + $0x1a8] sm:$0x3] %vm172, 0.0
        %v225 = vld [vmem:[%s168] sm:$0xff]
        %v226 = vld [vmem:[%s168 + $0x8] sm:$0xff]
        %v227 = vld [vmem:[%s168 + $0x10] sm:$0xff]
        %v228 = vld [vmem:[%s168 + $0x18] sm:$0xff]
        %v229 = vld [vmem:[%s168 + $0x20] sm:$0xff]
        %v230 = vld [vmem:[%s168 + $0x28] sm:$0xff]
        %v231 = vld [vmem:[%s168 + $0x30] sm:$0xff]
        %v232 = vld [vmem:[%s168 + $0x38] sm:$0xff]
        %v233 = vld [vmem:[%s168 + $0x40] sm:$0xff]
        %v234 = vld [vmem:[%s168 + $0x48] sm:$0xff]
        %v235 = vld [vmem:[%s168 + $0x50] sm:$0xff]
        %v236 = vld [vmem:[%s168 + $0x58] sm:$0xff]
        %v237 = vld [vmem:[%s168 + $0x60] sm:$0xff]
        %v238 = vld [vmem:[%s168 + $0x68] sm:$0xff]
        %v239 = vld [vmem:[%s168 + $0x70] sm:$0xff]
        %v240 = vld [vmem:[%s168 + $0x78] sm:$0xff]
        %v241 = vld [vmem:[%s168 + $0x80] sm:$0xff]
        %v242 = vld [vmem:[%s168 + $0x88] sm:$0xff]
        %v243 = vld [vmem:[%s168 + $0x90] sm:$0xff]
        %v244 = vld [vmem:[%s168 + $0x98] sm:$0xff]
        %v245 = vld [vmem:[%s168 + $0xa0] sm:$0xff]
        %v246 = vld [vmem:[%s168 + $0xa8] sm:$0xff]
        %v247 = vld [vmem:[%s168 + $0xb0] sm:$0xff]
        %v248 = vld [vmem:[%s168 + $0xb8] sm:$0xff]
        %v249 = vld [vmem:[%s168 + $0xc0] sm:$0xff]
        %v250 = vld [vmem:[%s168 + $0xc8] sm:$0xff]
        %v251 = vld [vmem:[%s168 + $0xd0] sm:$0xff]
        %v252 = vld [vmem:[%s168 + $0xd8] sm:$0xff]
        %v253 = vld [vmem:[%s168 + $0xe0] sm:$0xff]
        %v254 = vld [vmem:[%s168 + $0xe8] sm:$0xff]
        %v255 = vld [vmem:[%s168 + $0xf0] sm:$0xff]
        %v256 = vld [vmem:[%s168 + $0xf8] sm:$0xff]
        %s257 = scalar_lea.vmem [#allocation2], 24
        %258 = vst.msk [vmem:[%s257 + $0x1] sm:$0xff] %vm169, %v225
        %259 = vst.msk [vmem:[%s257 + $0x9] sm:$0xff] %vm169, %v226
        %260 = vst.msk [vmem:[%s257 + $0x19] sm:$0xff] %vm169, %v227
        %261 = vst.msk [vmem:[%s257 + $0x21] sm:$0xff] %vm169, %v228
        %262 = vst.msk [vmem:[%s257 + $0x31] sm:$0xff] %vm169, %v229
        %263 = vst.msk [vmem:[%s257 + $0x39] sm:$0xff] %vm169, %v230
        %264 = vst.msk [vmem:[%s257 + $0x49] sm:$0xff] %vm169, %v231
        %265 = vst.msk [vmem:[%s257 + $0x51] sm:$0xff] %vm169, %v232
        %266 = vst.msk [vmem:[%s257 + $0x61] sm:$0xff] %vm169, %v233
        %267 = vst.msk [vmem:[%s257 + $0x69] sm:$0xff] %vm169, %v234
        %268 = vst.msk [vmem:[%s257 + $0x79] sm:$0xff] %vm169, %v235
        %269 = vst.msk [vmem:[%s257 + $0x81] sm:$0xff] %vm169, %v236
        %270 = vst.msk [vmem:[%s257 + $0x91] sm:$0xff] %vm169, %v237
        %271 = vst.msk [vmem:[%s257 + $0x99] sm:$0xff] %vm169, %v238
        %272 = vst.msk [vmem:[%s257 + $0xa9] sm:$0xff] %vm169, %v239
        %273 = vst.msk [vmem:[%s257 + $0xb1] sm:$0xff] %vm169, %v240
        %274 = vst.msk [vmem:[%s257 + $0xc1] sm:$0xff] %vm169, %v241
        %275 = vst.msk [vmem:[%s257 + $0xc9] sm:$0xff] %vm169, %v242
        %276 = vst.msk [vmem:[%s257 + $0xd9] sm:$0xff] %vm169, %v243
        %277 = vst.msk [vmem:[%s257 + $0xe1] sm:$0xff] %vm169, %v244
        %278 = vst.msk [vmem:[%s257 + $0xf1] sm:$0xff] %vm169, %v245
        %279 = vst.msk [vmem:[%s257 + $0xf9] sm:$0xff] %vm169, %v246
        %280 = vst.msk [vmem:[%s257 + $0x109] sm:$0xff] %vm169, %v247
        %281 = vst.msk [vmem:[%s257 + $0x111] sm:$0xff] %vm169, %v248
        %282 = vst.msk [vmem:[%s257 + $0x121] sm:$0xff] %vm169, %v249
        %283 = vst.msk [vmem:[%s257 + $0x129] sm:$0xff] %vm169, %v250
        %284 = vst.msk [vmem:[%s257 + $0x139] sm:$0xff] %vm169, %v251
        %285 = vst.msk [vmem:[%s257 + $0x141] sm:$0xff] %vm169, %v252
        %286 = vst.msk [vmem:[%s257 + $0x151] sm:$0xff] %vm169, %v253
        %287 = vst.msk [vmem:[%s257 + $0x159] sm:$0xff] %vm169, %v254
        %288 = vst.msk [vmem:[%s257 + $0x169] sm:$0xff] %vm169, %v255
        %289 = vst.msk [vmem:[%s257 + $0x171] sm:$0xff] %vm169, %v256
        %v290 = vld [vmem:[#allocation2] sm:$0xff]
        %v291 = vld [vmem:[#allocation2 + $0x8] sm:$0xff]
        %v292 = vld [vmem:[#allocation2 + $0x18] sm:$0xff]
        %v293 = vld [vmem:[#allocation2 + $0x20] sm:$0xff]
        %v294 = vld [vmem:[#allocation2 + $0x30] sm:$0xff]
        %v295 = vld [vmem:[#allocation2 + $0x38] sm:$0xff]
        %v296 = vld [vmem:[#allocation2 + $0x48] sm:$0xff]
        %v297 = vld [vmem:[#allocation2 + $0x50] sm:$0xff]
        %v298 = vld [vmem:[#allocation2 + $0x60] sm:$0xff]
        %v299 = vld [vmem:[#allocation2 + $0x68] sm:$0xff]
        %v300 = vld [vmem:[#allocation2 + $0x78] sm:$0xff]
        %v301 = vld [vmem:[#allocation2 + $0x80] sm:$0xff]
        %v302 = vld [vmem:[#allocation2 + $0x90] sm:$0xff]
        %v303 = vld [vmem:[#allocation2 + $0x98] sm:$0xff]
        %v304 = vld [vmem:[#allocation2 + $0xa8] sm:$0xff]
        %v305 = vld [vmem:[#allocation2 + $0xb0] sm:$0xff]
        %v306 = vld [vmem:[#allocation2 + $0xc0] sm:$0xff]
        %v307 = vld [vmem:[#allocation2 + $0xc8] sm:$0xff]
        %v308 = vld [vmem:[#allocation2 + $0xd8] sm:$0xff]
        %v309 = vld [vmem:[#allocation2 + $0xe0] sm:$0xff]
        %v310 = vld [vmem:[#allocation2 + $0xf0] sm:$0xff]
        %v311 = vld [vmem:[#allocation2 + $0xf8] sm:$0xff]
        %v312 = vld [vmem:[#allocation2 + $0x108] sm:$0xff]
        %v313 = vld [vmem:[#allocation2 + $0x110] sm:$0xff]
        %v314 = vld [vmem:[#allocation2 + $0x120] sm:$0xff]
        %v315 = vld [vmem:[#allocation2 + $0x128] sm:$0xff]
        %v316 = vld [vmem:[#allocation2 + $0x138] sm:$0xff]
        %v317 = vld [vmem:[#allocation2 + $0x140] sm:$0xff]
        %v318 = vld [vmem:[#allocation2 + $0x150] sm:$0xff]
        %v319 = vld [vmem:[#allocation2 + $0x158] sm:$0xff]
        %v320 = vld [vmem:[#allocation2 + $0x168] sm:$0xff]
        %v321 = vld [vmem:[#allocation2 + $0x170] sm:$0xff]
        %322 = vst.msk [vmem:[#allocation3] sm:$0xff] %vm169, %v290
        %323 = vst.msk [vmem:[#allocation3 + $0x28] sm:$0xff] %vm169, %v291
        %324 = vst.msk [vmem:[#allocation3 + $0x50] sm:$0xff] %vm169, %v292
        %325 = vst.msk [vmem:[#allocation3 + $0x78] sm:$0xff] %vm169, %v293
        %326 = vst.msk [vmem:[#allocation3 + $0xa0] sm:$0xff] %vm169, %v294
        %327 = vst.msk [vmem:[#allocation3 + $0xc8] sm:$0xff] %vm169, %v295
        %328 = vst.msk [vmem:[#allocation3 + $0xf0] sm:$0xff] %vm169, %v296
        %329 = vst.msk [vmem:[#allocation3 + $0x118] sm:$0xff] %vm169, %v297
        %330 = vst.msk [vmem:[#allocation3 + $0x140] sm:$0xff] %vm169, %v298
        %331 = vst.msk [vmem:[#allocation3 + $0x168] sm:$0xff] %vm169, %v299
        %332 = vst.msk [vmem:[#allocation3 + $0x190] sm:$0xff] %vm169, %v300
        %333 = vst.msk [vmem:[#allocation3 + $0x1b8] sm:$0xff] %vm169, %v301
        %334 = vst.msk [vmem:[#allocation3 + $0x1e0] sm:$0xff] %vm169, %v302
        %335 = vst.msk [vmem:[#allocation3 + $0x208] sm:$0xff] %vm169, %v303
        %336 = vst.msk [vmem:[#allocation3 + $0x230] sm:$0xff] %vm169, %v304
        %337 = vst.msk [vmem:[#allocation3 + $0x258] sm:$0xff] %vm169, %v305
        %338 = vst.msk [vmem:[#allocation3 + $0x280] sm:$0xff] %vm169, %v306
        %339 = vst.msk [vmem:[#allocation3 + $0x2a8] sm:$0xff] %vm169, %v307
        %340 = vst.msk [vmem:[#allocation3 + $0x2d0] sm:$0xff] %vm169, %v308
        %341 = vst.msk [vmem:[#allocation3 + $0x2f8] sm:$0xff] %vm169, %v309
        %342 = vst.msk [vmem:[#allocation3 + $0x320] sm:$0xff] %vm169, %v310
        %343 = vst.msk [vmem:[#allocation3 + $0x348] sm:$0xff] %vm169, %v311
        %344 = vst.msk [vmem:[#allocation3 + $0x370] sm:$0xff] %vm169, %v312
        %345 = vst.msk [vmem:[#allocation3 + $0x398] sm:$0xff] %vm169, %v313
        %346 = vst.msk [vmem:[#allocation3 + $0x3c0] sm:$0xff] %vm169, %v314
        %347 = vst.msk [vmem:[#allocation3 + $0x3e8] sm:$0xff] %vm169, %v315
        %348 = vst.msk [vmem:[#allocation3 + $0x410] sm:$0xff] %vm169, %v316
        %349 = vst.msk [vmem:[#allocation3 + $0x438] sm:$0xff] %vm169, %v317
        %350 = vst.msk [vmem:[#allocation3 + $0x460] sm:$0xff] %vm169, %v318
        %351 = vst.msk [vmem:[#allocation3 + $0x488] sm:$0xff] %vm169, %v319
        %352 = vst.msk [vmem:[#allocation3 + $0x4b0] sm:$0xff] %vm169, %v320
        %353 = vst.msk [vmem:[#allocation3 + $0x4d8] sm:$0xff] %vm169, %v321
        %v354 = vld [vmem:[#allocation2 + $0x1] sm:$0xff]
        %v355 = vld [vmem:[#allocation2 + $0x9] sm:$0xff]
        %v356 = vld [vmem:[#allocation2 + $0x19] sm:$0xff]
        %v357 = vld [vmem:[#allocation2 + $0x21] sm:$0xff]
        %v358 = vld [vmem:[#allocation2 + $0x31] sm:$0xff]
        %v359 = vld [vmem:[#allocation2 + $0x39] sm:$0xff]
        %v360 = vld [vmem:[#allocation2 + $0x49] sm:$0xff]
        %v361 = vld [vmem:[#allocation2 + $0x51] sm:$0xff]
        %v362 = vld [vmem:[#allocation2 + $0x61] sm:$0xff]
        %v363 = vld [vmem:[#allocation2 + $0x69] sm:$0xff]
        %v364 = vld [vmem:[#allocation2 + $0x79] sm:$0xff]
        %v365 = vld [vmem:[#allocation2 + $0x81] sm:$0xff]
        %v366 = vld [vmem:[#allocation2 + $0x91] sm:$0xff]
        %v367 = vld [vmem:[#allocation2 + $0x99] sm:$0xff]
        %v368 = vld [vmem:[#allocation2 + $0xa9] sm:$0xff]
        %v369 = vld [vmem:[#allocation2 + $0xb1] sm:$0xff]
        %v370 = vld [vmem:[#allocation2 + $0xc1] sm:$0xff]
        %v371 = vld [vmem:[#allocation2 + $0xc9] sm:$0xff]
        %v372 = vld [vmem:[#allocation2 + $0xd9] sm:$0xff]
        %v373 = vld [vmem:[#allocation2 + $0xe1] sm:$0xff]
        %v374 = vld [vmem:[#allocation2 + $0xf1] sm:$0xff]
        %v375 = vld [vmem:[#allocation2 + $0xf9] sm:$0xff]
        %v376 = vld [vmem:[#allocation2 + $0x109] sm:$0xff]
        %v377 = vld [vmem:[#allocation2 + $0x111] sm:$0xff]
        %v378 = vld [vmem:[#allocation2 + $0x121] sm:$0xff]
        %v379 = vld [vmem:[#allocation2 + $0x129] sm:$0xff]
        %v380 = vld [vmem:[#allocation2 + $0x139] sm:$0xff]
        %v381 = vld [vmem:[#allocation2 + $0x141] sm:$0xff]
        %v382 = vld [vmem:[#allocation2 + $0x151] sm:$0xff]
        %v383 = vld [vmem:[#allocation2 + $0x159] sm:$0xff]
        %v384 = vld [vmem:[#allocation2 + $0x169] sm:$0xff]
        %v385 = vld [vmem:[#allocation2 + $0x171] sm:$0xff]
        %418 = vrot.lane.b32.xlu0 %v354, 64
        %v419 = vpop.permute.xlu0 %418
        %420 = vrot.lane.b32.xlu0 %v355, 64
        %v421 = vpop.permute.xlu0 %420
        %422 = vrot.lane.b32.xlu0 %v356, 64
        %v423 = vpop.permute.xlu0 %422
        %424 = vrot.lane.b32.xlu0 %v357, 64
        %v425 = vpop.permute.xlu0 %424
        %426 = vrot.lane.b32.xlu0 %v358, 64
        %v427 = vpop.permute.xlu0 %426
        %428 = vrot.lane.b32.xlu0 %v359, 64
        %v429 = vpop.permute.xlu0 %428
        %430 = vrot.lane.b32.xlu0 %v360, 64
        %v431 = vpop.permute.xlu0 %430
        %432 = vrot.lane.b32.xlu0 %v361, 64
        %v433 = vpop.permute.xlu0 %432
        %434 = vrot.lane.b32.xlu0 %v362, 64
        %v435 = vpop.permute.xlu0 %434
        %436 = vrot.lane.b32.xlu0 %v363, 64
        %v437 = vpop.permute.xlu0 %436
        %438 = vrot.lane.b32.xlu0 %v364, 64
        %v439 = vpop.permute.xlu0 %438
        %440 = vrot.lane.b32.xlu0 %v365, 64
        %v441 = vpop.permute.xlu0 %440
        %442 = vrot.lane.b32.xlu0 %v366, 64
        %v443 = vpop.permute.xlu0 %442
        %444 = vrot.lane.b32.xlu0 %v367, 64
        %v445 = vpop.permute.xlu0 %444
        %446 = vrot.lane.b32.xlu0 %v368, 64
        %v447 = vpop.permute.xlu0 %446
        %448 = vrot.lane.b32.xlu0 %v369, 64
        %v449 = vpop.permute.xlu0 %448
        %450 = vrot.lane.b32.xlu0 %v370, 64
        %v451 = vpop.permute.xlu0 %450
        %452 = vrot.lane.b32.xlu0 %v371, 64
        %v453 = vpop.permute.xlu0 %452
        %454 = vrot.lane.b32.xlu0 %v372, 64
        %v455 = vpop.permute.xlu0 %454
        %456 = vrot.lane.b32.xlu0 %v373, 64
        %v457 = vpop.permute.xlu0 %456
        %458 = vrot.lane.b32.xlu0 %v374, 64
        %v459 = vpop.permute.xlu0 %458
        %460 = vrot.lane.b32.xlu0 %v375, 64
        %v461 = vpop.permute.xlu0 %460
        %462 = vrot.lane.b32.xlu0 %v376, 64
        %v463 = vpop.permute.xlu0 %462
        %464 = vrot.lane.b32.xlu0 %v377, 64
        %v465 = vpop.permute.xlu0 %464
        %466 = vrot.lane.b32.xlu0 %v378, 64
        %v467 = vpop.permute.xlu0 %466
        %468 = vrot.lane.b32.xlu0 %v379, 64
        %v469 = vpop.permute.xlu0 %468
        %470 = vrot.lane.b32.xlu0 %v380, 64
        %v471 = vpop.permute.xlu0 %470
        %472 = vrot.lane.b32.xlu0 %v381, 64
        %v473 = vpop.permute.xlu0 %472
        %474 = vrot.lane.b32.xlu0 %v382, 64
        %v475 = vpop.permute.xlu0 %474
        %476 = vrot.lane.b32.xlu0 %v383, 64
        %v477 = vpop.permute.xlu0 %476
        %478 = vrot.lane.b32.xlu0 %v384, 64
        %v479 = vpop.permute.xlu0 %478
        %480 = vrot.lane.b32.xlu0 %v385, 64
        %v481 = vpop.permute.xlu0 %480
        %vm514 = vcmask 1048064
        %515 = vst.msk [vmem:[#allocation3] sm:$0xff] %vm514, %v419
        %516 = vst.msk [vmem:[#allocation3 + $0x28] sm:$0xff] %vm514, %v421
        %517 = vst.msk [vmem:[#allocation3 + $0x50] sm:$0xff] %vm514, %v423
        %518 = vst.msk [vmem:[#allocation3 + $0x78] sm:$0xff] %vm514, %v425
        %519 = vst.msk [vmem:[#allocation3 + $0xa0] sm:$0xff] %vm514, %v427
        %520 = vst.msk [vmem:[#allocation3 + $0xc8] sm:$0xff] %vm514, %v429
        %521 = vst.msk [vmem:[#allocation3 + $0xf0] sm:$0xff] %vm514, %v431
        %522 = vst.msk [vmem:[#allocation3 + $0x118] sm:$0xff] %vm514, %v433
        %523 = vst.msk [vmem:[#allocation3 + $0x140] sm:$0xff] %vm514, %v435
        %524 = vst.msk [vmem:[#allocation3 + $0x168] sm:$0xff] %vm514, %v437
        %525 = vst.msk [vmem:[#allocation3 + $0x190] sm:$0xff] %vm514, %v439
        %526 = vst.msk [vmem:[#allocation3 + $0x1b8] sm:$0xff] %vm514, %v441
        %527 = vst.msk [vmem:[#allocation3 + $0x1e0] sm:$0xff] %vm514, %v443
        %528 = vst.msk [vmem:[#allocation3 + $0x208] sm:$0xff] %vm514, %v445
        %529 = vst.msk [vmem:[#allocation3 + $0x230] sm:$0xff] %vm514, %v447
        %530 = vst.msk [vmem:[#allocation3 + $0x258] sm:$0xff] %vm514, %v449
        %531 = vst.msk [vmem:[#allocation3 + $0x280] sm:$0xff] %vm514, %v451
        %532 = vst.msk [vmem:[#allocation3 + $0x2a8] sm:$0xff] %vm514, %v453
        %533 = vst.msk [vmem:[#allocation3 + $0x2d0] sm:$0xff] %vm514, %v455
        %534 = vst.msk [vmem:[#allocation3 + $0x2f8] sm:$0xff] %vm514, %v457
        %535 = vst.msk [vmem:[#allocation3 + $0x320] sm:$0xff] %vm514, %v459
        %536 = vst.msk [vmem:[#allocation3 + $0x348] sm:$0xff] %vm514, %v461
        %537 = vst.msk [vmem:[#allocation3 + $0x370] sm:$0xff] %vm514, %v463
        %538 = vst.msk [vmem:[#allocation3 + $0x398] sm:$0xff] %vm514, %v465
        %539 = vst.msk [vmem:[#allocation3 + $0x3c0] sm:$0xff] %vm514, %v467
        %540 = vst.msk [vmem:[#allocation3 + $0x3e8] sm:$0xff] %vm514, %v469
        %541 = vst.msk [vmem:[#allocation3 + $0x410] sm:$0xff] %vm514, %v471
        %542 = vst.msk [vmem:[#allocation3 + $0x438] sm:$0xff] %vm514, %v473
        %543 = vst.msk [vmem:[#allocation3 + $0x460] sm:$0xff] %vm514, %v475
        %544 = vst.msk [vmem:[#allocation3 + $0x488] sm:$0xff] %vm514, %v477
        %545 = vst.msk [vmem:[#allocation3 + $0x4b0] sm:$0xff] %vm514, %v479
        %546 = vst.msk [vmem:[#allocation3 + $0x4d8] sm:$0xff] %vm514, %v481
        %v547 = vld [vmem:[#allocation2 + $0x2] sm:$0xff]
        %v548 = vld [vmem:[#allocation2 + $0xa] sm:$0xff]
        %v549 = vld [vmem:[#allocation2 + $0x1a] sm:$0xff]
        %v550 = vld [vmem:[#allocation2 + $0x22] sm:$0xff]
        %v551 = vld [vmem:[#allocation2 + $0x32] sm:$0xff]
        %v552 = vld [vmem:[#allocation2 + $0x3a] sm:$0xff]
        %v553 = vld [vmem:[#allocation2 + $0x4a] sm:$0xff]
        %v554 = vld [vmem:[#allocation2 + $0x52] sm:$0xff]
        %v555 = vld [vmem:[#allocation2 + $0x62] sm:$0xff]
        %v556 = vld [vmem:[#allocation2 + $0x6a] sm:$0xff]
        %v557 = vld [vmem:[#allocation2 + $0x7a] sm:$0xff]
        %v558 = vld [vmem:[#allocation2 + $0x82] sm:$0xff]
        %v559 = vld [vmem:[#allocation2 + $0x92] sm:$0xff]
        %v560 = vld [vmem:[#allocation2 + $0x9a] sm:$0xff]
        %v561 = vld [vmem:[#allocation2 + $0xaa] sm:$0xff]
        %v562 = vld [vmem:[#allocation2 + $0xb2] sm:$0xff]
        %v563 = vld [vmem:[#allocation2 + $0xc2] sm:$0xff]
        %v564 = vld [vmem:[#allocation2 + $0xca] sm:$0xff]
        %v565 = vld [vmem:[#allocation2 + $0xda] sm:$0xff]
        %v566 = vld [vmem:[#allocation2 + $0xe2] sm:$0xff]
        %v567 = vld [vmem:[#allocation2 + $0xf2] sm:$0xff]
        %v568 = vld [vmem:[#allocation2 + $0xfa] sm:$0xff]
        %v569 = vld [vmem:[#allocation2 + $0x10a] sm:$0xff]
        %v570 = vld [vmem:[#allocation2 + $0x112] sm:$0xff]
        %v571 = vld [vmem:[#allocation2 + $0x122] sm:$0xff]
        %v572 = vld [vmem:[#allocation2 + $0x12a] sm:$0xff]
        %v573 = vld [vmem:[#allocation2 + $0x13a] sm:$0xff]
        %v574 = vld [vmem:[#allocation2 + $0x142] sm:$0xff]
        %v575 = vld [vmem:[#allocation2 + $0x152] sm:$0xff]
        %v576 = vld [vmem:[#allocation2 + $0x15a] sm:$0xff]
        %v577 = vld [vmem:[#allocation2 + $0x16a] sm:$0xff]
        %v578 = vld [vmem:[#allocation2 + $0x172] sm:$0xff]
        %579 = vst.msk [vmem:[#allocation3 + $0x8] sm:$0xff] %vm169, %v547
        %580 = vst.msk [vmem:[#allocation3 + $0x30] sm:$0xff] %vm169, %v548
        %581 = vst.msk [vmem:[#allocation3 + $0x58] sm:$0xff] %vm169, %v549
        %582 = vst.msk [vmem:[#allocation3 + $0x80] sm:$0xff] %vm169, %v550
        %583 = vst.msk [vmem:[#allocation3 + $0xa8] sm:$0xff] %vm169, %v551
        %584 = vst.msk [vmem:[#allocation3 + $0xd0] sm:$0xff] %vm169, %v552
        %585 = vst.msk [vmem:[#allocation3 + $0xf8] sm:$0xff] %vm169, %v553
        %586 = vst.msk [vmem:[#allocation3 + $0x120] sm:$0xff] %vm169, %v554
        %587 = vst.msk [vmem:[#allocation3 + $0x148] sm:$0xff] %vm169, %v555
        %588 = vst.msk [vmem:[#allocation3 + $0x170] sm:$0xff] %vm169, %v556
        %589 = vst.msk [vmem:[#allocation3 + $0x198] sm:$0xff] %vm169, %v557
        %590 = vst.msk [vmem:[#allocation3 + $0x1c0] sm:$0xff] %vm169, %v558
        %591 = vst.msk [vmem:[#allocation3 + $0x1e8] sm:$0xff] %vm169, %v559
        %592 = vst.msk [vmem:[#allocation3 + $0x210] sm:$0xff] %vm169, %v560
        %593 = vst.msk [vmem:[#allocation3 + $0x238] sm:$0xff] %vm169, %v561
        %594 = vst.msk [vmem:[#allocation3 + $0x260] sm:$0xff] %vm169, %v562
        %595 = vst.msk [vmem:[#allocation3 + $0x288] sm:$0xff] %vm169, %v563
        %596 = vst.msk [vmem:[#allocation3 + $0x2b0] sm:$0xff] %vm169, %v564
        %597 = vst.msk [vmem:[#allocation3 + $0x2d8] sm:$0xff] %vm169, %v565
        %598 = vst.msk [vmem:[#allocation3 + $0x300] sm:$0xff] %vm169, %v566
        %599 = vst.msk [vmem:[#allocation3 + $0x328] sm:$0xff] %vm169, %v567
        %600 = vst.msk [vmem:[#allocation3 + $0x350] sm:$0xff] %vm169, %v568
        %601 = vst.msk [vmem:[#allocation3 + $0x378] sm:$0xff] %vm169, %v569
        %602 = vst.msk [vmem:[#allocation3 + $0x3a0] sm:$0xff] %vm169, %v570
        %603 = vst.msk [vmem:[#allocation3 + $0x3c8] sm:$0xff] %vm169, %v571
        %604 = vst.msk [vmem:[#allocation3 + $0x3f0] sm:$0xff] %vm169, %v572
        %605 = vst.msk [vmem:[#allocation3 + $0x418] sm:$0xff] %vm169, %v573
        %606 = vst.msk [vmem:[#allocation3 + $0x440] sm:$0xff] %vm169, %v574
        %607 = vst.msk [vmem:[#allocation3 + $0x468] sm:$0xff] %vm169, %v575
        %608 = vst.msk [vmem:[#allocation3 + $0x490] sm:$0xff] %vm169, %v576
        %609 = vst.msk [vmem:[#allocation3 + $0x4b8] sm:$0xff] %vm169, %v577
        %610 = vst.msk [vmem:[#allocation3 + $0x4e0] sm:$0xff] %vm169, %v578
        %v611 = vld [vmem:[%s257] sm:$0xff]
        %v612 = vld [vmem:[%s257 + $0x8] sm:$0xff]
        %v613 = vld [vmem:[%s257 + $0x18] sm:$0xff]
        %v614 = vld [vmem:[%s257 + $0x20] sm:$0xff]
        %v615 = vld [vmem:[%s257 + $0x30] sm:$0xff]
        %v616 = vld [vmem:[%s257 + $0x38] sm:$0xff]
        %v617 = vld [vmem:[%s257 + $0x48] sm:$0xff]
        %v618 = vld [vmem:[%s257 + $0x50] sm:$0xff]
        %v619 = vld [vmem:[%s257 + $0x60] sm:$0xff]
        %v620 = vld [vmem:[%s257 + $0x68] sm:$0xff]
        %v621 = vld [vmem:[%s257 + $0x78] sm:$0xff]
        %v622 = vld [vmem:[%s257 + $0x80] sm:$0xff]
        %v623 = vld [vmem:[%s257 + $0x90] sm:$0xff]
        %v624 = vld [vmem:[%s257 + $0x98] sm:$0xff]
        %v625 = vld [vmem:[%s257 + $0xa8] sm:$0xff]
        %v626 = vld [vmem:[%s257 + $0xb0] sm:$0xff]
        %v627 = vld [vmem:[%s257 + $0xc0] sm:$0xff]
        %v628 = vld [vmem:[%s257 + $0xc8] sm:$0xff]
        %v629 = vld [vmem:[%s257 + $0xd8] sm:$0xff]
        %v630 = vld [vmem:[%s257 + $0xe0] sm:$0xff]
        %v631 = vld [vmem:[%s257 + $0xf0] sm:$0xff]
        %v632 = vld [vmem:[%s257 + $0xf8] sm:$0xff]
        %v633 = vld [vmem:[%s257 + $0x108] sm:$0xff]
        %v634 = vld [vmem:[%s257 + $0x110] sm:$0xff]
        %v635 = vld [vmem:[%s257 + $0x120] sm:$0xff]
        %v636 = vld [vmem:[%s257 + $0x128] sm:$0xff]
        %v637 = vld [vmem:[%s257 + $0x138] sm:$0xff]
        %v638 = vld [vmem:[%s257 + $0x140] sm:$0xff]
        %v639 = vld [vmem:[%s257 + $0x150] sm:$0xff]
        %v640 = vld [vmem:[%s257 + $0x158] sm:$0xff]
        %v641 = vld [vmem:[%s257 + $0x168] sm:$0xff]
        %v642 = vld [vmem:[%s257 + $0x170] sm:$0xff]
        %675 = vrot.lane.b32.xlu0 %v611, 64
        %v676 = vpop.permute.xlu0 %675
        %677 = vrot.lane.b32.xlu0 %v612, 64
        %v678 = vpop.permute.xlu0 %677
        %679 = vrot.lane.b32.xlu0 %v613, 64
        %v680 = vpop.permute.xlu0 %679
        %681 = vrot.lane.b32.xlu0 %v614, 64
        %v682 = vpop.permute.xlu0 %681
        %683 = vrot.lane.b32.xlu0 %v615, 64
        %v684 = vpop.permute.xlu0 %683
        %685 = vrot.lane.b32.xlu0 %v616, 64
        %v686 = vpop.permute.xlu0 %685
        %687 = vrot.lane.b32.xlu0 %v617, 64
        %v688 = vpop.permute.xlu0 %687
        %689 = vrot.lane.b32.xlu0 %v618, 64
        %v690 = vpop.permute.xlu0 %689
        %691 = vrot.lane.b32.xlu0 %v619, 64
        %v692 = vpop.permute.xlu0 %691
        %693 = vrot.lane.b32.xlu0 %v620, 64
        %v694 = vpop.permute.xlu0 %693
        %695 = vrot.lane.b32.xlu0 %v621, 64
        %v696 = vpop.permute.xlu0 %695
        %697 = vrot.lane.b32.xlu0 %v622, 64
        %v698 = vpop.permute.xlu0 %697
        %699 = vrot.lane.b32.xlu0 %v623, 64
        %v700 = vpop.permute.xlu0 %699
        %701 = vrot.lane.b32.xlu0 %v624, 64
        %v702 = vpop.permute.xlu0 %701
        %703 = vrot.lane.b32.xlu0 %v625, 64
        %v704 = vpop.permute.xlu0 %703
        %705 = vrot.lane.b32.xlu0 %v626, 64
        %v706 = vpop.permute.xlu0 %705
        %707 = vrot.lane.b32.xlu0 %v627, 64
        %v708 = vpop.permute.xlu0 %707
        %709 = vrot.lane.b32.xlu0 %v628, 64
        %v710 = vpop.permute.xlu0 %709
        %711 = vrot.lane.b32.xlu0 %v629, 64
        %v712 = vpop.permute.xlu0 %711
        %713 = vrot.lane.b32.xlu0 %v630, 64
        %v714 = vpop.permute.xlu0 %713
        %715 = vrot.lane.b32.xlu0 %v631, 64
        %v716 = vpop.permute.xlu0 %715
        %717 = vrot.lane.b32.xlu0 %v632, 64
        %v718 = vpop.permute.xlu0 %717
        %719 = vrot.lane.b32.xlu0 %v633, 64
        %v720 = vpop.permute.xlu0 %719
        %721 = vrot.lane.b32.xlu0 %v634, 64
        %v722 = vpop.permute.xlu0 %721
        %723 = vrot.lane.b32.xlu0 %v635, 64
        %v724 = vpop.permute.xlu0 %723
        %725 = vrot.lane.b32.xlu0 %v636, 64
        %v726 = vpop.permute.xlu0 %725
        %727 = vrot.lane.b32.xlu0 %v637, 64
        %v728 = vpop.permute.xlu0 %727
        %729 = vrot.lane.b32.xlu0 %v638, 64
        %v730 = vpop.permute.xlu0 %729
        %731 = vrot.lane.b32.xlu0 %v639, 64
        %v732 = vpop.permute.xlu0 %731
        %733 = vrot.lane.b32.xlu0 %v640, 64
        %v734 = vpop.permute.xlu0 %733
        %735 = vrot.lane.b32.xlu0 %v641, 64
        %v736 = vpop.permute.xlu0 %735
        %737 = vrot.lane.b32.xlu0 %v642, 64
        %v738 = vpop.permute.xlu0 %737
        %771 = vst.msk [vmem:[#allocation3 + $0x8] sm:$0xff] %vm514, %v676
        %772 = vst.msk [vmem:[#allocation3 + $0x30] sm:$0xff] %vm514, %v678
        %773 = vst.msk [vmem:[#allocation3 + $0x58] sm:$0xff] %vm514, %v680
        %774 = vst.msk [vmem:[#allocation3 + $0x80] sm:$0xff] %vm514, %v682
        %775 = vst.msk [vmem:[#allocation3 + $0xa8] sm:$0xff] %vm514, %v684
        %776 = vst.msk [vmem:[#allocation3 + $0xd0] sm:$0xff] %vm514, %v686
        %777 = vst.msk [vmem:[#allocation3 + $0xf8] sm:$0xff] %vm514, %v688
        %778 = vst.msk [vmem:[#allocation3 + $0x120] sm:$0xff] %vm514, %v690
        %779 = vst.msk [vmem:[#allocation3 + $0x148] sm:$0xff] %vm514, %v692
        %780 = vst.msk [vmem:[#allocation3 + $0x170] sm:$0xff] %vm514, %v694
        %781 = vst.msk [vmem:[#allocation3 + $0x198] sm:$0xff] %vm514, %v696
        %782 = vst.msk [vmem:[#allocation3 + $0x1c0] sm:$0xff] %vm514, %v698
        %783 = vst.msk [vmem:[#allocation3 + $0x1e8] sm:$0xff] %vm514, %v700
        %784 = vst.msk [vmem:[#allocation3 + $0x210] sm:$0xff] %vm514, %v702
        %785 = vst.msk [vmem:[#allocation3 + $0x238] sm:$0xff] %vm514, %v704
        %786 = vst.msk [vmem:[#allocation3 + $0x260] sm:$0xff] %vm514, %v706
        %787 = vst.msk [vmem:[#allocation3 + $0x288] sm:$0xff] %vm514, %v708
        %788 = vst.msk [vmem:[#allocation3 + $0x2b0] sm:$0xff] %vm514, %v710
        %789 = vst.msk [vmem:[#allocation3 + $0x2d8] sm:$0xff] %vm514, %v712
        %790 = vst.msk [vmem:[#allocation3 + $0x300] sm:$0xff] %vm514, %v714
        %791 = vst.msk [vmem:[#allocation3 + $0x328] sm:$0xff] %vm514, %v716
        %792 = vst.msk [vmem:[#allocation3 + $0x350] sm:$0xff] %vm514, %v718
        %793 = vst.msk [vmem:[#allocation3 + $0x378] sm:$0xff] %vm514, %v720
        %794 = vst.msk [vmem:[#allocation3 + $0x3a0] sm:$0xff] %vm514, %v722
        %795 = vst.msk [vmem:[#allocation3 + $0x3c8] sm:$0xff] %vm514, %v724
        %796 = vst.msk [vmem:[#allocation3 + $0x3f0] sm:$0xff] %vm514, %v726
        %797 = vst.msk [vmem:[#allocation3 + $0x418] sm:$0xff] %vm514, %v728
        %798 = vst.msk [vmem:[#allocation3 + $0x440] sm:$0xff] %vm514, %v730
        %799 = vst.msk [vmem:[#allocation3 + $0x468] sm:$0xff] %vm514, %v732
        %800 = vst.msk [vmem:[#allocation3 + $0x490] sm:$0xff] %vm514, %v734
        %801 = vst.msk [vmem:[#allocation3 + $0x4b8] sm:$0xff] %vm514, %v736
        %802 = vst.msk [vmem:[#allocation3 + $0x4e0] sm:$0xff] %vm514, %v738
        %v803 = vld [vmem:[%s257 + $0x1] sm:$0xff]
        %v804 = vld [vmem:[%s257 + $0x9] sm:$0xff]
        %v805 = vld [vmem:[%s257 + $0x19] sm:$0xff]
        %v806 = vld [vmem:[%s257 + $0x21] sm:$0xff]
        %v807 = vld [vmem:[%s257 + $0x31] sm:$0xff]
        %v808 = vld [vmem:[%s257 + $0x39] sm:$0xff]
        %v809 = vld [vmem:[%s257 + $0x49] sm:$0xff]
        %v810 = vld [vmem:[%s257 + $0x51] sm:$0xff]
        %v811 = vld [vmem:[%s257 + $0x61] sm:$0xff]
        %v812 = vld [vmem:[%s257 + $0x69] sm:$0xff]
        %v813 = vld [vmem:[%s257 + $0x79] sm:$0xff]
        %v814 = vld [vmem:[%s257 + $0x81] sm:$0xff]
        %v815 = vld [vmem:[%s257 + $0x91] sm:$0xff]
        %v816 = vld [vmem:[%s257 + $0x99] sm:$0xff]
        %v817 = vld [vmem:[%s257 + $0xa9] sm:$0xff]
        %v818 = vld [vmem:[%s257 + $0xb1] sm:$0xff]
        %v819 = vld [vmem:[%s257 + $0xc1] sm:$0xff]
        %v820 = vld [vmem:[%s257 + $0xc9] sm:$0xff]
        %v821 = vld [vmem:[%s257 + $0xd9] sm:$0xff]
        %v822 = vld [vmem:[%s257 + $0xe1] sm:$0xff]
        %v823 = vld [vmem:[%s257 + $0xf1] sm:$0xff]
        %v824 = vld [vmem:[%s257 + $0xf9] sm:$0xff]
        %v825 = vld [vmem:[%s257 + $0x109] sm:$0xff]
        %v826 = vld [vmem:[%s257 + $0x111] sm:$0xff]
        %v827 = vld [vmem:[%s257 + $0x121] sm:$0xff]
        %v828 = vld [vmem:[%s257 + $0x129] sm:$0xff]
        %v829 = vld [vmem:[%s257 + $0x139] sm:$0xff]
        %v830 = vld [vmem:[%s257 + $0x141] sm:$0xff]
        %v831 = vld [vmem:[%s257 + $0x151] sm:$0xff]
        %v832 = vld [vmem:[%s257 + $0x159] sm:$0xff]
        %v833 = vld [vmem:[%s257 + $0x169] sm:$0xff]
        %v834 = vld [vmem:[%s257 + $0x171] sm:$0xff]
        %835 = vst.msk [vmem:[#allocation3 + $0x10] sm:$0xff] %vm169, %v803
        %836 = vst.msk [vmem:[#allocation3 + $0x38] sm:$0xff] %vm169, %v804
        %837 = vst.msk [vmem:[#allocation3 + $0x60] sm:$0xff] %vm169, %v805
        %838 = vst.msk [vmem:[#allocation3 + $0x88] sm:$0xff] %vm169, %v806
        %839 = vst.msk [vmem:[#allocation3 + $0xb0] sm:$0xff] %vm169, %v807
        %840 = vst.msk [vmem:[#allocation3 + $0xd8] sm:$0xff] %vm169, %v808
        %841 = vst.msk [vmem:[#allocation3 + $0x100] sm:$0xff] %vm169, %v809
        %842 = vst.msk [vmem:[#allocation3 + $0x128] sm:$0xff] %vm169, %v810
        %843 = vst.msk [vmem:[#allocation3 + $0x150] sm:$0xff] %vm169, %v811
        %844 = vst.msk [vmem:[#allocation3 + $0x178] sm:$0xff] %vm169, %v812
        %845 = vst.msk [vmem:[#allocation3 + $0x1a0] sm:$0xff] %vm169, %v813
        %846 = vst.msk [vmem:[#allocation3 + $0x1c8] sm:$0xff] %vm169, %v814
        %847 = vst.msk [vmem:[#allocation3 + $0x1f0] sm:$0xff] %vm169, %v815
        %848 = vst.msk [vmem:[#allocation3 + $0x218] sm:$0xff] %vm169, %v816
        %849 = vst.msk [vmem:[#allocation3 + $0x240] sm:$0xff] %vm169, %v817
        %850 = vst.msk [vmem:[#allocation3 + $0x268] sm:$0xff] %vm169, %v818
        %851 = vst.msk [vmem:[#allocation3 + $0x290] sm:$0xff] %vm169, %v819
        %852 = vst.msk [vmem:[#allocation3 + $0x2b8] sm:$0xff] %vm169, %v820
        %853 = vst.msk [vmem:[#allocation3 + $0x2e0] sm:$0xff] %vm169, %v821
        %854 = vst.msk [vmem:[#allocation3 + $0x308] sm:$0xff] %vm169, %v822
        %855 = vst.msk [vmem:[#allocation3 + $0x330] sm:$0xff] %vm169, %v823
        %856 = vst.msk [vmem:[#allocation3 + $0x358] sm:$0xff] %vm169, %v824
        %857 = vst.msk [vmem:[#allocation3 + $0x380] sm:$0xff] %vm169, %v825
        %858 = vst.msk [vmem:[#allocation3 + $0x3a8] sm:$0xff] %vm169, %v826
        %859 = vst.msk [vmem:[#allocation3 + $0x3d0] sm:$0xff] %vm169, %v827
        %860 = vst.msk [vmem:[#allocation3 + $0x3f8] sm:$0xff] %vm169, %v828
        %861 = vst.msk [vmem:[#allocation3 + $0x420] sm:$0xff] %vm169, %v829
        %862 = vst.msk [vmem:[#allocation3 + $0x448] sm:$0xff] %vm169, %v830
        %863 = vst.msk [vmem:[#allocation3 + $0x470] sm:$0xff] %vm169, %v831
        %864 = vst.msk [vmem:[#allocation3 + $0x498] sm:$0xff] %vm169, %v832
        %865 = vst.msk [vmem:[#allocation3 + $0x4c0] sm:$0xff] %vm169, %v833
        %866 = vst.msk [vmem:[#allocation3 + $0x4e8] sm:$0xff] %vm169, %v834
        %v867 = vld [vmem:[%s257 + $0x2] sm:$0xff]
        %v868 = vld [vmem:[%s257 + $0xa] sm:$0xff]
        %v869 = vld [vmem:[%s257 + $0x1a] sm:$0xff]
        %v870 = vld [vmem:[%s257 + $0x22] sm:$0xff]
        %v871 = vld [vmem:[%s257 + $0x32] sm:$0xff]
        %v872 = vld [vmem:[%s257 + $0x3a] sm:$0xff]
        %v873 = vld [vmem:[%s257 + $0x4a] sm:$0xff]
        %v874 = vld [vmem:[%s257 + $0x52] sm:$0xff]
        %v875 = vld [vmem:[%s257 + $0x62] sm:$0xff]
        %v876 = vld [vmem:[%s257 + $0x6a] sm:$0xff]
        %v877 = vld [vmem:[%s257 + $0x7a] sm:$0xff]
        %v878 = vld [vmem:[%s257 + $0x82] sm:$0xff]
        %v879 = vld [vmem:[%s257 + $0x92] sm:$0xff]
        %v880 = vld [vmem:[%s257 + $0x9a] sm:$0xff]
        %v881 = vld [vmem:[%s257 + $0xaa] sm:$0xff]
        %v882 = vld [vmem:[%s257 + $0xb2] sm:$0xff]
        %v883 = vld [vmem:[%s257 + $0xc2] sm:$0xff]
        %v884 = vld [vmem:[%s257 + $0xca] sm:$0xff]
        %v885 = vld [vmem:[%s257 + $0xda] sm:$0xff]
        %v886 = vld [vmem:[%s257 + $0xe2] sm:$0xff]
        %v887 = vld [vmem:[%s257 + $0xf2] sm:$0xff]
        %v888 = vld [vmem:[%s257 + $0xfa] sm:$0xff]
        %v889 = vld [vmem:[%s257 + $0x10a] sm:$0xff]
        %v890 = vld [vmem:[%s257 + $0x112] sm:$0xff]
        %v891 = vld [vmem:[%s257 + $0x122] sm:$0xff]
        %v892 = vld [vmem:[%s257 + $0x12a] sm:$0xff]
        %v893 = vld [vmem:[%s257 + $0x13a] sm:$0xff]
        %v894 = vld [vmem:[%s257 + $0x142] sm:$0xff]
        %v895 = vld [vmem:[%s257 + $0x152] sm:$0xff]
        %v896 = vld [vmem:[%s257 + $0x15a] sm:$0xff]
        %v897 = vld [vmem:[%s257 + $0x16a] sm:$0xff]
        %v898 = vld [vmem:[%s257 + $0x172] sm:$0xff]
        %931 = vrot.lane.b32.xlu0 %v867, 64
        %v932 = vpop.permute.xlu0 %931
        %933 = vrot.lane.b32.xlu0 %v868, 64
        %v934 = vpop.permute.xlu0 %933
        %935 = vrot.lane.b32.xlu0 %v869, 64
        %v936 = vpop.permute.xlu0 %935
        %937 = vrot.lane.b32.xlu0 %v870, 64
        %v938 = vpop.permute.xlu0 %937
        %939 = vrot.lane.b32.xlu0 %v871, 64
        %v940 = vpop.permute.xlu0 %939
        %941 = vrot.lane.b32.xlu0 %v872, 64
        %v942 = vpop.permute.xlu0 %941
        %943 = vrot.lane.b32.xlu0 %v873, 64
        %v944 = vpop.permute.xlu0 %943
        %945 = vrot.lane.b32.xlu0 %v874, 64
        %v946 = vpop.permute.xlu0 %945
        %947 = vrot.lane.b32.xlu0 %v875, 64
        %v948 = vpop.permute.xlu0 %947
        %949 = vrot.lane.b32.xlu0 %v876, 64
        %v950 = vpop.permute.xlu0 %949
        %951 = vrot.lane.b32.xlu0 %v877, 64
        %v952 = vpop.permute.xlu0 %951
        %953 = vrot.lane.b32.xlu0 %v878, 64
        %v954 = vpop.permute.xlu0 %953
        %955 = vrot.lane.b32.xlu0 %v879, 64
        %v956 = vpop.permute.xlu0 %955
        %957 = vrot.lane.b32.xlu0 %v880, 64
        %v958 = vpop.permute.xlu0 %957
        %959 = vrot.lane.b32.xlu0 %v881, 64
        %v960 = vpop.permute.xlu0 %959
        %961 = vrot.lane.b32.xlu0 %v882, 64
        %v962 = vpop.permute.xlu0 %961
        %963 = vrot.lane.b32.xlu0 %v883, 64
        %v964 = vpop.permute.xlu0 %963
        %965 = vrot.lane.b32.xlu0 %v884, 64
        %v966 = vpop.permute.xlu0 %965
        %967 = vrot.lane.b32.xlu0 %v885, 64
        %v968 = vpop.permute.xlu0 %967
        %969 = vrot.lane.b32.xlu0 %v886, 64
        %v970 = vpop.permute.xlu0 %969
        %971 = vrot.lane.b32.xlu0 %v887, 64
        %v972 = vpop.permute.xlu0 %971
        %973 = vrot.lane.b32.xlu0 %v888, 64
        %v974 = vpop.permute.xlu0 %973
        %975 = vrot.lane.b32.xlu0 %v889, 64
        %v976 = vpop.permute.xlu0 %975
        %977 = vrot.lane.b32.xlu0 %v890, 64
        %v978 = vpop.permute.xlu0 %977
        %979 = vrot.lane.b32.xlu0 %v891, 64
        %v980 = vpop.permute.xlu0 %979
        %981 = vrot.lane.b32.xlu0 %v892, 64
        %v982 = vpop.permute.xlu0 %981
        %983 = vrot.lane.b32.xlu0 %v893, 64
        %v984 = vpop.permute.xlu0 %983
        %985 = vrot.lane.b32.xlu0 %v894, 64
        %v986 = vpop.permute.xlu0 %985
        %987 = vrot.lane.b32.xlu0 %v895, 64
        %v988 = vpop.permute.xlu0 %987
        %989 = vrot.lane.b32.xlu0 %v896, 64
        %v990 = vpop.permute.xlu0 %989
        %991 = vrot.lane.b32.xlu0 %v897, 64
        %v992 = vpop.permute.xlu0 %991
        %993 = vrot.lane.b32.xlu0 %v898, 64
        %v994 = vpop.permute.xlu0 %993
        %1027 = vst.msk [vmem:[#allocation3 + $0x10] sm:$0xff] %vm514, %v932
        %1028 = vst.msk [vmem:[#allocation3 + $0x38] sm:$0xff] %vm514, %v934
        %1029 = vst.msk [vmem:[#allocation3 + $0x60] sm:$0xff] %vm514, %v936
        %1030 = vst.msk [vmem:[#allocation3 + $0x88] sm:$0xff] %vm514, %v938
        %1031 = vst.msk [vmem:[#allocation3 + $0xb0] sm:$0xff] %vm514, %v940
        %1032 = vst.msk [vmem:[#allocation3 + $0xd8] sm:$0xff] %vm514, %v942
        %1033 = vst.msk [vmem:[#allocation3 + $0x100] sm:$0xff] %vm514, %v944
        %1034 = vst.msk [vmem:[#allocation3 + $0x128] sm:$0xff] %vm514, %v946
        %1035 = vst.msk [vmem:[#allocation3 + $0x150] sm:$0xff] %vm514, %v948
        %1036 = vst.msk [vmem:[#allocation3 + $0x178] sm:$0xff] %vm514, %v950
        %1037 = vst.msk [vmem:[#allocation3 + $0x1a0] sm:$0xff] %vm514, %v952
        %1038 = vst.msk [vmem:[#allocation3 + $0x1c8] sm:$0xff] %vm514, %v954
        %1039 = vst.msk [vmem:[#allocation3 + $0x1f0] sm:$0xff] %vm514, %v956
        %1040 = vst.msk [vmem:[#allocation3 + $0x218] sm:$0xff] %vm514, %v958
        %1041 = vst.msk [vmem:[#allocation3 + $0x240] sm:$0xff] %vm514, %v960
        %1042 = vst.msk [vmem:[#allocation3 + $0x268] sm:$0xff] %vm514, %v962
        %1043 = vst.msk [vmem:[#allocation3 + $0x290] sm:$0xff] %vm514, %v964
        %1044 = vst.msk [vmem:[#allocation3 + $0x2b8] sm:$0xff] %vm514, %v966
        %1045 = vst.msk [vmem:[#allocation3 + $0x2e0] sm:$0xff] %vm514, %v968
        %1046 = vst.msk [vmem:[#allocation3 + $0x308] sm:$0xff] %vm514, %v970
        %1047 = vst.msk [vmem:[#allocation3 + $0x330] sm:$0xff] %vm514, %v972
        %1048 = vst.msk [vmem:[#allocation3 + $0x358] sm:$0xff] %vm514, %v974
        %1049 = vst.msk [vmem:[#allocation3 + $0x380] sm:$0xff] %vm514, %v976
        %1050 = vst.msk [vmem:[#allocation3 + $0x3a8] sm:$0xff] %vm514, %v978
        %1051 = vst.msk [vmem:[#allocation3 + $0x3d0] sm:$0xff] %vm514, %v980
        %1052 = vst.msk [vmem:[#allocation3 + $0x3f8] sm:$0xff] %vm514, %v982
        %1053 = vst.msk [vmem:[#allocation3 + $0x420] sm:$0xff] %vm514, %v984
        %1054 = vst.msk [vmem:[#allocation3 + $0x448] sm:$0xff] %vm514, %v986
        %1055 = vst.msk [vmem:[#allocation3 + $0x470] sm:$0xff] %vm514, %v988
        %1056 = vst.msk [vmem:[#allocation3 + $0x498] sm:$0xff] %vm514, %v990
        %1057 = vst.msk [vmem:[#allocation3 + $0x4c0] sm:$0xff] %vm514, %v992
        %1058 = vst.msk [vmem:[#allocation3 + $0x4e8] sm:$0xff] %vm514, %v994
        %s1059 = scalar_lea.vmem [#allocation2], 48
        %v1060 = vld [vmem:[%s1059] sm:$0xff]
        %v1061 = vld [vmem:[%s1059 + $0x8] sm:$0xff]
        %v1062 = vld [vmem:[%s1059 + $0x18] sm:$0xff]
        %v1063 = vld [vmem:[%s1059 + $0x20] sm:$0xff]
        %v1064 = vld [vmem:[%s1059 + $0x30] sm:$0xff]
        %v1065 = vld [vmem:[%s1059 + $0x38] sm:$0xff]
        %v1066 = vld [vmem:[%s1059 + $0x48] sm:$0xff]
        %v1067 = vld [vmem:[%s1059 + $0x50] sm:$0xff]
        %v1068 = vld [vmem:[%s1059 + $0x60] sm:$0xff]
        %v1069 = vld [vmem:[%s1059 + $0x68] sm:$0xff]
        %v1070 = vld [vmem:[%s1059 + $0x78] sm:$0xff]
        %v1071 = vld [vmem:[%s1059 + $0x80] sm:$0xff]
        %v1072 = vld [vmem:[%s1059 + $0x90] sm:$0xff]
        %v1073 = vld [vmem:[%s1059 + $0x98] sm:$0xff]
        %v1074 = vld [vmem:[%s1059 + $0xa8] sm:$0xff]
        %v1075 = vld [vmem:[%s1059 + $0xb0] sm:$0xff]
        %v1076 = vld [vmem:[%s1059 + $0xc0] sm:$0xff]
        %v1077 = vld [vmem:[%s1059 + $0xc8] sm:$0xff]
        %v1078 = vld [vmem:[%s1059 + $0xd8] sm:$0xff]
        %v1079 = vld [vmem:[%s1059 + $0xe0] sm:$0xff]
        %v1080 = vld [vmem:[%s1059 + $0xf0] sm:$0xff]
        %v1081 = vld [vmem:[%s1059 + $0xf8] sm:$0xff]
        %v1082 = vld [vmem:[%s1059 + $0x108] sm:$0xff]
        %v1083 = vld [vmem:[%s1059 + $0x110] sm:$0xff]
        %v1084 = vld [vmem:[%s1059 + $0x120] sm:$0xff]
        %v1085 = vld [vmem:[%s1059 + $0x128] sm:$0xff]
        %v1086 = vld [vmem:[%s1059 + $0x138] sm:$0xff]
        %v1087 = vld [vmem:[%s1059 + $0x140] sm:$0xff]
        %v1088 = vld [vmem:[%s1059 + $0x150] sm:$0xff]
        %v1089 = vld [vmem:[%s1059 + $0x158] sm:$0xff]
        %v1090 = vld [vmem:[%s1059 + $0x168] sm:$0xff]
        %v1091 = vld [vmem:[%s1059 + $0x170] sm:$0xff]
        %1092 = vst.msk [vmem:[#allocation3 + $0x18] sm:$0xff] %vm169, %v1060
        %1093 = vst.msk [vmem:[#allocation3 + $0x40] sm:$0xff] %vm169, %v1061
        %1094 = vst.msk [vmem:[#allocation3 + $0x68] sm:$0xff] %vm169, %v1062
        %1095 = vst.msk [vmem:[#allocation3 + $0x90] sm:$0xff] %vm169, %v1063
        %1096 = vst.msk [vmem:[#allocation3 + $0xb8] sm:$0xff] %vm169, %v1064
        %1097 = vst.msk [vmem:[#allocation3 + $0xe0] sm:$0xff] %vm169, %v1065
        %1098 = vst.msk [vmem:[#allocation3 + $0x108] sm:$0xff] %vm169, %v1066
        %1099 = vst.msk [vmem:[#allocation3 + $0x130] sm:$0xff] %vm169, %v1067
        %1100 = vst.msk [vmem:[#allocation3 + $0x158] sm:$0xff] %vm169, %v1068
        %1101 = vst.msk [vmem:[#allocation3 + $0x180] sm:$0xff] %vm169, %v1069
        %1102 = vst.msk [vmem:[#allocation3 + $0x1a8] sm:$0xff] %vm169, %v1070
        %1103 = vst.msk [vmem:[#allocation3 + $0x1d0] sm:$0xff] %vm169, %v1071
        %1104 = vst.msk [vmem:[#allocation3 + $0x1f8] sm:$0xff] %vm169, %v1072
        %1105 = vst.msk [vmem:[#allocation3 + $0x220] sm:$0xff] %vm169, %v1073
        %1106 = vst.msk [vmem:[#allocation3 + $0x248] sm:$0xff] %vm169, %v1074
        %1107 = vst.msk [vmem:[#allocation3 + $0x270] sm:$0xff] %vm169, %v1075
        %1108 = vst.msk [vmem:[#allocation3 + $0x298] sm:$0xff] %vm169, %v1076
        %1109 = vst.msk [vmem:[#allocation3 + $0x2c0] sm:$0xff] %vm169, %v1077
        %1110 = vst.msk [vmem:[#allocation3 + $0x2e8] sm:$0xff] %vm169, %v1078
        %1111 = vst.msk [vmem:[#allocation3 + $0x310] sm:$0xff] %vm169, %v1079
        %1112 = vst.msk [vmem:[#allocation3 + $0x338] sm:$0xff] %vm169, %v1080
        %1113 = vst.msk [vmem:[#allocation3 + $0x360] sm:$0xff] %vm169, %v1081
        %1114 = vst.msk [vmem:[#allocation3 + $0x388] sm:$0xff] %vm169, %v1082
        %1115 = vst.msk [vmem:[#allocation3 + $0x3b0] sm:$0xff] %vm169, %v1083
        %1116 = vst.msk [vmem:[#allocation3 + $0x3d8] sm:$0xff] %vm169, %v1084
        %1117 = vst.msk [vmem:[#allocation3 + $0x400] sm:$0xff] %vm169, %v1085
        %1118 = vst.msk [vmem:[#allocation3 + $0x428] sm:$0xff] %vm169, %v1086
        %1119 = vst.msk [vmem:[#allocation3 + $0x450] sm:$0xff] %vm169, %v1087
        %1120 = vst.msk [vmem:[#allocation3 + $0x478] sm:$0xff] %vm169, %v1088
        %1121 = vst.msk [vmem:[#allocation3 + $0x4a0] sm:$0xff] %vm169, %v1089
        %1122 = vst.msk [vmem:[#allocation3 + $0x4c8] sm:$0xff] %vm169, %v1090
        %1123 = vst.msk [vmem:[#allocation3 + $0x4f0] sm:$0xff] %vm169, %v1091
        %v1124 = vld [vmem:[%s1059 + $0x1] sm:$0xff]
        %v1125 = vld [vmem:[%s1059 + $0x9] sm:$0xff]
        %v1126 = vld [vmem:[%s1059 + $0x19] sm:$0xff]
        %v1127 = vld [vmem:[%s1059 + $0x21] sm:$0xff]
        %v1128 = vld [vmem:[%s1059 + $0x31] sm:$0xff]
        %v1129 = vld [vmem:[%s1059 + $0x39] sm:$0xff]
        %v1130 = vld [vmem:[%s1059 + $0x49] sm:$0xff]
        %v1131 = vld [vmem:[%s1059 + $0x51] sm:$0xff]
        %v1132 = vld [vmem:[%s1059 + $0x61] sm:$0xff]
        %v1133 = vld [vmem:[%s1059 + $0x69] sm:$0xff]
        %v1134 = vld [vmem:[%s1059 + $0x79] sm:$0xff]
        %v1135 = vld [vmem:[%s1059 + $0x81] sm:$0xff]
        %v1136 = vld [vmem:[%s1059 + $0x91] sm:$0xff]
        %v1137 = vld [vmem:[%s1059 + $0x99] sm:$0xff]
        %v1138 = vld [vmem:[%s1059 + $0xa9] sm:$0xff]
        %v1139 = vld [vmem:[%s1059 + $0xb1] sm:$0xff]
        %v1140 = vld [vmem:[%s1059 + $0xc1] sm:$0xff]
        %v1141 = vld [vmem:[%s1059 + $0xc9] sm:$0xff]
        %v1142 = vld [vmem:[%s1059 + $0xd9] sm:$0xff]
        %v1143 = vld [vmem:[%s1059 + $0xe1] sm:$0xff]
        %v1144 = vld [vmem:[%s1059 + $0xf1] sm:$0xff]
        %v1145 = vld [vmem:[%s1059 + $0xf9] sm:$0xff]
        %v1146 = vld [vmem:[%s1059 + $0x109] sm:$0xff]
        %v1147 = vld [vmem:[%s1059 + $0x111] sm:$0xff]
        %v1148 = vld [vmem:[%s1059 + $0x121] sm:$0xff]
        %v1149 = vld [vmem:[%s1059 + $0x129] sm:$0xff]
        %v1150 = vld [vmem:[%s1059 + $0x139] sm:$0xff]
        %v1151 = vld [vmem:[%s1059 + $0x141] sm:$0xff]
        %v1152 = vld [vmem:[%s1059 + $0x151] sm:$0xff]
        %v1153 = vld [vmem:[%s1059 + $0x159] sm:$0xff]
        %v1154 = vld [vmem:[%s1059 + $0x169] sm:$0xff]
        %v1155 = vld [vmem:[%s1059 + $0x171] sm:$0xff]
        %1188 = vrot.lane.b32.xlu0 %v1124, 64
        %v1189 = vpop.permute.xlu0 %1188
        %1190 = vrot.lane.b32.xlu0 %v1125, 64
        %v1191 = vpop.permute.xlu0 %1190
        %1192 = vrot.lane.b32.xlu0 %v1126, 64
        %v1193 = vpop.permute.xlu0 %1192
        %1194 = vrot.lane.b32.xlu0 %v1127, 64
        %v1195 = vpop.permute.xlu0 %1194
        %1196 = vrot.lane.b32.xlu0 %v1128, 64
        %v1197 = vpop.permute.xlu0 %1196
        %1198 = vrot.lane.b32.xlu0 %v1129, 64
        %v1199 = vpop.permute.xlu0 %1198
        %1200 = vrot.lane.b32.xlu0 %v1130, 64
        %v1201 = vpop.permute.xlu0 %1200
        %1202 = vrot.lane.b32.xlu0 %v1131, 64
        %v1203 = vpop.permute.xlu0 %1202
        %1204 = vrot.lane.b32.xlu0 %v1132, 64
        %v1205 = vpop.permute.xlu0 %1204
        %1206 = vrot.lane.b32.xlu0 %v1133, 64
        %v1207 = vpop.permute.xlu0 %1206
        %1208 = vrot.lane.b32.xlu0 %v1134, 64
        %v1209 = vpop.permute.xlu0 %1208
        %1210 = vrot.lane.b32.xlu0 %v1135, 64
        %v1211 = vpop.permute.xlu0 %1210
        %1212 = vrot.lane.b32.xlu0 %v1136, 64
        %v1213 = vpop.permute.xlu0 %1212
        %1214 = vrot.lane.b32.xlu0 %v1137, 64
        %v1215 = vpop.permute.xlu0 %1214
        %1216 = vrot.lane.b32.xlu0 %v1138, 64
        %v1217 = vpop.permute.xlu0 %1216
        %1218 = vrot.lane.b32.xlu0 %v1139, 64
        %v1219 = vpop.permute.xlu0 %1218
        %1220 = vrot.lane.b32.xlu0 %v1140, 64
        %v1221 = vpop.permute.xlu0 %1220
        %1222 = vrot.lane.b32.xlu0 %v1141, 64
        %v1223 = vpop.permute.xlu0 %1222
        %1224 = vrot.lane.b32.xlu0 %v1142, 64
        %v1225 = vpop.permute.xlu0 %1224
        %1226 = vrot.lane.b32.xlu0 %v1143, 64
        %v1227 = vpop.permute.xlu0 %1226
        %1228 = vrot.lane.b32.xlu0 %v1144, 64
        %v1229 = vpop.permute.xlu0 %1228
        %1230 = vrot.lane.b32.xlu0 %v1145, 64
        %v1231 = vpop.permute.xlu0 %1230
        %1232 = vrot.lane.b32.xlu0 %v1146, 64
        %v1233 = vpop.permute.xlu0 %1232
        %1234 = vrot.lane.b32.xlu0 %v1147, 64
        %v1235 = vpop.permute.xlu0 %1234
        %1236 = vrot.lane.b32.xlu0 %v1148, 64
        %v1237 = vpop.permute.xlu0 %1236
        %1238 = vrot.lane.b32.xlu0 %v1149, 64
        %v1239 = vpop.permute.xlu0 %1238
        %1240 = vrot.lane.b32.xlu0 %v1150, 64
        %v1241 = vpop.permute.xlu0 %1240
        %1242 = vrot.lane.b32.xlu0 %v1151, 64
        %v1243 = vpop.permute.xlu0 %1242
        %1244 = vrot.lane.b32.xlu0 %v1152, 64
        %v1245 = vpop.permute.xlu0 %1244
        %1246 = vrot.lane.b32.xlu0 %v1153, 64
        %v1247 = vpop.permute.xlu0 %1246
        %1248 = vrot.lane.b32.xlu0 %v1154, 64
        %v1249 = vpop.permute.xlu0 %1248
        %1250 = vrot.lane.b32.xlu0 %v1155, 64
        %v1251 = vpop.permute.xlu0 %1250
        %1284 = vst.msk [vmem:[#allocation3 + $0x18] sm:$0xff] %vm514, %v1189
        %1285 = vst.msk [vmem:[#allocation3 + $0x40] sm:$0xff] %vm514, %v1191
        %1286 = vst.msk [vmem:[#allocation3 + $0x68] sm:$0xff] %vm514, %v1193
        %1287 = vst.msk [vmem:[#allocation3 + $0x90] sm:$0xff] %vm514, %v1195
        %1288 = vst.msk [vmem:[#allocation3 + $0xb8] sm:$0xff] %vm514, %v1197
        %1289 = vst.msk [vmem:[#allocation3 + $0xe0] sm:$0xff] %vm514, %v1199
        %1290 = vst.msk [vmem:[#allocation3 + $0x108] sm:$0xff] %vm514, %v1201
        %1291 = vst.msk [vmem:[#allocation3 + $0x130] sm:$0xff] %vm514, %v1203
        %1292 = vst.msk [vmem:[#allocation3 + $0x158] sm:$0xff] %vm514, %v1205
        %1293 = vst.msk [vmem:[#allocation3 + $0x180] sm:$0xff] %vm514, %v1207
        %1294 = vst.msk [vmem:[#allocation3 + $0x1a8] sm:$0xff] %vm514, %v1209
        %1295 = vst.msk [vmem:[#allocation3 + $0x1d0] sm:$0xff] %vm514, %v1211
        %1296 = vst.msk [vmem:[#allocation3 + $0x1f8] sm:$0xff] %vm514, %v1213
        %1297 = vst.msk [vmem:[#allocation3 + $0x220] sm:$0xff] %vm514, %v1215
        %1298 = vst.msk [vmem:[#allocation3 + $0x248] sm:$0xff] %vm514, %v1217
        %1299 = vst.msk [vmem:[#allocation3 + $0x270] sm:$0xff] %vm514, %v1219
        %1300 = vst.msk [vmem:[#allocation3 + $0x298] sm:$0xff] %vm514, %v1221
        %1301 = vst.msk [vmem:[#allocation3 + $0x2c0] sm:$0xff] %vm514, %v1223
        %1302 = vst.msk [vmem:[#allocation3 + $0x2e8] sm:$0xff] %vm514, %v1225
        %1303 = vst.msk [vmem:[#allocation3 + $0x310] sm:$0xff] %vm514, %v1227
        %1304 = vst.msk [vmem:[#allocation3 + $0x338] sm:$0xff] %vm514, %v1229
        %1305 = vst.msk [vmem:[#allocation3 + $0x360] sm:$0xff] %vm514, %v1231
        %1306 = vst.msk [vmem:[#allocation3 + $0x388] sm:$0xff] %vm514, %v1233
        %1307 = vst.msk [vmem:[#allocation3 + $0x3b0] sm:$0xff] %vm514, %v1235
        %1308 = vst.msk [vmem:[#allocation3 + $0x3d8] sm:$0xff] %vm514, %v1237
        %1309 = vst.msk [vmem:[#allocation3 + $0x400] sm:$0xff] %vm514, %v1239
        %1310 = vst.msk [vmem:[#allocation3 + $0x428] sm:$0xff] %vm514, %v1241
        %1311 = vst.msk [vmem:[#allocation3 + $0x450] sm:$0xff] %vm514, %v1243
        %1312 = vst.msk [vmem:[#allocation3 + $0x478] sm:$0xff] %vm514, %v1245
        %1313 = vst.msk [vmem:[#allocation3 + $0x4a0] sm:$0xff] %vm514, %v1247
        %1314 = vst.msk [vmem:[#allocation3 + $0x4c8] sm:$0xff] %vm514, %v1249
        %1315 = vst.msk [vmem:[#allocation3 + $0x4f0] sm:$0xff] %vm514, %v1251
        %v1316 = vld [vmem:[%s1059 + $0x2] sm:$0xff]
        %v1317 = vld [vmem:[%s1059 + $0xa] sm:$0xff]
        %v1318 = vld [vmem:[%s1059 + $0x1a] sm:$0xff]
        %v1319 = vld [vmem:[%s1059 + $0x22] sm:$0xff]
        %v1320 = vld [vmem:[%s1059 + $0x32] sm:$0xff]
        %v1321 = vld [vmem:[%s1059 + $0x3a] sm:$0xff]
        %v1322 = vld [vmem:[%s1059 + $0x4a] sm:$0xff]
        %v1323 = vld [vmem:[%s1059 + $0x52] sm:$0xff]
        %v1324 = vld [vmem:[%s1059 + $0x62] sm:$0xff]
        %v1325 = vld [vmem:[%s1059 + $0x6a] sm:$0xff]
        %v1326 = vld [vmem:[%s1059 + $0x7a] sm:$0xff]
        %v1327 = vld [vmem:[%s1059 + $0x82] sm:$0xff]
        %v1328 = vld [vmem:[%s1059 + $0x92] sm:$0xff]
        %v1329 = vld [vmem:[%s1059 + $0x9a] sm:$0xff]
        %v1330 = vld [vmem:[%s1059 + $0xaa] sm:$0xff]
        %v1331 = vld [vmem:[%s1059 + $0xb2] sm:$0xff]
        %v1332 = vld [vmem:[%s1059 + $0xc2] sm:$0xff]
        %v1333 = vld [vmem:[%s1059 + $0xca] sm:$0xff]
        %v1334 = vld [vmem:[%s1059 + $0xda] sm:$0xff]
        %v1335 = vld [vmem:[%s1059 + $0xe2] sm:$0xff]
        %v1336 = vld [vmem:[%s1059 + $0xf2] sm:$0xff]
        %v1337 = vld [vmem:[%s1059 + $0xfa] sm:$0xff]
        %v1338 = vld [vmem:[%s1059 + $0x10a] sm:$0xff]
        %v1339 = vld [vmem:[%s1059 + $0x112] sm:$0xff]
        %v1340 = vld [vmem:[%s1059 + $0x122] sm:$0xff]
        %v1341 = vld [vmem:[%s1059 + $0x12a] sm:$0xff]
        %v1342 = vld [vmem:[%s1059 + $0x13a] sm:$0xff]
        %v1343 = vld [vmem:[%s1059 + $0x142] sm:$0xff]
        %v1344 = vld [vmem:[%s1059 + $0x152] sm:$0xff]
        %v1345 = vld [vmem:[%s1059 + $0x15a] sm:$0xff]
        %v1346 = vld [vmem:[%s1059 + $0x16a] sm:$0xff]
        %v1347 = vld [vmem:[%s1059 + $0x172] sm:$0xff]
        %1348 = vst.msk [vmem:[#allocation3 + $0x20] sm:$0xff] %vm169, %v1316
        %1349 = vst.msk [vmem:[#allocation3 + $0x48] sm:$0xff] %vm169, %v1317
        %1350 = vst.msk [vmem:[#allocation3 + $0x70] sm:$0xff] %vm169, %v1318
        %1351 = vst.msk [vmem:[#allocation3 + $0x98] sm:$0xff] %vm169, %v1319
        %1352 = vst.msk [vmem:[#allocation3 + $0xc0] sm:$0xff] %vm169, %v1320
        %1353 = vst.msk [vmem:[#allocation3 + $0xe8] sm:$0xff] %vm169, %v1321
        %1354 = vst.msk [vmem:[#allocation3 + $0x110] sm:$0xff] %vm169, %v1322
        %1355 = vst.msk [vmem:[#allocation3 + $0x138] sm:$0xff] %vm169, %v1323
        %1356 = vst.msk [vmem:[#allocation3 + $0x160] sm:$0xff] %vm169, %v1324
        %1357 = vst.msk [vmem:[#allocation3 + $0x188] sm:$0xff] %vm169, %v1325
        %1358 = vst.msk [vmem:[#allocation3 + $0x1b0] sm:$0xff] %vm169, %v1326
        %1359 = vst.msk [vmem:[#allocation3 + $0x1d8] sm:$0xff] %vm169, %v1327
        %1360 = vst.msk [vmem:[#allocation3 + $0x200] sm:$0xff] %vm169, %v1328
        %1361 = vst.msk [vmem:[#allocation3 + $0x228] sm:$0xff] %vm169, %v1329
        %1362 = vst.msk [vmem:[#allocation3 + $0x250] sm:$0xff] %vm169, %v1330
        %1363 = vst.msk [vmem:[#allocation3 + $0x278] sm:$0xff] %vm169, %v1331
        %1364 = vst.msk [vmem:[#allocation3 + $0x2a0] sm:$0xff] %vm169, %v1332
        %1365 = vst.msk [vmem:[#allocation3 + $0x2c8] sm:$0xff] %vm169, %v1333
        %1366 = vst.msk [vmem:[#allocation3 + $0x2f0] sm:$0xff] %vm169, %v1334
        %1367 = vst.msk [vmem:[#allocation3 + $0x318] sm:$0xff] %vm169, %v1335
        %1368 = vst.msk [vmem:[#allocation3 + $0x340] sm:$0xff] %vm169, %v1336
        %1369 = vst.msk [vmem:[#allocation3 + $0x368] sm:$0xff] %vm169, %v1337
        %1370 = vst.msk [vmem:[#allocation3 + $0x390] sm:$0xff] %vm169, %v1338
        %1371 = vst.msk [vmem:[#allocation3 + $0x3b8] sm:$0xff] %vm169, %v1339
        %1372 = vst.msk [vmem:[#allocation3 + $0x3e0] sm:$0xff] %vm169, %v1340
        %1373 = vst.msk [vmem:[#allocation3 + $0x408] sm:$0xff] %vm169, %v1341
        %1374 = vst.msk [vmem:[#allocation3 + $0x430] sm:$0xff] %vm169, %v1342
        %1375 = vst.msk [vmem:[#allocation3 + $0x458] sm:$0xff] %vm169, %v1343
        %1376 = vst.msk [vmem:[#allocation3 + $0x480] sm:$0xff] %vm169, %v1344
        %1377 = vst.msk [vmem:[#allocation3 + $0x4a8] sm:$0xff] %vm169, %v1345
        %1378 = vst.msk [vmem:[#allocation3 + $0x4d0] sm:$0xff] %vm169, %v1346
        %1379 = vst.msk [vmem:[#allocation3 + $0x4f8] sm:$0xff] %vm169, %v1347
        %v1380 = vld [vmem:[#allocation3] sm:$0xff]
        %v1381 = vld [vmem:[#allocation3 + $0x8] sm:$0xff]
        %v1382 = vld [vmem:[#allocation3 + $0x10] sm:$0xff]
        %v1383 = vld [vmem:[#allocation3 + $0x18] sm:$0xff]
        %v1384 = vld [vmem:[#allocation3 + $0x20] sm:$0xff]
        %v1385 = vld [vmem:[#allocation3 + $0x28] sm:$0xff]
        %v1386 = vld [vmem:[#allocation3 + $0x30] sm:$0xff]
        %v1387 = vld [vmem:[#allocation3 + $0x38] sm:$0xff]
        %v1388 = vld [vmem:[#allocation3 + $0x40] sm:$0xff]
        %v1389 = vld [vmem:[#allocation3 + $0x48] sm:$0xff]
        %v1390 = vld [vmem:[#allocation3 + $0x50] sm:$0xff]
        %v1391 = vld [vmem:[#allocation3 + $0x58] sm:$0xff]
        %v1392 = vld [vmem:[#allocation3 + $0x60] sm:$0xff]
        %v1393 = vld [vmem:[#allocation3 + $0x68] sm:$0xff]
        %v1394 = vld [vmem:[#allocation3 + $0x70] sm:$0xff]
        %v1395 = vld [vmem:[#allocation3 + $0x78] sm:$0xff]
        %v1396 = vld [vmem:[#allocation3 + $0x80] sm:$0xff]
        %v1397 = vld [vmem:[#allocation3 + $0x88] sm:$0xff]
        %v1398 = vld [vmem:[#allocation3 + $0x90] sm:$0xff]
        %v1399 = vld [vmem:[#allocation3 + $0x98] sm:$0xff]
        %v1400 = vld [vmem:[#allocation3 + $0xa0] sm:$0xff]
        %v1401 = vld [vmem:[#allocation3 + $0xa8] sm:$0xff]
        %v1402 = vld [vmem:[#allocation3 + $0xb0] sm:$0xff]
        %v1403 = vld [vmem:[#allocation3 + $0xb8] sm:$0xff]
        %v1404 = vld [vmem:[#allocation3 + $0xc0] sm:$0xff]
        %v1405 = vld [vmem:[#allocation3 + $0xc8] sm:$0xff]
        %v1406 = vld [vmem:[#allocation3 + $0xd0] sm:$0xff]
        %v1407 = vld [vmem:[#allocation3 + $0xd8] sm:$0xff]
        %v1408 = vld [vmem:[#allocation3 + $0xe0] sm:$0xff]
        %v1409 = vld [vmem:[#allocation3 + $0xe8] sm:$0xff]
        %v1410 = vld [vmem:[#allocation3 + $0xf0] sm:$0xff]
        %v1411 = vld [vmem:[#allocation3 + $0xf8] sm:$0xff]
        %v1412 = vld [vmem:[#allocation3 + $0x100] sm:$0xff]
        %v1413 = vld [vmem:[#allocation3 + $0x108] sm:$0xff]
        %v1414 = vld [vmem:[#allocation3 + $0x110] sm:$0xff]
        %v1415 = vld [vmem:[#allocation3 + $0x118] sm:$0xff]
        %v1416 = vld [vmem:[#allocation3 + $0x120] sm:$0xff]
        %v1417 = vld [vmem:[#allocation3 + $0x128] sm:$0xff]
        %v1418 = vld [vmem:[#allocation3 + $0x130] sm:$0xff]
        %v1419 = vld [vmem:[#allocation3 + $0x138] sm:$0xff]
        %v1420 = vld [vmem:[#allocation3 + $0x140] sm:$0xff]
        %v1421 = vld [vmem:[#allocation3 + $0x148] sm:$0xff]
        %v1422 = vld [vmem:[#allocation3 + $0x150] sm:$0xff]
        %v1423 = vld [vmem:[#allocation3 + $0x158] sm:$0xff]
        %v1424 = vld [vmem:[#allocation3 + $0x160] sm:$0xff]
        %v1425 = vld [vmem:[#allocation3 + $0x168] sm:$0xff]
        %v1426 = vld [vmem:[#allocation3 + $0x170] sm:$0xff]
        %v1427 = vld [vmem:[#allocation3 + $0x178] sm:$0xff]
        %v1428 = vld [vmem:[#allocation3 + $0x180] sm:$0xff]
        %v1429 = vld [vmem:[#allocation3 + $0x188] sm:$0xff]
        %v1430 = vld [vmem:[#allocation3 + $0x190] sm:$0xff]
        %v1431 = vld [vmem:[#allocation3 + $0x198] sm:$0xff]
        %v1432 = vld [vmem:[#allocation3 + $0x1a0] sm:$0xff]
        %v1433 = vld [vmem:[#allocation3 + $0x1a8] sm:$0xff]
        %v1434 = vld [vmem:[#allocation3 + $0x1b0] sm:$0xff]
        %v1435 = vld [vmem:[#allocation3 + $0x1b8] sm:$0xff]
        %v1436 = vld [vmem:[#allocation3 + $0x1c0] sm:$0xff]
        %v1437 = vld [vmem:[#allocation3 + $0x1c8] sm:$0xff]
        %v1438 = vld [vmem:[#allocation3 + $0x1d0] sm:$0xff]
        %v1439 = vld [vmem:[#allocation3 + $0x1d8] sm:$0xff]
        %v1440 = vld [vmem:[#allocation3 + $0x1e0] sm:$0xff]
        %v1441 = vld [vmem:[#allocation3 + $0x1e8] sm:$0xff]
        %v1442 = vld [vmem:[#allocation3 + $0x1f0] sm:$0xff]
        %v1443 = vld [vmem:[#allocation3 + $0x1f8] sm:$0xff]
        %v1444 = vld [vmem:[#allocation3 + $0x200] sm:$0xff]
        %v1445 = vld [vmem:[#allocation3 + $0x208] sm:$0xff]
        %v1446 = vld [vmem:[#allocation3 + $0x210] sm:$0xff]
        %v1447 = vld [vmem:[#allocation3 + $0x218] sm:$0xff]
        %v1448 = vld [vmem:[#allocation3 + $0x220] sm:$0xff]
        %v1449 = vld [vmem:[#allocation3 + $0x228] sm:$0xff]
        %v1450 = vld [vmem:[#allocation3 + $0x230] sm:$0xff]
        %v1451 = vld [vmem:[#allocation3 + $0x238] sm:$0xff]
        %v1452 = vld [vmem:[#allocation3 + $0x240] sm:$0xff]
        %v1453 = vld [vmem:[#allocation3 + $0x248] sm:$0xff]
        %v1454 = vld [vmem:[#allocation3 + $0x250] sm:$0xff]
        %v1455 = vld [vmem:[#allocation3 + $0x258] sm:$0xff]
        %v1456 = vld [vmem:[#allocation3 + $0x260] sm:$0xff]
        %v1457 = vld [vmem:[#allocation3 + $0x268] sm:$0xff]
        %v1458 = vld [vmem:[#allocation3 + $0x270] sm:$0xff]
        %v1459 = vld [vmem:[#allocation3 + $0x278] sm:$0xff]
        %v1460 = vld [vmem:[#allocation3 + $0x280] sm:$0xff]
        %v1461 = vld [vmem:[#allocation3 + $0x288] sm:$0xff]
        %v1462 = vld [vmem:[#allocation3 + $0x290] sm:$0xff]
        %v1463 = vld [vmem:[#allocation3 + $0x298] sm:$0xff]
        %v1464 = vld [vmem:[#allocation3 + $0x2a0] sm:$0xff]
        %v1465 = vld [vmem:[#allocation3 + $0x2a8] sm:$0xff]
        %v1466 = vld [vmem:[#allocation3 + $0x2b0] sm:$0xff]
        %v1467 = vld [vmem:[#allocation3 + $0x2b8] sm:$0xff]
        %v1468 = vld [vmem:[#allocation3 + $0x2c0] sm:$0xff]
        %v1469 = vld [vmem:[#allocation3 + $0x2c8] sm:$0xff]
        %v1470 = vld [vmem:[#allocation3 + $0x2d0] sm:$0xff]
        %v1471 = vld [vmem:[#allocation3 + $0x2d8] sm:$0xff]
        %v1472 = vld [vmem:[#allocation3 + $0x2e0] sm:$0xff]
        %v1473 = vld [vmem:[#allocation3 + $0x2e8] sm:$0xff]
        %v1474 = vld [vmem:[#allocation3 + $0x2f0] sm:$0xff]
        %v1475 = vld [vmem:[#allocation3 + $0x2f8] sm:$0xff]
        %v1476 = vld [vmem:[#allocation3 + $0x300] sm:$0xff]
        %v1477 = vld [vmem:[#allocation3 + $0x308] sm:$0xff]
        %v1478 = vld [vmem:[#allocation3 + $0x310] sm:$0xff]
        %v1479 = vld [vmem:[#allocation3 + $0x318] sm:$0xff]
        %v1480 = vld [vmem:[#allocation3 + $0x320] sm:$0xff]
        %v1481 = vld [vmem:[#allocation3 + $0x328] sm:$0xff]
        %v1482 = vld [vmem:[#allocation3 + $0x330] sm:$0xff]
        %v1483 = vld [vmem:[#allocation3 + $0x338] sm:$0xff]
        %v1484 = vld [vmem:[#allocation3 + $0x340] sm:$0xff]
        %v1485 = vld [vmem:[#allocation3 + $0x348] sm:$0xff]
        %v1486 = vld [vmem:[#allocation3 + $0x350] sm:$0xff]
        %v1487 = vld [vmem:[#allocation3 + $0x358] sm:$0xff]
        %v1488 = vld [vmem:[#allocation3 + $0x360] sm:$0xff]
        %v1489 = vld [vmem:[#allocation3 + $0x368] sm:$0xff]
        %v1490 = vld [vmem:[#allocation3 + $0x370] sm:$0xff]
        %v1491 = vld [vmem:[#allocation3 + $0x378] sm:$0xff]
        %v1492 = vld [vmem:[#allocation3 + $0x380] sm:$0xff]
        %v1493 = vld [vmem:[#allocation3 + $0x388] sm:$0xff]
        %v1494 = vld [vmem:[#allocation3 + $0x390] sm:$0xff]
        %v1495 = vld [vmem:[#allocation3 + $0x398] sm:$0xff]
        %v1496 = vld [vmem:[#allocation3 + $0x3a0] sm:$0xff]
        %v1497 = vld [vmem:[#allocation3 + $0x3a8] sm:$0xff]
        %v1498 = vld [vmem:[#allocation3 + $0x3b0] sm:$0xff]
        %v1499 = vld [vmem:[#allocation3 + $0x3b8] sm:$0xff]
        %v1500 = vld [vmem:[#allocation3 + $0x3c0] sm:$0xff]
        %v1501 = vld [vmem:[#allocation3 + $0x3c8] sm:$0xff]
        %v1502 = vld [vmem:[#allocation3 + $0x3d0] sm:$0xff]
        %v1503 = vld [vmem:[#allocation3 + $0x3d8] sm:$0xff]
        %v1504 = vld [vmem:[#allocation3 + $0x3e0] sm:$0xff]
        %v1505 = vld [vmem:[#allocation3 + $0x3e8] sm:$0xff]
        %v1506 = vld [vmem:[#allocation3 + $0x3f0] sm:$0xff]
        %v1507 = vld [vmem:[#allocation3 + $0x3f8] sm:$0xff]
        %v1508 = vld [vmem:[#allocation3 + $0x400] sm:$0xff]
        %v1509 = vld [vmem:[#allocation3 + $0x408] sm:$0xff]
        %v1510 = vld [vmem:[#allocation3 + $0x410] sm:$0xff]
        %v1511 = vld [vmem:[#allocation3 + $0x418] sm:$0xff]
        %v1512 = vld [vmem:[#allocation3 + $0x420] sm:$0xff]
        %v1513 = vld [vmem:[#allocation3 + $0x428] sm:$0xff]
        %v1514 = vld [vmem:[#allocation3 + $0x430] sm:$0xff]
        %v1515 = vld [vmem:[#allocation3 + $0x438] sm:$0xff]
        %v1516 = vld [vmem:[#allocation3 + $0x440] sm:$0xff]
        %v1517 = vld [vmem:[#allocation3 + $0x448] sm:$0xff]
        %v1518 = vld [vmem:[#allocation3 + $0x450] sm:$0xff]
        %v1519 = vld [vmem:[#allocation3 + $0x458] sm:$0xff]
        %v1520 = vld [vmem:[#allocation3 + $0x460] sm:$0xff]
        %v1521 = vld [vmem:[#allocation3 + $0x468] sm:$0xff]
        %v1522 = vld [vmem:[#allocation3 + $0x470] sm:$0xff]
        %v1523 = vld [vmem:[#allocation3 + $0x478] sm:$0xff]
        %v1524 = vld [vmem:[#allocation3 + $0x480] sm:$0xff]
        %v1525 = vld [vmem:[#allocation3 + $0x488] sm:$0xff]
        %v1526 = vld [vmem:[#allocation3 + $0x490] sm:$0xff]
        %v1527 = vld [vmem:[#allocation3 + $0x498] sm:$0xff]
        %v1528 = vld [vmem:[#allocation3 + $0x4a0] sm:$0xff]
        %v1529 = vld [vmem:[#allocation3 + $0x4a8] sm:$0xff]
        %v1530 = vld [vmem:[#allocation3 + $0x4b0] sm:$0xff]
        %v1531 = vld [vmem:[#allocation3 + $0x4b8] sm:$0xff]
        %v1532 = vld [vmem:[#allocation3 + $0x4c0] sm:$0xff]
        %v1533 = vld [vmem:[#allocation3 + $0x4c8] sm:$0xff]
        %v1534 = vld [vmem:[#allocation3 + $0x4d0] sm:$0xff]
        %v1535 = vld [vmem:[#allocation3 + $0x4d8] sm:$0xff]
        %v1536 = vld [vmem:[#allocation3 + $0x4e0] sm:$0xff]
        %v1537 = vld [vmem:[#allocation3 + $0x4e8] sm:$0xff]
        %v1538 = vld [vmem:[#allocation3 + $0x4f0] sm:$0xff]
        %v1539 = vld [vmem:[#allocation3 + $0x4f8] sm:$0xff]
        %v1540 = vld [vmem:[%s1] sm:$0xff]
        %v1541 = vld [vmem:[%s1 + $0x8] sm:$0xff]
        %v1542 = vld [vmem:[%s1 + $0x10] sm:$0xff]
        %v1543 = vld [vmem:[%s1 + $0x18] sm:$0xff]
        %v1544 = vld [vmem:[%s1 + $0x20] sm:$0xff]
        %v1545 = vld [vmem:[%s1 + $0x28] sm:$0xff]
        %v1546 = vld [vmem:[%s1 + $0x30] sm:$0xff]
        %v1547 = vld [vmem:[%s1 + $0x38] sm:$0xff]
        %v1548 = vld [vmem:[%s1 + $0x40] sm:$0xff]
        %v1549 = vld [vmem:[%s1 + $0x48] sm:$0xff]
        %v1550 = vld [vmem:[%s1 + $0x50] sm:$0xff]
        %v1551 = vld [vmem:[%s1 + $0x58] sm:$0xff]
        %v1552 = vld [vmem:[%s1 + $0x60] sm:$0xff]
        %v1553 = vld [vmem:[%s1 + $0x68] sm:$0xff]
        %v1554 = vld [vmem:[%s1 + $0x70] sm:$0xff]
        %v1555 = vld [vmem:[%s1 + $0x78] sm:$0xff]
        %v1556 = vld [vmem:[%s1 + $0x80] sm:$0xff]
        %v1557 = vld [vmem:[%s1 + $0x88] sm:$0xff]
        %v1558 = vld [vmem:[%s1 + $0x90] sm:$0xff]
        %v1559 = vld [vmem:[%s1 + $0x98] sm:$0xff]
        %v1560 = vld [vmem:[%s1 + $0xa0] sm:$0xff]
        %v1561 = vld [vmem:[%s1 + $0xa8] sm:$0xff]
        %v1562 = vld [vmem:[%s1 + $0xb0] sm:$0xff]
        %v1563 = vld [vmem:[%s1 + $0xb8] sm:$0xff]
        %v1564 = vld [vmem:[%s1 + $0xc0] sm:$0xff]
        %v1565 = vld [vmem:[%s1 + $0xc8] sm:$0xff]
        %v1566 = vld [vmem:[%s1 + $0xd0] sm:$0xff]
        %v1567 = vld [vmem:[%s1 + $0xd8] sm:$0xff]
        %v1568 = vld [vmem:[%s1 + $0xe0] sm:$0xff]
        %v1569 = vld [vmem:[%s1 + $0xe8] sm:$0xff]
        %v1570 = vld [vmem:[%s1 + $0xf0] sm:$0xff]
        %v1571 = vld [vmem:[%s1 + $0xf8] sm:$0xff]
        %v1572 = vld [vmem:[%s1 + $0x100] sm:$0xff]
        %v1573 = vld [vmem:[%s1 + $0x108] sm:$0xff]
        %v1574 = vld [vmem:[%s1 + $0x110] sm:$0xff]
        %v1575 = vld [vmem:[%s1 + $0x118] sm:$0xff]
        %v1576 = vld [vmem:[%s1 + $0x120] sm:$0xff]
        %v1577 = vld [vmem:[%s1 + $0x128] sm:$0xff]
        %v1578 = vld [vmem:[%s1 + $0x130] sm:$0xff]
        %v1579 = vld [vmem:[%s1 + $0x138] sm:$0xff]
        %v1580 = vld [vmem:[%s1 + $0x140] sm:$0xff]
        %v1581 = vld [vmem:[%s1 + $0x148] sm:$0xff]
        %v1582 = vld [vmem:[%s1 + $0x150] sm:$0xff]
        %v1583 = vld [vmem:[%s1 + $0x158] sm:$0xff]
        %v1584 = vld [vmem:[%s1 + $0x160] sm:$0xff]
        %v1585 = vld [vmem:[%s1 + $0x168] sm:$0xff]
        %v1586 = vld [vmem:[%s1 + $0x170] sm:$0xff]
        %v1587 = vld [vmem:[%s1 + $0x178] sm:$0xff]
        %v1588 = vld [vmem:[%s1 + $0x180] sm:$0xff]
        %v1589 = vld [vmem:[%s1 + $0x188] sm:$0xff]
        %v1590 = vld [vmem:[%s1 + $0x190] sm:$0xff]
        %v1591 = vld [vmem:[%s1 + $0x198] sm:$0xff]
        %v1592 = vld [vmem:[%s1 + $0x1a0] sm:$0xff]
        %v1593 = vld [vmem:[%s1 + $0x1a8] sm:$0xff]
        %v1594 = vld [vmem:[%s1 + $0x1b0] sm:$0xff]
        %v1595 = vld [vmem:[%s1 + $0x1b8] sm:$0xff]
        %v1596 = vld [vmem:[%s1 + $0x1c0] sm:$0xff]
        %v1597 = vld [vmem:[%s1 + $0x1c8] sm:$0xff]
        %v1598 = vld [vmem:[%s1 + $0x1d0] sm:$0xff]
        %v1599 = vld [vmem:[%s1 + $0x1d8] sm:$0xff]
        %v1600 = vld [vmem:[%s1 + $0x1e0] sm:$0xff]
        %v1601 = vld [vmem:[%s1 + $0x1e8] sm:$0xff]
        %v1602 = vld [vmem:[%s1 + $0x1f0] sm:$0xff]
        %v1603 = vld [vmem:[%s1 + $0x1f8] sm:$0xff]
        %v1604 = vld [vmem:[%s1 + $0x200] sm:$0xff]
        %v1605 = vld [vmem:[%s1 + $0x208] sm:$0xff]
        %v1606 = vld [vmem:[%s1 + $0x210] sm:$0xff]
        %v1607 = vld [vmem:[%s1 + $0x218] sm:$0xff]
        %v1608 = vld [vmem:[%s1 + $0x220] sm:$0xff]
        %v1609 = vld [vmem:[%s1 + $0x228] sm:$0xff]
        %v1610 = vld [vmem:[%s1 + $0x230] sm:$0xff]
        %v1611 = vld [vmem:[%s1 + $0x238] sm:$0xff]
        %v1612 = vld [vmem:[%s2] sm:$0x1]
        %v1614 = vperm.slane %v1612, 0
        %v1617 = vsel %vm169, %v1384, 0
        %v1620 = vsel %vm169, %v1389, 0
        %v1623 = vsel %vm169, %v1394, 0
        %v1626 = vsel %vm169, %v1399, 0
        %v1629 = vsel %vm169, %v1404, 0
        %v1632 = vsel %vm169, %v1409, 0
        %v1635 = vsel %vm169, %v1414, 0
        %v1638 = vsel %vm169, %v1419, 0
        %v1641 = vsel %vm169, %v1424, 0
        %v1644 = vsel %vm169, %v1429, 0
        %v1647 = vsel %vm169, %v1434, 0
        %v1650 = vsel %vm169, %v1439, 0
        %v1653 = vsel %vm169, %v1444, 0
        %v1656 = vsel %vm169, %v1449, 0
        %v1659 = vsel %vm169, %v1454, 0
        %v1662 = vsel %vm169, %v1459, 0
        %v1665 = vsel %vm169, %v1464, 0
        %v1668 = vsel %vm169, %v1469, 0
        %v1671 = vsel %vm169, %v1474, 0
        %v1674 = vsel %vm169, %v1479, 0
        %v1677 = vsel %vm169, %v1484, 0
        %v1680 = vsel %vm169, %v1489, 0
        %v1683 = vsel %vm169, %v1494, 0
        %v1686 = vsel %vm169, %v1499, 0
        %v1689 = vsel %vm169, %v1504, 0
        %v1692 = vsel %vm169, %v1509, 0
        %v1695 = vsel %vm169, %v1514, 0
        %v1698 = vsel %vm169, %v1519, 0
        %v1701 = vsel %vm169, %v1524, 0
        %v1704 = vsel %vm169, %v1529, 0
        %v1707 = vsel %vm169, %v1534, 0
        %v1710 = vsel %vm169, %v1539, 0
        %1712 = vmatpush.msra.mxu0 %v1555
        %1713 = vmatpush.msra.mxu0 %v1554
        %1714 = vmatpush.msra.mxu0 %v1553
        %1715 = vmatpush.msra.mxu0 %v1552
        %1716 = vmatpush.msra.mxu0 %v1551
        %1717 = vmatpush.msra.mxu0 %v1550
        %1718 = vmatpush.msra.mxu0 %v1549
        %1719 = vmatpush.msra.mxu0 %v1548
        %1720 = vmatpush.msra.mxu0 %v1547
        %1721 = vmatpush.msra.mxu0 %v1546
        %1722 = vmatpush.msra.mxu0 %v1545
        %1723 = vmatpush.msra.mxu0 %v1544
        %1724 = vmatpush.msra.mxu0 %v1543
        %1725 = vmatpush.msra.mxu0 %v1542
        %1726 = vmatpush.msra.mxu0 %v1541
        %1727 = vmatpush.msra.mxu0 %v1540
        %1728 = vmatmul.f32.gmra.mxu0 %v1380
        %v1729 = vpop.f32.mrf.mxu0
        %v1730 = vadd.f32 %v1614, %v1729
        %1731 = vmatmul.f32.gmra.mxu0 %v1385
        %v1732 = vpop.f32.mrf.mxu0
        %v1733 = vadd.f32 %v1614, %v1732
        %1734 = vmatmul.f32.gmra.mxu0 %v1390
        %v1735 = vpop.f32.mrf.mxu0
        %v1736 = vadd.f32 %v1614, %v1735
        %1737 = vmatmul.f32.gmra.mxu0 %v1395
        %v1738 = vpop.f32.mrf.mxu0
        %v1739 = vadd.f32 %v1614, %v1738
        %1740 = vmatmul.f32.gmra.mxu0 %v1400
        %v1741 = vpop.f32.mrf.mxu0
        %v1742 = vadd.f32 %v1614, %v1741
        %1743 = vmatmul.f32.gmra.mxu0 %v1405
        %v1744 = vpop.f32.mrf.mxu0
        %v1745 = vadd.f32 %v1614, %v1744
        %1746 = vmatmul.f32.gmra.mxu0 %v1410
        %v1747 = vpop.f32.mrf.mxu0
        %v1748 = vadd.f32 %v1614, %v1747
        %1749 = vmatmul.f32.gmra.mxu0 %v1415
        %v1750 = vpop.f32.mrf.mxu0
        %v1751 = vadd.f32 %v1614, %v1750
        %1752 = vmatmul.f32.gmra.mxu0 %v1420
        %v1753 = vpop.f32.mrf.mxu0
        %v1754 = vadd.f32 %v1614, %v1753
        %1755 = vmatmul.f32.gmra.mxu0 %v1425
        %v1756 = vpop.f32.mrf.mxu0
        %v1757 = vadd.f32 %v1614, %v1756
        %1758 = vmatmul.f32.gmra.mxu0 %v1430
        %v1759 = vpop.f32.mrf.mxu0
        %v1760 = vadd.f32 %v1614, %v1759
        %1761 = vmatmul.f32.gmra.mxu0 %v1435
        %v1762 = vpop.f32.mrf.mxu0
        %v1763 = vadd.f32 %v1614, %v1762
        %1764 = vmatmul.f32.gmra.mxu0 %v1440
        %v1765 = vpop.f32.mrf.mxu0
        %v1766 = vadd.f32 %v1614, %v1765
        %1767 = vmatmul.f32.gmra.mxu0 %v1445
        %v1768 = vpop.f32.mrf.mxu0
        %v1769 = vadd.f32 %v1614, %v1768
        %1770 = vmatmul.f32.gmra.mxu0 %v1450
        %v1771 = vpop.f32.mrf.mxu0
        %v1772 = vadd.f32 %v1614, %v1771
        %1773 = vmatmul.f32.gmra.mxu0 %v1455
        %v1774 = vpop.f32.mrf.mxu0
        %v1775 = vadd.f32 %v1614, %v1774
        %1776 = vmatmul.f32.gmra.mxu0 %v1460
        %v1777 = vpop.f32.mrf.mxu0
        %v1778 = vadd.f32 %v1614, %v1777
        %1779 = vmatmul.f32.gmra.mxu0 %v1465
        %v1780 = vpop.f32.mrf.mxu0
        %v1781 = vadd.f32 %v1614, %v1780
        %1782 = vmatmul.f32.gmra.mxu0 %v1470
        %v1783 = vpop.f32.mrf.mxu0
        %v1784 = vadd.f32 %v1614, %v1783
        %1785 = vmatmul.f32.gmra.mxu0 %v1475
        %v1786 = vpop.f32.mrf.mxu0
        %v1787 = vadd.f32 %v1614, %v1786
        %1788 = vmatmul.f32.gmra.mxu0 %v1480
        %v1789 = vpop.f32.mrf.mxu0
        %v1790 = vadd.f32 %v1614, %v1789
        %1791 = vmatmul.f32.gmra.mxu0 %v1485
        %v1792 = vpop.f32.mrf.mxu0
        %v1793 = vadd.f32 %v1614, %v1792
        %1794 = vmatmul.f32.gmra.mxu0 %v1490
        %v1795 = vpop.f32.mrf.mxu0
        %v1796 = vadd.f32 %v1614, %v1795
        %1797 = vmatmul.f32.gmra.mxu0 %v1495
        %v1798 = vpop.f32.mrf.mxu0
        %v1799 = vadd.f32 %v1614, %v1798
        %1800 = vmatmul.f32.gmra.mxu0 %v1500
        %v1801 = vpop.f32.mrf.mxu0
        %v1802 = vadd.f32 %v1614, %v1801
        %1803 = vmatmul.f32.gmra.mxu0 %v1505
        %v1804 = vpop.f32.mrf.mxu0
        %v1805 = vadd.f32 %v1614, %v1804
        %1806 = vmatmul.f32.gmra.mxu0 %v1510
        %v1807 = vpop.f32.mrf.mxu0
        %v1808 = vadd.f32 %v1614, %v1807
        %1809 = vmatmul.f32.gmra.mxu0 %v1515
        %v1810 = vpop.f32.mrf.mxu0
        %v1811 = vadd.f32 %v1614, %v1810
        %1812 = vmatmul.f32.gmra.mxu0 %v1520
        %v1813 = vpop.f32.mrf.mxu0
        %v1814 = vadd.f32 %v1614, %v1813
        %1815 = vmatmul.f32.gmra.mxu0 %v1525
        %v1816 = vpop.f32.mrf.mxu0
        %v1817 = vadd.f32 %v1614, %v1816
        %1818 = vmatmul.f32.gmra.mxu0 %v1530
        %v1819 = vpop.f32.mrf.mxu0
        %v1820 = vadd.f32 %v1614, %v1819
        %1821 = vmatmul.f32.gmra.mxu0 %v1535
        %v1822 = vpop.f32.mrf.mxu0
        %v1823 = vadd.f32 %v1614, %v1822
        %1824 = vdwg.mxu0
        %1825 = vmatpush.msra.mxu0 %v1571
        %1826 = vmatpush.msra.mxu0 %v1570
        %1827 = vmatpush.msra.mxu0 %v1569
        %1828 = vmatpush.msra.mxu0 %v1568
        %1829 = vmatpush.msra.mxu0 %v1567
        %1830 = vmatpush.msra.mxu0 %v1566
        %1831 = vmatpush.msra.mxu0 %v1565
        %1832 = vmatpush.msra.mxu0 %v1564
        %1833 = vmatpush.msra.mxu0 %v1563
        %1834 = vmatpush.msra.mxu0 %v1562
        %1835 = vmatpush.msra.mxu0 %v1561
        %1836 = vmatpush.msra.mxu0 %v1560
        %1837 = vmatpush.msra.mxu0 %v1559
        %1838 = vmatpush.msra.mxu0 %v1558
        %1839 = vmatpush.msra.mxu0 %v1557
        %1840 = vmatpush.msra.mxu0 %v1556
        %1841 = vmatmul.f32.gmra.mxu0 %v1381
        %v1842 = vpop.f32.mrf.mxu0
        %v1843 = vadd.f32 %v1730, %v1842
        %1844 = vmatmul.f32.gmra.mxu0 %v1386
        %v1845 = vpop.f32.mrf.mxu0
        %v1846 = vadd.f32 %v1733, %v1845
        %1847 = vmatmul.f32.gmra.mxu0 %v1391
        %v1848 = vpop.f32.mrf.mxu0
        %v1849 = vadd.f32 %v1736, %v1848
        %1850 = vmatmul.f32.gmra.mxu0 %v1396
        %v1851 = vpop.f32.mrf.mxu0
        %v1852 = vadd.f32 %v1739, %v1851
        %1853 = vmatmul.f32.gmra.mxu0 %v1401
        %v1854 = vpop.f32.mrf.mxu0
        %v1855 = vadd.f32 %v1742, %v1854
        %1856 = vmatmul.f32.gmra.mxu0 %v1406
        %v1857 = vpop.f32.mrf.mxu0
        %v1858 = vadd.f32 %v1745, %v1857
        %1859 = vmatmul.f32.gmra.mxu0 %v1411
        %v1860 = vpop.f32.mrf.mxu0
        %v1861 = vadd.f32 %v1748, %v1860
        %1862 = vmatmul.f32.gmra.mxu0 %v1416
        %v1863 = vpop.f32.mrf.mxu0
        %v1864 = vadd.f32 %v1751, %v1863
        %1865 = vmatmul.f32.gmra.mxu0 %v1421
        %v1866 = vpop.f32.mrf.mxu0
        %v1867 = vadd.f32 %v1754, %v1866
        %1868 = vmatmul.f32.gmra.mxu0 %v1426
        %v1869 = vpop.f32.mrf.mxu0
        %v1870 = vadd.f32 %v1757, %v1869
        %1871 = vmatmul.f32.gmra.mxu0 %v1431
        %v1872 = vpop.f32.mrf.mxu0
        %v1873 = vadd.f32 %v1760, %v1872
        %1874 = vmatmul.f32.gmra.mxu0 %v1436
        %v1875 = vpop.f32.mrf.mxu0
        %v1876 = vadd.f32 %v1763, %v1875
        %1877 = vmatmul.f32.gmra.mxu0 %v1441
        %v1878 = vpop.f32.mrf.mxu0
        %v1879 = vadd.f32 %v1766, %v1878
        %1880 = vmatmul.f32.gmra.mxu0 %v1446
        %v1881 = vpop.f32.mrf.mxu0
        %v1882 = vadd.f32 %v1769, %v1881
        %1883 = vmatmul.f32.gmra.mxu0 %v1451
        %v1884 = vpop.f32.mrf.mxu0
        %v1885 = vadd.f32 %v1772, %v1884
        %1886 = vmatmul.f32.gmra.mxu0 %v1456
        %v1887 = vpop.f32.mrf.mxu0
        %v1888 = vadd.f32 %v1775, %v1887
        %1889 = vmatmul.f32.gmra.mxu0 %v1461
        %v1890 = vpop.f32.mrf.mxu0
        %v1891 = vadd.f32 %v1778, %v1890
        %1892 = vmatmul.f32.gmra.mxu0 %v1466
        %v1893 = vpop.f32.mrf.mxu0
        %v1894 = vadd.f32 %v1781, %v1893
        %1895 = vmatmul.f32.gmra.mxu0 %v1471
        %v1896 = vpop.f32.mrf.mxu0
        %v1897 = vadd.f32 %v1784, %v1896
        %1898 = vmatmul.f32.gmra.mxu0 %v1476
        %v1899 = vpop.f32.mrf.mxu0
        %v1900 = vadd.f32 %v1787, %v1899
        %1901 = vmatmul.f32.gmra.mxu0 %v1481
        %v1902 = vpop.f32.mrf.mxu0
        %v1903 = vadd.f32 %v1790, %v1902
        %1904 = vmatmul.f32.gmra.mxu0 %v1486
        %v1905 = vpop.f32.mrf.mxu0
        %v1906 = vadd.f32 %v1793, %v1905
        %1907 = vmatmul.f32.gmra.mxu0 %v1491
        %v1908 = vpop.f32.mrf.mxu0
        %v1909 = vadd.f32 %v1796, %v1908
        %1910 = vmatmul.f32.gmra.mxu0 %v1496
        %v1911 = vpop.f32.mrf.mxu0
        %v1912 = vadd.f32 %v1799, %v1911
        %1913 = vmatmul.f32.gmra.mxu0 %v1501
        %v1914 = vpop.f32.mrf.mxu0
        %v1915 = vadd.f32 %v1802, %v1914
        %1916 = vmatmul.f32.gmra.mxu0 %v1506
        %v1917 = vpop.f32.mrf.mxu0
        %v1918 = vadd.f32 %v1805, %v1917
        %1919 = vmatmul.f32.gmra.mxu0 %v1511
        %v1920 = vpop.f32.mrf.mxu0
        %v1921 = vadd.f32 %v1808, %v1920
        %1922 = vmatmul.f32.gmra.mxu0 %v1516
        %v1923 = vpop.f32.mrf.mxu0
        %v1924 = vadd.f32 %v1811, %v1923
        %1925 = vmatmul.f32.gmra.mxu0 %v1521
        %v1926 = vpop.f32.mrf.mxu0
        %v1927 = vadd.f32 %v1814, %v1926
        %1928 = vmatmul.f32.gmra.mxu0 %v1526
        %v1929 = vpop.f32.mrf.mxu0
        %v1930 = vadd.f32 %v1817, %v1929
        %1931 = vmatmul.f32.gmra.mxu0 %v1531
        %v1932 = vpop.f32.mrf.mxu0
        %v1933 = vadd.f32 %v1820, %v1932
        %1934 = vmatmul.f32.gmra.mxu0 %v1536
        %v1935 = vpop.f32.mrf.mxu0
        %v1936 = vadd.f32 %v1823, %v1935
        %1937 = vdwg.mxu0
        %1938 = vmatpush.msra.mxu0 %v1587
        %1939 = vmatpush.msra.mxu0 %v1586
        %1940 = vmatpush.msra.mxu0 %v1585
        %1941 = vmatpush.msra.mxu0 %v1584
        %1942 = vmatpush.msra.mxu0 %v1583
        %1943 = vmatpush.msra.mxu0 %v1582
        %1944 = vmatpush.msra.mxu0 %v1581
        %1945 = vmatpush.msra.mxu0 %v1580
        %1946 = vmatpush.msra.mxu0 %v1579
        %1947 = vmatpush.msra.mxu0 %v1578
        %1948 = vmatpush.msra.mxu0 %v1577
        %1949 = vmatpush.msra.mxu0 %v1576
        %1950 = vmatpush.msra.mxu0 %v1575
        %1951 = vmatpush.msra.mxu0 %v1574
        %1952 = vmatpush.msra.mxu0 %v1573
        %1953 = vmatpush.msra.mxu0 %v1572
        %1954 = vmatmul.f32.gmra.mxu0 %v1382
        %v1955 = vpop.f32.mrf.mxu0
        %v1956 = vadd.f32 %v1843, %v1955
        %1957 = vmatmul.f32.gmra.mxu0 %v1387
        %v1958 = vpop.f32.mrf.mxu0
        %v1959 = vadd.f32 %v1846, %v1958
        %1960 = vmatmul.f32.gmra.mxu0 %v1392
        %v1961 = vpop.f32.mrf.mxu0
        %v1962 = vadd.f32 %v1849, %v1961
        %1963 = vmatmul.f32.gmra.mxu0 %v1397
        %v1964 = vpop.f32.mrf.mxu0
        %v1965 = vadd.f32 %v1852, %v1964
        %1966 = vmatmul.f32.gmra.mxu0 %v1402
        %v1967 = vpop.f32.mrf.mxu0
        %v1968 = vadd.f32 %v1855, %v1967
        %1969 = vmatmul.f32.gmra.mxu0 %v1407
        %v1970 = vpop.f32.mrf.mxu0
        %v1971 = vadd.f32 %v1858, %v1970
        %1972 = vmatmul.f32.gmra.mxu0 %v1412
        %v1973 = vpop.f32.mrf.mxu0
        %v1974 = vadd.f32 %v1861, %v1973
        %1975 = vmatmul.f32.gmra.mxu0 %v1417
        %v1976 = vpop.f32.mrf.mxu0
        %v1977 = vadd.f32 %v1864, %v1976
        %1978 = vmatmul.f32.gmra.mxu0 %v1422
        %v1979 = vpop.f32.mrf.mxu0
        %v1980 = vadd.f32 %v1867, %v1979
        %1981 = vmatmul.f32.gmra.mxu0 %v1427
        %v1982 = vpop.f32.mrf.mxu0
        %v1983 = vadd.f32 %v1870, %v1982
        %1984 = vmatmul.f32.gmra.mxu0 %v1432
        %v1985 = vpop.f32.mrf.mxu0
        %v1986 = vadd.f32 %v1873, %v1985
        %1987 = vmatmul.f32.gmra.mxu0 %v1437
        %v1988 = vpop.f32.mrf.mxu0
        %v1989 = vadd.f32 %v1876, %v1988
        %1990 = vmatmul.f32.gmra.mxu0 %v1442
        %v1991 = vpop.f32.mrf.mxu0
        %v1992 = vadd.f32 %v1879, %v1991
        %1993 = vmatmul.f32.gmra.mxu0 %v1447
        %v1994 = vpop.f32.mrf.mxu0
        %v1995 = vadd.f32 %v1882, %v1994
        %1996 = vmatmul.f32.gmra.mxu0 %v1452
        %v1997 = vpop.f32.mrf.mxu0
        %v1998 = vadd.f32 %v1885, %v1997
        %1999 = vmatmul.f32.gmra.mxu0 %v1457
        %v2000 = vpop.f32.mrf.mxu0
        %v2001 = vadd.f32 %v1888, %v2000
        %2002 = vmatmul.f32.gmra.mxu0 %v1462
        %v2003 = vpop.f32.mrf.mxu0
        %v2004 = vadd.f32 %v1891, %v2003
        %2005 = vmatmul.f32.gmra.mxu0 %v1467
        %v2006 = vpop.f32.mrf.mxu0
        %v2007 = vadd.f32 %v1894, %v2006
        %2008 = vmatmul.f32.gmra.mxu0 %v1472
        %v2009 = vpop.f32.mrf.mxu0
        %v2010 = vadd.f32 %v1897, %v2009
        %2011 = vmatmul.f32.gmra.mxu0 %v1477
        %v2012 = vpop.f32.mrf.mxu0
        %v2013 = vadd.f32 %v1900, %v2012
        %2014 = vmatmul.f32.gmra.mxu0 %v1482
        %v2015 = vpop.f32.mrf.mxu0
        %v2016 = vadd.f32 %v1903, %v2015
        %2017 = vmatmul.f32.gmra.mxu0 %v1487
        %v2018 = vpop.f32.mrf.mxu0
        %v2019 = vadd.f32 %v1906, %v2018
        %2020 = vmatmul.f32.gmra.mxu0 %v1492
        %v2021 = vpop.f32.mrf.mxu0
        %v2022 = vadd.f32 %v1909, %v2021
        %2023 = vmatmul.f32.gmra.mxu0 %v1497
        %v2024 = vpop.f32.mrf.mxu0
        %v2025 = vadd.f32 %v1912, %v2024
        %2026 = vmatmul.f32.gmra.mxu0 %v1502
        %v2027 = vpop.f32.mrf.mxu0
        %v2028 = vadd.f32 %v1915, %v2027
        %2029 = vmatmul.f32.gmra.mxu0 %v1507
        %v2030 = vpop.f32.mrf.mxu0
        %v2031 = vadd.f32 %v1918, %v2030
        %2032 = vmatmul.f32.gmra.mxu0 %v1512
        %v2033 = vpop.f32.mrf.mxu0
        %v2034 = vadd.f32 %v1921, %v2033
        %2035 = vmatmul.f32.gmra.mxu0 %v1517
        %v2036 = vpop.f32.mrf.mxu0
        %v2037 = vadd.f32 %v1924, %v2036
        %2038 = vmatmul.f32.gmra.mxu0 %v1522
        %v2039 = vpop.f32.mrf.mxu0
        %v2040 = vadd.f32 %v1927, %v2039
        %2041 = vmatmul.f32.gmra.mxu0 %v1527
        %v2042 = vpop.f32.mrf.mxu0
        %v2043 = vadd.f32 %v1930, %v2042
        %2044 = vmatmul.f32.gmra.mxu0 %v1532
        %v2045 = vpop.f32.mrf.mxu0
        %v2046 = vadd.f32 %v1933, %v2045
        %2047 = vmatmul.f32.gmra.mxu0 %v1537
        %v2048 = vpop.f32.mrf.mxu0
        %v2049 = vadd.f32 %v1936, %v2048
        %2050 = vdwg.mxu0
        %2051 = vmatpush.msra.mxu0 %v1603
        %2052 = vmatpush.msra.mxu0 %v1602
        %2053 = vmatpush.msra.mxu0 %v1601
        %2054 = vmatpush.msra.mxu0 %v1600
        %2055 = vmatpush.msra.mxu0 %v1599
        %2056 = vmatpush.msra.mxu0 %v1598
        %2057 = vmatpush.msra.mxu0 %v1597
        %2058 = vmatpush.msra.mxu0 %v1596
        %2059 = vmatpush.msra.mxu0 %v1595
        %2060 = vmatpush.msra.mxu0 %v1594
        %2061 = vmatpush.msra.mxu0 %v1593
        %2062 = vmatpush.msra.mxu0 %v1592
        %2063 = vmatpush.msra.mxu0 %v1591
        %2064 = vmatpush.msra.mxu0 %v1590
        %2065 = vmatpush.msra.mxu0 %v1589
        %2066 = vmatpush.msra.mxu0 %v1588
        %2067 = vmatmul.f32.gmra.mxu0 %v1383
        %v2068 = vpop.f32.mrf.mxu0
        %v2069 = vadd.f32 %v1956, %v2068
        %2070 = vmatmul.f32.gmra.mxu0 %v1388
        %v2071 = vpop.f32.mrf.mxu0
        %v2072 = vadd.f32 %v1959, %v2071
        %2073 = vmatmul.f32.gmra.mxu0 %v1393
        %v2074 = vpop.f32.mrf.mxu0
        %v2075 = vadd.f32 %v1962, %v2074
        %2076 = vmatmul.f32.gmra.mxu0 %v1398
        %v2077 = vpop.f32.mrf.mxu0
        %v2078 = vadd.f32 %v1965, %v2077
        %2079 = vmatmul.f32.gmra.mxu0 %v1403
        %v2080 = vpop.f32.mrf.mxu0
        %v2081 = vadd.f32 %v1968, %v2080
        %2082 = vmatmul.f32.gmra.mxu0 %v1408
        %v2083 = vpop.f32.mrf.mxu0
        %v2084 = vadd.f32 %v1971, %v2083
        %2085 = vmatmul.f32.gmra.mxu0 %v1413
        %v2086 = vpop.f32.mrf.mxu0
        %v2087 = vadd.f32 %v1974, %v2086
        %2088 = vmatmul.f32.gmra.mxu0 %v1418
        %v2089 = vpop.f32.mrf.mxu0
        %v2090 = vadd.f32 %v1977, %v2089
        %2091 = vmatmul.f32.gmra.mxu0 %v1423
        %v2092 = vpop.f32.mrf.mxu0
        %v2093 = vadd.f32 %v1980, %v2092
        %2094 = vmatmul.f32.gmra.mxu0 %v1428
        %v2095 = vpop.f32.mrf.mxu0
        %v2096 = vadd.f32 %v1983, %v2095
        %2097 = vmatmul.f32.gmra.mxu0 %v1433
        %v2098 = vpop.f32.mrf.mxu0
        %v2099 = vadd.f32 %v1986, %v2098
        %2100 = vmatmul.f32.gmra.mxu0 %v1438
        %v2101 = vpop.f32.mrf.mxu0
        %v2102 = vadd.f32 %v1989, %v2101
        %2103 = vmatmul.f32.gmra.mxu0 %v1443
        %v2104 = vpop.f32.mrf.mxu0
        %v2105 = vadd.f32 %v1992, %v2104
        %2106 = vmatmul.f32.gmra.mxu0 %v1448
        %v2107 = vpop.f32.mrf.mxu0
        %v2108 = vadd.f32 %v1995, %v2107
        %2109 = vmatmul.f32.gmra.mxu0 %v1453
        %v2110 = vpop.f32.mrf.mxu0
        %v2111 = vadd.f32 %v1998, %v2110
        %2112 = vmatmul.f32.gmra.mxu0 %v1458
        %v2113 = vpop.f32.mrf.mxu0
        %v2114 = vadd.f32 %v2001, %v2113
        %2115 = vmatmul.f32.gmra.mxu0 %v1463
        %v2116 = vpop.f32.mrf.mxu0
        %v2117 = vadd.f32 %v2004, %v2116
        %2118 = vmatmul.f32.gmra.mxu0 %v1468
        %v2119 = vpop.f32.mrf.mxu0
        %v2120 = vadd.f32 %v2007, %v2119
        %2121 = vmatmul.f32.gmra.mxu0 %v1473
        %v2122 = vpop.f32.mrf.mxu0
        %v2123 = vadd.f32 %v2010, %v2122
        %2124 = vmatmul.f32.gmra.mxu0 %v1478
        %v2125 = vpop.f32.mrf.mxu0
        %v2126 = vadd.f32 %v2013, %v2125
        %2127 = vmatmul.f32.gmra.mxu0 %v1483
        %v2128 = vpop.f32.mrf.mxu0
        %v2129 = vadd.f32 %v2016, %v2128
        %2130 = vmatmul.f32.gmra.mxu0 %v1488
        %v2131 = vpop.f32.mrf.mxu0
        %v2132 = vadd.f32 %v2019, %v2131
        %2133 = vmatmul.f32.gmra.mxu0 %v1493
        %v2134 = vpop.f32.mrf.mxu0
        %v2135 = vadd.f32 %v2022, %v2134
        %2136 = vmatmul.f32.gmra.mxu0 %v1498
        %v2137 = vpop.f32.mrf.mxu0
        %v2138 = vadd.f32 %v2025, %v2137
        %2139 = vmatmul.f32.gmra.mxu0 %v1503
        %v2140 = vpop.f32.mrf.mxu0
        %v2141 = vadd.f32 %v2028, %v2140
        %2142 = vmatmul.f32.gmra.mxu0 %v1508
        %v2143 = vpop.f32.mrf.mxu0
        %v2144 = vadd.f32 %v2031, %v2143
        %2145 = vmatmul.f32.gmra.mxu0 %v1513
        %v2146 = vpop.f32.mrf.mxu0
        %v2147 = vadd.f32 %v2034, %v2146
        %2148 = vmatmul.f32.gmra.mxu0 %v1518
        %v2149 = vpop.f32.mrf.mxu0
        %v2150 = vadd.f32 %v2037, %v2149
        %2151 = vmatmul.f32.gmra.mxu0 %v1523
        %v2152 = vpop.f32.mrf.mxu0
        %v2153 = vadd.f32 %v2040, %v2152
        %2154 = vmatmul.f32.gmra.mxu0 %v1528
        %v2155 = vpop.f32.mrf.mxu0
        %v2156 = vadd.f32 %v2043, %v2155
        %2157 = vmatmul.f32.gmra.mxu0 %v1533
        %v2158 = vpop.f32.mrf.mxu0
        %v2159 = vadd.f32 %v2046, %v2158
        %2160 = vmatmul.f32.gmra.mxu0 %v1538
        %v2161 = vpop.f32.mrf.mxu0
        %v2162 = vadd.f32 %v2049, %v2161
        %2163 = vdwg.mxu0
        %2164 = vmatpush.msra.mxu0 0.0
        %2165 = vmatpush.msra.mxu0 0.0
        %2166 = vmatpush.msra.mxu0 0.0
        %2167 = vmatpush.msra.mxu0 0.0
        %2168 = vmatpush.msra.mxu0 0.0
        %2169 = vmatpush.msra.mxu0 0.0
        %2170 = vmatpush.msra.mxu0 0.0
        %2171 = vmatpush.msra.mxu0 0.0
        %2172 = vmatpush.msra.mxu0 %v1611
        %2173 = vmatpush.msra.mxu0 %v1610
        %2174 = vmatpush.msra.mxu0 %v1609
        %2175 = vmatpush.msra.mxu0 %v1608
        %2176 = vmatpush.msra.mxu0 %v1607
        %2177 = vmatpush.msra.mxu0 %v1606
        %2178 = vmatpush.msra.mxu0 %v1605
        %2179 = vmatpush.msra.mxu0 %v1604
        %2180 = vmatmul.f32.gmra.mxu0 %v1617
        %v2181 = vpop.f32.mrf.mxu0
        %v2182 = vadd.f32 %v2069, %v2181
        %2183 = vmatmul.f32.gmra.mxu0 %v1620
        %v2184 = vpop.f32.mrf.mxu0
        %v2185 = vadd.f32 %v2072, %v2184
        %2186 = vmatmul.f32.gmra.mxu0 %v1623
        %v2187 = vpop.f32.mrf.mxu0
        %v2188 = vadd.f32 %v2075, %v2187
        %2189 = vmatmul.f32.gmra.mxu0 %v1626
        %v2190 = vpop.f32.mrf.mxu0
        %v2191 = vadd.f32 %v2078, %v2190
        %2192 = vmatmul.f32.gmra.mxu0 %v1629
        %v2193 = vpop.f32.mrf.mxu0
        %v2194 = vadd.f32 %v2081, %v2193
        %2195 = vmatmul.f32.gmra.mxu0 %v1632
        %v2196 = vpop.f32.mrf.mxu0
        %v2197 = vadd.f32 %v2084, %v2196
        %2198 = vmatmul.f32.gmra.mxu0 %v1635
        %v2199 = vpop.f32.mrf.mxu0
        %v2200 = vadd.f32 %v2087, %v2199
        %2201 = vmatmul.f32.gmra.mxu0 %v1638
        %v2202 = vpop.f32.mrf.mxu0
        %v2203 = vadd.f32 %v2090, %v2202
        %2204 = vmatmul.f32.gmra.mxu0 %v1641
        %v2205 = vpop.f32.mrf.mxu0
        %v2206 = vadd.f32 %v2093, %v2205
        %2207 = vmatmul.f32.gmra.mxu0 %v1644
        %v2208 = vpop.f32.mrf.mxu0
        %v2209 = vadd.f32 %v2096, %v2208
        %2210 = vmatmul.f32.gmra.mxu0 %v1647
        %v2211 = vpop.f32.mrf.mxu0
        %v2212 = vadd.f32 %v2099, %v2211
        %2213 = vmatmul.f32.gmra.mxu0 %v1650
        %v2214 = vpop.f32.mrf.mxu0
        %v2215 = vadd.f32 %v2102, %v2214
        %2216 = vmatmul.f32.gmra.mxu0 %v1653
        %v2217 = vpop.f32.mrf.mxu0
        %v2218 = vadd.f32 %v2105, %v2217
        %2219 = vmatmul.f32.gmra.mxu0 %v1656
        %v2220 = vpop.f32.mrf.mxu0
        %v2221 = vadd.f32 %v2108, %v2220
        %2222 = vmatmul.f32.gmra.mxu0 %v1659
        %v2223 = vpop.f32.mrf.mxu0
        %v2224 = vadd.f32 %v2111, %v2223
        %2225 = vmatmul.f32.gmra.mxu0 %v1662
        %v2226 = vpop.f32.mrf.mxu0
        %v2227 = vadd.f32 %v2114, %v2226
        %2228 = vmatmul.f32.gmra.mxu0 %v1665
        %v2229 = vpop.f32.mrf.mxu0
        %v2230 = vadd.f32 %v2117, %v2229
        %2231 = vmatmul.f32.gmra.mxu0 %v1668
        %v2232 = vpop.f32.mrf.mxu0
        %v2233 = vadd.f32 %v2120, %v2232
        %2234 = vmatmul.f32.gmra.mxu0 %v1671
        %v2235 = vpop.f32.mrf.mxu0
        %v2236 = vadd.f32 %v2123, %v2235
        %2237 = vmatmul.f32.gmra.mxu0 %v1674
        %v2238 = vpop.f32.mrf.mxu0
        %v2239 = vadd.f32 %v2126, %v2238
        %2240 = vmatmul.f32.gmra.mxu0 %v1677
        %v2241 = vpop.f32.mrf.mxu0
        %v2242 = vadd.f32 %v2129, %v2241
        %2243 = vmatmul.f32.gmra.mxu0 %v1680
        %v2244 = vpop.f32.mrf.mxu0
        %v2245 = vadd.f32 %v2132, %v2244
        %2246 = vmatmul.f32.gmra.mxu0 %v1683
        %v2247 = vpop.f32.mrf.mxu0
        %v2248 = vadd.f32 %v2135, %v2247
        %2249 = vmatmul.f32.gmra.mxu0 %v1686
        %v2250 = vpop.f32.mrf.mxu0
        %v2251 = vadd.f32 %v2138, %v2250
        %2252 = vmatmul.f32.gmra.mxu0 %v1689
        %v2253 = vpop.f32.mrf.mxu0
        %v2254 = vadd.f32 %v2141, %v2253
        %2255 = vmatmul.f32.gmra.mxu0 %v1692
        %v2256 = vpop.f32.mrf.mxu0
        %v2257 = vadd.f32 %v2144, %v2256
        %2258 = vmatmul.f32.gmra.mxu0 %v1695
        %v2259 = vpop.f32.mrf.mxu0
        %v2260 = vadd.f32 %v2147, %v2259
        %2261 = vmatmul.f32.gmra.mxu0 %v1698
        %v2262 = vpop.f32.mrf.mxu0
        %v2263 = vadd.f32 %v2150, %v2262
        %2264 = vmatmul.f32.gmra.mxu0 %v1701
        %v2265 = vpop.f32.mrf.mxu0
        %v2266 = vadd.f32 %v2153, %v2265
        %2267 = vmatmul.f32.gmra.mxu0 %v1704
        %v2268 = vpop.f32.mrf.mxu0
        %v2269 = vadd.f32 %v2156, %v2268
        %2270 = vmatmul.f32.gmra.mxu0 %v1707
        %v2271 = vpop.f32.mrf.mxu0
        %v2272 = vadd.f32 %v2159, %v2271
        %2273 = vmatmul.f32.gmra.mxu0 %v1710
        %v2274 = vpop.f32.mrf.mxu0
        %v2275 = vadd.f32 %v2162, %v2274
        %2276 = vdwg.mxu0
        %vm2277 = vcmp.ge.f32.partialorder %v2182, 0.0
        %vm2278 = vcmp.ge.f32.partialorder %v2185, 0.0
        %vm2279 = vcmp.ge.f32.partialorder %v2188, 0.0
        %vm2280 = vcmp.ge.f32.partialorder %v2191, 0.0
        %vm2281 = vcmp.ge.f32.partialorder %v2194, 0.0
        %vm2282 = vcmp.ge.f32.partialorder %v2197, 0.0
        %vm2283 = vcmp.ge.f32.partialorder %v2200, 0.0
        %vm2284 = vcmp.ge.f32.partialorder %v2203, 0.0
        %vm2285 = vcmp.ge.f32.partialorder %v2206, 0.0
        %vm2286 = vcmp.ge.f32.partialorder %v2209, 0.0
        %vm2287 = vcmp.ge.f32.partialorder %v2212, 0.0
        %vm2288 = vcmp.ge.f32.partialorder %v2215, 0.0
        %vm2289 = vcmp.ge.f32.partialorder %v2218, 0.0
        %vm2290 = vcmp.ge.f32.partialorder %v2221, 0.0
        %vm2291 = vcmp.ge.f32.partialorder %v2224, 0.0
        %vm2292 = vcmp.ge.f32.partialorder %v2227, 0.0
        %vm2293 = vcmp.ge.f32.partialorder %v2230, 0.0
        %vm2294 = vcmp.ge.f32.partialorder %v2233, 0.0
        %vm2295 = vcmp.ge.f32.partialorder %v2236, 0.0
        %vm2296 = vcmp.ge.f32.partialorder %v2239, 0.0
        %vm2297 = vcmp.ge.f32.partialorder %v2242, 0.0
        %vm2298 = vcmp.ge.f32.partialorder %v2245, 0.0
        %vm2299 = vcmp.ge.f32.partialorder %v2248, 0.0
        %vm2300 = vcmp.ge.f32.partialorder %v2251, 0.0
        %vm2301 = vcmp.ge.f32.partialorder %v2254, 0.0
        %vm2302 = vcmp.ge.f32.partialorder %v2257, 0.0
        %vm2303 = vcmp.ge.f32.partialorder %v2260, 0.0
        %vm2304 = vcmp.ge.f32.partialorder %v2263, 0.0
        %vm2305 = vcmp.ge.f32.partialorder %v2266, 0.0
        %vm2306 = vcmp.ge.f32.partialorder %v2269, 0.0
        %vm2307 = vcmp.ge.f32.partialorder %v2272, 0.0
        %vm2308 = vcmp.ge.f32.partialorder %v2275, 0.0
        %v2309 = vmul.f32 %v2182, 0.2
        %v2310 = vmul.f32 %v2185, 0.2
        %v2311 = vmul.f32 %v2188, 0.2
        %v2312 = vmul.f32 %v2191, 0.2
        %v2313 = vmul.f32 %v2194, 0.2
        %v2314 = vmul.f32 %v2197, 0.2
        %v2315 = vmul.f32 %v2200, 0.2
        %v2316 = vmul.f32 %v2203, 0.2
        %v2317 = vmul.f32 %v2206, 0.2
        %v2318 = vmul.f32 %v2209, 0.2
        %v2319 = vmul.f32 %v2212, 0.2
        %v2320 = vmul.f32 %v2215, 0.2
        %v2321 = vmul.f32 %v2218, 0.2
        %v2322 = vmul.f32 %v2221, 0.2
        %v2323 = vmul.f32 %v2224, 0.2
        %v2324 = vmul.f32 %v2227, 0.2
        %v2325 = vmul.f32 %v2230, 0.2
        %v2326 = vmul.f32 %v2233, 0.2
        %v2327 = vmul.f32 %v2236, 0.2
        %v2328 = vmul.f32 %v2239, 0.2
        %v2329 = vmul.f32 %v2242, 0.2
        %v2330 = vmul.f32 %v2245, 0.2
        %v2331 = vmul.f32 %v2248, 0.2
        %v2332 = vmul.f32 %v2251, 0.2
        %v2333 = vmul.f32 %v2254, 0.2
        %v2334 = vmul.f32 %v2257, 0.2
        %v2335 = vmul.f32 %v2260, 0.2
        %v2336 = vmul.f32 %v2263, 0.2
        %v2337 = vmul.f32 %v2266, 0.2
        %v2338 = vmul.f32 %v2269, 0.2
        %v2339 = vmul.f32 %v2272, 0.2
        %v2340 = vmul.f32 %v2275, 0.2
        %v2341 = vsel %vm2277, %v2182, %v2309
        %v2342 = vsel %vm2278, %v2185, %v2310
        %v2343 = vsel %vm2279, %v2188, %v2311
        %v2344 = vsel %vm2280, %v2191, %v2312
        %v2345 = vsel %vm2281, %v2194, %v2313
        %v2346 = vsel %vm2282, %v2197, %v2314
        %v2347 = vsel %vm2283, %v2200, %v2315
        %v2348 = vsel %vm2284, %v2203, %v2316
        %v2349 = vsel %vm2285, %v2206, %v2317
        %v2350 = vsel %vm2286, %v2209, %v2318
        %v2351 = vsel %vm2287, %v2212, %v2319
        %v2352 = vsel %vm2288, %v2215, %v2320
        %v2353 = vsel %vm2289, %v2218, %v2321
        %v2354 = vsel %vm2290, %v2221, %v2322
        %v2355 = vsel %vm2291, %v2224, %v2323
        %v2356 = vsel %vm2292, %v2227, %v2324
        %v2357 = vsel %vm2293, %v2230, %v2325
        %v2358 = vsel %vm2294, %v2233, %v2326
        %v2359 = vsel %vm2295, %v2236, %v2327
        %v2360 = vsel %vm2296, %v2239, %v2328
        %v2361 = vsel %vm2297, %v2242, %v2329
        %v2362 = vsel %vm2298, %v2245, %v2330
        %v2363 = vsel %vm2299, %v2248, %v2331
        %v2364 = vsel %vm2300, %v2251, %v2332
        %v2365 = vsel %vm2301, %v2254, %v2333
        %v2366 = vsel %vm2302, %v2257, %v2334
        %v2367 = vsel %vm2303, %v2260, %v2335
        %v2368 = vsel %vm2304, %v2263, %v2336
        %v2369 = vsel %vm2305, %v2266, %v2337
        %v2370 = vsel %vm2306, %v2269, %v2338
        %v2371 = vsel %vm2307, %v2272, %v2339
        %v2372 = vsel %vm2308, %v2275, %v2340
        %2373 = vst.msk [vmem:[%s257 + $0x1] sm:$0xff] %vm169, %v2341
        %2374 = vst.msk [vmem:[%s257 + $0x9] sm:$0xff] %vm169, %v2342
        %2375 = vst.msk [vmem:[%s257 + $0x19] sm:$0xff] %vm169, %v2343
        %2376 = vst.msk [vmem:[%s257 + $0x21] sm:$0xff] %vm169, %v2344
        %2377 = vst.msk [vmem:[%s257 + $0x31] sm:$0xff] %vm169, %v2345
        %2378 = vst.msk [vmem:[%s257 + $0x39] sm:$0xff] %vm169, %v2346
        %2379 = vst.msk [vmem:[%s257 + $0x49] sm:$0xff] %vm169, %v2347
        %2380 = vst.msk [vmem:[%s257 + $0x51] sm:$0xff] %vm169, %v2348
        %2381 = vst.msk [vmem:[%s257 + $0x61] sm:$0xff] %vm169, %v2349
        %2382 = vst.msk [vmem:[%s257 + $0x69] sm:$0xff] %vm169, %v2350
        %2383 = vst.msk [vmem:[%s257 + $0x79] sm:$0xff] %vm169, %v2351
        %2384 = vst.msk [vmem:[%s257 + $0x81] sm:$0xff] %vm169, %v2352
        %2385 = vst.msk [vmem:[%s257 + $0x91] sm:$0xff] %vm169, %v2353
        %2386 = vst.msk [vmem:[%s257 + $0x99] sm:$0xff] %vm169, %v2354
        %2387 = vst.msk [vmem:[%s257 + $0xa9] sm:$0xff] %vm169, %v2355
        %2388 = vst.msk [vmem:[%s257 + $0xb1] sm:$0xff] %vm169, %v2356
        %2389 = vst.msk [vmem:[%s257 + $0xc1] sm:$0xff] %vm169, %v2357
        %2390 = vst.msk [vmem:[%s257 + $0xc9] sm:$0xff] %vm169, %v2358
        %2391 = vst.msk [vmem:[%s257 + $0xd9] sm:$0xff] %vm169, %v2359
        %2392 = vst.msk [vmem:[%s257 + $0xe1] sm:$0xff] %vm169, %v2360
        %2393 = vst.msk [vmem:[%s257 + $0xf1] sm:$0xff] %vm169, %v2361
        %2394 = vst.msk [vmem:[%s257 + $0xf9] sm:$0xff] %vm169, %v2362
        %2395 = vst.msk [vmem:[%s257 + $0x109] sm:$0xff] %vm169, %v2363
        %2396 = vst.msk [vmem:[%s257 + $0x111] sm:$0xff] %vm169, %v2364
        %2397 = vst.msk [vmem:[%s257 + $0x121] sm:$0xff] %vm169, %v2365
        %2398 = vst.msk [vmem:[%s257 + $0x129] sm:$0xff] %vm169, %v2366
        %2399 = vst.msk [vmem:[%s257 + $0x139] sm:$0xff] %vm169, %v2367
        %2400 = vst.msk [vmem:[%s257 + $0x141] sm:$0xff] %vm169, %v2368
        %2401 = vst.msk [vmem:[%s257 + $0x151] sm:$0xff] %vm169, %v2369
        %2402 = vst.msk [vmem:[%s257 + $0x159] sm:$0xff] %vm169, %v2370
        %2403 = vst.msk [vmem:[%s257 + $0x169] sm:$0xff] %vm169, %v2371
        %2404 = vst.msk [vmem:[%s257 + $0x171] sm:$0xff] %vm169, %v2372
        %v2405 = vld [vmem:[#allocation2] sm:$0xff]
        %v2406 = vld [vmem:[#allocation2 + $0x8] sm:$0xff]
        %v2407 = vld [vmem:[#allocation2 + $0x18] sm:$0xff]
        %v2408 = vld [vmem:[#allocation2 + $0x20] sm:$0xff]
        %v2409 = vld [vmem:[#allocation2 + $0x30] sm:$0xff]
        %v2410 = vld [vmem:[#allocation2 + $0x38] sm:$0xff]
        %v2411 = vld [vmem:[#allocation2 + $0x48] sm:$0xff]
        %v2412 = vld [vmem:[#allocation2 + $0x50] sm:$0xff]
        %v2413 = vld [vmem:[#allocation2 + $0x60] sm:$0xff]
        %v2414 = vld [vmem:[#allocation2 + $0x68] sm:$0xff]
        %v2415 = vld [vmem:[#allocation2 + $0x78] sm:$0xff]
        %v2416 = vld [vmem:[#allocation2 + $0x80] sm:$0xff]
        %v2417 = vld [vmem:[#allocation2 + $0x90] sm:$0xff]
        %v2418 = vld [vmem:[#allocation2 + $0x98] sm:$0xff]
        %v2419 = vld [vmem:[#allocation2 + $0xa8] sm:$0xff]
        %v2420 = vld [vmem:[#allocation2 + $0xb0] sm:$0xff]
        %v2421 = vld [vmem:[#allocation2 + $0xc0] sm:$0xff]
        %v2422 = vld [vmem:[#allocation2 + $0xc8] sm:$0xff]
        %v2423 = vld [vmem:[#allocation2 + $0xd8] sm:$0xff]
        %v2424 = vld [vmem:[#allocation2 + $0xe0] sm:$0xff]
        %v2425 = vld [vmem:[#allocation2 + $0xf0] sm:$0xff]
        %v2426 = vld [vmem:[#allocation2 + $0xf8] sm:$0xff]
        %v2427 = vld [vmem:[#allocation2 + $0x108] sm:$0xff]
        %v2428 = vld [vmem:[#allocation2 + $0x110] sm:$0xff]
        %v2429 = vld [vmem:[#allocation2 + $0x120] sm:$0xff]
        %v2430 = vld [vmem:[#allocation2 + $0x128] sm:$0xff]
        %v2431 = vld [vmem:[#allocation2 + $0x138] sm:$0xff]
        %v2432 = vld [vmem:[#allocation2 + $0x140] sm:$0xff]
        %v2433 = vld [vmem:[#allocation2 + $0x150] sm:$0xff]
        %v2434 = vld [vmem:[#allocation2 + $0x158] sm:$0xff]
        %v2435 = vld [vmem:[#allocation2 + $0x168] sm:$0xff]
        %v2436 = vld [vmem:[#allocation2 + $0x170] sm:$0xff]
        %2437 = vst.msk [vmem:[#allocation3] sm:$0xff] %vm169, %v2405
        %2438 = vst.msk [vmem:[#allocation3 + $0x28] sm:$0xff] %vm169, %v2406
        %2439 = vst.msk [vmem:[#allocation3 + $0x50] sm:$0xff] %vm169, %v2407
        %2440 = vst.msk [vmem:[#allocation3 + $0x78] sm:$0xff] %vm169, %v2408
        %2441 = vst.msk [vmem:[#allocation3 + $0xa0] sm:$0xff] %vm169, %v2409
        %2442 = vst.msk [vmem:[#allocation3 + $0xc8] sm:$0xff] %vm169, %v2410
        %2443 = vst.msk [vmem:[#allocation3 + $0xf0] sm:$0xff] %vm169, %v2411
        %2444 = vst.msk [vmem:[#allocation3 + $0x118] sm:$0xff] %vm169, %v2412
        %2445 = vst.msk [vmem:[#allocation3 + $0x140] sm:$0xff] %vm169, %v2413
        %2446 = vst.msk [vmem:[#allocation3 + $0x168] sm:$0xff] %vm169, %v2414
        %2447 = vst.msk [vmem:[#allocation3 + $0x190] sm:$0xff] %vm169, %v2415
        %2448 = vst.msk [vmem:[#allocation3 + $0x1b8] sm:$0xff] %vm169, %v2416
        %2449 = vst.msk [vmem:[#allocation3 + $0x1e0] sm:$0xff] %vm169, %v2417
        %2450 = vst.msk [vmem:[#allocation3 + $0x208] sm:$0xff] %vm169, %v2418
        %2451 = vst.msk [vmem:[#allocation3 + $0x230] sm:$0xff] %vm169, %v2419
        %2452 = vst.msk [vmem:[#allocation3 + $0x258] sm:$0xff] %vm169, %v2420
        %2453 = vst.msk [vmem:[#allocation3 + $0x280] sm:$0xff] %vm169, %v2421
        %2454 = vst.msk [vmem:[#allocation3 + $0x2a8] sm:$0xff] %vm169, %v2422
        %2455 = vst.msk [vmem:[#allocation3 + $0x2d0] sm:$0xff] %vm169, %v2423
        %2456 = vst.msk [vmem:[#allocation3 + $0x2f8] sm:$0xff] %vm169, %v2424
        %2457 = vst.msk [vmem:[#allocation3 + $0x320] sm:$0xff] %vm169, %v2425
        %2458 = vst.msk [vmem:[#allocation3 + $0x348] sm:$0xff] %vm169, %v2426
        %2459 = vst.msk [vmem:[#allocation3 + $0x370] sm:$0xff] %vm169, %v2427
        %2460 = vst.msk [vmem:[#allocation3 + $0x398] sm:$0xff] %vm169, %v2428
        %2461 = vst.msk [vmem:[#allocation3 + $0x3c0] sm:$0xff] %vm169, %v2429
        %2462 = vst.msk [vmem:[#allocation3 + $0x3e8] sm:$0xff] %vm169, %v2430
        %2463 = vst.msk [vmem:[#allocation3 + $0x410] sm:$0xff] %vm169, %v2431
        %2464 = vst.msk [vmem:[#allocation3 + $0x438] sm:$0xff] %vm169, %v2432
        %2465 = vst.msk [vmem:[#allocation3 + $0x460] sm:$0xff] %vm169, %v2433
        %2466 = vst.msk [vmem:[#allocation3 + $0x488] sm:$0xff] %vm169, %v2434
        %2467 = vst.msk [vmem:[#allocation3 + $0x4b0] sm:$0xff] %vm169, %v2435
        %2468 = vst.msk [vmem:[#allocation3 + $0x4d8] sm:$0xff] %vm169, %v2436
        %v2469 = vld [vmem:[#allocation2 + $0x1] sm:$0xff]
        %v2470 = vld [vmem:[#allocation2 + $0x9] sm:$0xff]
        %v2471 = vld [vmem:[#allocation2 + $0x19] sm:$0xff]
        %v2472 = vld [vmem:[#allocation2 + $0x21] sm:$0xff]
        %v2473 = vld [vmem:[#allocation2 + $0x31] sm:$0xff]
        %v2474 = vld [vmem:[#allocation2 + $0x39] sm:$0xff]
        %v2475 = vld [vmem:[#allocation2 + $0x49] sm:$0xff]
        %v2476 = vld [vmem:[#allocation2 + $0x51] sm:$0xff]
        %v2477 = vld [vmem:[#allocation2 + $0x61] sm:$0xff]
        %v2478 = vld [vmem:[#allocation2 + $0x69] sm:$0xff]
        %v2479 = vld [vmem:[#allocation2 + $0x79] sm:$0xff]
        %v2480 = vld [vmem:[#allocation2 + $0x81] sm:$0xff]
        %v2481 = vld [vmem:[#allocation2 + $0x91] sm:$0xff]
        %v2482 = vld [vmem:[#allocation2 + $0x99] sm:$0xff]
        %v2483 = vld [vmem:[#allocation2 + $0xa9] sm:$0xff]
        %v2484 = vld [vmem:[#allocation2 + $0xb1] sm:$0xff]
        %v2485 = vld [vmem:[#allocation2 + $0xc1] sm:$0xff]
        %v2486 = vld [vmem:[#allocation2 + $0xc9] sm:$0xff]
        %v2487 = vld [vmem:[#allocation2 + $0xd9] sm:$0xff]
        %v2488 = vld [vmem:[#allocation2 + $0xe1] sm:$0xff]
        %v2489 = vld [vmem:[#allocation2 + $0xf1] sm:$0xff]
        %v2490 = vld [vmem:[#allocation2 + $0xf9] sm:$0xff]
        %v2491 = vld [vmem:[#allocation2 + $0x109] sm:$0xff]
        %v2492 = vld [vmem:[#allocation2 + $0x111] sm:$0xff]
        %v2493 = vld [vmem:[#allocation2 + $0x121] sm:$0xff]
        %v2494 = vld [vmem:[#allocation2 + $0x129] sm:$0xff]
        %v2495 = vld [vmem:[#allocation2 + $0x139] sm:$0xff]
        %v2496 = vld [vmem:[#allocation2 + $0x141] sm:$0xff]
        %v2497 = vld [vmem:[#allocation2 + $0x151] sm:$0xff]
        %v2498 = vld [vmem:[#allocation2 + $0x159] sm:$0xff]
        %v2499 = vld [vmem:[#allocation2 + $0x169] sm:$0xff]
        %v2500 = vld [vmem:[#allocation2 + $0x171] sm:$0xff]
        %2533 = vrot.lane.b32.xlu0 %v2469, 64
        %v2534 = vpop.permute.xlu0 %2533
        %2535 = vrot.lane.b32.xlu0 %v2470, 64
        %v2536 = vpop.permute.xlu0 %2535
        %2537 = vrot.lane.b32.xlu0 %v2471, 64
        %v2538 = vpop.permute.xlu0 %2537
        %2539 = vrot.lane.b32.xlu0 %v2472, 64
        %v2540 = vpop.permute.xlu0 %2539
        %2541 = vrot.lane.b32.xlu0 %v2473, 64
        %v2542 = vpop.permute.xlu0 %2541
        %2543 = vrot.lane.b32.xlu0 %v2474, 64
        %v2544 = vpop.permute.xlu0 %2543
        %2545 = vrot.lane.b32.xlu0 %v2475, 64
        %v2546 = vpop.permute.xlu0 %2545
        %2547 = vrot.lane.b32.xlu0 %v2476, 64
        %v2548 = vpop.permute.xlu0 %2547
        %2549 = vrot.lane.b32.xlu0 %v2477, 64
        %v2550 = vpop.permute.xlu0 %2549
        %2551 = vrot.lane.b32.xlu0 %v2478, 64
        %v2552 = vpop.permute.xlu0 %2551
        %2553 = vrot.lane.b32.xlu0 %v2479, 64
        %v2554 = vpop.permute.xlu0 %2553
        %2555 = vrot.lane.b32.xlu0 %v2480, 64
        %v2556 = vpop.permute.xlu0 %2555
        %2557 = vrot.lane.b32.xlu0 %v2481, 64
        %v2558 = vpop.permute.xlu0 %2557
        %2559 = vrot.lane.b32.xlu0 %v2482, 64
        %v2560 = vpop.permute.xlu0 %2559
        %2561 = vrot.lane.b32.xlu0 %v2483, 64
        %v2562 = vpop.permute.xlu0 %2561
        %2563 = vrot.lane.b32.xlu0 %v2484, 64
        %v2564 = vpop.permute.xlu0 %2563
        %2565 = vrot.lane.b32.xlu0 %v2485, 64
        %v2566 = vpop.permute.xlu0 %2565
        %2567 = vrot.lane.b32.xlu0 %v2486, 64
        %v2568 = vpop.permute.xlu0 %2567
        %2569 = vrot.lane.b32.xlu0 %v2487, 64
        %v2570 = vpop.permute.xlu0 %2569
        %2571 = vrot.lane.b32.xlu0 %v2488, 64
        %v2572 = vpop.permute.xlu0 %2571
        %2573 = vrot.lane.b32.xlu0 %v2489, 64
        %v2574 = vpop.permute.xlu0 %2573
        %2575 = vrot.lane.b32.xlu0 %v2490, 64
        %v2576 = vpop.permute.xlu0 %2575
        %2577 = vrot.lane.b32.xlu0 %v2491, 64
        %v2578 = vpop.permute.xlu0 %2577
        %2579 = vrot.lane.b32.xlu0 %v2492, 64
        %v2580 = vpop.permute.xlu0 %2579
        %2581 = vrot.lane.b32.xlu0 %v2493, 64
        %v2582 = vpop.permute.xlu0 %2581
        %2583 = vrot.lane.b32.xlu0 %v2494, 64
        %v2584 = vpop.permute.xlu0 %2583
        %2585 = vrot.lane.b32.xlu0 %v2495, 64
        %v2586 = vpop.permute.xlu0 %2585
        %2587 = vrot.lane.b32.xlu0 %v2496, 64
        %v2588 = vpop.permute.xlu0 %2587
        %2589 = vrot.lane.b32.xlu0 %v2497, 64
        %v2590 = vpop.permute.xlu0 %2589
        %2591 = vrot.lane.b32.xlu0 %v2498, 64
        %v2592 = vpop.permute.xlu0 %2591
        %2593 = vrot.lane.b32.xlu0 %v2499, 64
        %v2594 = vpop.permute.xlu0 %2593
        %2595 = vrot.lane.b32.xlu0 %v2500, 64
        %v2596 = vpop.permute.xlu0 %2595
        %2629 = vst.msk [vmem:[#allocation3] sm:$0xff] %vm514, %v2534
        %2630 = vst.msk [vmem:[#allocation3 + $0x28] sm:$0xff] %vm514, %v2536
        %2631 = vst.msk [vmem:[#allocation3 + $0x50] sm:$0xff] %vm514, %v2538
        %2632 = vst.msk [vmem:[#allocation3 + $0x78] sm:$0xff] %vm514, %v2540
        %2633 = vst.msk [vmem:[#allocation3 + $0xa0] sm:$0xff] %vm514, %v2542
        %2634 = vst.msk [vmem:[#allocation3 + $0xc8] sm:$0xff] %vm514, %v2544
        %2635 = vst.msk [vmem:[#allocation3 + $0xf0] sm:$0xff] %vm514, %v2546
        %2636 = vst.msk [vmem:[#allocation3 + $0x118] sm:$0xff] %vm514, %v2548
        %2637 = vst.msk [vmem:[#allocation3 + $0x140] sm:$0xff] %vm514, %v2550
        %2638 = vst.msk [vmem:[#allocation3 + $0x168] sm:$0xff] %vm514, %v2552
        %2639 = vst.msk [vmem:[#allocation3 + $0x190] sm:$0xff] %vm514, %v2554
        %2640 = vst.msk [vmem:[#allocation3 + $0x1b8] sm:$0xff] %vm514, %v2556
        %2641 = vst.msk [vmem:[#allocation3 + $0x1e0] sm:$0xff] %vm514, %v2558
        %2642 = vst.msk [vmem:[#allocation3 + $0x208] sm:$0xff] %vm514, %v2560
        %2643 = vst.msk [vmem:[#allocation3 + $0x230] sm:$0xff] %vm514, %v2562
        %2644 = vst.msk [vmem:[#allocation3 + $0x258] sm:$0xff] %vm514, %v2564
        %2645 = vst.msk [vmem:[#allocation3 + $0x280] sm:$0xff] %vm514, %v2566
        %2646 = vst.msk [vmem:[#allocation3 + $0x2a8] sm:$0xff] %vm514, %v2568
        %2647 = vst.msk [vmem:[#allocation3 + $0x2d0] sm:$0xff] %vm514, %v2570
        %2648 = vst.msk [vmem:[#allocation3 + $0x2f8] sm:$0xff] %vm514, %v2572
        %2649 = vst.msk [vmem:[#allocation3 + $0x320] sm:$0xff] %vm514, %v2574
        %2650 = vst.msk [vmem:[#allocation3 + $0x348] sm:$0xff] %vm514, %v2576
        %2651 = vst.msk [vmem:[#allocation3 + $0x370] sm:$0xff] %vm514, %v2578
        %2652 = vst.msk [vmem:[#allocation3 + $0x398] sm:$0xff] %vm514, %v2580
        %2653 = vst.msk [vmem:[#allocation3 + $0x3c0] sm:$0xff] %vm514, %v2582
        %2654 = vst.msk [vmem:[#allocation3 + $0x3e8] sm:$0xff] %vm514, %v2584
        %2655 = vst.msk [vmem:[#allocation3 + $0x410] sm:$0xff] %vm514, %v2586
        %2656 = vst.msk [vmem:[#allocation3 + $0x438] sm:$0xff] %vm514, %v2588
        %2657 = vst.msk [vmem:[#allocation3 + $0x460] sm:$0xff] %vm514, %v2590
        %2658 = vst.msk [vmem:[#allocation3 + $0x488] sm:$0xff] %vm514, %v2592
        %2659 = vst.msk [vmem:[#allocation3 + $0x4b0] sm:$0xff] %vm514, %v2594
        %2660 = vst.msk [vmem:[#allocation3 + $0x4d8] sm:$0xff] %vm514, %v2596
        %v2661 = vld [vmem:[#allocation2 + $0x2] sm:$0xff]
        %v2662 = vld [vmem:[#allocation2 + $0xa] sm:$0xff]
        %v2663 = vld [vmem:[#allocation2 + $0x1a] sm:$0xff]
        %v2664 = vld [vmem:[#allocation2 + $0x22] sm:$0xff]
        %v2665 = vld [vmem:[#allocation2 + $0x32] sm:$0xff]
        %v2666 = vld [vmem:[#allocation2 + $0x3a] sm:$0xff]
        %v2667 = vld [vmem:[#allocation2 + $0x4a] sm:$0xff]
        %v2668 = vld [vmem:[#allocation2 + $0x52] sm:$0xff]
        %v2669 = vld [vmem:[#allocation2 + $0x62] sm:$0xff]
        %v2670 = vld [vmem:[#allocation2 + $0x6a] sm:$0xff]
        %v2671 = vld [vmem:[#allocation2 + $0x7a] sm:$0xff]
        %v2672 = vld [vmem:[#allocation2 + $0x82] sm:$0xff]
        %v2673 = vld [vmem:[#allocation2 + $0x92] sm:$0xff]
        %v2674 = vld [vmem:[#allocation2 + $0x9a] sm:$0xff]
        %v2675 = vld [vmem:[#allocation2 + $0xaa] sm:$0xff]
        %v2676 = vld [vmem:[#allocation2 + $0xb2] sm:$0xff]
        %v2677 = vld [vmem:[#allocation2 + $0xc2] sm:$0xff]
        %v2678 = vld [vmem:[#allocation2 + $0xca] sm:$0xff]
        %v2679 = vld [vmem:[#allocation2 + $0xda] sm:$0xff]
        %v2680 = vld [vmem:[#allocation2 + $0xe2] sm:$0xff]
        %v2681 = vld [vmem:[#allocation2 + $0xf2] sm:$0xff]
        %v2682 = vld [vmem:[#allocation2 + $0xfa] sm:$0xff]
        %v2683 = vld [vmem:[#allocation2 + $0x10a] sm:$0xff]
        %v2684 = vld [vmem:[#allocation2 + $0x112] sm:$0xff]
        %v2685 = vld [vmem:[#allocation2 + $0x122] sm:$0xff]
        %v2686 = vld [vmem:[#allocation2 + $0x12a] sm:$0xff]
        %v2687 = vld [vmem:[#allocation2 + $0x13a] sm:$0xff]
        %v2688 = vld [vmem:[#allocation2 + $0x142] sm:$0xff]
        %v2689 = vld [vmem:[#allocation2 + $0x152] sm:$0xff]
        %v2690 = vld [vmem:[#allocation2 + $0x15a] sm:$0xff]
        %v2691 = vld [vmem:[#allocation2 + $0x16a] sm:$0xff]
        %v2692 = vld [vmem:[#allocation2 + $0x172] sm:$0xff]
        %2693 = vst.msk [vmem:[#allocation3 + $0x8] sm:$0xff] %vm169, %v2661
        %2694 = vst.msk [vmem:[#allocation3 + $0x30] sm:$0xff] %vm169, %v2662
        %2695 = vst.msk [vmem:[#allocation3 + $0x58] sm:$0xff] %vm169, %v2663
        %2696 = vst.msk [vmem:[#allocation3 + $0x80] sm:$0xff] %vm169, %v2664
        %2697 = vst.msk [vmem:[#allocation3 + $0xa8] sm:$0xff] %vm169, %v2665
        %2698 = vst.msk [vmem:[#allocation3 + $0xd0] sm:$0xff] %vm169, %v2666
        %2699 = vst.msk [vmem:[#allocation3 + $0xf8] sm:$0xff] %vm169, %v2667
        %2700 = vst.msk [vmem:[#allocation3 + $0x120] sm:$0xff] %vm169, %v2668
        %2701 = vst.msk [vmem:[#allocation3 + $0x148] sm:$0xff] %vm169, %v2669
        %2702 = vst.msk [vmem:[#allocation3 + $0x170] sm:$0xff] %vm169, %v2670
        %2703 = vst.msk [vmem:[#allocation3 + $0x198] sm:$0xff] %vm169, %v2671
        %2704 = vst.msk [vmem:[#allocation3 + $0x1c0] sm:$0xff] %vm169, %v2672
        %2705 = vst.msk [vmem:[#allocation3 + $0x1e8] sm:$0xff] %vm169, %v2673
        %2706 = vst.msk [vmem:[#allocation3 + $0x210] sm:$0xff] %vm169, %v2674
        %2707 = vst.msk [vmem:[#allocation3 + $0x238] sm:$0xff] %vm169, %v2675
        %2708 = vst.msk [vmem:[#allocation3 + $0x260] sm:$0xff] %vm169, %v2676
        %2709 = vst.msk [vmem:[#allocation3 + $0x288] sm:$0xff] %vm169, %v2677
        %2710 = vst.msk [vmem:[#allocation3 + $0x2b0] sm:$0xff] %vm169, %v2678
        %2711 = vst.msk [vmem:[#allocation3 + $0x2d8] sm:$0xff] %vm169, %v2679
        %2712 = vst.msk [vmem:[#allocation3 + $0x300] sm:$0xff] %vm169, %v2680
        %2713 = vst.msk [vmem:[#allocation3 + $0x328] sm:$0xff] %vm169, %v2681
        %2714 = vst.msk [vmem:[#allocation3 + $0x350] sm:$0xff] %vm169, %v2682
        %2715 = vst.msk [vmem:[#allocation3 + $0x378] sm:$0xff] %vm169, %v2683
        %2716 = vst.msk [vmem:[#allocation3 + $0x3a0] sm:$0xff] %vm169, %v2684
        %2717 = vst.msk [vmem:[#allocation3 + $0x3c8] sm:$0xff] %vm169, %v2685
        %2718 = vst.msk [vmem:[#allocation3 + $0x3f0] sm:$0xff] %vm169, %v2686
        %2719 = vst.msk [vmem:[#allocation3 + $0x418] sm:$0xff] %vm169, %v2687
        %2720 = vst.msk [vmem:[#allocation3 + $0x440] sm:$0xff] %vm169, %v2688
        %2721 = vst.msk [vmem:[#allocation3 + $0x468] sm:$0xff] %vm169, %v2689
        %2722 = vst.msk [vmem:[#allocation3 + $0x490] sm:$0xff] %vm169, %v2690
        %2723 = vst.msk [vmem:[#allocation3 + $0x4b8] sm:$0xff] %vm169, %v2691
        %2724 = vst.msk [vmem:[#allocation3 + $0x4e0] sm:$0xff] %vm169, %v2692
        %v2725 = vld [vmem:[%s257] sm:$0xff]
        %v2726 = vld [vmem:[%s257 + $0x8] sm:$0xff]
        %v2727 = vld [vmem:[%s257 + $0x18] sm:$0xff]
        %v2728 = vld [vmem:[%s257 + $0x20] sm:$0xff]
        %v2729 = vld [vmem:[%s257 + $0x30] sm:$0xff]
        %v2730 = vld [vmem:[%s257 + $0x38] sm:$0xff]
        %v2731 = vld [vmem:[%s257 + $0x48] sm:$0xff]
        %v2732 = vld [vmem:[%s257 + $0x50] sm:$0xff]
        %v2733 = vld [vmem:[%s257 + $0x60] sm:$0xff]
        %v2734 = vld [vmem:[%s257 + $0x68] sm:$0xff]
        %v2735 = vld [vmem:[%s257 + $0x78] sm:$0xff]
        %v2736 = vld [vmem:[%s257 + $0x80] sm:$0xff]
        %v2737 = vld [vmem:[%s257 + $0x90] sm:$0xff]
        %v2738 = vld [vmem:[%s257 + $0x98] sm:$0xff]
        %v2739 = vld [vmem:[%s257 + $0xa8] sm:$0xff]
        %v2740 = vld [vmem:[%s257 + $0xb0] sm:$0xff]
        %v2741 = vld [vmem:[%s257 + $0xc0] sm:$0xff]
        %v2742 = vld [vmem:[%s257 + $0xc8] sm:$0xff]
        %v2743 = vld [vmem:[%s257 + $0xd8] sm:$0xff]
        %v2744 = vld [vmem:[%s257 + $0xe0] sm:$0xff]
        %v2745 = vld [vmem:[%s257 + $0xf0] sm:$0xff]
        %v2746 = vld [vmem:[%s257 + $0xf8] sm:$0xff]
        %v2747 = vld [vmem:[%s257 + $0x108] sm:$0xff]
        %v2748 = vld [vmem:[%s257 + $0x110] sm:$0xff]
        %v2749 = vld [vmem:[%s257 + $0x120] sm:$0xff]
        %v2750 = vld [vmem:[%s257 + $0x128] sm:$0xff]
        %v2751 = vld [vmem:[%s257 + $0x138] sm:$0xff]
        %v2752 = vld [vmem:[%s257 + $0x140] sm:$0xff]
        %v2753 = vld [vmem:[%s257 + $0x150] sm:$0xff]
        %v2754 = vld [vmem:[%s257 + $0x158] sm:$0xff]
        %v2755 = vld [vmem:[%s257 + $0x168] sm:$0xff]
        %v2756 = vld [vmem:[%s257 + $0x170] sm:$0xff]
        %2789 = vrot.lane.b32.xlu0 %v2725, 64
        %v2790 = vpop.permute.xlu0 %2789
        %2791 = vrot.lane.b32.xlu0 %v2726, 64
        %v2792 = vpop.permute.xlu0 %2791
        %2793 = vrot.lane.b32.xlu0 %v2727, 64
        %v2794 = vpop.permute.xlu0 %2793
        %2795 = vrot.lane.b32.xlu0 %v2728, 64
        %v2796 = vpop.permute.xlu0 %2795
        %2797 = vrot.lane.b32.xlu0 %v2729, 64
        %v2798 = vpop.permute.xlu0 %2797
        %2799 = vrot.lane.b32.xlu0 %v2730, 64
        %v2800 = vpop.permute.xlu0 %2799
        %2801 = vrot.lane.b32.xlu0 %v2731, 64
        %v2802 = vpop.permute.xlu0 %2801
        %2803 = vrot.lane.b32.xlu0 %v2732, 64
        %v2804 = vpop.permute.xlu0 %2803
        %2805 = vrot.lane.b32.xlu0 %v2733, 64
        %v2806 = vpop.permute.xlu0 %2805
        %2807 = vrot.lane.b32.xlu0 %v2734, 64
        %v2808 = vpop.permute.xlu0 %2807
        %2809 = vrot.lane.b32.xlu0 %v2735, 64
        %v2810 = vpop.permute.xlu0 %2809
        %2811 = vrot.lane.b32.xlu0 %v2736, 64
        %v2812 = vpop.permute.xlu0 %2811
        %2813 = vrot.lane.b32.xlu0 %v2737, 64
        %v2814 = vpop.permute.xlu0 %2813
        %2815 = vrot.lane.b32.xlu0 %v2738, 64
        %v2816 = vpop.permute.xlu0 %2815
        %2817 = vrot.lane.b32.xlu0 %v2739, 64
        %v2818 = vpop.permute.xlu0 %2817
        %2819 = vrot.lane.b32.xlu0 %v2740, 64
        %v2820 = vpop.permute.xlu0 %2819
        %2821 = vrot.lane.b32.xlu0 %v2741, 64
        %v2822 = vpop.permute.xlu0 %2821
        %2823 = vrot.lane.b32.xlu0 %v2742, 64
        %v2824 = vpop.permute.xlu0 %2823
        %2825 = vrot.lane.b32.xlu0 %v2743, 64
        %v2826 = vpop.permute.xlu0 %2825
        %2827 = vrot.lane.b32.xlu0 %v2744, 64
        %v2828 = vpop.permute.xlu0 %2827
        %2829 = vrot.lane.b32.xlu0 %v2745, 64
        %v2830 = vpop.permute.xlu0 %2829
        %2831 = vrot.lane.b32.xlu0 %v2746, 64
        %v2832 = vpop.permute.xlu0 %2831
        %2833 = vrot.lane.b32.xlu0 %v2747, 64
        %v2834 = vpop.permute.xlu0 %2833
        %2835 = vrot.lane.b32.xlu0 %v2748, 64
        %v2836 = vpop.permute.xlu0 %2835
        %2837 = vrot.lane.b32.xlu0 %v2749, 64
        %v2838 = vpop.permute.xlu0 %2837
        %2839 = vrot.lane.b32.xlu0 %v2750, 64
        %v2840 = vpop.permute.xlu0 %2839
        %2841 = vrot.lane.b32.xlu0 %v2751, 64
        %v2842 = vpop.permute.xlu0 %2841
        %2843 = vrot.lane.b32.xlu0 %v2752, 64
        %v2844 = vpop.permute.xlu0 %2843
        %2845 = vrot.lane.b32.xlu0 %v2753, 64
        %v2846 = vpop.permute.xlu0 %2845
        %2847 = vrot.lane.b32.xlu0 %v2754, 64
        %v2848 = vpop.permute.xlu0 %2847
        %2849 = vrot.lane.b32.xlu0 %v2755, 64
        %v2850 = vpop.permute.xlu0 %2849
        %2851 = vrot.lane.b32.xlu0 %v2756, 64
        %v2852 = vpop.permute.xlu0 %2851
        %2885 = vst.msk [vmem:[#allocation3 + $0x8] sm:$0xff] %vm514, %v2790
        %2886 = vst.msk [vmem:[#allocation3 + $0x30] sm:$0xff] %vm514, %v2792
        %2887 = vst.msk [vmem:[#allocation3 + $0x58] sm:$0xff] %vm514, %v2794
        %2888 = vst.msk [vmem:[#allocation3 + $0x80] sm:$0xff] %vm514, %v2796
        %2889 = vst.msk [vmem:[#allocation3 + $0xa8] sm:$0xff] %vm514, %v2798
        %2890 = vst.msk [vmem:[#allocation3 + $0xd0] sm:$0xff] %vm514, %v2800
        %2891 = vst.msk [vmem:[#allocation3 + $0xf8] sm:$0xff] %vm514, %v2802
        %2892 = vst.msk [vmem:[#allocation3 + $0x120] sm:$0xff] %vm514, %v2804
        %2893 = vst.msk [vmem:[#allocation3 + $0x148] sm:$0xff] %vm514, %v2806
        %2894 = vst.msk [vmem:[#allocation3 + $0x170] sm:$0xff] %vm514, %v2808
        %2895 = vst.msk [vmem:[#allocation3 + $0x198] sm:$0xff] %vm514, %v2810
        %2896 = vst.msk [vmem:[#allocation3 + $0x1c0] sm:$0xff] %vm514, %v2812
        %2897 = vst.msk [vmem:[#allocation3 + $0x1e8] sm:$0xff] %vm514, %v2814
        %2898 = vst.msk [vmem:[#allocation3 + $0x210] sm:$0xff] %vm514, %v2816
        %2899 = vst.msk [vmem:[#allocation3 + $0x238] sm:$0xff] %vm514, %v2818
        %2900 = vst.msk [vmem:[#allocation3 + $0x260] sm:$0xff] %vm514, %v2820
        %2901 = vst.msk [vmem:[#allocation3 + $0x288] sm:$0xff] %vm514, %v2822
        %2902 = vst.msk [vmem:[#allocation3 + $0x2b0] sm:$0xff] %vm514, %v2824
        %2903 = vst.msk [vmem:[#allocation3 + $0x2d8] sm:$0xff] %vm514, %v2826
        %2904 = vst.msk [vmem:[#allocation3 + $0x300] sm:$0xff] %vm514, %v2828
        %2905 = vst.msk [vmem:[#allocation3 + $0x328] sm:$0xff] %vm514, %v2830
        %2906 = vst.msk [vmem:[#allocation3 + $0x350] sm:$0xff] %vm514, %v2832
        %2907 = vst.msk [vmem:[#allocation3 + $0x378] sm:$0xff] %vm514, %v2834
        %2908 = vst.msk [vmem:[#allocation3 + $0x3a0] sm:$0xff] %vm514, %v2836
        %2909 = vst.msk [vmem:[#allocation3 + $0x3c8] sm:$0xff] %vm514, %v2838
        %2910 = vst.msk [vmem:[#allocation3 + $0x3f0] sm:$0xff] %vm514, %v2840
        %2911 = vst.msk [vmem:[#allocation3 + $0x418] sm:$0xff] %vm514, %v2842
        %2912 = vst.msk [vmem:[#allocation3 + $0x440] sm:$0xff] %vm514, %v2844
        %2913 = vst.msk [vmem:[#allocation3 + $0x468] sm:$0xff] %vm514, %v2846
        %2914 = vst.msk [vmem:[#allocation3 + $0x490] sm:$0xff] %vm514, %v2848
        %2915 = vst.msk [vmem:[#allocation3 + $0x4b8] sm:$0xff] %vm514, %v2850
        %2916 = vst.msk [vmem:[#allocation3 + $0x4e0] sm:$0xff] %vm514, %v2852
        %v2917 = vld [vmem:[%s257 + $0x1] sm:$0xff]
        %v2918 = vld [vmem:[%s257 + $0x9] sm:$0xff]
        %v2919 = vld [vmem:[%s257 + $0x19] sm:$0xff]
        %v2920 = vld [vmem:[%s257 + $0x21] sm:$0xff]
        %v2921 = vld [vmem:[%s257 + $0x31] sm:$0xff]
        %v2922 = vld [vmem:[%s257 + $0x39] sm:$0xff]
        %v2923 = vld [vmem:[%s257 + $0x49] sm:$0xff]
        %v2924 = vld [vmem:[%s257 + $0x51] sm:$0xff]
        %v2925 = vld [vmem:[%s257 + $0x61] sm:$0xff]
        %v2926 = vld [vmem:[%s257 + $0x69] sm:$0xff]
        %v2927 = vld [vmem:[%s257 + $0x79] sm:$0xff]
        %v2928 = vld [vmem:[%s257 + $0x81] sm:$0xff]
        %v2929 = vld [vmem:[%s257 + $0x91] sm:$0xff]
        %v2930 = vld [vmem:[%s257 + $0x99] sm:$0xff]
        %v2931 = vld [vmem:[%s257 + $0xa9] sm:$0xff]
        %v2932 = vld [vmem:[%s257 + $0xb1] sm:$0xff]
        %v2933 = vld [vmem:[%s257 + $0xc1] sm:$0xff]
        %v2934 = vld [vmem:[%s257 + $0xc9] sm:$0xff]
        %v2935 = vld [vmem:[%s257 + $0xd9] sm:$0xff]
        %v2936 = vld [vmem:[%s257 + $0xe1] sm:$0xff]
        %v2937 = vld [vmem:[%s257 + $0xf1] sm:$0xff]
        %v2938 = vld [vmem:[%s257 + $0xf9] sm:$0xff]
        %v2939 = vld [vmem:[%s257 + $0x109] sm:$0xff]
        %v2940 = vld [vmem:[%s257 + $0x111] sm:$0xff]
        %v2941 = vld [vmem:[%s257 + $0x121] sm:$0xff]
        %v2942 = vld [vmem:[%s257 + $0x129] sm:$0xff]
        %v2943 = vld [vmem:[%s257 + $0x139] sm:$0xff]
        %v2944 = vld [vmem:[%s257 + $0x141] sm:$0xff]
        %v2945 = vld [vmem:[%s257 + $0x151] sm:$0xff]
        %v2946 = vld [vmem:[%s257 + $0x159] sm:$0xff]
        %v2947 = vld [vmem:[%s257 + $0x169] sm:$0xff]
        %v2948 = vld [vmem:[%s257 + $0x171] sm:$0xff]
        %2949 = vst.msk [vmem:[#allocation3 + $0x10] sm:$0xff] %vm169, %v2917
        %2950 = vst.msk [vmem:[#allocation3 + $0x38] sm:$0xff] %vm169, %v2918
        %2951 = vst.msk [vmem:[#allocation3 + $0x60] sm:$0xff] %vm169, %v2919
        %2952 = vst.msk [vmem:[#allocation3 + $0x88] sm:$0xff] %vm169, %v2920
        %2953 = vst.msk [vmem:[#allocation3 + $0xb0] sm:$0xff] %vm169, %v2921
        %2954 = vst.msk [vmem:[#allocation3 + $0xd8] sm:$0xff] %vm169, %v2922
        %2955 = vst.msk [vmem:[#allocation3 + $0x100] sm:$0xff] %vm169, %v2923
        %2956 = vst.msk [vmem:[#allocation3 + $0x128] sm:$0xff] %vm169, %v2924
        %2957 = vst.msk [vmem:[#allocation3 + $0x150] sm:$0xff] %vm169, %v2925
        %2958 = vst.msk [vmem:[#allocation3 + $0x178] sm:$0xff] %vm169, %v2926
        %2959 = vst.msk [vmem:[#allocation3 + $0x1a0] sm:$0xff] %vm169, %v2927
        %2960 = vst.msk [vmem:[#allocation3 + $0x1c8] sm:$0xff] %vm169, %v2928
        %2961 = vst.msk [vmem:[#allocation3 + $0x1f0] sm:$0xff] %vm169, %v2929
        %2962 = vst.msk [vmem:[#allocation3 + $0x218] sm:$0xff] %vm169, %v2930
        %2963 = vst.msk [vmem:[#allocation3 + $0x240] sm:$0xff] %vm169, %v2931
        %2964 = vst.msk [vmem:[#allocation3 + $0x268] sm:$0xff] %vm169, %v2932
        %2965 = vst.msk [vmem:[#allocation3 + $0x290] sm:$0xff] %vm169, %v2933
        %2966 = vst.msk [vmem:[#allocation3 + $0x2b8] sm:$0xff] %vm169, %v2934
        %2967 = vst.msk [vmem:[#allocation3 + $0x2e0] sm:$0xff] %vm169, %v2935
        %2968 = vst.msk [vmem:[#allocation3 + $0x308] sm:$0xff] %vm169, %v2936
        %2969 = vst.msk [vmem:[#allocation3 + $0x330] sm:$0xff] %vm169, %v2937
        %2970 = vst.msk [vmem:[#allocation3 + $0x358] sm:$0xff] %vm169, %v2938
        %2971 = vst.msk [vmem:[#allocation3 + $0x380] sm:$0xff] %vm169, %v2939
        %2972 = vst.msk [vmem:[#allocation3 + $0x3a8] sm:$0xff] %vm169, %v2940
        %2973 = vst.msk [vmem:[#allocation3 + $0x3d0] sm:$0xff] %vm169, %v2941
        %2974 = vst.msk [vmem:[#allocation3 + $0x3f8] sm:$0xff] %vm169, %v2942
        %2975 = vst.msk [vmem:[#allocation3 + $0x420] sm:$0xff] %vm169, %v2943
        %2976 = vst.msk [vmem:[#allocation3 + $0x448] sm:$0xff] %vm169, %v2944
        %2977 = vst.msk [vmem:[#allocation3 + $0x470] sm:$0xff] %vm169, %v2945
        %2978 = vst.msk [vmem:[#allocation3 + $0x498] sm:$0xff] %vm169, %v2946
        %2979 = vst.msk [vmem:[#allocation3 + $0x4c0] sm:$0xff] %vm169, %v2947
        %2980 = vst.msk [vmem:[#allocation3 + $0x4e8] sm:$0xff] %vm169, %v2948
        %v2981 = vld [vmem:[%s257 + $0x2] sm:$0xff]
        %v2982 = vld [vmem:[%s257 + $0xa] sm:$0xff]
        %v2983 = vld [vmem:[%s257 + $0x1a] sm:$0xff]
        %v2984 = vld [vmem:[%s257 + $0x22] sm:$0xff]
        %v2985 = vld [vmem:[%s257 + $0x32] sm:$0xff]
        %v2986 = vld [vmem:[%s257 + $0x3a] sm:$0xff]
        %v2987 = vld [vmem:[%s257 + $0x4a] sm:$0xff]
        %v2988 = vld [vmem:[%s257 + $0x52] sm:$0xff]
        %v2989 = vld [vmem:[%s257 + $0x62] sm:$0xff]
        %v2990 = vld [vmem:[%s257 + $0x6a] sm:$0xff]
        %v2991 = vld [vmem:[%s257 + $0x7a] sm:$0xff]
        %v2992 = vld [vmem:[%s257 + $0x82] sm:$0xff]
        %v2993 = vld [vmem:[%s257 + $0x92] sm:$0xff]
        %v2994 = vld [vmem:[%s257 + $0x9a] sm:$0xff]
        %v2995 = vld [vmem:[%s257 + $0xaa] sm:$0xff]
        %v2996 = vld [vmem:[%s257 + $0xb2] sm:$0xff]
        %v2997 = vld [vmem:[%s257 + $0xc2] sm:$0xff]
        %v2998 = vld [vmem:[%s257 + $0xca] sm:$0xff]
        %v2999 = vld [vmem:[%s257 + $0xda] sm:$0xff]
        %v3000 = vld [vmem:[%s257 + $0xe2] sm:$0xff]
        %v3001 = vld [vmem:[%s257 + $0xf2] sm:$0xff]
        %v3002 = vld [vmem:[%s257 + $0xfa] sm:$0xff]
        %v3003 = vld [vmem:[%s257 + $0x10a] sm:$0xff]
        %v3004 = vld [vmem:[%s257 + $0x112] sm:$0xff]
        %v3005 = vld [vmem:[%s257 + $0x122] sm:$0xff]
        %v3006 = vld [vmem:[%s257 + $0x12a] sm:$0xff]
        %v3007 = vld [vmem:[%s257 + $0x13a] sm:$0xff]
        %v3008 = vld [vmem:[%s257 + $0x142] sm:$0xff]
        %v3009 = vld [vmem:[%s257 + $0x152] sm:$0xff]
        %v3010 = vld [vmem:[%s257 + $0x15a] sm:$0xff]
        %v3011 = vld [vmem:[%s257 + $0x16a] sm:$0xff]
        %v3012 = vld [vmem:[%s257 + $0x172] sm:$0xff]
        %3045 = vrot.lane.b32.xlu0 %v2981, 64
        %v3046 = vpop.permute.xlu0 %3045
        %3047 = vrot.lane.b32.xlu0 %v2982, 64
        %v3048 = vpop.permute.xlu0 %3047
        %3049 = vrot.lane.b32.xlu0 %v2983, 64
        %v3050 = vpop.permute.xlu0 %3049
        %3051 = vrot.lane.b32.xlu0 %v2984, 64
        %v3052 = vpop.permute.xlu0 %3051
        %3053 = vrot.lane.b32.xlu0 %v2985, 64
        %v3054 = vpop.permute.xlu0 %3053
        %3055 = vrot.lane.b32.xlu0 %v2986, 64
        %v3056 = vpop.permute.xlu0 %3055
        %3057 = vrot.lane.b32.xlu0 %v2987, 64
        %v3058 = vpop.permute.xlu0 %3057
        %3059 = vrot.lane.b32.xlu0 %v2988, 64
        %v3060 = vpop.permute.xlu0 %3059
        %3061 = vrot.lane.b32.xlu0 %v2989, 64
        %v3062 = vpop.permute.xlu0 %3061
        %3063 = vrot.lane.b32.xlu0 %v2990, 64
        %v3064 = vpop.permute.xlu0 %3063
        %3065 = vrot.lane.b32.xlu0 %v2991, 64
        %v3066 = vpop.permute.xlu0 %3065
        %3067 = vrot.lane.b32.xlu0 %v2992, 64
        %v3068 = vpop.permute.xlu0 %3067
        %3069 = vrot.lane.b32.xlu0 %v2993, 64
        %v3070 = vpop.permute.xlu0 %3069
        %3071 = vrot.lane.b32.xlu0 %v2994, 64
        %v3072 = vpop.permute.xlu0 %3071
        %3073 = vrot.lane.b32.xlu0 %v2995, 64
        %v3074 = vpop.permute.xlu0 %3073
        %3075 = vrot.lane.b32.xlu0 %v2996, 64
        %v3076 = vpop.permute.xlu0 %3075
        %3077 = vrot.lane.b32.xlu0 %v2997, 64
        %v3078 = vpop.permute.xlu0 %3077
        %3079 = vrot.lane.b32.xlu0 %v2998, 64
        %v3080 = vpop.permute.xlu0 %3079
        %3081 = vrot.lane.b32.xlu0 %v2999, 64
        %v3082 = vpop.permute.xlu0 %3081
        %3083 = vrot.lane.b32.xlu0 %v3000, 64
        %v3084 = vpop.permute.xlu0 %3083
        %3085 = vrot.lane.b32.xlu0 %v3001, 64
        %v3086 = vpop.permute.xlu0 %3085
        %3087 = vrot.lane.b32.xlu0 %v3002, 64
        %v3088 = vpop.permute.xlu0 %3087
        %3089 = vrot.lane.b32.xlu0 %v3003, 64
        %v3090 = vpop.permute.xlu0 %3089
        %3091 = vrot.lane.b32.xlu0 %v3004, 64
        %v3092 = vpop.permute.xlu0 %3091
        %3093 = vrot.lane.b32.xlu0 %v3005, 64
        %v3094 = vpop.permute.xlu0 %3093
        %3095 = vrot.lane.b32.xlu0 %v3006, 64
        %v3096 = vpop.permute.xlu0 %3095
        %3097 = vrot.lane.b32.xlu0 %v3007, 64
        %v3098 = vpop.permute.xlu0 %3097
        %3099 = vrot.lane.b32.xlu0 %v3008, 64
        %v3100 = vpop.permute.xlu0 %3099
        %3101 = vrot.lane.b32.xlu0 %v3009, 64
        %v3102 = vpop.permute.xlu0 %3101
        %3103 = vrot.lane.b32.xlu0 %v3010, 64
        %v3104 = vpop.permute.xlu0 %3103
        %3105 = vrot.lane.b32.xlu0 %v3011, 64
        %v3106 = vpop.permute.xlu0 %3105
        %3107 = vrot.lane.b32.xlu0 %v3012, 64
        %v3108 = vpop.permute.xlu0 %3107
        %3141 = vst.msk [vmem:[#allocation3 + $0x10] sm:$0xff] %vm514, %v3046
        %3142 = vst.msk [vmem:[#allocation3 + $0x38] sm:$0xff] %vm514, %v3048
        %3143 = vst.msk [vmem:[#allocation3 + $0x60] sm:$0xff] %vm514, %v3050
        %3144 = vst.msk [vmem:[#allocation3 + $0x88] sm:$0xff] %vm514, %v3052
        %3145 = vst.msk [vmem:[#allocation3 + $0xb0] sm:$0xff] %vm514, %v3054
        %3146 = vst.msk [vmem:[#allocation3 + $0xd8] sm:$0xff] %vm514, %v3056
        %3147 = vst.msk [vmem:[#allocation3 + $0x100] sm:$0xff] %vm514, %v3058
        %3148 = vst.msk [vmem:[#allocation3 + $0x128] sm:$0xff] %vm514, %v3060
        %3149 = vst.msk [vmem:[#allocation3 + $0x150] sm:$0xff] %vm514, %v3062
        %3150 = vst.msk [vmem:[#allocation3 + $0x178] sm:$0xff] %vm514, %v3064
        %3151 = vst.msk [vmem:[#allocation3 + $0x1a0] sm:$0xff] %vm514, %v3066
        %3152 = vst.msk [vmem:[#allocation3 + $0x1c8] sm:$0xff] %vm514, %v3068
        %3153 = vst.msk [vmem:[#allocation3 + $0x1f0] sm:$0xff] %vm514, %v3070
        %3154 = vst.msk [vmem:[#allocation3 + $0x218] sm:$0xff] %vm514, %v3072
        %3155 = vst.msk [vmem:[#allocation3 + $0x240] sm:$0xff] %vm514, %v3074
        %3156 = vst.msk [vmem:[#allocation3 + $0x268] sm:$0xff] %vm514, %v3076
        %3157 = vst.msk [vmem:[#allocation3 + $0x290] sm:$0xff] %vm514, %v3078
        %3158 = vst.msk [vmem:[#allocation3 + $0x2b8] sm:$0xff] %vm514, %v3080
        %3159 = vst.msk [vmem:[#allocation3 + $0x2e0] sm:$0xff] %vm514, %v3082
        %3160 = vst.msk [vmem:[#allocation3 + $0x308] sm:$0xff] %vm514, %v3084
        %3161 = vst.msk [vmem:[#allocation3 + $0x330] sm:$0xff] %vm514, %v3086
        %3162 = vst.msk [vmem:[#allocation3 + $0x358] sm:$0xff] %vm514, %v3088
        %3163 = vst.msk [vmem:[#allocation3 + $0x380] sm:$0xff] %vm514, %v3090
        %3164 = vst.msk [vmem:[#allocation3 + $0x3a8] sm:$0xff] %vm514, %v3092
        %3165 = vst.msk [vmem:[#allocation3 + $0x3d0] sm:$0xff] %vm514, %v3094
        %3166 = vst.msk [vmem:[#allocation3 + $0x3f8] sm:$0xff] %vm514, %v3096
        %3167 = vst.msk [vmem:[#allocation3 + $0x420] sm:$0xff] %vm514, %v3098
        %3168 = vst.msk [vmem:[#allocation3 + $0x448] sm:$0xff] %vm514, %v3100
        %3169 = vst.msk [vmem:[#allocation3 + $0x470] sm:$0xff] %vm514, %v3102
        %3170 = vst.msk [vmem:[#allocation3 + $0x498] sm:$0xff] %vm514, %v3104
        %3171 = vst.msk [vmem:[#allocation3 + $0x4c0] sm:$0xff] %vm514, %v3106
        %3172 = vst.msk [vmem:[#allocation3 + $0x4e8] sm:$0xff] %vm514, %v3108
        %v3173 = vld [vmem:[%s1059] sm:$0xff]
        %v3174 = vld [vmem:[%s1059 + $0x8] sm:$0xff]
        %v3175 = vld [vmem:[%s1059 + $0x18] sm:$0xff]
        %v3176 = vld [vmem:[%s1059 + $0x20] sm:$0xff]
        %v3177 = vld [vmem:[%s1059 + $0x30] sm:$0xff]
        %v3178 = vld [vmem:[%s1059 + $0x38] sm:$0xff]
        %v3179 = vld [vmem:[%s1059 + $0x48] sm:$0xff]
        %v3180 = vld [vmem:[%s1059 + $0x50] sm:$0xff]
        %v3181 = vld [vmem:[%s1059 + $0x60] sm:$0xff]
        %v3182 = vld [vmem:[%s1059 + $0x68] sm:$0xff]
        %v3183 = vld [vmem:[%s1059 + $0x78] sm:$0xff]
        %v3184 = vld [vmem:[%s1059 + $0x80] sm:$0xff]
        %v3185 = vld [vmem:[%s1059 + $0x90] sm:$0xff]
        %v3186 = vld [vmem:[%s1059 + $0x98] sm:$0xff]
        %v3187 = vld [vmem:[%s1059 + $0xa8] sm:$0xff]
        %v3188 = vld [vmem:[%s1059 + $0xb0] sm:$0xff]
        %v3189 = vld [vmem:[%s1059 + $0xc0] sm:$0xff]
        %v3190 = vld [vmem:[%s1059 + $0xc8] sm:$0xff]
        %v3191 = vld [vmem:[%s1059 + $0xd8] sm:$0xff]
        %v3192 = vld [vmem:[%s1059 + $0xe0] sm:$0xff]
        %v3193 = vld [vmem:[%s1059 + $0xf0] sm:$0xff]
        %v3194 = vld [vmem:[%s1059 + $0xf8] sm:$0xff]
        %v3195 = vld [vmem:[%s1059 + $0x108] sm:$0xff]
        %v3196 = vld [vmem:[%s1059 + $0x110] sm:$0xff]
        %v3197 = vld [vmem:[%s1059 + $0x120] sm:$0xff]
        %v3198 = vld [vmem:[%s1059 + $0x128] sm:$0xff]
        %v3199 = vld [vmem:[%s1059 + $0x138] sm:$0xff]
        %v3200 = vld [vmem:[%s1059 + $0x140] sm:$0xff]
        %v3201 = vld [vmem:[%s1059 + $0x150] sm:$0xff]
        %v3202 = vld [vmem:[%s1059 + $0x158] sm:$0xff]
        %v3203 = vld [vmem:[%s1059 + $0x168] sm:$0xff]
        %v3204 = vld [vmem:[%s1059 + $0x170] sm:$0xff]
        %3205 = vst.msk [vmem:[#allocation3 + $0x18] sm:$0xff] %vm169, %v3173
        %3206 = vst.msk [vmem:[#allocation3 + $0x40] sm:$0xff] %vm169, %v3174
        %3207 = vst.msk [vmem:[#allocation3 + $0x68] sm:$0xff] %vm169, %v3175
        %3208 = vst.msk [vmem:[#allocation3 + $0x90] sm:$0xff] %vm169, %v3176
        %3209 = vst.msk [vmem:[#allocation3 + $0xb8] sm:$0xff] %vm169, %v3177
        %3210 = vst.msk [vmem:[#allocation3 + $0xe0] sm:$0xff] %vm169, %v3178
        %3211 = vst.msk [vmem:[#allocation3 + $0x108] sm:$0xff] %vm169, %v3179
        %3212 = vst.msk [vmem:[#allocation3 + $0x130] sm:$0xff] %vm169, %v3180
        %3213 = vst.msk [vmem:[#allocation3 + $0x158] sm:$0xff] %vm169, %v3181
        %3214 = vst.msk [vmem:[#allocation3 + $0x180] sm:$0xff] %vm169, %v3182
        %3215 = vst.msk [vmem:[#allocation3 + $0x1a8] sm:$0xff] %vm169, %v3183
        %3216 = vst.msk [vmem:[#allocation3 + $0x1d0] sm:$0xff] %vm169, %v3184
        %3217 = vst.msk [vmem:[#allocation3 + $0x1f8] sm:$0xff] %vm169, %v3185
        %3218 = vst.msk [vmem:[#allocation3 + $0x220] sm:$0xff] %vm169, %v3186
        %3219 = vst.msk [vmem:[#allocation3 + $0x248] sm:$0xff] %vm169, %v3187
        %3220 = vst.msk [vmem:[#allocation3 + $0x270] sm:$0xff] %vm169, %v3188
        %3221 = vst.msk [vmem:[#allocation3 + $0x298] sm:$0xff] %vm169, %v3189
        %3222 = vst.msk [vmem:[#allocation3 + $0x2c0] sm:$0xff] %vm169, %v3190
        %3223 = vst.msk [vmem:[#allocation3 + $0x2e8] sm:$0xff] %vm169, %v3191
        %3224 = vst.msk [vmem:[#allocation3 + $0x310] sm:$0xff] %vm169, %v3192
        %3225 = vst.msk [vmem:[#allocation3 + $0x338] sm:$0xff] %vm169, %v3193
        %3226 = vst.msk [vmem:[#allocation3 + $0x360] sm:$0xff] %vm169, %v3194
        %3227 = vst.msk [vmem:[#allocation3 + $0x388] sm:$0xff] %vm169, %v3195
        %3228 = vst.msk [vmem:[#allocation3 + $0x3b0] sm:$0xff] %vm169, %v3196
        %3229 = vst.msk [vmem:[#allocation3 + $0x3d8] sm:$0xff] %vm169, %v3197
        %3230 = vst.msk [vmem:[#allocation3 + $0x400] sm:$0xff] %vm169, %v3198
        %3231 = vst.msk [vmem:[#allocation3 + $0x428] sm:$0xff] %vm169, %v3199
        %3232 = vst.msk [vmem:[#allocation3 + $0x450] sm:$0xff] %vm169, %v3200
        %3233 = vst.msk [vmem:[#allocation3 + $0x478] sm:$0xff] %vm169, %v3201
        %3234 = vst.msk [vmem:[#allocation3 + $0x4a0] sm:$0xff] %vm169, %v3202
        %3235 = vst.msk [vmem:[#allocation3 + $0x4c8] sm:$0xff] %vm169, %v3203
        %3236 = vst.msk [vmem:[#allocation3 + $0x4f0] sm:$0xff] %vm169, %v3204
        %v3237 = vld [vmem:[%s1059 + $0x1] sm:$0xff]
        %v3238 = vld [vmem:[%s1059 + $0x9] sm:$0xff]
        %v3239 = vld [vmem:[%s1059 + $0x19] sm:$0xff]
        %v3240 = vld [vmem:[%s1059 + $0x21] sm:$0xff]
        %v3241 = vld [vmem:[%s1059 + $0x31] sm:$0xff]
        %v3242 = vld [vmem:[%s1059 + $0x39] sm:$0xff]
        %v3243 = vld [vmem:[%s1059 + $0x49] sm:$0xff]
        %v3244 = vld [vmem:[%s1059 + $0x51] sm:$0xff]
        %v3245 = vld [vmem:[%s1059 + $0x61] sm:$0xff]
        %v3246 = vld [vmem:[%s1059 + $0x69] sm:$0xff]
        %v3247 = vld [vmem:[%s1059 + $0x79] sm:$0xff]
        %v3248 = vld [vmem:[%s1059 + $0x81] sm:$0xff]
        %v3249 = vld [vmem:[%s1059 + $0x91] sm:$0xff]
        %v3250 = vld [vmem:[%s1059 + $0x99] sm:$0xff]
        %v3251 = vld [vmem:[%s1059 + $0xa9] sm:$0xff]
        %v3252 = vld [vmem:[%s1059 + $0xb1] sm:$0xff]
        %v3253 = vld [vmem:[%s1059 + $0xc1] sm:$0xff]
        %v3254 = vld [vmem:[%s1059 + $0xc9] sm:$0xff]
        %v3255 = vld [vmem:[%s1059 + $0xd9] sm:$0xff]
        %v3256 = vld [vmem:[%s1059 + $0xe1] sm:$0xff]
        %v3257 = vld [vmem:[%s1059 + $0xf1] sm:$0xff]
        %v3258 = vld [vmem:[%s1059 + $0xf9] sm:$0xff]
        %v3259 = vld [vmem:[%s1059 + $0x109] sm:$0xff]
        %v3260 = vld [vmem:[%s1059 + $0x111] sm:$0xff]
        %v3261 = vld [vmem:[%s1059 + $0x121] sm:$0xff]
        %v3262 = vld [vmem:[%s1059 + $0x129] sm:$0xff]
        %v3263 = vld [vmem:[%s1059 + $0x139] sm:$0xff]
        %v3264 = vld [vmem:[%s1059 + $0x141] sm:$0xff]
        %v3265 = vld [vmem:[%s1059 + $0x151] sm:$0xff]
        %v3266 = vld [vmem:[%s1059 + $0x159] sm:$0xff]
        %v3267 = vld [vmem:[%s1059 + $0x169] sm:$0xff]
        %v3268 = vld [vmem:[%s1059 + $0x171] sm:$0xff]
        %3301 = vrot.lane.b32.xlu0 %v3237, 64
        %v3302 = vpop.permute.xlu0 %3301
        %3303 = vrot.lane.b32.xlu0 %v3238, 64
        %v3304 = vpop.permute.xlu0 %3303
        %3305 = vrot.lane.b32.xlu0 %v3239, 64
        %v3306 = vpop.permute.xlu0 %3305
        %3307 = vrot.lane.b32.xlu0 %v3240, 64
        %v3308 = vpop.permute.xlu0 %3307
        %3309 = vrot.lane.b32.xlu0 %v3241, 64
        %v3310 = vpop.permute.xlu0 %3309
        %3311 = vrot.lane.b32.xlu0 %v3242, 64
        %v3312 = vpop.permute.xlu0 %3311
        %3313 = vrot.lane.b32.xlu0 %v3243, 64
        %v3314 = vpop.permute.xlu0 %3313
        %3315 = vrot.lane.b32.xlu0 %v3244, 64
        %v3316 = vpop.permute.xlu0 %3315
        %3317 = vrot.lane.b32.xlu0 %v3245, 64
        %v3318 = vpop.permute.xlu0 %3317
        %3319 = vrot.lane.b32.xlu0 %v3246, 64
        %v3320 = vpop.permute.xlu0 %3319
        %3321 = vrot.lane.b32.xlu0 %v3247, 64
        %v3322 = vpop.permute.xlu0 %3321
        %3323 = vrot.lane.b32.xlu0 %v3248, 64
        %v3324 = vpop.permute.xlu0 %3323
        %3325 = vrot.lane.b32.xlu0 %v3249, 64
        %v3326 = vpop.permute.xlu0 %3325
        %3327 = vrot.lane.b32.xlu0 %v3250, 64
        %v3328 = vpop.permute.xlu0 %3327
        %3329 = vrot.lane.b32.xlu0 %v3251, 64
        %v3330 = vpop.permute.xlu0 %3329
        %3331 = vrot.lane.b32.xlu0 %v3252, 64
        %v3332 = vpop.permute.xlu0 %3331
        %3333 = vrot.lane.b32.xlu0 %v3253, 64
        %v3334 = vpop.permute.xlu0 %3333
        %3335 = vrot.lane.b32.xlu0 %v3254, 64
        %v3336 = vpop.permute.xlu0 %3335
        %3337 = vrot.lane.b32.xlu0 %v3255, 64
        %v3338 = vpop.permute.xlu0 %3337
        %3339 = vrot.lane.b32.xlu0 %v3256, 64
        %v3340 = vpop.permute.xlu0 %3339
        %3341 = vrot.lane.b32.xlu0 %v3257, 64
        %v3342 = vpop.permute.xlu0 %3341
        %3343 = vrot.lane.b32.xlu0 %v3258, 64
        %v3344 = vpop.permute.xlu0 %3343
        %3345 = vrot.lane.b32.xlu0 %v3259, 64
        %v3346 = vpop.permute.xlu0 %3345
        %3347 = vrot.lane.b32.xlu0 %v3260, 64
        %v3348 = vpop.permute.xlu0 %3347
        %3349 = vrot.lane.b32.xlu0 %v3261, 64
        %v3350 = vpop.permute.xlu0 %3349
        %3351 = vrot.lane.b32.xlu0 %v3262, 64
        %v3352 = vpop.permute.xlu0 %3351
        %3353 = vrot.lane.b32.xlu0 %v3263, 64
        %v3354 = vpop.permute.xlu0 %3353
        %3355 = vrot.lane.b32.xlu0 %v3264, 64
        %v3356 = vpop.permute.xlu0 %3355
        %3357 = vrot.lane.b32.xlu0 %v3265, 64
        %v3358 = vpop.permute.xlu0 %3357
        %3359 = vrot.lane.b32.xlu0 %v3266, 64
        %v3360 = vpop.permute.xlu0 %3359
        %3361 = vrot.lane.b32.xlu0 %v3267, 64
        %v3362 = vpop.permute.xlu0 %3361
        %3363 = vrot.lane.b32.xlu0 %v3268, 64
        %v3364 = vpop.permute.xlu0 %3363
        %3397 = vst.msk [vmem:[#allocation3 + $0x18] sm:$0xff] %vm514, %v3302
        %3398 = vst.msk [vmem:[#allocation3 + $0x40] sm:$0xff] %vm514, %v3304
        %3399 = vst.msk [vmem:[#allocation3 + $0x68] sm:$0xff] %vm514, %v3306
        %3400 = vst.msk [vmem:[#allocation3 + $0x90] sm:$0xff] %vm514, %v3308
        %3401 = vst.msk [vmem:[#allocation3 + $0xb8] sm:$0xff] %vm514, %v3310
        %3402 = vst.msk [vmem:[#allocation3 + $0xe0] sm:$0xff] %vm514, %v3312
        %3403 = vst.msk [vmem:[#allocation3 + $0x108] sm:$0xff] %vm514, %v3314
        %3404 = vst.msk [vmem:[#allocation3 + $0x130] sm:$0xff] %vm514, %v3316
        %3405 = vst.msk [vmem:[#allocation3 + $0x158] sm:$0xff] %vm514, %v3318
        %3406 = vst.msk [vmem:[#allocation3 + $0x180] sm:$0xff] %vm514, %v3320
        %3407 = vst.msk [vmem:[#allocation3 + $0x1a8] sm:$0xff] %vm514, %v3322
        %3408 = vst.msk [vmem:[#allocation3 + $0x1d0] sm:$0xff] %vm514, %v3324
        %3409 = vst.msk [vmem:[#allocation3 + $0x1f8] sm:$0xff] %vm514, %v3326
        %3410 = vst.msk [vmem:[#allocation3 + $0x220] sm:$0xff] %vm514, %v3328
        %3411 = vst.msk [vmem:[#allocation3 + $0x248] sm:$0xff] %vm514, %v3330
        %3412 = vst.msk [vmem:[#allocation3 + $0x270] sm:$0xff] %vm514, %v3332
        %3413 = vst.msk [vmem:[#allocation3 + $0x298] sm:$0xff] %vm514, %v3334
        %3414 = vst.msk [vmem:[#allocation3 + $0x2c0] sm:$0xff] %vm514, %v3336
        %3415 = vst.msk [vmem:[#allocation3 + $0x2e8] sm:$0xff] %vm514, %v3338
        %3416 = vst.msk [vmem:[#allocation3 + $0x310] sm:$0xff] %vm514, %v3340
        %3417 = vst.msk [vmem:[#allocation3 + $0x338] sm:$0xff] %vm514, %v3342
        %3418 = vst.msk [vmem:[#allocation3 + $0x360] sm:$0xff] %vm514, %v3344
        %3419 = vst.msk [vmem:[#allocation3 + $0x388] sm:$0xff] %vm514, %v3346
        %3420 = vst.msk [vmem:[#allocation3 + $0x3b0] sm:$0xff] %vm514, %v3348
        %3421 = vst.msk [vmem:[#allocation3 + $0x3d8] sm:$0xff] %vm514, %v3350
        %3422 = vst.msk [vmem:[#allocation3 + $0x400] sm:$0xff] %vm514, %v3352
        %3423 = vst.msk [vmem:[#allocation3 + $0x428] sm:$0xff] %vm514, %v3354
        %3424 = vst.msk [vmem:[#allocation3 + $0x450] sm:$0xff] %vm514, %v3356
        %3425 = vst.msk [vmem:[#allocation3 + $0x478] sm:$0xff] %vm514, %v3358
        %3426 = vst.msk [vmem:[#allocation3 + $0x4a0] sm:$0xff] %vm514, %v3360
        %3427 = vst.msk [vmem:[#allocation3 + $0x4c8] sm:$0xff] %vm514, %v3362
        %3428 = vst.msk [vmem:[#allocation3 + $0x4f0] sm:$0xff] %vm514, %v3364
        %v3429 = vld [vmem:[%s1059 + $0x2] sm:$0xff]
        %v3430 = vld [vmem:[%s1059 + $0xa] sm:$0xff]
        %v3431 = vld [vmem:[%s1059 + $0x1a] sm:$0xff]
        %v3432 = vld [vmem:[%s1059 + $0x22] sm:$0xff]
        %v3433 = vld [vmem:[%s1059 + $0x32] sm:$0xff]
        %v3434 = vld [vmem:[%s1059 + $0x3a] sm:$0xff]
        %v3435 = vld [vmem:[%s1059 + $0x4a] sm:$0xff]
        %v3436 = vld [vmem:[%s1059 + $0x52] sm:$0xff]
        %v3437 = vld [vmem:[%s1059 + $0x62] sm:$0xff]
        %v3438 = vld [vmem:[%s1059 + $0x6a] sm:$0xff]
        %v3439 = vld [vmem:[%s1059 + $0x7a] sm:$0xff]
        %v3440 = vld [vmem:[%s1059 + $0x82] sm:$0xff]
        %v3441 = vld [vmem:[%s1059 + $0x92] sm:$0xff]
        %v3442 = vld [vmem:[%s1059 + $0x9a] sm:$0xff]
        %v3443 = vld [vmem:[%s1059 + $0xaa] sm:$0xff]
        %v3444 = vld [vmem:[%s1059 + $0xb2] sm:$0xff]
        %v3445 = vld [vmem:[%s1059 + $0xc2] sm:$0xff]
        %v3446 = vld [vmem:[%s1059 + $0xca] sm:$0xff]
        %v3447 = vld [vmem:[%s1059 + $0xda] sm:$0xff]
        %v3448 = vld [vmem:[%s1059 + $0xe2] sm:$0xff]
        %v3449 = vld [vmem:[%s1059 + $0xf2] sm:$0xff]
        %v3450 = vld [vmem:[%s1059 + $0xfa] sm:$0xff]
        %v3451 = vld [vmem:[%s1059 + $0x10a] sm:$0xff]
        %v3452 = vld [vmem:[%s1059 + $0x112] sm:$0xff]
        %v3453 = vld [vmem:[%s1059 + $0x122] sm:$0xff]
        %v3454 = vld [vmem:[%s1059 + $0x12a] sm:$0xff]
        %v3455 = vld [vmem:[%s1059 + $0x13a] sm:$0xff]
        %v3456 = vld [vmem:[%s1059 + $0x142] sm:$0xff]
        %v3457 = vld [vmem:[%s1059 + $0x152] sm:$0xff]
        %v3458 = vld [vmem:[%s1059 + $0x15a] sm:$0xff]
        %v3459 = vld [vmem:[%s1059 + $0x16a] sm:$0xff]
        %v3460 = vld [vmem:[%s1059 + $0x172] sm:$0xff]
        %3461 = vst.msk [vmem:[#allocation3 + $0x20] sm:$0xff] %vm169, %v3429
        %3462 = vst.msk [vmem:[#allocation3 + $0x48] sm:$0xff] %vm169, %v3430
        %3463 = vst.msk [vmem:[#allocation3 + $0x70] sm:$0xff] %vm169, %v3431
        %3464 = vst.msk [vmem:[#allocation3 + $0x98] sm:$0xff] %vm169, %v3432
        %3465 = vst.msk [vmem:[#allocation3 + $0xc0] sm:$0xff] %vm169, %v3433
        %3466 = vst.msk [vmem:[#allocation3 + $0xe8] sm:$0xff] %vm169, %v3434
        %3467 = vst.msk [vmem:[#allocation3 + $0x110] sm:$0xff] %vm169, %v3435
        %3468 = vst.msk [vmem:[#allocation3 + $0x138] sm:$0xff] %vm169, %v3436
        %3469 = vst.msk [vmem:[#allocation3 + $0x160] sm:$0xff] %vm169, %v3437
        %3470 = vst.msk [vmem:[#allocation3 + $0x188] sm:$0xff] %vm169, %v3438
        %3471 = vst.msk [vmem:[#allocation3 + $0x1b0] sm:$0xff] %vm169, %v3439
        %3472 = vst.msk [vmem:[#allocation3 + $0x1d8] sm:$0xff] %vm169, %v3440
        %3473 = vst.msk [vmem:[#allocation3 + $0x200] sm:$0xff] %vm169, %v3441
        %3474 = vst.msk [vmem:[#allocation3 + $0x228] sm:$0xff] %vm169, %v3442
        %3475 = vst.msk [vmem:[#allocation3 + $0x250] sm:$0xff] %vm169, %v3443
        %3476 = vst.msk [vmem:[#allocation3 + $0x278] sm:$0xff] %vm169, %v3444
        %3477 = vst.msk [vmem:[#allocation3 + $0x2a0] sm:$0xff] %vm169, %v3445
        %3478 = vst.msk [vmem:[#allocation3 + $0x2c8] sm:$0xff] %vm169, %v3446
        %3479 = vst.msk [vmem:[#allocation3 + $0x2f0] sm:$0xff] %vm169, %v3447
        %3480 = vst.msk [vmem:[#allocation3 + $0x318] sm:$0xff] %vm169, %v3448
        %3481 = vst.msk [vmem:[#allocation3 + $0x340] sm:$0xff] %vm169, %v3449
        %3482 = vst.msk [vmem:[#allocation3 + $0x368] sm:$0xff] %vm169, %v3450
        %3483 = vst.msk [vmem:[#allocation3 + $0x390] sm:$0xff] %vm169, %v3451
        %3484 = vst.msk [vmem:[#allocation3 + $0x3b8] sm:$0xff] %vm169, %v3452
        %3485 = vst.msk [vmem:[#allocation3 + $0x3e0] sm:$0xff] %vm169, %v3453
        %3486 = vst.msk [vmem:[#allocation3 + $0x408] sm:$0xff] %vm169, %v3454
        %3487 = vst.msk [vmem:[#allocation3 + $0x430] sm:$0xff] %vm169, %v3455
        %3488 = vst.msk [vmem:[#allocation3 + $0x458] sm:$0xff] %vm169, %v3456
        %3489 = vst.msk [vmem:[#allocation3 + $0x480] sm:$0xff] %vm169, %v3457
        %3490 = vst.msk [vmem:[#allocation3 + $0x4a8] sm:$0xff] %vm169, %v3458
        %3491 = vst.msk [vmem:[#allocation3 + $0x4d0] sm:$0xff] %vm169, %v3459
        %3492 = vst.msk [vmem:[#allocation3 + $0x4f8] sm:$0xff] %vm169, %v3460
        %v3493 = vld [vmem:[#allocation3] sm:$0xff]
        %v3494 = vld [vmem:[#allocation3 + $0x8] sm:$0xff]
        %v3495 = vld [vmem:[#allocation3 + $0x10] sm:$0xff]
        %v3496 = vld [vmem:[#allocation3 + $0x18] sm:$0xff]
        %v3497 = vld [vmem:[#allocation3 + $0x20] sm:$0xff]
        %v3498 = vld [vmem:[#allocation3 + $0x28] sm:$0xff]
        %v3499 = vld [vmem:[#allocation3 + $0x30] sm:$0xff]
        %v3500 = vld [vmem:[#allocation3 + $0x38] sm:$0xff]
        %v3501 = vld [vmem:[#allocation3 + $0x40] sm:$0xff]
        %v3502 = vld [vmem:[#allocation3 + $0x48] sm:$0xff]
        %v3503 = vld [vmem:[#allocation3 + $0x50] sm:$0xff]
        %v3504 = vld [vmem:[#allocation3 + $0x58] sm:$0xff]
        %v3505 = vld [vmem:[#allocation3 + $0x60] sm:$0xff]
        %v3506 = vld [vmem:[#allocation3 + $0x68] sm:$0xff]
        %v3507 = vld [vmem:[#allocation3 + $0x70] sm:$0xff]
        %v3508 = vld [vmem:[#allocation3 + $0x78] sm:$0xff]
        %v3509 = vld [vmem:[#allocation3 + $0x80] sm:$0xff]
        %v3510 = vld [vmem:[#allocation3 + $0x88] sm:$0xff]
        %v3511 = vld [vmem:[#allocation3 + $0x90] sm:$0xff]
        %v3512 = vld [vmem:[#allocation3 + $0x98] sm:$0xff]
        %v3513 = vld [vmem:[#allocation3 + $0xa0] sm:$0xff]
        %v3514 = vld [vmem:[#allocation3 + $0xa8] sm:$0xff]
        %v3515 = vld [vmem:[#allocation3 + $0xb0] sm:$0xff]
        %v3516 = vld [vmem:[#allocation3 + $0xb8] sm:$0xff]
        %v3517 = vld [vmem:[#allocation3 + $0xc0] sm:$0xff]
        %v3518 = vld [vmem:[#allocation3 + $0xc8] sm:$0xff]
        %v3519 = vld [vmem:[#allocation3 + $0xd0] sm:$0xff]
        %v3520 = vld [vmem:[#allocation3 + $0xd8] sm:$0xff]
        %v3521 = vld [vmem:[#allocation3 + $0xe0] sm:$0xff]
        %v3522 = vld [vmem:[#allocation3 + $0xe8] sm:$0xff]
        %v3523 = vld [vmem:[#allocation3 + $0xf0] sm:$0xff]
        %v3524 = vld [vmem:[#allocation3 + $0xf8] sm:$0xff]
        %v3525 = vld [vmem:[#allocation3 + $0x100] sm:$0xff]
        %v3526 = vld [vmem:[#allocation3 + $0x108] sm:$0xff]
        %v3527 = vld [vmem:[#allocation3 + $0x110] sm:$0xff]
        %v3528 = vld [vmem:[#allocation3 + $0x118] sm:$0xff]
        %v3529 = vld [vmem:[#allocation3 + $0x120] sm:$0xff]
        %v3530 = vld [vmem:[#allocation3 + $0x128] sm:$0xff]
        %v3531 = vld [vmem:[#allocation3 + $0x130] sm:$0xff]
        %v3532 = vld [vmem:[#allocation3 + $0x138] sm:$0xff]
        %v3533 = vld [vmem:[#allocation3 + $0x140] sm:$0xff]
        %v3534 = vld [vmem:[#allocation3 + $0x148] sm:$0xff]
        %v3535 = vld [vmem:[#allocation3 + $0x150] sm:$0xff]
        %v3536 = vld [vmem:[#allocation3 + $0x158] sm:$0xff]
        %v3537 = vld [vmem:[#allocation3 + $0x160] sm:$0xff]
        %v3538 = vld [vmem:[#allocation3 + $0x168] sm:$0xff]
        %v3539 = vld [vmem:[#allocation3 + $0x170] sm:$0xff]
        %v3540 = vld [vmem:[#allocation3 + $0x178] sm:$0xff]
        %v3541 = vld [vmem:[#allocation3 + $0x180] sm:$0xff]
        %v3542 = vld [vmem:[#allocation3 + $0x188] sm:$0xff]
        %v3543 = vld [vmem:[#allocation3 + $0x190] sm:$0xff]
        %v3544 = vld [vmem:[#allocation3 + $0x198] sm:$0xff]
        %v3545 = vld [vmem:[#allocation3 + $0x1a0] sm:$0xff]
        %v3546 = vld [vmem:[#allocation3 + $0x1a8] sm:$0xff]
        %v3547 = vld [vmem:[#allocation3 + $0x1b0] sm:$0xff]
        %v3548 = vld [vmem:[#allocation3 + $0x1b8] sm:$0xff]
        %v3549 = vld [vmem:[#allocation3 + $0x1c0] sm:$0xff]
        %v3550 = vld [vmem:[#allocation3 + $0x1c8] sm:$0xff]
        %v3551 = vld [vmem:[#allocation3 + $0x1d0] sm:$0xff]
        %v3552 = vld [vmem:[#allocation3 + $0x1d8] sm:$0xff]
        %v3553 = vld [vmem:[#allocation3 + $0x1e0] sm:$0xff]
        %v3554 = vld [vmem:[#allocation3 + $0x1e8] sm:$0xff]
        %v3555 = vld [vmem:[#allocation3 + $0x1f0] sm:$0xff]
        %v3556 = vld [vmem:[#allocation3 + $0x1f8] sm:$0xff]
        %v3557 = vld [vmem:[#allocation3 + $0x200] sm:$0xff]
        %v3558 = vld [vmem:[#allocation3 + $0x208] sm:$0xff]
        %v3559 = vld [vmem:[#allocation3 + $0x210] sm:$0xff]
        %v3560 = vld [vmem:[#allocation3 + $0x218] sm:$0xff]
        %v3561 = vld [vmem:[#allocation3 + $0x220] sm:$0xff]
        %v3562 = vld [vmem:[#allocation3 + $0x228] sm:$0xff]
        %v3563 = vld [vmem:[#allocation3 + $0x230] sm:$0xff]
        %v3564 = vld [vmem:[#allocation3 + $0x238] sm:$0xff]
        %v3565 = vld [vmem:[#allocation3 + $0x240] sm:$0xff]
        %v3566 = vld [vmem:[#allocation3 + $0x248] sm:$0xff]
        %v3567 = vld [vmem:[#allocation3 + $0x250] sm:$0xff]
        %v3568 = vld [vmem:[#allocation3 + $0x258] sm:$0xff]
        %v3569 = vld [vmem:[#allocation3 + $0x260] sm:$0xff]
        %v3570 = vld [vmem:[#allocation3 + $0x268] sm:$0xff]
        %v3571 = vld [vmem:[#allocation3 + $0x270] sm:$0xff]
        %v3572 = vld [vmem:[#allocation3 + $0x278] sm:$0xff]
        %v3573 = vld [vmem:[#allocation3 + $0x280] sm:$0xff]
        %v3574 = vld [vmem:[#allocation3 + $0x288] sm:$0xff]
        %v3575 = vld [vmem:[#allocation3 + $0x290] sm:$0xff]
        %v3576 = vld [vmem:[#allocation3 + $0x298] sm:$0xff]
        %v3577 = vld [vmem:[#allocation3 + $0x2a0] sm:$0xff]
        %v3578 = vld [vmem:[#allocation3 + $0x2a8] sm:$0xff]
        %v3579 = vld [vmem:[#allocation3 + $0x2b0] sm:$0xff]
        %v3580 = vld [vmem:[#allocation3 + $0x2b8] sm:$0xff]
        %v3581 = vld [vmem:[#allocation3 + $0x2c0] sm:$0xff]
        %v3582 = vld [vmem:[#allocation3 + $0x2c8] sm:$0xff]
        %v3583 = vld [vmem:[#allocation3 + $0x2d0] sm:$0xff]
        %v3584 = vld [vmem:[#allocation3 + $0x2d8] sm:$0xff]
        %v3585 = vld [vmem:[#allocation3 + $0x2e0] sm:$0xff]
        %v3586 = vld [vmem:[#allocation3 + $0x2e8] sm:$0xff]
        %v3587 = vld [vmem:[#allocation3 + $0x2f0] sm:$0xff]
        %v3588 = vld [vmem:[#allocation3 + $0x2f8] sm:$0xff]
        %v3589 = vld [vmem:[#allocation3 + $0x300] sm:$0xff]
        %v3590 = vld [vmem:[#allocation3 + $0x308] sm:$0xff]
        %v3591 = vld [vmem:[#allocation3 + $0x310] sm:$0xff]
        %v3592 = vld [vmem:[#allocation3 + $0x318] sm:$0xff]
        %v3593 = vld [vmem:[#allocation3 + $0x320] sm:$0xff]
        %v3594 = vld [vmem:[#allocation3 + $0x328] sm:$0xff]
        %v3595 = vld [vmem:[#allocation3 + $0x330] sm:$0xff]
        %v3596 = vld [vmem:[#allocation3 + $0x338] sm:$0xff]
        %v3597 = vld [vmem:[#allocation3 + $0x340] sm:$0xff]
        %v3598 = vld [vmem:[#allocation3 + $0x348] sm:$0xff]
        %v3599 = vld [vmem:[#allocation3 + $0x350] sm:$0xff]
        %v3600 = vld [vmem:[#allocation3 + $0x358] sm:$0xff]
        %v3601 = vld [vmem:[#allocation3 + $0x360] sm:$0xff]
        %v3602 = vld [vmem:[#allocation3 + $0x368] sm:$0xff]
        %v3603 = vld [vmem:[#allocation3 + $0x370] sm:$0xff]
        %v3604 = vld [vmem:[#allocation3 + $0x378] sm:$0xff]
        %v3605 = vld [vmem:[#allocation3 + $0x380] sm:$0xff]
        %v3606 = vld [vmem:[#allocation3 + $0x388] sm:$0xff]
        %v3607 = vld [vmem:[#allocation3 + $0x390] sm:$0xff]
        %v3608 = vld [vmem:[#allocation3 + $0x398] sm:$0xff]
        %v3609 = vld [vmem:[#allocation3 + $0x3a0] sm:$0xff]
        %v3610 = vld [vmem:[#allocation3 + $0x3a8] sm:$0xff]
        %v3611 = vld [vmem:[#allocation3 + $0x3b0] sm:$0xff]
        %v3612 = vld [vmem:[#allocation3 + $0x3b8] sm:$0xff]
        %v3613 = vld [vmem:[#allocation3 + $0x3c0] sm:$0xff]
        %v3614 = vld [vmem:[#allocation3 + $0x3c8] sm:$0xff]
        %v3615 = vld [vmem:[#allocation3 + $0x3d0] sm:$0xff]
        %v3616 = vld [vmem:[#allocation3 + $0x3d8] sm:$0xff]
        %v3617 = vld [vmem:[#allocation3 + $0x3e0] sm:$0xff]
        %v3618 = vld [vmem:[#allocation3 + $0x3e8] sm:$0xff]
        %v3619 = vld [vmem:[#allocation3 + $0x3f0] sm:$0xff]
        %v3620 = vld [vmem:[#allocation3 + $0x3f8] sm:$0xff]
        %v3621 = vld [vmem:[#allocation3 + $0x400] sm:$0xff]
        %v3622 = vld [vmem:[#allocation3 + $0x408] sm:$0xff]
        %v3623 = vld [vmem:[#allocation3 + $0x410] sm:$0xff]
        %v3624 = vld [vmem:[#allocation3 + $0x418] sm:$0xff]
        %v3625 = vld [vmem:[#allocation3 + $0x420] sm:$0xff]
        %v3626 = vld [vmem:[#allocation3 + $0x428] sm:$0xff]
        %v3627 = vld [vmem:[#allocation3 + $0x430] sm:$0xff]
        %v3628 = vld [vmem:[#allocation3 + $0x438] sm:$0xff]
        %v3629 = vld [vmem:[#allocation3 + $0x440] sm:$0xff]
        %v3630 = vld [vmem:[#allocation3 + $0x448] sm:$0xff]
        %v3631 = vld [vmem:[#allocation3 + $0x450] sm:$0xff]
        %v3632 = vld [vmem:[#allocation3 + $0x458] sm:$0xff]
        %v3633 = vld [vmem:[#allocation3 + $0x460] sm:$0xff]
        %v3634 = vld [vmem:[#allocation3 + $0x468] sm:$0xff]
        %v3635 = vld [vmem:[#allocation3 + $0x470] sm:$0xff]
        %v3636 = vld [vmem:[#allocation3 + $0x478] sm:$0xff]
        %v3637 = vld [vmem:[#allocation3 + $0x480] sm:$0xff]
        %v3638 = vld [vmem:[#allocation3 + $0x488] sm:$0xff]
        %v3639 = vld [vmem:[#allocation3 + $0x490] sm:$0xff]
        %v3640 = vld [vmem:[#allocation3 + $0x498] sm:$0xff]
        %v3641 = vld [vmem:[#allocation3 + $0x4a0] sm:$0xff]
        %v3642 = vld [vmem:[#allocation3 + $0x4a8] sm:$0xff]
        %v3643 = vld [vmem:[#allocation3 + $0x4b0] sm:$0xff]
        %v3644 = vld [vmem:[#allocation3 + $0x4b8] sm:$0xff]
        %v3645 = vld [vmem:[#allocation3 + $0x4c0] sm:$0xff]
        %v3646 = vld [vmem:[#allocation3 + $0x4c8] sm:$0xff]
        %v3647 = vld [vmem:[#allocation3 + $0x4d0] sm:$0xff]
        %v3648 = vld [vmem:[#allocation3 + $0x4d8] sm:$0xff]
        %v3649 = vld [vmem:[#allocation3 + $0x4e0] sm:$0xff]
        %v3650 = vld [vmem:[#allocation3 + $0x4e8] sm:$0xff]
        %v3651 = vld [vmem:[#allocation3 + $0x4f0] sm:$0xff]
        %v3652 = vld [vmem:[#allocation3 + $0x4f8] sm:$0xff]
        %s3653 = scalar_lea.vmem %s1, 576
        %v3654 = vld [vmem:[%s3653] sm:$0xff]
        %v3655 = vld [vmem:[%s3653 + $0x8] sm:$0xff]
        %v3656 = vld [vmem:[%s3653 + $0x10] sm:$0xff]
        %v3657 = vld [vmem:[%s3653 + $0x18] sm:$0xff]
        %v3658 = vld [vmem:[%s3653 + $0x20] sm:$0xff]
        %v3659 = vld [vmem:[%s3653 + $0x28] sm:$0xff]
        %v3660 = vld [vmem:[%s3653 + $0x30] sm:$0xff]
        %v3661 = vld [vmem:[%s3653 + $0x38] sm:$0xff]
        %v3662 = vld [vmem:[%s3653 + $0x40] sm:$0xff]
        %v3663 = vld [vmem:[%s3653 + $0x48] sm:$0xff]
        %v3664 = vld [vmem:[%s3653 + $0x50] sm:$0xff]
        %v3665 = vld [vmem:[%s3653 + $0x58] sm:$0xff]
        %v3666 = vld [vmem:[%s3653 + $0x60] sm:$0xff]
        %v3667 = vld [vmem:[%s3653 + $0x68] sm:$0xff]
        %v3668 = vld [vmem:[%s3653 + $0x70] sm:$0xff]
        %v3669 = vld [vmem:[%s3653 + $0x78] sm:$0xff]
        %v3670 = vld [vmem:[%s3653 + $0x80] sm:$0xff]
        %v3671 = vld [vmem:[%s3653 + $0x88] sm:$0xff]
        %v3672 = vld [vmem:[%s3653 + $0x90] sm:$0xff]
        %v3673 = vld [vmem:[%s3653 + $0x98] sm:$0xff]
        %v3674 = vld [vmem:[%s3653 + $0xa0] sm:$0xff]
        %v3675 = vld [vmem:[%s3653 + $0xa8] sm:$0xff]
        %v3676 = vld [vmem:[%s3653 + $0xb0] sm:$0xff]
        %v3677 = vld [vmem:[%s3653 + $0xb8] sm:$0xff]
        %v3678 = vld [vmem:[%s3653 + $0xc0] sm:$0xff]
        %v3679 = vld [vmem:[%s3653 + $0xc8] sm:$0xff]
        %v3680 = vld [vmem:[%s3653 + $0xd0] sm:$0xff]
        %v3681 = vld [vmem:[%s3653 + $0xd8] sm:$0xff]
        %v3682 = vld [vmem:[%s3653 + $0xe0] sm:$0xff]
        %v3683 = vld [vmem:[%s3653 + $0xe8] sm:$0xff]
        %v3684 = vld [vmem:[%s3653 + $0xf0] sm:$0xff]
        %v3685 = vld [vmem:[%s3653 + $0xf8] sm:$0xff]
        %v3686 = vld [vmem:[%s3653 + $0x100] sm:$0xff]
        %v3687 = vld [vmem:[%s3653 + $0x108] sm:$0xff]
        %v3688 = vld [vmem:[%s3653 + $0x110] sm:$0xff]
        %v3689 = vld [vmem:[%s3653 + $0x118] sm:$0xff]
        %v3690 = vld [vmem:[%s3653 + $0x120] sm:$0xff]
        %v3691 = vld [vmem:[%s3653 + $0x128] sm:$0xff]
        %v3692 = vld [vmem:[%s3653 + $0x130] sm:$0xff]
        %v3693 = vld [vmem:[%s3653 + $0x138] sm:$0xff]
        %v3694 = vld [vmem:[%s3653 + $0x140] sm:$0xff]
        %v3695 = vld [vmem:[%s3653 + $0x148] sm:$0xff]
        %v3696 = vld [vmem:[%s3653 + $0x150] sm:$0xff]
        %v3697 = vld [vmem:[%s3653 + $0x158] sm:$0xff]
        %v3698 = vld [vmem:[%s3653 + $0x160] sm:$0xff]
        %v3699 = vld [vmem:[%s3653 + $0x168] sm:$0xff]
        %v3700 = vld [vmem:[%s3653 + $0x170] sm:$0xff]
        %v3701 = vld [vmem:[%s3653 + $0x178] sm:$0xff]
        %v3702 = vld [vmem:[%s3653 + $0x180] sm:$0xff]
        %v3703 = vld [vmem:[%s3653 + $0x188] sm:$0xff]
        %v3704 = vld [vmem:[%s3653 + $0x190] sm:$0xff]
        %v3705 = vld [vmem:[%s3653 + $0x198] sm:$0xff]
        %v3706 = vld [vmem:[%s3653 + $0x1a0] sm:$0xff]
        %v3707 = vld [vmem:[%s3653 + $0x1a8] sm:$0xff]
        %v3708 = vld [vmem:[%s3653 + $0x1b0] sm:$0xff]
        %v3709 = vld [vmem:[%s3653 + $0x1b8] sm:$0xff]
        %v3710 = vld [vmem:[%s3653 + $0x1c0] sm:$0xff]
        %v3711 = vld [vmem:[%s3653 + $0x1c8] sm:$0xff]
        %v3712 = vld [vmem:[%s3653 + $0x1d0] sm:$0xff]
        %v3713 = vld [vmem:[%s3653 + $0x1d8] sm:$0xff]
        %v3714 = vld [vmem:[%s3653 + $0x1e0] sm:$0xff]
        %v3715 = vld [vmem:[%s3653 + $0x1e8] sm:$0xff]
        %v3716 = vld [vmem:[%s3653 + $0x1f0] sm:$0xff]
        %v3717 = vld [vmem:[%s3653 + $0x1f8] sm:$0xff]
        %v3718 = vld [vmem:[%s3653 + $0x200] sm:$0xff]
        %v3719 = vld [vmem:[%s3653 + $0x208] sm:$0xff]
        %v3720 = vld [vmem:[%s3653 + $0x210] sm:$0xff]
        %v3721 = vld [vmem:[%s3653 + $0x218] sm:$0xff]
        %v3722 = vld [vmem:[%s3653 + $0x220] sm:$0xff]
        %v3723 = vld [vmem:[%s3653 + $0x228] sm:$0xff]
        %v3724 = vld [vmem:[%s3653 + $0x230] sm:$0xff]
        %v3725 = vld [vmem:[%s3653 + $0x238] sm:$0xff]
        %s3726 = scalar_lea.vmem %s2, 1
        %v3727 = vld [vmem:[%s3726] sm:$0x1]
        %v3729 = vperm.slane %v3727, 0
        %v3732 = vsel %vm169, %v3497, 0
        %v3735 = vsel %vm169, %v3502, 0
        %v3738 = vsel %vm169, %v3507, 0
        %v3741 = vsel %vm169, %v3512, 0
        %v3744 = vsel %vm169, %v3517, 0
        %v3747 = vsel %vm169, %v3522, 0
        %v3750 = vsel %vm169, %v3527, 0
        %v3753 = vsel %vm169, %v3532, 0
        %v3756 = vsel %vm169, %v3537, 0
        %v3759 = vsel %vm169, %v3542, 0
        %v3762 = vsel %vm169, %v3547, 0
        %v3765 = vsel %vm169, %v3552, 0
        %v3768 = vsel %vm169, %v3557, 0
        %v3771 = vsel %vm169, %v3562, 0
        %v3774 = vsel %vm169, %v3567, 0
        %v3777 = vsel %vm169, %v3572, 0
        %v3780 = vsel %vm169, %v3577, 0
        %v3783 = vsel %vm169, %v3582, 0
        %v3786 = vsel %vm169, %v3587, 0
        %v3789 = vsel %vm169, %v3592, 0
        %v3792 = vsel %vm169, %v3597, 0
        %v3795 = vsel %vm169, %v3602, 0
        %v3798 = vsel %vm169, %v3607, 0
        %v3801 = vsel %vm169, %v3612, 0
        %v3804 = vsel %vm169, %v3617, 0
        %v3807 = vsel %vm169, %v3622, 0
        %v3810 = vsel %vm169, %v3627, 0
        %v3813 = vsel %vm169, %v3632, 0
        %v3816 = vsel %vm169, %v3637, 0
        %v3819 = vsel %vm169, %v3642, 0
        %v3822 = vsel %vm169, %v3647, 0
        %v3825 = vsel %vm169, %v3652, 0
        %3827 = vmatpush.msra.mxu0 %v3669
        %3828 = vmatpush.msra.mxu0 %v3668
        %3829 = vmatpush.msra.mxu0 %v3667
        %3830 = vmatpush.msra.mxu0 %v3666
        %3831 = vmatpush.msra.mxu0 %v3665
        %3832 = vmatpush.msra.mxu0 %v3664
        %3833 = vmatpush.msra.mxu0 %v3663
        %3834 = vmatpush.msra.mxu0 %v3662
        %3835 = vmatpush.msra.mxu0 %v3661
        %3836 = vmatpush.msra.mxu0 %v3660
        %3837 = vmatpush.msra.mxu0 %v3659
        %3838 = vmatpush.msra.mxu0 %v3658
        %3839 = vmatpush.msra.mxu0 %v3657
        %3840 = vmatpush.msra.mxu0 %v3656
        %3841 = vmatpush.msra.mxu0 %v3655
        %3842 = vmatpush.msra.mxu0 %v3654
        %3843 = vmatmul.f32.gmra.mxu0 %v3493
        %v3844 = vpop.f32.mrf.mxu0
        %v3845 = vadd.f32 %v3729, %v3844
        %3846 = vmatmul.f32.gmra.mxu0 %v3498
        %v3847 = vpop.f32.mrf.mxu0
        %v3848 = vadd.f32 %v3729, %v3847
        %3849 = vmatmul.f32.gmra.mxu0 %v3503
        %v3850 = vpop.f32.mrf.mxu0
        %v3851 = vadd.f32 %v3729, %v3850
        %3852 = vmatmul.f32.gmra.mxu0 %v3508
        %v3853 = vpop.f32.mrf.mxu0
        %v3854 = vadd.f32 %v3729, %v3853
        %3855 = vmatmul.f32.gmra.mxu0 %v3513
        %v3856 = vpop.f32.mrf.mxu0
        %v3857 = vadd.f32 %v3729, %v3856
        %3858 = vmatmul.f32.gmra.mxu0 %v3518
        %v3859 = vpop.f32.mrf.mxu0
        %v3860 = vadd.f32 %v3729, %v3859
        %3861 = vmatmul.f32.gmra.mxu0 %v3523
        %v3862 = vpop.f32.mrf.mxu0
        %v3863 = vadd.f32 %v3729, %v3862
        %3864 = vmatmul.f32.gmra.mxu0 %v3528
        %v3865 = vpop.f32.mrf.mxu0
        %v3866 = vadd.f32 %v3729, %v3865
        %3867 = vmatmul.f32.gmra.mxu0 %v3533
        %v3868 = vpop.f32.mrf.mxu0
        %v3869 = vadd.f32 %v3729, %v3868
        %3870 = vmatmul.f32.gmra.mxu0 %v3538
        %v3871 = vpop.f32.mrf.mxu0
        %v3872 = vadd.f32 %v3729, %v3871
        %3873 = vmatmul.f32.gmra.mxu0 %v3543
        %v3874 = vpop.f32.mrf.mxu0
        %v3875 = vadd.f32 %v3729, %v3874
        %3876 = vmatmul.f32.gmra.mxu0 %v3548
        %v3877 = vpop.f32.mrf.mxu0
        %v3878 = vadd.f32 %v3729, %v3877
        %3879 = vmatmul.f32.gmra.mxu0 %v3553
        %v3880 = vpop.f32.mrf.mxu0
        %v3881 = vadd.f32 %v3729, %v3880
        %3882 = vmatmul.f32.gmra.mxu0 %v3558
        %v3883 = vpop.f32.mrf.mxu0
        %v3884 = vadd.f32 %v3729, %v3883
        %3885 = vmatmul.f32.gmra.mxu0 %v3563
        %v3886 = vpop.f32.mrf.mxu0
        %v3887 = vadd.f32 %v3729, %v3886
        %3888 = vmatmul.f32.gmra.mxu0 %v3568
        %v3889 = vpop.f32.mrf.mxu0
        %v3890 = vadd.f32 %v3729, %v3889
        %3891 = vmatmul.f32.gmra.mxu0 %v3573
        %v3892 = vpop.f32.mrf.mxu0
        %v3893 = vadd.f32 %v3729, %v3892
        %3894 = vmatmul.f32.gmra.mxu0 %v3578
        %v3895 = vpop.f32.mrf.mxu0
        %v3896 = vadd.f32 %v3729, %v3895
        %3897 = vmatmul.f32.gmra.mxu0 %v3583
        %v3898 = vpop.f32.mrf.mxu0
        %v3899 = vadd.f32 %v3729, %v3898
        %3900 = vmatmul.f32.gmra.mxu0 %v3588
        %v3901 = vpop.f32.mrf.mxu0
        %v3902 = vadd.f32 %v3729, %v3901
        %3903 = vmatmul.f32.gmra.mxu0 %v3593
        %v3904 = vpop.f32.mrf.mxu0
        %v3905 = vadd.f32 %v3729, %v3904
        %3906 = vmatmul.f32.gmra.mxu0 %v3598
        %v3907 = vpop.f32.mrf.mxu0
        %v3908 = vadd.f32 %v3729, %v3907
        %3909 = vmatmul.f32.gmra.mxu0 %v3603
        %v3910 = vpop.f32.mrf.mxu0
        %v3911 = vadd.f32 %v3729, %v3910
        %3912 = vmatmul.f32.gmra.mxu0 %v3608
        %v3913 = vpop.f32.mrf.mxu0
        %v3914 = vadd.f32 %v3729, %v3913
        %3915 = vmatmul.f32.gmra.mxu0 %v3613
        %v3916 = vpop.f32.mrf.mxu0
        %v3917 = vadd.f32 %v3729, %v3916
        %3918 = vmatmul.f32.gmra.mxu0 %v3618
        %v3919 = vpop.f32.mrf.mxu0
        %v3920 = vadd.f32 %v3729, %v3919
        %3921 = vmatmul.f32.gmra.mxu0 %v3623
        %v3922 = vpop.f32.mrf.mxu0
        %v3923 = vadd.f32 %v3729, %v3922
        %3924 = vmatmul.f32.gmra.mxu0 %v3628
        %v3925 = vpop.f32.mrf.mxu0
        %v3926 = vadd.f32 %v3729, %v3925
        %3927 = vmatmul.f32.gmra.mxu0 %v3633
        %v3928 = vpop.f32.mrf.mxu0
        %v3929 = vadd.f32 %v3729, %v3928
        %3930 = vmatmul.f32.gmra.mxu0 %v3638
        %v3931 = vpop.f32.mrf.mxu0
        %v3932 = vadd.f32 %v3729, %v3931
        %3933 = vmatmul.f32.gmra.mxu0 %v3643
        %v3934 = vpop.f32.mrf.mxu0
        %v3935 = vadd.f32 %v3729, %v3934
        %3936 = vmatmul.f32.gmra.mxu0 %v3648
        %v3937 = vpop.f32.mrf.mxu0
        %v3938 = vadd.f32 %v3729, %v3937
        %3939 = vdwg.mxu0
        %3940 = vmatpush.msra.mxu0 %v3685
        %3941 = vmatpush.msra.mxu0 %v3684
        %3942 = vmatpush.msra.mxu0 %v3683
        %3943 = vmatpush.msra.mxu0 %v3682
        %3944 = vmatpush.msra.mxu0 %v3681
        %3945 = vmatpush.msra.mxu0 %v3680
        %3946 = vmatpush.msra.mxu0 %v3679
        %3947 = vmatpush.msra.mxu0 %v3678
        %3948 = vmatpush.msra.mxu0 %v3677
        %3949 = vmatpush.msra.mxu0 %v3676
        %3950 = vmatpush.msra.mxu0 %v3675
        %3951 = vmatpush.msra.mxu0 %v3674
        %3952 = vmatpush.msra.mxu0 %v3673
        %3953 = vmatpush.msra.mxu0 %v3672
        %3954 = vmatpush.msra.mxu0 %v3671
        %3955 = vmatpush.msra.mxu0 %v3670
        %3956 = vmatmul.f32.gmra.mxu0 %v3494
        %v3957 = vpop.f32.mrf.mxu0
        %v3958 = vadd.f32 %v3845, %v3957
        %3959 = vmatmul.f32.gmra.mxu0 %v3499
        %v3960 = vpop.f32.mrf.mxu0
        %v3961 = vadd.f32 %v3848, %v3960
        %3962 = vmatmul.f32.gmra.mxu0 %v3504
        %v3963 = vpop.f32.mrf.mxu0
        %v3964 = vadd.f32 %v3851, %v3963
        %3965 = vmatmul.f32.gmra.mxu0 %v3509
        %v3966 = vpop.f32.mrf.mxu0
        %v3967 = vadd.f32 %v3854, %v3966
        %3968 = vmatmul.f32.gmra.mxu0 %v3514
        %v3969 = vpop.f32.mrf.mxu0
        %v3970 = vadd.f32 %v3857, %v3969
        %3971 = vmatmul.f32.gmra.mxu0 %v3519
        %v3972 = vpop.f32.mrf.mxu0
        %v3973 = vadd.f32 %v3860, %v3972
        %3974 = vmatmul.f32.gmra.mxu0 %v3524
        %v3975 = vpop.f32.mrf.mxu0
        %v3976 = vadd.f32 %v3863, %v3975
        %3977 = vmatmul.f32.gmra.mxu0 %v3529
        %v3978 = vpop.f32.mrf.mxu0
        %v3979 = vadd.f32 %v3866, %v3978
        %3980 = vmatmul.f32.gmra.mxu0 %v3534
        %v3981 = vpop.f32.mrf.mxu0
        %v3982 = vadd.f32 %v3869, %v3981
        %3983 = vmatmul.f32.gmra.mxu0 %v3539
        %v3984 = vpop.f32.mrf.mxu0
        %v3985 = vadd.f32 %v3872, %v3984
        %3986 = vmatmul.f32.gmra.mxu0 %v3544
        %v3987 = vpop.f32.mrf.mxu0
        %v3988 = vadd.f32 %v3875, %v3987
        %3989 = vmatmul.f32.gmra.mxu0 %v3549
        %v3990 = vpop.f32.mrf.mxu0
        %v3991 = vadd.f32 %v3878, %v3990
        %3992 = vmatmul.f32.gmra.mxu0 %v3554
        %v3993 = vpop.f32.mrf.mxu0
        %v3994 = vadd.f32 %v3881, %v3993
        %3995 = vmatmul.f32.gmra.mxu0 %v3559
        %v3996 = vpop.f32.mrf.mxu0
        %v3997 = vadd.f32 %v3884, %v3996
        %3998 = vmatmul.f32.gmra.mxu0 %v3564
        %v3999 = vpop.f32.mrf.mxu0
        %v4000 = vadd.f32 %v3887, %v3999
        %4001 = vmatmul.f32.gmra.mxu0 %v3569
        %v4002 = vpop.f32.mrf.mxu0
        %v4003 = vadd.f32 %v3890, %v4002
        %4004 = vmatmul.f32.gmra.mxu0 %v3574
        %v4005 = vpop.f32.mrf.mxu0
        %v4006 = vadd.f32 %v3893, %v4005
        %4007 = vmatmul.f32.gmra.mxu0 %v3579
        %v4008 = vpop.f32.mrf.mxu0
        %v4009 = vadd.f32 %v3896, %v4008
        %4010 = vmatmul.f32.gmra.mxu0 %v3584
        %v4011 = vpop.f32.mrf.mxu0
        %v4012 = vadd.f32 %v3899, %v4011
        %4013 = vmatmul.f32.gmra.mxu0 %v3589
        %v4014 = vpop.f32.mrf.mxu0
        %v4015 = vadd.f32 %v3902, %v4014
        %4016 = vmatmul.f32.gmra.mxu0 %v3594
        %v4017 = vpop.f32.mrf.mxu0
        %v4018 = vadd.f32 %v3905, %v4017
        %4019 = vmatmul.f32.gmra.mxu0 %v3599
        %v4020 = vpop.f32.mrf.mxu0
        %v4021 = vadd.f32 %v3908, %v4020
        %4022 = vmatmul.f32.gmra.mxu0 %v3604
        %v4023 = vpop.f32.mrf.mxu0
        %v4024 = vadd.f32 %v3911, %v4023
        %4025 = vmatmul.f32.gmra.mxu0 %v3609
        %v4026 = vpop.f32.mrf.mxu0
        %v4027 = vadd.f32 %v3914, %v4026
        %4028 = vmatmul.f32.gmra.mxu0 %v3614
        %v4029 = vpop.f32.mrf.mxu0
        %v4030 = vadd.f32 %v3917, %v4029
        %4031 = vmatmul.f32.gmra.mxu0 %v3619
        %v4032 = vpop.f32.mrf.mxu0
        %v4033 = vadd.f32 %v3920, %v4032
        %4034 = vmatmul.f32.gmra.mxu0 %v3624
        %v4035 = vpop.f32.mrf.mxu0
        %v4036 = vadd.f32 %v3923, %v4035
        %4037 = vmatmul.f32.gmra.mxu0 %v3629
        %v4038 = vpop.f32.mrf.mxu0
        %v4039 = vadd.f32 %v3926, %v4038
        %4040 = vmatmul.f32.gmra.mxu0 %v3634
        %v4041 = vpop.f32.mrf.mxu0
        %v4042 = vadd.f32 %v3929, %v4041
        %4043 = vmatmul.f32.gmra.mxu0 %v3639
        %v4044 = vpop.f32.mrf.mxu0
        %v4045 = vadd.f32 %v3932, %v4044
        %4046 = vmatmul.f32.gmra.mxu0 %v3644
        %v4047 = vpop.f32.mrf.mxu0
        %v4048 = vadd.f32 %v3935, %v4047
        %4049 = vmatmul.f32.gmra.mxu0 %v3649
        %v4050 = vpop.f32.mrf.mxu0
        %v4051 = vadd.f32 %v3938, %v4050
        %4052 = vdwg.mxu0
        %4053 = vmatpush.msra.mxu0 %v3701
        %4054 = vmatpush.msra.mxu0 %v3700
        %4055 = vmatpush.msra.mxu0 %v3699
        %4056 = vmatpush.msra.mxu0 %v3698
        %4057 = vmatpush.msra.mxu0 %v3697
        %4058 = vmatpush.msra.mxu0 %v3696
        %4059 = vmatpush.msra.mxu0 %v3695
        %4060 = vmatpush.msra.mxu0 %v3694
        %4061 = vmatpush.msra.mxu0 %v3693
        %4062 = vmatpush.msra.mxu0 %v3692
        %4063 = vmatpush.msra.mxu0 %v3691
        %4064 = vmatpush.msra.mxu0 %v3690
        %4065 = vmatpush.msra.mxu0 %v3689
        %4066 = vmatpush.msra.mxu0 %v3688
        %4067 = vmatpush.msra.mxu0 %v3687
        %4068 = vmatpush.msra.mxu0 %v3686
        %4069 = vmatmul.f32.gmra.mxu0 %v3495
        %v4070 = vpop.f32.mrf.mxu0
        %v4071 = vadd.f32 %v3958, %v4070
        %4072 = vmatmul.f32.gmra.mxu0 %v3500
        %v4073 = vpop.f32.mrf.mxu0
        %v4074 = vadd.f32 %v3961, %v4073
        %4075 = vmatmul.f32.gmra.mxu0 %v3505
        %v4076 = vpop.f32.mrf.mxu0
        %v4077 = vadd.f32 %v3964, %v4076
        %4078 = vmatmul.f32.gmra.mxu0 %v3510
        %v4079 = vpop.f32.mrf.mxu0
        %v4080 = vadd.f32 %v3967, %v4079
        %4081 = vmatmul.f32.gmra.mxu0 %v3515
        %v4082 = vpop.f32.mrf.mxu0
        %v4083 = vadd.f32 %v3970, %v4082
        %4084 = vmatmul.f32.gmra.mxu0 %v3520
        %v4085 = vpop.f32.mrf.mxu0
        %v4086 = vadd.f32 %v3973, %v4085
        %4087 = vmatmul.f32.gmra.mxu0 %v3525
        %v4088 = vpop.f32.mrf.mxu0
        %v4089 = vadd.f32 %v3976, %v4088
        %4090 = vmatmul.f32.gmra.mxu0 %v3530
        %v4091 = vpop.f32.mrf.mxu0
        %v4092 = vadd.f32 %v3979, %v4091
        %4093 = vmatmul.f32.gmra.mxu0 %v3535
        %v4094 = vpop.f32.mrf.mxu0
        %v4095 = vadd.f32 %v3982, %v4094
        %4096 = vmatmul.f32.gmra.mxu0 %v3540
        %v4097 = vpop.f32.mrf.mxu0
        %v4098 = vadd.f32 %v3985, %v4097
        %4099 = vmatmul.f32.gmra.mxu0 %v3545
        %v4100 = vpop.f32.mrf.mxu0
        %v4101 = vadd.f32 %v3988, %v4100
        %4102 = vmatmul.f32.gmra.mxu0 %v3550
        %v4103 = vpop.f32.mrf.mxu0
        %v4104 = vadd.f32 %v3991, %v4103
        %4105 = vmatmul.f32.gmra.mxu0 %v3555
        %v4106 = vpop.f32.mrf.mxu0
        %v4107 = vadd.f32 %v3994, %v4106
        %4108 = vmatmul.f32.gmra.mxu0 %v3560
        %v4109 = vpop.f32.mrf.mxu0
        %v4110 = vadd.f32 %v3997, %v4109
        %4111 = vmatmul.f32.gmra.mxu0 %v3565
        %v4112 = vpop.f32.mrf.mxu0
        %v4113 = vadd.f32 %v4000, %v4112
        %4114 = vmatmul.f32.gmra.mxu0 %v3570
        %v4115 = vpop.f32.mrf.mxu0
        %v4116 = vadd.f32 %v4003, %v4115
        %4117 = vmatmul.f32.gmra.mxu0 %v3575
        %v4118 = vpop.f32.mrf.mxu0
        %v4119 = vadd.f32 %v4006, %v4118
        %4120 = vmatmul.f32.gmra.mxu0 %v3580
        %v4121 = vpop.f32.mrf.mxu0
        %v4122 = vadd.f32 %v4009, %v4121
        %4123 = vmatmul.f32.gmra.mxu0 %v3585
        %v4124 = vpop.f32.mrf.mxu0
        %v4125 = vadd.f32 %v4012, %v4124
        %4126 = vmatmul.f32.gmra.mxu0 %v3590
        %v4127 = vpop.f32.mrf.mxu0
        %v4128 = vadd.f32 %v4015, %v4127
        %4129 = vmatmul.f32.gmra.mxu0 %v3595
        %v4130 = vpop.f32.mrf.mxu0
        %v4131 = vadd.f32 %v4018, %v4130
        %4132 = vmatmul.f32.gmra.mxu0 %v3600
        %v4133 = vpop.f32.mrf.mxu0
        %v4134 = vadd.f32 %v4021, %v4133
        %4135 = vmatmul.f32.gmra.mxu0 %v3605
        %v4136 = vpop.f32.mrf.mxu0
        %v4137 = vadd.f32 %v4024, %v4136
        %4138 = vmatmul.f32.gmra.mxu0 %v3610
        %v4139 = vpop.f32.mrf.mxu0
        %v4140 = vadd.f32 %v4027, %v4139
        %4141 = vmatmul.f32.gmra.mxu0 %v3615
        %v4142 = vpop.f32.mrf.mxu0
        %v4143 = vadd.f32 %v4030, %v4142
        %4144 = vmatmul.f32.gmra.mxu0 %v3620
        %v4145 = vpop.f32.mrf.mxu0
        %v4146 = vadd.f32 %v4033, %v4145
        %4147 = vmatmul.f32.gmra.mxu0 %v3625
        %v4148 = vpop.f32.mrf.mxu0
        %v4149 = vadd.f32 %v4036, %v4148
        %4150 = vmatmul.f32.gmra.mxu0 %v3630
        %v4151 = vpop.f32.mrf.mxu0
        %v4152 = vadd.f32 %v4039, %v4151
        %4153 = vmatmul.f32.gmra.mxu0 %v3635
        %v4154 = vpop.f32.mrf.mxu0
        %v4155 = vadd.f32 %v4042, %v4154
        %4156 = vmatmul.f32.gmra.mxu0 %v3640
        %v4157 = vpop.f32.mrf.mxu0
        %v4158 = vadd.f32 %v4045, %v4157
        %4159 = vmatmul.f32.gmra.mxu0 %v3645
        %v4160 = vpop.f32.mrf.mxu0
        %v4161 = vadd.f32 %v4048, %v4160
        %4162 = vmatmul.f32.gmra.mxu0 %v3650
        %v4163 = vpop.f32.mrf.mxu0
        %v4164 = vadd.f32 %v4051, %v4163
        %4165 = vdwg.mxu0
        %4166 = vmatpush.msra.mxu0 %v3717
        %4167 = vmatpush.msra.mxu0 %v3716
        %4168 = vmatpush.msra.mxu0 %v3715
        %4169 = vmatpush.msra.mxu0 %v3714
        %4170 = vmatpush.msra.mxu0 %v3713
        %4171 = vmatpush.msra.mxu0 %v3712
        %4172 = vmatpush.msra.mxu0 %v3711
        %4173 = vmatpush.msra.mxu0 %v3710
        %4174 = vmatpush.msra.mxu0 %v3709
        %4175 = vmatpush.msra.mxu0 %v3708
        %4176 = vmatpush.msra.mxu0 %v3707
        %4177 = vmatpush.msra.mxu0 %v3706
        %4178 = vmatpush.msra.mxu0 %v3705
        %4179 = vmatpush.msra.mxu0 %v3704
        %4180 = vmatpush.msra.mxu0 %v3703
        %4181 = vmatpush.msra.mxu0 %v3702
        %4182 = vmatmul.f32.gmra.mxu0 %v3496
        %v4183 = vpop.f32.mrf.mxu0
        %v4184 = vadd.f32 %v4071, %v4183
        %4185 = vmatmul.f32.gmra.mxu0 %v3501
        %v4186 = vpop.f32.mrf.mxu0
        %v4187 = vadd.f32 %v4074, %v4186
        %4188 = vmatmul.f32.gmra.mxu0 %v3506
        %v4189 = vpop.f32.mrf.mxu0
        %v4190 = vadd.f32 %v4077, %v4189
        %4191 = vmatmul.f32.gmra.mxu0 %v3511
        %v4192 = vpop.f32.mrf.mxu0
        %v4193 = vadd.f32 %v4080, %v4192
        %4194 = vmatmul.f32.gmra.mxu0 %v3516
        %v4195 = vpop.f32.mrf.mxu0
        %v4196 = vadd.f32 %v4083, %v4195
        %4197 = vmatmul.f32.gmra.mxu0 %v3521
        %v4198 = vpop.f32.mrf.mxu0
        %v4199 = vadd.f32 %v4086, %v4198
        %4200 = vmatmul.f32.gmra.mxu0 %v3526
        %v4201 = vpop.f32.mrf.mxu0
        %v4202 = vadd.f32 %v4089, %v4201
        %4203 = vmatmul.f32.gmra.mxu0 %v3531
        %v4204 = vpop.f32.mrf.mxu0
        %v4205 = vadd.f32 %v4092, %v4204
        %4206 = vmatmul.f32.gmra.mxu0 %v3536
        %v4207 = vpop.f32.mrf.mxu0
        %v4208 = vadd.f32 %v4095, %v4207
        %4209 = vmatmul.f32.gmra.mxu0 %v3541
        %v4210 = vpop.f32.mrf.mxu0
        %v4211 = vadd.f32 %v4098, %v4210
        %4212 = vmatmul.f32.gmra.mxu0 %v3546
        %v4213 = vpop.f32.mrf.mxu0
        %v4214 = vadd.f32 %v4101, %v4213
        %4215 = vmatmul.f32.gmra.mxu0 %v3551
        %v4216 = vpop.f32.mrf.mxu0
        %v4217 = vadd.f32 %v4104, %v4216
        %4218 = vmatmul.f32.gmra.mxu0 %v3556
        %v4219 = vpop.f32.mrf.mxu0
        %v4220 = vadd.f32 %v4107, %v4219
        %4221 = vmatmul.f32.gmra.mxu0 %v3561
        %v4222 = vpop.f32.mrf.mxu0
        %v4223 = vadd.f32 %v4110, %v4222
        %4224 = vmatmul.f32.gmra.mxu0 %v3566
        %v4225 = vpop.f32.mrf.mxu0
        %v4226 = vadd.f32 %v4113, %v4225
        %4227 = vmatmul.f32.gmra.mxu0 %v3571
        %v4228 = vpop.f32.mrf.mxu0
        %v4229 = vadd.f32 %v4116, %v4228
        %4230 = vmatmul.f32.gmra.mxu0 %v3576
        %v4231 = vpop.f32.mrf.mxu0
        %v4232 = vadd.f32 %v4119, %v4231
        %4233 = vmatmul.f32.gmra.mxu0 %v3581
        %v4234 = vpop.f32.mrf.mxu0
        %v4235 = vadd.f32 %v4122, %v4234
        %4236 = vmatmul.f32.gmra.mxu0 %v3586
        %v4237 = vpop.f32.mrf.mxu0
        %v4238 = vadd.f32 %v4125, %v4237
        %4239 = vmatmul.f32.gmra.mxu0 %v3591
        %v4240 = vpop.f32.mrf.mxu0
        %v4241 = vadd.f32 %v4128, %v4240
        %4242 = vmatmul.f32.gmra.mxu0 %v3596
        %v4243 = vpop.f32.mrf.mxu0
        %v4244 = vadd.f32 %v4131, %v4243
        %4245 = vmatmul.f32.gmra.mxu0 %v3601
        %v4246 = vpop.f32.mrf.mxu0
        %v4247 = vadd.f32 %v4134, %v4246
        %4248 = vmatmul.f32.gmra.mxu0 %v3606
        %v4249 = vpop.f32.mrf.mxu0
        %v4250 = vadd.f32 %v4137, %v4249
        %4251 = vmatmul.f32.gmra.mxu0 %v3611
        %v4252 = vpop.f32.mrf.mxu0
        %v4253 = vadd.f32 %v4140, %v4252
        %4254 = vmatmul.f32.gmra.mxu0 %v3616
        %v4255 = vpop.f32.mrf.mxu0
        %v4256 = vadd.f32 %v4143, %v4255
        %4257 = vmatmul.f32.gmra.mxu0 %v3621
        %v4258 = vpop.f32.mrf.mxu0
        %v4259 = vadd.f32 %v4146, %v4258
        %4260 = vmatmul.f32.gmra.mxu0 %v3626
        %v4261 = vpop.f32.mrf.mxu0
        %v4262 = vadd.f32 %v4149, %v4261
        %4263 = vmatmul.f32.gmra.mxu0 %v3631
        %v4264 = vpop.f32.mrf.mxu0
        %v4265 = vadd.f32 %v4152, %v4264
        %4266 = vmatmul.f32.gmra.mxu0 %v3636
        %v4267 = vpop.f32.mrf.mxu0
        %v4268 = vadd.f32 %v4155, %v4267
        %4269 = vmatmul.f32.gmra.mxu0 %v3641
        %v4270 = vpop.f32.mrf.mxu0
        %v4271 = vadd.f32 %v4158, %v4270
        %4272 = vmatmul.f32.gmra.mxu0 %v3646
        %v4273 = vpop.f32.mrf.mxu0
        %v4274 = vadd.f32 %v4161, %v4273
        %4275 = vmatmul.f32.gmra.mxu0 %v3651
        %v4276 = vpop.f32.mrf.mxu0
        %v4277 = vadd.f32 %v4164, %v4276
        %4278 = vdwg.mxu0
        %4279 = vmatpush.msra.mxu0 0.0
        %4280 = vmatpush.msra.mxu0 0.0
        %4281 = vmatpush.msra.mxu0 0.0
        %4282 = vmatpush.msra.mxu0 0.0
        %4283 = vmatpush.msra.mxu0 0.0
        %4284 = vmatpush.msra.mxu0 0.0
        %4285 = vmatpush.msra.mxu0 0.0
        %4286 = vmatpush.msra.mxu0 0.0
        %4287 = vmatpush.msra.mxu0 %v3725
        %4288 = vmatpush.msra.mxu0 %v3724
        %4289 = vmatpush.msra.mxu0 %v3723
        %4290 = vmatpush.msra.mxu0 %v3722
        %4291 = vmatpush.msra.mxu0 %v3721
        %4292 = vmatpush.msra.mxu0 %v3720
        %4293 = vmatpush.msra.mxu0 %v3719
        %4294 = vmatpush.msra.mxu0 %v3718
        %4295 = vmatmul.f32.gmra.mxu0 %v3732
        %v4296 = vpop.f32.mrf.mxu0
        %v4297 = vadd.f32 %v4184, %v4296
        %4298 = vmatmul.f32.gmra.mxu0 %v3735
        %v4299 = vpop.f32.mrf.mxu0
        %v4300 = vadd.f32 %v4187, %v4299
        %4301 = vmatmul.f32.gmra.mxu0 %v3738
        %v4302 = vpop.f32.mrf.mxu0
        %v4303 = vadd.f32 %v4190, %v4302
        %4304 = vmatmul.f32.gmra.mxu0 %v3741
        %v4305 = vpop.f32.mrf.mxu0
        %v4306 = vadd.f32 %v4193, %v4305
        %4307 = vmatmul.f32.gmra.mxu0 %v3744
        %v4308 = vpop.f32.mrf.mxu0
        %v4309 = vadd.f32 %v4196, %v4308
        %4310 = vmatmul.f32.gmra.mxu0 %v3747
        %v4311 = vpop.f32.mrf.mxu0
        %v4312 = vadd.f32 %v4199, %v4311
        %4313 = vmatmul.f32.gmra.mxu0 %v3750
        %v4314 = vpop.f32.mrf.mxu0
        %v4315 = vadd.f32 %v4202, %v4314
        %4316 = vmatmul.f32.gmra.mxu0 %v3753
        %v4317 = vpop.f32.mrf.mxu0
        %v4318 = vadd.f32 %v4205, %v4317
        %4319 = vmatmul.f32.gmra.mxu0 %v3756
        %v4320 = vpop.f32.mrf.mxu0
        %v4321 = vadd.f32 %v4208, %v4320
        %4322 = vmatmul.f32.gmra.mxu0 %v3759
        %v4323 = vpop.f32.mrf.mxu0
        %v4324 = vadd.f32 %v4211, %v4323
        %4325 = vmatmul.f32.gmra.mxu0 %v3762
        %v4326 = vpop.f32.mrf.mxu0
        %v4327 = vadd.f32 %v4214, %v4326
        %4328 = vmatmul.f32.gmra.mxu0 %v3765
        %v4329 = vpop.f32.mrf.mxu0
        %v4330 = vadd.f32 %v4217, %v4329
        %4331 = vmatmul.f32.gmra.mxu0 %v3768
        %v4332 = vpop.f32.mrf.mxu0
        %v4333 = vadd.f32 %v4220, %v4332
        %4334 = vmatmul.f32.gmra.mxu0 %v3771
        %v4335 = vpop.f32.mrf.mxu0
        %v4336 = vadd.f32 %v4223, %v4335
        %4337 = vmatmul.f32.gmra.mxu0 %v3774
        %v4338 = vpop.f32.mrf.mxu0
        %v4339 = vadd.f32 %v4226, %v4338
        %4340 = vmatmul.f32.gmra.mxu0 %v3777
        %v4341 = vpop.f32.mrf.mxu0
        %v4342 = vadd.f32 %v4229, %v4341
        %4343 = vmatmul.f32.gmra.mxu0 %v3780
        %v4344 = vpop.f32.mrf.mxu0
        %v4345 = vadd.f32 %v4232, %v4344
        %4346 = vmatmul.f32.gmra.mxu0 %v3783
        %v4347 = vpop.f32.mrf.mxu0
        %v4348 = vadd.f32 %v4235, %v4347
        %4349 = vmatmul.f32.gmra.mxu0 %v3786
        %v4350 = vpop.f32.mrf.mxu0
        %v4351 = vadd.f32 %v4238, %v4350
        %4352 = vmatmul.f32.gmra.mxu0 %v3789
        %v4353 = vpop.f32.mrf.mxu0
        %v4354 = vadd.f32 %v4241, %v4353
        %4355 = vmatmul.f32.gmra.mxu0 %v3792
        %v4356 = vpop.f32.mrf.mxu0
        %v4357 = vadd.f32 %v4244, %v4356
        %4358 = vmatmul.f32.gmra.mxu0 %v3795
        %v4359 = vpop.f32.mrf.mxu0
        %v4360 = vadd.f32 %v4247, %v4359
        %4361 = vmatmul.f32.gmra.mxu0 %v3798
        %v4362 = vpop.f32.mrf.mxu0
        %v4363 = vadd.f32 %v4250, %v4362
        %4364 = vmatmul.f32.gmra.mxu0 %v3801
        %v4365 = vpop.f32.mrf.mxu0
        %v4366 = vadd.f32 %v4253, %v4365
        %4367 = vmatmul.f32.gmra.mxu0 %v3804
        %v4368 = vpop.f32.mrf.mxu0
        %v4369 = vadd.f32 %v4256, %v4368
        %4370 = vmatmul.f32.gmra.mxu0 %v3807
        %v4371 = vpop.f32.mrf.mxu0
        %v4372 = vadd.f32 %v4259, %v4371
        %4373 = vmatmul.f32.gmra.mxu0 %v3810
        %v4374 = vpop.f32.mrf.mxu0
        %v4375 = vadd.f32 %v4262, %v4374
        %4376 = vmatmul.f32.gmra.mxu0 %v3813
        %v4377 = vpop.f32.mrf.mxu0
        %v4378 = vadd.f32 %v4265, %v4377
        %4379 = vmatmul.f32.gmra.mxu0 %v3816
        %v4380 = vpop.f32.mrf.mxu0
        %v4381 = vadd.f32 %v4268, %v4380
        %4382 = vmatmul.f32.gmra.mxu0 %v3819
        %v4383 = vpop.f32.mrf.mxu0
        %v4384 = vadd.f32 %v4271, %v4383
        %4385 = vmatmul.f32.gmra.mxu0 %v3822
        %v4386 = vpop.f32.mrf.mxu0
        %v4387 = vadd.f32 %v4274, %v4386
        %4388 = vmatmul.f32.gmra.mxu0 %v3825
        %v4389 = vpop.f32.mrf.mxu0
        %v4390 = vadd.f32 %v4277, %v4389
        %4391 = vdwg.mxu0
        %vm4392 = vcmp.ge.f32.partialorder %v4297, 0.0
        %vm4393 = vcmp.ge.f32.partialorder %v4300, 0.0
        %vm4394 = vcmp.ge.f32.partialorder %v4303, 0.0
        %vm4395 = vcmp.ge.f32.partialorder %v4306, 0.0
        %vm4396 = vcmp.ge.f32.partialorder %v4309, 0.0
        %vm4397 = vcmp.ge.f32.partialorder %v4312, 0.0
        %vm4398 = vcmp.ge.f32.partialorder %v4315, 0.0
        %vm4399 = vcmp.ge.f32.partialorder %v4318, 0.0
        %vm4400 = vcmp.ge.f32.partialorder %v4321, 0.0
        %vm4401 = vcmp.ge.f32.partialorder %v4324, 0.0
        %vm4402 = vcmp.ge.f32.partialorder %v4327, 0.0
        %vm4403 = vcmp.ge.f32.partialorder %v4330, 0.0
        %vm4404 = vcmp.ge.f32.partialorder %v4333, 0.0
        %vm4405 = vcmp.ge.f32.partialorder %v4336, 0.0
        %vm4406 = vcmp.ge.f32.partialorder %v4339, 0.0
        %vm4407 = vcmp.ge.f32.partialorder %v4342, 0.0
        %vm4408 = vcmp.ge.f32.partialorder %v4345, 0.0
        %vm4409 = vcmp.ge.f32.partialorder %v4348, 0.0
        %vm4410 = vcmp.ge.f32.partialorder %v4351, 0.0
        %vm4411 = vcmp.ge.f32.partialorder %v4354, 0.0
        %vm4412 = vcmp.ge.f32.partialorder %v4357, 0.0
        %vm4413 = vcmp.ge.f32.partialorder %v4360, 0.0
        %vm4414 = vcmp.ge.f32.partialorder %v4363, 0.0
        %vm4415 = vcmp.ge.f32.partialorder %v4366, 0.0
        %vm4416 = vcmp.ge.f32.partialorder %v4369, 0.0
        %vm4417 = vcmp.ge.f32.partialorder %v4372, 0.0
        %vm4418 = vcmp.ge.f32.partialorder %v4375, 0.0
        %vm4419 = vcmp.ge.f32.partialorder %v4378, 0.0
        %vm4420 = vcmp.ge.f32.partialorder %v4381, 0.0
        %vm4421 = vcmp.ge.f32.partialorder %v4384, 0.0
        %vm4422 = vcmp.ge.f32.partialorder %v4387, 0.0
        %vm4423 = vcmp.ge.f32.partialorder %v4390, 0.0
        %v4424 = vmul.f32 %v4297, 0.2
        %v4425 = vmul.f32 %v4300, 0.2
        %v4426 = vmul.f32 %v4303, 0.2
        %v4427 = vmul.f32 %v4306, 0.2
        %v4428 = vmul.f32 %v4309, 0.2
        %v4429 = vmul.f32 %v4312, 0.2
        %v4430 = vmul.f32 %v4315, 0.2
        %v4431 = vmul.f32 %v4318, 0.2
        %v4432 = vmul.f32 %v4321, 0.2
        %v4433 = vmul.f32 %v4324, 0.2
        %v4434 = vmul.f32 %v4327, 0.2
        %v4435 = vmul.f32 %v4330, 0.2
        %v4436 = vmul.f32 %v4333, 0.2
        %v4437 = vmul.f32 %v4336, 0.2
        %v4438 = vmul.f32 %v4339, 0.2
        %v4439 = vmul.f32 %v4342, 0.2
        %v4440 = vmul.f32 %v4345, 0.2
        %v4441 = vmul.f32 %v4348, 0.2
        %v4442 = vmul.f32 %v4351, 0.2
        %v4443 = vmul.f32 %v4354, 0.2
        %v4444 = vmul.f32 %v4357, 0.2
        %v4445 = vmul.f32 %v4360, 0.2
        %v4446 = vmul.f32 %v4363, 0.2
        %v4447 = vmul.f32 %v4366, 0.2
        %v4448 = vmul.f32 %v4369, 0.2
        %v4449 = vmul.f32 %v4372, 0.2
        %v4450 = vmul.f32 %v4375, 0.2
        %v4451 = vmul.f32 %v4378, 0.2
        %v4452 = vmul.f32 %v4381, 0.2
        %v4453 = vmul.f32 %v4384, 0.2
        %v4454 = vmul.f32 %v4387, 0.2
        %v4455 = vmul.f32 %v4390, 0.2
        %v4456 = vsel %vm4392, %v4297, %v4424
        %v4457 = vsel %vm4393, %v4300, %v4425
        %v4458 = vsel %vm4394, %v4303, %v4426
        %v4459 = vsel %vm4395, %v4306, %v4427
        %v4460 = vsel %vm4396, %v4309, %v4428
        %v4461 = vsel %vm4397, %v4312, %v4429
        %v4462 = vsel %vm4398, %v4315, %v4430
        %v4463 = vsel %vm4399, %v4318, %v4431
        %v4464 = vsel %vm4400, %v4321, %v4432
        %v4465 = vsel %vm4401, %v4324, %v4433
        %v4466 = vsel %vm4402, %v4327, %v4434
        %v4467 = vsel %vm4403, %v4330, %v4435
        %v4468 = vsel %vm4404, %v4333, %v4436
        %v4469 = vsel %vm4405, %v4336, %v4437
        %v4470 = vsel %vm4406, %v4339, %v4438
        %v4471 = vsel %vm4407, %v4342, %v4439
        %v4472 = vsel %vm4408, %v4345, %v4440
        %v4473 = vsel %vm4409, %v4348, %v4441
        %v4474 = vsel %vm4410, %v4351, %v4442
        %v4475 = vsel %vm4411, %v4354, %v4443
        %v4476 = vsel %vm4412, %v4357, %v4444
        %v4477 = vsel %vm4413, %v4360, %v4445
        %v4478 = vsel %vm4414, %v4363, %v4446
        %v4479 = vsel %vm4415, %v4366, %v4447
        %v4480 = vsel %vm4416, %v4369, %v4448
        %v4481 = vsel %vm4417, %v4372, %v4449
        %v4482 = vsel %vm4418, %v4375, %v4450
        %v4483 = vsel %vm4419, %v4378, %v4451
        %v4484 = vsel %vm4420, %v4381, %v4452
        %v4485 = vsel %vm4421, %v4384, %v4453
        %v4486 = vsel %vm4422, %v4387, %v4454
        %v4487 = vsel %vm4423, %v4390, %v4455
        %4488 = vst.msk [vmem:[%s257 + $0x1] sm:$0xff] %vm169, %v4456
        %4489 = vst.msk [vmem:[%s257 + $0x9] sm:$0xff] %vm169, %v4457
        %4490 = vst.msk [vmem:[%s257 + $0x19] sm:$0xff] %vm169, %v4458
        %4491 = vst.msk [vmem:[%s257 + $0x21] sm:$0xff] %vm169, %v4459
        %4492 = vst.msk [vmem:[%s257 + $0x31] sm:$0xff] %vm169, %v4460
        %4493 = vst.msk [vmem:[%s257 + $0x39] sm:$0xff] %vm169, %v4461
        %4494 = vst.msk [vmem:[%s257 + $0x49] sm:$0xff] %vm169, %v4462
        %4495 = vst.msk [vmem:[%s257 + $0x51] sm:$0xff] %vm169, %v4463
        %4496 = vst.msk [vmem:[%s257 + $0x61] sm:$0xff] %vm169, %v4464
        %4497 = vst.msk [vmem:[%s257 + $0x69] sm:$0xff] %vm169, %v4465
        %4498 = vst.msk [vmem:[%s257 + $0x79] sm:$0xff] %vm169, %v4466
        %4499 = vst.msk [vmem:[%s257 + $0x81] sm:$0xff] %vm169, %v4467
        %4500 = vst.msk [vmem:[%s257 + $0x91] sm:$0xff] %vm169, %v4468
        %4501 = vst.msk [vmem:[%s257 + $0x99] sm:$0xff] %vm169, %v4469
        %4502 = vst.msk [vmem:[%s257 + $0xa9] sm:$0xff] %vm169, %v4470
        %4503 = vst.msk [vmem:[%s257 + $0xb1] sm:$0xff] %vm169, %v4471
        %4504 = vst.msk [vmem:[%s257 + $0xc1] sm:$0xff] %vm169, %v4472
        %4505 = vst.msk [vmem:[%s257 + $0xc9] sm:$0xff] %vm169, %v4473
        %4506 = vst.msk [vmem:[%s257 + $0xd9] sm:$0xff] %vm169, %v4474
        %4507 = vst.msk [vmem:[%s257 + $0xe1] sm:$0xff] %vm169, %v4475
        %4508 = vst.msk [vmem:[%s257 + $0xf1] sm:$0xff] %vm169, %v4476
        %4509 = vst.msk [vmem:[%s257 + $0xf9] sm:$0xff] %vm169, %v4477
        %4510 = vst.msk [vmem:[%s257 + $0x109] sm:$0xff] %vm169, %v4478
        %4511 = vst.msk [vmem:[%s257 + $0x111] sm:$0xff] %vm169, %v4479
        %4512 = vst.msk [vmem:[%s257 + $0x121] sm:$0xff] %vm169, %v4480
        %4513 = vst.msk [vmem:[%s257 + $0x129] sm:$0xff] %vm169, %v4481
        %4514 = vst.msk [vmem:[%s257 + $0x139] sm:$0xff] %vm169, %v4482
        %4515 = vst.msk [vmem:[%s257 + $0x141] sm:$0xff] %vm169, %v4483
        %4516 = vst.msk [vmem:[%s257 + $0x151] sm:$0xff] %vm169, %v4484
        %4517 = vst.msk [vmem:[%s257 + $0x159] sm:$0xff] %vm169, %v4485
        %4518 = vst.msk [vmem:[%s257 + $0x169] sm:$0xff] %vm169, %v4486
        %4519 = vst.msk [vmem:[%s257 + $0x171] sm:$0xff] %vm169, %v4487
        %v4520 = vld [vmem:[#allocation2] sm:$0xff]
        %v4521 = vld [vmem:[#allocation2 + $0x8] sm:$0xff]
        %v4522 = vld [vmem:[#allocation2 + $0x18] sm:$0xff]
        %v4523 = vld [vmem:[#allocation2 + $0x20] sm:$0xff]
        %v4524 = vld [vmem:[#allocation2 + $0x30] sm:$0xff]
        %v4525 = vld [vmem:[#allocation2 + $0x38] sm:$0xff]
        %v4526 = vld [vmem:[#allocation2 + $0x48] sm:$0xff]
        %v4527 = vld [vmem:[#allocation2 + $0x50] sm:$0xff]
        %v4528 = vld [vmem:[#allocation2 + $0x60] sm:$0xff]
        %v4529 = vld [vmem:[#allocation2 + $0x68] sm:$0xff]
        %v4530 = vld [vmem:[#allocation2 + $0x78] sm:$0xff]
        %v4531 = vld [vmem:[#allocation2 + $0x80] sm:$0xff]
        %v4532 = vld [vmem:[#allocation2 + $0x90] sm:$0xff]
        %v4533 = vld [vmem:[#allocation2 + $0x98] sm:$0xff]
        %v4534 = vld [vmem:[#allocation2 + $0xa8] sm:$0xff]
        %v4535 = vld [vmem:[#allocation2 + $0xb0] sm:$0xff]
        %v4536 = vld [vmem:[#allocation2 + $0xc0] sm:$0xff]
        %v4537 = vld [vmem:[#allocation2 + $0xc8] sm:$0xff]
        %v4538 = vld [vmem:[#allocation2 + $0xd8] sm:$0xff]
        %v4539 = vld [vmem:[#allocation2 + $0xe0] sm:$0xff]
        %v4540 = vld [vmem:[#allocation2 + $0xf0] sm:$0xff]
        %v4541 = vld [vmem:[#allocation2 + $0xf8] sm:$0xff]
        %v4542 = vld [vmem:[#allocation2 + $0x108] sm:$0xff]
        %v4543 = vld [vmem:[#allocation2 + $0x110] sm:$0xff]
        %v4544 = vld [vmem:[#allocation2 + $0x120] sm:$0xff]
        %v4545 = vld [vmem:[#allocation2 + $0x128] sm:$0xff]
        %v4546 = vld [vmem:[#allocation2 + $0x138] sm:$0xff]
        %v4547 = vld [vmem:[#allocation2 + $0x140] sm:$0xff]
        %v4548 = vld [vmem:[#allocation2 + $0x150] sm:$0xff]
        %v4549 = vld [vmem:[#allocation2 + $0x158] sm:$0xff]
        %v4550 = vld [vmem:[#allocation2 + $0x168] sm:$0xff]
        %v4551 = vld [vmem:[#allocation2 + $0x170] sm:$0xff]
        %4552 = vst.msk [vmem:[#allocation3] sm:$0xff] %vm169, %v4520
        %4553 = vst.msk [vmem:[#allocation3 + $0x28] sm:$0xff] %vm169, %v4521
        %4554 = vst.msk [vmem:[#allocation3 + $0x50] sm:$0xff] %vm169, %v4522
        %4555 = vst.msk [vmem:[#allocation3 + $0x78] sm:$0xff] %vm169, %v4523
        %4556 = vst.msk [vmem:[#allocation3 + $0xa0] sm:$0xff] %vm169, %v4524
        %4557 = vst.msk [vmem:[#allocation3 + $0xc8] sm:$0xff] %vm169, %v4525
        %4558 = vst.msk [vmem:[#allocation3 + $0xf0] sm:$0xff] %vm169, %v4526
        %4559 = vst.msk [vmem:[#allocation3 + $0x118] sm:$0xff] %vm169, %v4527
        %4560 = vst.msk [vmem:[#allocation3 + $0x140] sm:$0xff] %vm169, %v4528
        %4561 = vst.msk [vmem:[#allocation3 + $0x168] sm:$0xff] %vm169, %v4529
        %4562 = vst.msk [vmem:[#allocation3 + $0x190] sm:$0xff] %vm169, %v4530
        %4563 = vst.msk [vmem:[#allocation3 + $0x1b8] sm:$0xff] %vm169, %v4531
        %4564 = vst.msk [vmem:[#allocation3 + $0x1e0] sm:$0xff] %vm169, %v4532
        %4565 = vst.msk [vmem:[#allocation3 + $0x208] sm:$0xff] %vm169, %v4533
        %4566 = vst.msk [vmem:[#allocation3 + $0x230] sm:$0xff] %vm169, %v4534
        %4567 = vst.msk [vmem:[#allocation3 + $0x258] sm:$0xff] %vm169, %v4535
        %4568 = vst.msk [vmem:[#allocation3 + $0x280] sm:$0xff] %vm169, %v4536
        %4569 = vst.msk [vmem:[#allocation3 + $0x2a8] sm:$0xff] %vm169, %v4537
        %4570 = vst.msk [vmem:[#allocation3 + $0x2d0] sm:$0xff] %vm169, %v4538
        %4571 = vst.msk [vmem:[#allocation3 + $0x2f8] sm:$0xff] %vm169, %v4539
        %4572 = vst.msk [vmem:[#allocation3 + $0x320] sm:$0xff] %vm169, %v4540
        %4573 = vst.msk [vmem:[#allocation3 + $0x348] sm:$0xff] %vm169, %v4541
        %4574 = vst.msk [vmem:[#allocation3 + $0x370] sm:$0xff] %vm169, %v4542
        %4575 = vst.msk [vmem:[#allocation3 + $0x398] sm:$0xff] %vm169, %v4543
        %4576 = vst.msk [vmem:[#allocation3 + $0x3c0] sm:$0xff] %vm169, %v4544
        %4577 = vst.msk [vmem:[#allocation3 + $0x3e8] sm:$0xff] %vm169, %v4545
        %4578 = vst.msk [vmem:[#allocation3 + $0x410] sm:$0xff] %vm169, %v4546
        %4579 = vst.msk [vmem:[#allocation3 + $0x438] sm:$0xff] %vm169, %v4547
        %4580 = vst.msk [vmem:[#allocation3 + $0x460] sm:$0xff] %vm169, %v4548
        %4581 = vst.msk [vmem:[#allocation3 + $0x488] sm:$0xff] %vm169, %v4549
        %4582 = vst.msk [vmem:[#allocation3 + $0x4b0] sm:$0xff] %vm169, %v4550
        %4583 = vst.msk [vmem:[#allocation3 + $0x4d8] sm:$0xff] %vm169, %v4551
        %v4584 = vld [vmem:[#allocation2 + $0x1] sm:$0xff]
        %v4585 = vld [vmem:[#allocation2 + $0x9] sm:$0xff]
        %v4586 = vld [vmem:[#allocation2 + $0x19] sm:$0xff]
        %v4587 = vld [vmem:[#allocation2 + $0x21] sm:$0xff]
        %v4588 = vld [vmem:[#allocation2 + $0x31] sm:$0xff]
        %v4589 = vld [vmem:[#allocation2 + $0x39] sm:$0xff]
        %v4590 = vld [vmem:[#allocation2 + $0x49] sm:$0xff]
        %v4591 = vld [vmem:[#allocation2 + $0x51] sm:$0xff]
        %v4592 = vld [vmem:[#allocation2 + $0x61] sm:$0xff]
        %v4593 = vld [vmem:[#allocation2 + $0x69] sm:$0xff]
        %v4594 = vld [vmem:[#allocation2 + $0x79] sm:$0xff]
        %v4595 = vld [vmem:[#allocation2 + $0x81] sm:$0xff]
        %v4596 = vld [vmem:[#allocation2 + $0x91] sm:$0xff]
        %v4597 = vld [vmem:[#allocation2 + $0x99] sm:$0xff]
        %v4598 = vld [vmem:[#allocation2 + $0xa9] sm:$0xff]
        %v4599 = vld [vmem:[#allocation2 + $0xb1] sm:$0xff]
        %v4600 = vld [vmem:[#allocation2 + $0xc1] sm:$0xff]
        %v4601 = vld [vmem:[#allocation2 + $0xc9] sm:$0xff]
        %v4602 = vld [vmem:[#allocation2 + $0xd9] sm:$0xff]
        %v4603 = vld [vmem:[#allocation2 + $0xe1] sm:$0xff]
        %v4604 = vld [vmem:[#allocation2 + $0xf1] sm:$0xff]
        %v4605 = vld [vmem:[#allocation2 + $0xf9] sm:$0xff]
        %v4606 = vld [vmem:[#allocation2 + $0x109] sm:$0xff]
        %v4607 = vld [vmem:[#allocation2 + $0x111] sm:$0xff]
        %v4608 = vld [vmem:[#allocation2 + $0x121] sm:$0xff]
        %v4609 = vld [vmem:[#allocation2 + $0x129] sm:$0xff]
        %v4610 = vld [vmem:[#allocation2 + $0x139] sm:$0xff]
        %v4611 = vld [vmem:[#allocation2 + $0x141] sm:$0xff]
        %v4612 = vld [vmem:[#allocation2 + $0x151] sm:$0xff]
        %v4613 = vld [vmem:[#allocation2 + $0x159] sm:$0xff]
        %v4614 = vld [vmem:[#allocation2 + $0x169] sm:$0xff]
        %v4615 = vld [vmem:[#allocation2 + $0x171] sm:$0xff]
        %4648 = vrot.lane.b32.xlu0 %v4584, 64
        %v4649 = vpop.permute.xlu0 %4648
        %4650 = vrot.lane.b32.xlu0 %v4585, 64
        %v4651 = vpop.permute.xlu0 %4650
        %4652 = vrot.lane.b32.xlu0 %v4586, 64
        %v4653 = vpop.permute.xlu0 %4652
        %4654 = vrot.lane.b32.xlu0 %v4587, 64
        %v4655 = vpop.permute.xlu0 %4654
        %4656 = vrot.lane.b32.xlu0 %v4588, 64
        %v4657 = vpop.permute.xlu0 %4656
        %4658 = vrot.lane.b32.xlu0 %v4589, 64
        %v4659 = vpop.permute.xlu0 %4658
        %4660 = vrot.lane.b32.xlu0 %v4590, 64
        %v4661 = vpop.permute.xlu0 %4660
        %4662 = vrot.lane.b32.xlu0 %v4591, 64
        %v4663 = vpop.permute.xlu0 %4662
        %4664 = vrot.lane.b32.xlu0 %v4592, 64
        %v4665 = vpop.permute.xlu0 %4664
        %4666 = vrot.lane.b32.xlu0 %v4593, 64
        %v4667 = vpop.permute.xlu0 %4666
        %4668 = vrot.lane.b32.xlu0 %v4594, 64
        %v4669 = vpop.permute.xlu0 %4668
        %4670 = vrot.lane.b32.xlu0 %v4595, 64
        %v4671 = vpop.permute.xlu0 %4670
        %4672 = vrot.lane.b32.xlu0 %v4596, 64
        %v4673 = vpop.permute.xlu0 %4672
        %4674 = vrot.lane.b32.xlu0 %v4597, 64
        %v4675 = vpop.permute.xlu0 %4674
        %4676 = vrot.lane.b32.xlu0 %v4598, 64
        %v4677 = vpop.permute.xlu0 %4676
        %4678 = vrot.lane.b32.xlu0 %v4599, 64
        %v4679 = vpop.permute.xlu0 %4678
        %4680 = vrot.lane.b32.xlu0 %v4600, 64
        %v4681 = vpop.permute.xlu0 %4680
        %4682 = vrot.lane.b32.xlu0 %v4601, 64
        %v4683 = vpop.permute.xlu0 %4682
        %4684 = vrot.lane.b32.xlu0 %v4602, 64
        %v4685 = vpop.permute.xlu0 %4684
        %4686 = vrot.lane.b32.xlu0 %v4603, 64
        %v4687 = vpop.permute.xlu0 %4686
        %4688 = vrot.lane.b32.xlu0 %v4604, 64
        %v4689 = vpop.permute.xlu0 %4688
        %4690 = vrot.lane.b32.xlu0 %v4605, 64
        %v4691 = vpop.permute.xlu0 %4690
        %4692 = vrot.lane.b32.xlu0 %v4606, 64
        %v4693 = vpop.permute.xlu0 %4692
        %4694 = vrot.lane.b32.xlu0 %v4607, 64
        %v4695 = vpop.permute.xlu0 %4694
        %4696 = vrot.lane.b32.xlu0 %v4608, 64
        %v4697 = vpop.permute.xlu0 %4696
        %4698 = vrot.lane.b32.xlu0 %v4609, 64
        %v4699 = vpop.permute.xlu0 %4698
        %4700 = vrot.lane.b32.xlu0 %v4610, 64
        %v4701 = vpop.permute.xlu0 %4700
        %4702 = vrot.lane.b32.xlu0 %v4611, 64
        %v4703 = vpop.permute.xlu0 %4702
        %4704 = vrot.lane.b32.xlu0 %v4612, 64
        %v4705 = vpop.permute.xlu0 %4704
        %4706 = vrot.lane.b32.xlu0 %v4613, 64
        %v4707 = vpop.permute.xlu0 %4706
        %4708 = vrot.lane.b32.xlu0 %v4614, 64
        %v4709 = vpop.permute.xlu0 %4708
        %4710 = vrot.lane.b32.xlu0 %v4615, 64
        %v4711 = vpop.permute.xlu0 %4710
        %4744 = vst.msk [vmem:[#allocation3] sm:$0xff] %vm514, %v4649
        %4745 = vst.msk [vmem:[#allocation3 + $0x28] sm:$0xff] %vm514, %v4651
        %4746 = vst.msk [vmem:[#allocation3 + $0x50] sm:$0xff] %vm514, %v4653
        %4747 = vst.msk [vmem:[#allocation3 + $0x78] sm:$0xff] %vm514, %v4655
        %4748 = vst.msk [vmem:[#allocation3 + $0xa0] sm:$0xff] %vm514, %v4657
        %4749 = vst.msk [vmem:[#allocation3 + $0xc8] sm:$0xff] %vm514, %v4659
        %4750 = vst.msk [vmem:[#allocation3 + $0xf0] sm:$0xff] %vm514, %v4661
        %4751 = vst.msk [vmem:[#allocation3 + $0x118] sm:$0xff] %vm514, %v4663
        %4752 = vst.msk [vmem:[#allocation3 + $0x140] sm:$0xff] %vm514, %v4665
        %4753 = vst.msk [vmem:[#allocation3 + $0x168] sm:$0xff] %vm514, %v4667
        %4754 = vst.msk [vmem:[#allocation3 + $0x190] sm:$0xff] %vm514, %v4669
        %4755 = vst.msk [vmem:[#allocation3 + $0x1b8] sm:$0xff] %vm514, %v4671
        %4756 = vst.msk [vmem:[#allocation3 + $0x1e0] sm:$0xff] %vm514, %v4673
        %4757 = vst.msk [vmem:[#allocation3 + $0x208] sm:$0xff] %vm514, %v4675
        %4758 = vst.msk [vmem:[#allocation3 + $0x230] sm:$0xff] %vm514, %v4677
        %4759 = vst.msk [vmem:[#allocation3 + $0x258] sm:$0xff] %vm514, %v4679
        %4760 = vst.msk [vmem:[#allocation3 + $0x280] sm:$0xff] %vm514, %v4681
        %4761 = vst.msk [vmem:[#allocation3 + $0x2a8] sm:$0xff] %vm514, %v4683
        %4762 = vst.msk [vmem:[#allocation3 + $0x2d0] sm:$0xff] %vm514, %v4685
        %4763 = vst.msk [vmem:[#allocation3 + $0x2f8] sm:$0xff] %vm514, %v4687
        %4764 = vst.msk [vmem:[#allocation3 + $0x320] sm:$0xff] %vm514, %v4689
        %4765 = vst.msk [vmem:[#allocation3 + $0x348] sm:$0xff] %vm514, %v4691
        %4766 = vst.msk [vmem:[#allocation3 + $0x370] sm:$0xff] %vm514, %v4693
        %4767 = vst.msk [vmem:[#allocation3 + $0x398] sm:$0xff] %vm514, %v4695
        %4768 = vst.msk [vmem:[#allocation3 + $0x3c0] sm:$0xff] %vm514, %v4697
        %4769 = vst.msk [vmem:[#allocation3 + $0x3e8] sm:$0xff] %vm514, %v4699
        %4770 = vst.msk [vmem:[#allocation3 + $0x410] sm:$0xff] %vm514, %v4701
        %4771 = vst.msk [vmem:[#allocation3 + $0x438] sm:$0xff] %vm514, %v4703
        %4772 = vst.msk [vmem:[#allocation3 + $0x460] sm:$0xff] %vm514, %v4705
        %4773 = vst.msk [vmem:[#allocation3 + $0x488] sm:$0xff] %vm514, %v4707
        %4774 = vst.msk [vmem:[#allocation3 + $0x4b0] sm:$0xff] %vm514, %v4709
        %4775 = vst.msk [vmem:[#allocation3 + $0x4d8] sm:$0xff] %vm514, %v4711
        %v4776 = vld [vmem:[#allocation2 + $0x2] sm:$0xff]
        %v4777 = vld [vmem:[#allocation2 + $0xa] sm:$0xff]
        %v4778 = vld [vmem:[#allocation2 + $0x1a] sm:$0xff]
        %v4779 = vld [vmem:[#allocation2 + $0x22] sm:$0xff]
        %v4780 = vld [vmem:[#allocation2 + $0x32] sm:$0xff]
        %v4781 = vld [vmem:[#allocation2 + $0x3a] sm:$0xff]
        %v4782 = vld [vmem:[#allocation2 + $0x4a] sm:$0xff]
        %v4783 = vld [vmem:[#allocation2 + $0x52] sm:$0xff]
        %v4784 = vld [vmem:[#allocation2 + $0x62] sm:$0xff]
        %v4785 = vld [vmem:[#allocation2 + $0x6a] sm:$0xff]
        %v4786 = vld [vmem:[#allocation2 + $0x7a] sm:$0xff]
        %v4787 = vld [vmem:[#allocation2 + $0x82] sm:$0xff]
        %v4788 = vld [vmem:[#allocation2 + $0x92] sm:$0xff]
        %v4789 = vld [vmem:[#allocation2 + $0x9a] sm:$0xff]
        %v4790 = vld [vmem:[#allocation2 + $0xaa] sm:$0xff]
        %v4791 = vld [vmem:[#allocation2 + $0xb2] sm:$0xff]
        %v4792 = vld [vmem:[#allocation2 + $0xc2] sm:$0xff]
        %v4793 = vld [vmem:[#allocation2 + $0xca] sm:$0xff]
        %v4794 = vld [vmem:[#allocation2 + $0xda] sm:$0xff]
        %v4795 = vld [vmem:[#allocation2 + $0xe2] sm:$0xff]
        %v4796 = vld [vmem:[#allocation2 + $0xf2] sm:$0xff]
        %v4797 = vld [vmem:[#allocation2 + $0xfa] sm:$0xff]
        %v4798 = vld [vmem:[#allocation2 + $0x10a] sm:$0xff]
        %v4799 = vld [vmem:[#allocation2 + $0x112] sm:$0xff]
        %v4800 = vld [vmem:[#allocation2 + $0x122] sm:$0xff]
        %v4801 = vld [vmem:[#allocation2 + $0x12a] sm:$0xff]
        %v4802 = vld [vmem:[#allocation2 + $0x13a] sm:$0xff]
        %v4803 = vld [vmem:[#allocation2 + $0x142] sm:$0xff]
        %v4804 = vld [vmem:[#allocation2 + $0x152] sm:$0xff]
        %v4805 = vld [vmem:[#allocation2 + $0x15a] sm:$0xff]
        %v4806 = vld [vmem:[#allocation2 + $0x16a] sm:$0xff]
        %v4807 = vld [vmem:[#allocation2 + $0x172] sm:$0xff]
        %4808 = vst.msk [vmem:[#allocation3 + $0x8] sm:$0xff] %vm169, %v4776
        %4809 = vst.msk [vmem:[#allocation3 + $0x30] sm:$0xff] %vm169, %v4777
        %4810 = vst.msk [vmem:[#allocation3 + $0x58] sm:$0xff] %vm169, %v4778
        %4811 = vst.msk [vmem:[#allocation3 + $0x80] sm:$0xff] %vm169, %v4779
        %4812 = vst.msk [vmem:[#allocation3 + $0xa8] sm:$0xff] %vm169, %v4780
        %4813 = vst.msk [vmem:[#allocation3 + $0xd0] sm:$0xff] %vm169, %v4781
        %4814 = vst.msk [vmem:[#allocation3 + $0xf8] sm:$0xff] %vm169, %v4782
        %4815 = vst.msk [vmem:[#allocation3 + $0x120] sm:$0xff] %vm169, %v4783
        %4816 = vst.msk [vmem:[#allocation3 + $0x148] sm:$0xff] %vm169, %v4784
        %4817 = vst.msk [vmem:[#allocation3 + $0x170] sm:$0xff] %vm169, %v4785
        %4818 = vst.msk [vmem:[#allocation3 + $0x198] sm:$0xff] %vm169, %v4786
        %4819 = vst.msk [vmem:[#allocation3 + $0x1c0] sm:$0xff] %vm169, %v4787
        %4820 = vst.msk [vmem:[#allocation3 + $0x1e8] sm:$0xff] %vm169, %v4788
        %4821 = vst.msk [vmem:[#allocation3 + $0x210] sm:$0xff] %vm169, %v4789
        %4822 = vst.msk [vmem:[#allocation3 + $0x238] sm:$0xff] %vm169, %v4790
        %4823 = vst.msk [vmem:[#allocation3 + $0x260] sm:$0xff] %vm169, %v4791
        %4824 = vst.msk [vmem:[#allocation3 + $0x288] sm:$0xff] %vm169, %v4792
        %4825 = vst.msk [vmem:[#allocation3 + $0x2b0] sm:$0xff] %vm169, %v4793
        %4826 = vst.msk [vmem:[#allocation3 + $0x2d8] sm:$0xff] %vm169, %v4794
        %4827 = vst.msk [vmem:[#allocation3 + $0x300] sm:$0xff] %vm169, %v4795
        %4828 = vst.msk [vmem:[#allocation3 + $0x328] sm:$0xff] %vm169, %v4796
        %4829 = vst.msk [vmem:[#allocation3 + $0x350] sm:$0xff] %vm169, %v4797
        %4830 = vst.msk [vmem:[#allocation3 + $0x378] sm:$0xff] %vm169, %v4798
        %4831 = vst.msk [vmem:[#allocation3 + $0x3a0] sm:$0xff] %vm169, %v4799
        %4832 = vst.msk [vmem:[#allocation3 + $0x3c8] sm:$0xff] %vm169, %v4800
        %4833 = vst.msk [vmem:[#allocation3 + $0x3f0] sm:$0xff] %vm169, %v4801
        %4834 = vst.msk [vmem:[#allocation3 + $0x418] sm:$0xff] %vm169, %v4802
        %4835 = vst.msk [vmem:[#allocation3 + $0x440] sm:$0xff] %vm169, %v4803
        %4836 = vst.msk [vmem:[#allocation3 + $0x468] sm:$0xff] %vm169, %v4804
        %4837 = vst.msk [vmem:[#allocation3 + $0x490] sm:$0xff] %vm169, %v4805
        %4838 = vst.msk [vmem:[#allocation3 + $0x4b8] sm:$0xff] %vm169, %v4806
        %4839 = vst.msk [vmem:[#allocation3 + $0x4e0] sm:$0xff] %vm169, %v4807
        %v4840 = vld [vmem:[%s257] sm:$0xff]
        %v4841 = vld [vmem:[%s257 + $0x8] sm:$0xff]
        %v4842 = vld [vmem:[%s257 + $0x18] sm:$0xff]
        %v4843 = vld [vmem:[%s257 + $0x20] sm:$0xff]
        %v4844 = vld [vmem:[%s257 + $0x30] sm:$0xff]
        %v4845 = vld [vmem:[%s257 + $0x38] sm:$0xff]
        %v4846 = vld [vmem:[%s257 + $0x48] sm:$0xff]
        %v4847 = vld [vmem:[%s257 + $0x50] sm:$0xff]
        %v4848 = vld [vmem:[%s257 + $0x60] sm:$0xff]
        %v4849 = vld [vmem:[%s257 + $0x68] sm:$0xff]
        %v4850 = vld [vmem:[%s257 + $0x78] sm:$0xff]
        %v4851 = vld [vmem:[%s257 + $0x80] sm:$0xff]
        %v4852 = vld [vmem:[%s257 + $0x90] sm:$0xff]
        %v4853 = vld [vmem:[%s257 + $0x98] sm:$0xff]
        %v4854 = vld [vmem:[%s257 + $0xa8] sm:$0xff]
        %v4855 = vld [vmem:[%s257 + $0xb0] sm:$0xff]
        %v4856 = vld [vmem:[%s257 + $0xc0] sm:$0xff]
        %v4857 = vld [vmem:[%s257 + $0xc8] sm:$0xff]
        %v4858 = vld [vmem:[%s257 + $0xd8] sm:$0xff]
        %v4859 = vld [vmem:[%s257 + $0xe0] sm:$0xff]
        %v4860 = vld [vmem:[%s257 + $0xf0] sm:$0xff]
        %v4861 = vld [vmem:[%s257 + $0xf8] sm:$0xff]
        %v4862 = vld [vmem:[%s257 + $0x108] sm:$0xff]
        %v4863 = vld [vmem:[%s257 + $0x110] sm:$0xff]
        %v4864 = vld [vmem:[%s257 + $0x120] sm:$0xff]
        %v4865 = vld [vmem:[%s257 + $0x128] sm:$0xff]
        %v4866 = vld [vmem:[%s257 + $0x138] sm:$0xff]
        %v4867 = vld [vmem:[%s257 + $0x140] sm:$0xff]
        %v4868 = vld [vmem:[%s257 + $0x150] sm:$0xff]
        %v4869 = vld [vmem:[%s257 + $0x158] sm:$0xff]
        %v4870 = vld [vmem:[%s257 + $0x168] sm:$0xff]
        %v4871 = vld [vmem:[%s257 + $0x170] sm:$0xff]
        %4904 = vrot.lane.b32.xlu0 %v4840, 64
        %v4905 = vpop.permute.xlu0 %4904
        %4906 = vrot.lane.b32.xlu0 %v4841, 64
        %v4907 = vpop.permute.xlu0 %4906
        %4908 = vrot.lane.b32.xlu0 %v4842, 64
        %v4909 = vpop.permute.xlu0 %4908
        %4910 = vrot.lane.b32.xlu0 %v4843, 64
        %v4911 = vpop.permute.xlu0 %4910
        %4912 = vrot.lane.b32.xlu0 %v4844, 64
        %v4913 = vpop.permute.xlu0 %4912
        %4914 = vrot.lane.b32.xlu0 %v4845, 64
        %v4915 = vpop.permute.xlu0 %4914
        %4916 = vrot.lane.b32.xlu0 %v4846, 64
        %v4917 = vpop.permute.xlu0 %4916
        %4918 = vrot.lane.b32.xlu0 %v4847, 64
        %v4919 = vpop.permute.xlu0 %4918
        %4920 = vrot.lane.b32.xlu0 %v4848, 64
        %v4921 = vpop.permute.xlu0 %4920
        %4922 = vrot.lane.b32.xlu0 %v4849, 64
        %v4923 = vpop.permute.xlu0 %4922
        %4924 = vrot.lane.b32.xlu0 %v4850, 64
        %v4925 = vpop.permute.xlu0 %4924
        %4926 = vrot.lane.b32.xlu0 %v4851, 64
        %v4927 = vpop.permute.xlu0 %4926
        %4928 = vrot.lane.b32.xlu0 %v4852, 64
        %v4929 = vpop.permute.xlu0 %4928
        %4930 = vrot.lane.b32.xlu0 %v4853, 64
        %v4931 = vpop.permute.xlu0 %4930
        %4932 = vrot.lane.b32.xlu0 %v4854, 64
        %v4933 = vpop.permute.xlu0 %4932
        %4934 = vrot.lane.b32.xlu0 %v4855, 64
        %v4935 = vpop.permute.xlu0 %4934
        %4936 = vrot.lane.b32.xlu0 %v4856, 64
        %v4937 = vpop.permute.xlu0 %4936
        %4938 = vrot.lane.b32.xlu0 %v4857, 64
        %v4939 = vpop.permute.xlu0 %4938
        %4940 = vrot.lane.b32.xlu0 %v4858, 64
        %v4941 = vpop.permute.xlu0 %4940
        %4942 = vrot.lane.b32.xlu0 %v4859, 64
        %v4943 = vpop.permute.xlu0 %4942
        %4944 = vrot.lane.b32.xlu0 %v4860, 64
        %v4945 = vpop.permute.xlu0 %4944
        %4946 = vrot.lane.b32.xlu0 %v4861, 64
        %v4947 = vpop.permute.xlu0 %4946
        %4948 = vrot.lane.b32.xlu0 %v4862, 64
        %v4949 = vpop.permute.xlu0 %4948
        %4950 = vrot.lane.b32.xlu0 %v4863, 64
        %v4951 = vpop.permute.xlu0 %4950
        %4952 = vrot.lane.b32.xlu0 %v4864, 64
        %v4953 = vpop.permute.xlu0 %4952
        %4954 = vrot.lane.b32.xlu0 %v4865, 64
        %v4955 = vpop.permute.xlu0 %4954
        %4956 = vrot.lane.b32.xlu0 %v4866, 64
        %v4957 = vpop.permute.xlu0 %4956
        %4958 = vrot.lane.b32.xlu0 %v4867, 64
        %v4959 = vpop.permute.xlu0 %4958
        %4960 = vrot.lane.b32.xlu0 %v4868, 64
        %v4961 = vpop.permute.xlu0 %4960
        %4962 = vrot.lane.b32.xlu0 %v4869, 64
        %v4963 = vpop.permute.xlu0 %4962
        %4964 = vrot.lane.b32.xlu0 %v4870, 64
        %v4965 = vpop.permute.xlu0 %4964
        %4966 = vrot.lane.b32.xlu0 %v4871, 64
        %v4967 = vpop.permute.xlu0 %4966
        %5000 = vst.msk [vmem:[#allocation3 + $0x8] sm:$0xff] %vm514, %v4905
        %5001 = vst.msk [vmem:[#allocation3 + $0x30] sm:$0xff] %vm514, %v4907
        %5002 = vst.msk [vmem:[#allocation3 + $0x58] sm:$0xff] %vm514, %v4909
        %5003 = vst.msk [vmem:[#allocation3 + $0x80] sm:$0xff] %vm514, %v4911
        %5004 = vst.msk [vmem:[#allocation3 + $0xa8] sm:$0xff] %vm514, %v4913
        %5005 = vst.msk [vmem:[#allocation3 + $0xd0] sm:$0xff] %vm514, %v4915
        %5006 = vst.msk [vmem:[#allocation3 + $0xf8] sm:$0xff] %vm514, %v4917
        %5007 = vst.msk [vmem:[#allocation3 + $0x120] sm:$0xff] %vm514, %v4919
        %5008 = vst.msk [vmem:[#allocation3 + $0x148] sm:$0xff] %vm514, %v4921
        %5009 = vst.msk [vmem:[#allocation3 + $0x170] sm:$0xff] %vm514, %v4923
        %5010 = vst.msk [vmem:[#allocation3 + $0x198] sm:$0xff] %vm514, %v4925
        %5011 = vst.msk [vmem:[#allocation3 + $0x1c0] sm:$0xff] %vm514, %v4927
        %5012 = vst.msk [vmem:[#allocation3 + $0x1e8] sm:$0xff] %vm514, %v4929
        %5013 = vst.msk [vmem:[#allocation3 + $0x210] sm:$0xff] %vm514, %v4931
        %5014 = vst.msk [vmem:[#allocation3 + $0x238] sm:$0xff] %vm514, %v4933
        %5015 = vst.msk [vmem:[#allocation3 + $0x260] sm:$0xff] %vm514, %v4935
        %5016 = vst.msk [vmem:[#allocation3 + $0x288] sm:$0xff] %vm514, %v4937
        %5017 = vst.msk [vmem:[#allocation3 + $0x2b0] sm:$0xff] %vm514, %v4939
        %5018 = vst.msk [vmem:[#allocation3 + $0x2d8] sm:$0xff] %vm514, %v4941
        %5019 = vst.msk [vmem:[#allocation3 + $0x300] sm:$0xff] %vm514, %v4943
        %5020 = vst.msk [vmem:[#allocation3 + $0x328] sm:$0xff] %vm514, %v4945
        %5021 = vst.msk [vmem:[#allocation3 + $0x350] sm:$0xff] %vm514, %v4947
        %5022 = vst.msk [vmem:[#allocation3 + $0x378] sm:$0xff] %vm514, %v4949
        %5023 = vst.msk [vmem:[#allocation3 + $0x3a0] sm:$0xff] %vm514, %v4951
        %5024 = vst.msk [vmem:[#allocation3 + $0x3c8] sm:$0xff] %vm514, %v4953
        %5025 = vst.msk [vmem:[#allocation3 + $0x3f0] sm:$0xff] %vm514, %v4955
        %5026 = vst.msk [vmem:[#allocation3 + $0x418] sm:$0xff] %vm514, %v4957
        %5027 = vst.msk [vmem:[#allocation3 + $0x440] sm:$0xff] %vm514, %v4959
        %5028 = vst.msk [vmem:[#allocation3 + $0x468] sm:$0xff] %vm514, %v4961
        %5029 = vst.msk [vmem:[#allocation3 + $0x490] sm:$0xff] %vm514, %v4963
        %5030 = vst.msk [vmem:[#allocation3 + $0x4b8] sm:$0xff] %vm514, %v4965
        %5031 = vst.msk [vmem:[#allocation3 + $0x4e0] sm:$0xff] %vm514, %v4967
        %v5032 = vld [vmem:[%s257 + $0x1] sm:$0xff]
        %v5033 = vld [vmem:[%s257 + $0x9] sm:$0xff]
        %v5034 = vld [vmem:[%s257 + $0x19] sm:$0xff]
        %v5035 = vld [vmem:[%s257 + $0x21] sm:$0xff]
        %v5036 = vld [vmem:[%s257 + $0x31] sm:$0xff]
        %v5037 = vld [vmem:[%s257 + $0x39] sm:$0xff]
        %v5038 = vld [vmem:[%s257 + $0x49] sm:$0xff]
        %v5039 = vld [vmem:[%s257 + $0x51] sm:$0xff]
        %v5040 = vld [vmem:[%s257 + $0x61] sm:$0xff]
        %v5041 = vld [vmem:[%s257 + $0x69] sm:$0xff]
        %v5042 = vld [vmem:[%s257 + $0x79] sm:$0xff]
        %v5043 = vld [vmem:[%s257 + $0x81] sm:$0xff]
        %v5044 = vld [vmem:[%s257 + $0x91] sm:$0xff]
        %v5045 = vld [vmem:[%s257 + $0x99] sm:$0xff]
        %v5046 = vld [vmem:[%s257 + $0xa9] sm:$0xff]
        %v5047 = vld [vmem:[%s257 + $0xb1] sm:$0xff]
        %v5048 = vld [vmem:[%s257 + $0xc1] sm:$0xff]
        %v5049 = vld [vmem:[%s257 + $0xc9] sm:$0xff]
        %v5050 = vld [vmem:[%s257 + $0xd9] sm:$0xff]
        %v5051 = vld [vmem:[%s257 + $0xe1] sm:$0xff]
        %v5052 = vld [vmem:[%s257 + $0xf1] sm:$0xff]
        %v5053 = vld [vmem:[%s257 + $0xf9] sm:$0xff]
        %v5054 = vld [vmem:[%s257 + $0x109] sm:$0xff]
        %v5055 = vld [vmem:[%s257 + $0x111] sm:$0xff]
        %v5056 = vld [vmem:[%s257 + $0x121] sm:$0xff]
        %v5057 = vld [vmem:[%s257 + $0x129] sm:$0xff]
        %v5058 = vld [vmem:[%s257 + $0x139] sm:$0xff]
        %v5059 = vld [vmem:[%s257 + $0x141] sm:$0xff]
        %v5060 = vld [vmem:[%s257 + $0x151] sm:$0xff]
        %v5061 = vld [vmem:[%s257 + $0x159] sm:$0xff]
        %v5062 = vld [vmem:[%s257 + $0x169] sm:$0xff]
        %v5063 = vld [vmem:[%s257 + $0x171] sm:$0xff]
        %5064 = vst.msk [vmem:[#allocation3 + $0x10] sm:$0xff] %vm169, %v5032
        %5065 = vst.msk [vmem:[#allocation3 + $0x38] sm:$0xff] %vm169, %v5033
        %5066 = vst.msk [vmem:[#allocation3 + $0x60] sm:$0xff] %vm169, %v5034
        %5067 = vst.msk [vmem:[#allocation3 + $0x88] sm:$0xff] %vm169, %v5035
        %5068 = vst.msk [vmem:[#allocation3 + $0xb0] sm:$0xff] %vm169, %v5036
        %5069 = vst.msk [vmem:[#allocation3 + $0xd8] sm:$0xff] %vm169, %v5037
        %5070 = vst.msk [vmem:[#allocation3 + $0x100] sm:$0xff] %vm169, %v5038
        %5071 = vst.msk [vmem:[#allocation3 + $0x128] sm:$0xff] %vm169, %v5039
        %5072 = vst.msk [vmem:[#allocation3 + $0x150] sm:$0xff] %vm169, %v5040
        %5073 = vst.msk [vmem:[#allocation3 + $0x178] sm:$0xff] %vm169, %v5041
        %5074 = vst.msk [vmem:[#allocation3 + $0x1a0] sm:$0xff] %vm169, %v5042
        %5075 = vst.msk [vmem:[#allocation3 + $0x1c8] sm:$0xff] %vm169, %v5043
        %5076 = vst.msk [vmem:[#allocation3 + $0x1f0] sm:$0xff] %vm169, %v5044
        %5077 = vst.msk [vmem:[#allocation3 + $0x218] sm:$0xff] %vm169, %v5045
        %5078 = vst.msk [vmem:[#allocation3 + $0x240] sm:$0xff] %vm169, %v5046
        %5079 = vst.msk [vmem:[#allocation3 + $0x268] sm:$0xff] %vm169, %v5047
        %5080 = vst.msk [vmem:[#allocation3 + $0x290] sm:$0xff] %vm169, %v5048
        %5081 = vst.msk [vmem:[#allocation3 + $0x2b8] sm:$0xff] %vm169, %v5049
        %5082 = vst.msk [vmem:[#allocation3 + $0x2e0] sm:$0xff] %vm169, %v5050
        %5083 = vst.msk [vmem:[#allocation3 + $0x308] sm:$0xff] %vm169, %v5051
        %5084 = vst.msk [vmem:[#allocation3 + $0x330] sm:$0xff] %vm169, %v5052
        %5085 = vst.msk [vmem:[#allocation3 + $0x358] sm:$0xff] %vm169, %v5053
        %5086 = vst.msk [vmem:[#allocation3 + $0x380] sm:$0xff] %vm169, %v5054
        %5087 = vst.msk [vmem:[#allocation3 + $0x3a8] sm:$0xff] %vm169, %v5055
        %5088 = vst.msk [vmem:[#allocation3 + $0x3d0] sm:$0xff] %vm169, %v5056
        %5089 = vst.msk [vmem:[#allocation3 + $0x3f8] sm:$0xff] %vm169, %v5057
        %5090 = vst.msk [vmem:[#allocation3 + $0x420] sm:$0xff] %vm169, %v5058
        %5091 = vst.msk [vmem:[#allocation3 + $0x448] sm:$0xff] %vm169, %v5059
        %5092 = vst.msk [vmem:[#allocation3 + $0x470] sm:$0xff] %vm169, %v5060
        %5093 = vst.msk [vmem:[#allocation3 + $0x498] sm:$0xff] %vm169, %v5061
        %5094 = vst.msk [vmem:[#allocation3 + $0x4c0] sm:$0xff] %vm169, %v5062
        %5095 = vst.msk [vmem:[#allocation3 + $0x4e8] sm:$0xff] %vm169, %v5063
        %v5096 = vld [vmem:[%s257 + $0x2] sm:$0xff]
        %v5097 = vld [vmem:[%s257 + $0xa] sm:$0xff]
        %v5098 = vld [vmem:[%s257 + $0x1a] sm:$0xff]
        %v5099 = vld [vmem:[%s257 + $0x22] sm:$0xff]
        %v5100 = vld [vmem:[%s257 + $0x32] sm:$0xff]
        %v5101 = vld [vmem:[%s257 + $0x3a] sm:$0xff]
        %v5102 = vld [vmem:[%s257 + $0x4a] sm:$0xff]
        %v5103 = vld [vmem:[%s257 + $0x52] sm:$0xff]
        %v5104 = vld [vmem:[%s257 + $0x62] sm:$0xff]
        %v5105 = vld [vmem:[%s257 + $0x6a] sm:$0xff]
        %v5106 = vld [vmem:[%s257 + $0x7a] sm:$0xff]
        %v5107 = vld [vmem:[%s257 + $0x82] sm:$0xff]
        %v5108 = vld [vmem:[%s257 + $0x92] sm:$0xff]
        %v5109 = vld [vmem:[%s257 + $0x9a] sm:$0xff]
        %v5110 = vld [vmem:[%s257 + $0xaa] sm:$0xff]
        %v5111 = vld [vmem:[%s257 + $0xb2] sm:$0xff]
        %v5112 = vld [vmem:[%s257 + $0xc2] sm:$0xff]
        %v5113 = vld [vmem:[%s257 + $0xca] sm:$0xff]
        %v5114 = vld [vmem:[%s257 + $0xda] sm:$0xff]
        %v5115 = vld [vmem:[%s257 + $0xe2] sm:$0xff]
        %v5116 = vld [vmem:[%s257 + $0xf2] sm:$0xff]
        %v5117 = vld [vmem:[%s257 + $0xfa] sm:$0xff]
        %v5118 = vld [vmem:[%s257 + $0x10a] sm:$0xff]
        %v5119 = vld [vmem:[%s257 + $0x112] sm:$0xff]
        %v5120 = vld [vmem:[%s257 + $0x122] sm:$0xff]
        %v5121 = vld [vmem:[%s257 + $0x12a] sm:$0xff]
        %v5122 = vld [vmem:[%s257 + $0x13a] sm:$0xff]
        %v5123 = vld [vmem:[%s257 + $0x142] sm:$0xff]
        %v5124 = vld [vmem:[%s257 + $0x152] sm:$0xff]
        %v5125 = vld [vmem:[%s257 + $0x15a] sm:$0xff]
        %v5126 = vld [vmem:[%s257 + $0x16a] sm:$0xff]
        %v5127 = vld [vmem:[%s257 + $0x172] sm:$0xff]
        %5160 = vrot.lane.b32.xlu0 %v5096, 64
        %v5161 = vpop.permute.xlu0 %5160
        %5162 = vrot.lane.b32.xlu0 %v5097, 64
        %v5163 = vpop.permute.xlu0 %5162
        %5164 = vrot.lane.b32.xlu0 %v5098, 64
        %v5165 = vpop.permute.xlu0 %5164
        %5166 = vrot.lane.b32.xlu0 %v5099, 64
        %v5167 = vpop.permute.xlu0 %5166
        %5168 = vrot.lane.b32.xlu0 %v5100, 64
        %v5169 = vpop.permute.xlu0 %5168
        %5170 = vrot.lane.b32.xlu0 %v5101, 64
        %v5171 = vpop.permute.xlu0 %5170
        %5172 = vrot.lane.b32.xlu0 %v5102, 64
        %v5173 = vpop.permute.xlu0 %5172
        %5174 = vrot.lane.b32.xlu0 %v5103, 64
        %v5175 = vpop.permute.xlu0 %5174
        %5176 = vrot.lane.b32.xlu0 %v5104, 64
        %v5177 = vpop.permute.xlu0 %5176
        %5178 = vrot.lane.b32.xlu0 %v5105, 64
        %v5179 = vpop.permute.xlu0 %5178
        %5180 = vrot.lane.b32.xlu0 %v5106, 64
        %v5181 = vpop.permute.xlu0 %5180
        %5182 = vrot.lane.b32.xlu0 %v5107, 64
        %v5183 = vpop.permute.xlu0 %5182
        %5184 = vrot.lane.b32.xlu0 %v5108, 64
        %v5185 = vpop.permute.xlu0 %5184
        %5186 = vrot.lane.b32.xlu0 %v5109, 64
        %v5187 = vpop.permute.xlu0 %5186
        %5188 = vrot.lane.b32.xlu0 %v5110, 64
        %v5189 = vpop.permute.xlu0 %5188
        %5190 = vrot.lane.b32.xlu0 %v5111, 64
        %v5191 = vpop.permute.xlu0 %5190
        %5192 = vrot.lane.b32.xlu0 %v5112, 64
        %v5193 = vpop.permute.xlu0 %5192
        %5194 = vrot.lane.b32.xlu0 %v5113, 64
        %v5195 = vpop.permute.xlu0 %5194
        %5196 = vrot.lane.b32.xlu0 %v5114, 64
        %v5197 = vpop.permute.xlu0 %5196
        %5198 = vrot.lane.b32.xlu0 %v5115, 64
        %v5199 = vpop.permute.xlu0 %5198
        %5200 = vrot.lane.b32.xlu0 %v5116, 64
        %v5201 = vpop.permute.xlu0 %5200
        %5202 = vrot.lane.b32.xlu0 %v5117, 64
        %v5203 = vpop.permute.xlu0 %5202
        %5204 = vrot.lane.b32.xlu0 %v5118, 64
        %v5205 = vpop.permute.xlu0 %5204
        %5206 = vrot.lane.b32.xlu0 %v5119, 64
        %v5207 = vpop.permute.xlu0 %5206
        %5208 = vrot.lane.b32.xlu0 %v5120, 64
        %v5209 = vpop.permute.xlu0 %5208
        %5210 = vrot.lane.b32.xlu0 %v5121, 64
        %v5211 = vpop.permute.xlu0 %5210
        %5212 = vrot.lane.b32.xlu0 %v5122, 64
        %v5213 = vpop.permute.xlu0 %5212
        %5214 = vrot.lane.b32.xlu0 %v5123, 64
        %v5215 = vpop.permute.xlu0 %5214
        %5216 = vrot.lane.b32.xlu0 %v5124, 64
        %v5217 = vpop.permute.xlu0 %5216
        %5218 = vrot.lane.b32.xlu0 %v5125, 64
        %v5219 = vpop.permute.xlu0 %5218
        %5220 = vrot.lane.b32.xlu0 %v5126, 64
        %v5221 = vpop.permute.xlu0 %5220
        %5222 = vrot.lane.b32.xlu0 %v5127, 64
        %v5223 = vpop.permute.xlu0 %5222
        %5256 = vst.msk [vmem:[#allocation3 + $0x10] sm:$0xff] %vm514, %v5161
        %5257 = vst.msk [vmem:[#allocation3 + $0x38] sm:$0xff] %vm514, %v5163
        %5258 = vst.msk [vmem:[#allocation3 + $0x60] sm:$0xff] %vm514, %v5165
        %5259 = vst.msk [vmem:[#allocation3 + $0x88] sm:$0xff] %vm514, %v5167
        %5260 = vst.msk [vmem:[#allocation3 + $0xb0] sm:$0xff] %vm514, %v5169
        %5261 = vst.msk [vmem:[#allocation3 + $0xd8] sm:$0xff] %vm514, %v5171
        %5262 = vst.msk [vmem:[#allocation3 + $0x100] sm:$0xff] %vm514, %v5173
        %5263 = vst.msk [vmem:[#allocation3 + $0x128] sm:$0xff] %vm514, %v5175
        %5264 = vst.msk [vmem:[#allocation3 + $0x150] sm:$0xff] %vm514, %v5177
        %5265 = vst.msk [vmem:[#allocation3 + $0x178] sm:$0xff] %vm514, %v5179
        %5266 = vst.msk [vmem:[#allocation3 + $0x1a0] sm:$0xff] %vm514, %v5181
        %5267 = vst.msk [vmem:[#allocation3 + $0x1c8] sm:$0xff] %vm514, %v5183
        %5268 = vst.msk [vmem:[#allocation3 + $0x1f0] sm:$0xff] %vm514, %v5185
        %5269 = vst.msk [vmem:[#allocation3 + $0x218] sm:$0xff] %vm514, %v5187
        %5270 = vst.msk [vmem:[#allocation3 + $0x240] sm:$0xff] %vm514, %v5189
        %5271 = vst.msk [vmem:[#allocation3 + $0x268] sm:$0xff] %vm514, %v5191
        %5272 = vst.msk [vmem:[#allocation3 + $0x290] sm:$0xff] %vm514, %v5193
        %5273 = vst.msk [vmem:[#allocation3 + $0x2b8] sm:$0xff] %vm514, %v5195
        %5274 = vst.msk [vmem:[#allocation3 + $0x2e0] sm:$0xff] %vm514, %v5197
        %5275 = vst.msk [vmem:[#allocation3 + $0x308] sm:$0xff] %vm514, %v5199
        %5276 = vst.msk [vmem:[#allocation3 + $0x330] sm:$0xff] %vm514, %v5201
        %5277 = vst.msk [vmem:[#allocation3 + $0x358] sm:$0xff] %vm514, %v5203
        %5278 = vst.msk [vmem:[#allocation3 + $0x380] sm:$0xff] %vm514, %v5205
        %5279 = vst.msk [vmem:[#allocation3 + $0x3a8] sm:$0xff] %vm514, %v5207
        %5280 = vst.msk [vmem:[#allocation3 + $0x3d0] sm:$0xff] %vm514, %v5209
        %5281 = vst.msk [vmem:[#allocation3 + $0x3f8] sm:$0xff] %vm514, %v5211
        %5282 = vst.msk [vmem:[#allocation3 + $0x420] sm:$0xff] %vm514, %v5213
        %5283 = vst.msk [vmem:[#allocation3 + $0x448] sm:$0xff] %vm514, %v5215
        %5284 = vst.msk [vmem:[#allocation3 + $0x470] sm:$0xff] %vm514, %v5217
        %5285 = vst.msk [vmem:[#allocation3 + $0x498] sm:$0xff] %vm514, %v5219
        %5286 = vst.msk [vmem:[#allocation3 + $0x4c0] sm:$0xff] %vm514, %v5221
        %5287 = vst.msk [vmem:[#allocation3 + $0x4e8] sm:$0xff] %vm514, %v5223
        %v5288 = vld [vmem:[%s1059] sm:$0xff]
        %v5289 = vld [vmem:[%s1059 + $0x8] sm:$0xff]
        %v5290 = vld [vmem:[%s1059 + $0x18] sm:$0xff]
        %v5291 = vld [vmem:[%s1059 + $0x20] sm:$0xff]
        %v5292 = vld [vmem:[%s1059 + $0x30] sm:$0xff]
        %v5293 = vld [vmem:[%s1059 + $0x38] sm:$0xff]
        %v5294 = vld [vmem:[%s1059 + $0x48] sm:$0xff]
        %v5295 = vld [vmem:[%s1059 + $0x50] sm:$0xff]
        %v5296 = vld [vmem:[%s1059 + $0x60] sm:$0xff]
        %v5297 = vld [vmem:[%s1059 + $0x68] sm:$0xff]
        %v5298 = vld [vmem:[%s1059 + $0x78] sm:$0xff]
        %v5299 = vld [vmem:[%s1059 + $0x80] sm:$0xff]
        %v5300 = vld [vmem:[%s1059 + $0x90] sm:$0xff]
        %v5301 = vld [vmem:[%s1059 + $0x98] sm:$0xff]
        %v5302 = vld [vmem:[%s1059 + $0xa8] sm:$0xff]
        %v5303 = vld [vmem:[%s1059 + $0xb0] sm:$0xff]
        %v5304 = vld [vmem:[%s1059 + $0xc0] sm:$0xff]
        %v5305 = vld [vmem:[%s1059 + $0xc8] sm:$0xff]
        %v5306 = vld [vmem:[%s1059 + $0xd8] sm:$0xff]
        %v5307 = vld [vmem:[%s1059 + $0xe0] sm:$0xff]
        %v5308 = vld [vmem:[%s1059 + $0xf0] sm:$0xff]
        %v5309 = vld [vmem:[%s1059 + $0xf8] sm:$0xff]
        %v5310 = vld [vmem:[%s1059 + $0x108] sm:$0xff]
        %v5311 = vld [vmem:[%s1059 + $0x110] sm:$0xff]
        %v5312 = vld [vmem:[%s1059 + $0x120] sm:$0xff]
        %v5313 = vld [vmem:[%s1059 + $0x128] sm:$0xff]
        %v5314 = vld [vmem:[%s1059 + $0x138] sm:$0xff]
        %v5315 = vld [vmem:[%s1059 + $0x140] sm:$0xff]
        %v5316 = vld [vmem:[%s1059 + $0x150] sm:$0xff]
        %v5317 = vld [vmem:[%s1059 + $0x158] sm:$0xff]
        %v5318 = vld [vmem:[%s1059 + $0x168] sm:$0xff]
        %v5319 = vld [vmem:[%s1059 + $0x170] sm:$0xff]
        %5320 = vst.msk [vmem:[#allocation3 + $0x18] sm:$0xff] %vm169, %v5288
        %5321 = vst.msk [vmem:[#allocation3 + $0x40] sm:$0xff] %vm169, %v5289
        %5322 = vst.msk [vmem:[#allocation3 + $0x68] sm:$0xff] %vm169, %v5290
        %5323 = vst.msk [vmem:[#allocation3 + $0x90] sm:$0xff] %vm169, %v5291
        %5324 = vst.msk [vmem:[#allocation3 + $0xb8] sm:$0xff] %vm169, %v5292
        %5325 = vst.msk [vmem:[#allocation3 + $0xe0] sm:$0xff] %vm169, %v5293
        %5326 = vst.msk [vmem:[#allocation3 + $0x108] sm:$0xff] %vm169, %v5294
        %5327 = vst.msk [vmem:[#allocation3 + $0x130] sm:$0xff] %vm169, %v5295
        %5328 = vst.msk [vmem:[#allocation3 + $0x158] sm:$0xff] %vm169, %v5296
        %5329 = vst.msk [vmem:[#allocation3 + $0x180] sm:$0xff] %vm169, %v5297
        %5330 = vst.msk [vmem:[#allocation3 + $0x1a8] sm:$0xff] %vm169, %v5298
        %5331 = vst.msk [vmem:[#allocation3 + $0x1d0] sm:$0xff] %vm169, %v5299
        %5332 = vst.msk [vmem:[#allocation3 + $0x1f8] sm:$0xff] %vm169, %v5300
        %5333 = vst.msk [vmem:[#allocation3 + $0x220] sm:$0xff] %vm169, %v5301
        %5334 = vst.msk [vmem:[#allocation3 + $0x248] sm:$0xff] %vm169, %v5302
        %5335 = vst.msk [vmem:[#allocation3 + $0x270] sm:$0xff] %vm169, %v5303
        %5336 = vst.msk [vmem:[#allocation3 + $0x298] sm:$0xff] %vm169, %v5304
        %5337 = vst.msk [vmem:[#allocation3 + $0x2c0] sm:$0xff] %vm169, %v5305
        %5338 = vst.msk [vmem:[#allocation3 + $0x2e8] sm:$0xff] %vm169, %v5306
        %5339 = vst.msk [vmem:[#allocation3 + $0x310] sm:$0xff] %vm169, %v5307
        %5340 = vst.msk [vmem:[#allocation3 + $0x338] sm:$0xff] %vm169, %v5308
        %5341 = vst.msk [vmem:[#allocation3 + $0x360] sm:$0xff] %vm169, %v5309
        %5342 = vst.msk [vmem:[#allocation3 + $0x388] sm:$0xff] %vm169, %v5310
        %5343 = vst.msk [vmem:[#allocation3 + $0x3b0] sm:$0xff] %vm169, %v5311
        %5344 = vst.msk [vmem:[#allocation3 + $0x3d8] sm:$0xff] %vm169, %v5312
        %5345 = vst.msk [vmem:[#allocation3 + $0x400] sm:$0xff] %vm169, %v5313
        %5346 = vst.msk [vmem:[#allocation3 + $0x428] sm:$0xff] %vm169, %v5314
        %5347 = vst.msk [vmem:[#allocation3 + $0x450] sm:$0xff] %vm169, %v5315
        %5348 = vst.msk [vmem:[#allocation3 + $0x478] sm:$0xff] %vm169, %v5316
        %5349 = vst.msk [vmem:[#allocation3 + $0x4a0] sm:$0xff] %vm169, %v5317
        %5350 = vst.msk [vmem:[#allocation3 + $0x4c8] sm:$0xff] %vm169, %v5318
        %5351 = vst.msk [vmem:[#allocation3 + $0x4f0] sm:$0xff] %vm169, %v5319
        %v5352 = vld [vmem:[%s1059 + $0x1] sm:$0xff]
        %v5353 = vld [vmem:[%s1059 + $0x9] sm:$0xff]
        %v5354 = vld [vmem:[%s1059 + $0x19] sm:$0xff]
        %v5355 = vld [vmem:[%s1059 + $0x21] sm:$0xff]
        %v5356 = vld [vmem:[%s1059 + $0x31] sm:$0xff]
        %v5357 = vld [vmem:[%s1059 + $0x39] sm:$0xff]
        %v5358 = vld [vmem:[%s1059 + $0x49] sm:$0xff]
        %v5359 = vld [vmem:[%s1059 + $0x51] sm:$0xff]
        %v5360 = vld [vmem:[%s1059 + $0x61] sm:$0xff]
        %v5361 = vld [vmem:[%s1059 + $0x69] sm:$0xff]
        %v5362 = vld [vmem:[%s1059 + $0x79] sm:$0xff]
        %v5363 = vld [vmem:[%s1059 + $0x81] sm:$0xff]
        %v5364 = vld [vmem:[%s1059 + $0x91] sm:$0xff]
        %v5365 = vld [vmem:[%s1059 + $0x99] sm:$0xff]
        %v5366 = vld [vmem:[%s1059 + $0xa9] sm:$0xff]
        %v5367 = vld [vmem:[%s1059 + $0xb1] sm:$0xff]
        %v5368 = vld [vmem:[%s1059 + $0xc1] sm:$0xff]
        %v5369 = vld [vmem:[%s1059 + $0xc9] sm:$0xff]
        %v5370 = vld [vmem:[%s1059 + $0xd9] sm:$0xff]
        %v5371 = vld [vmem:[%s1059 + $0xe1] sm:$0xff]
        %v5372 = vld [vmem:[%s1059 + $0xf1] sm:$0xff]
        %v5373 = vld [vmem:[%s1059 + $0xf9] sm:$0xff]
        %v5374 = vld [vmem:[%s1059 + $0x109] sm:$0xff]
        %v5375 = vld [vmem:[%s1059 + $0x111] sm:$0xff]
        %v5376 = vld [vmem:[%s1059 + $0x121] sm:$0xff]
        %v5377 = vld [vmem:[%s1059 + $0x129] sm:$0xff]
        %v5378 = vld [vmem:[%s1059 + $0x139] sm:$0xff]
        %v5379 = vld [vmem:[%s1059 + $0x141] sm:$0xff]
        %v5380 = vld [vmem:[%s1059 + $0x151] sm:$0xff]
        %v5381 = vld [vmem:[%s1059 + $0x159] sm:$0xff]
        %v5382 = vld [vmem:[%s1059 + $0x169] sm:$0xff]
        %v5383 = vld [vmem:[%s1059 + $0x171] sm:$0xff]
        %5416 = vrot.lane.b32.xlu0 %v5352, 64
        %v5417 = vpop.permute.xlu0 %5416
        %5418 = vrot.lane.b32.xlu0 %v5353, 64
        %v5419 = vpop.permute.xlu0 %5418
        %5420 = vrot.lane.b32.xlu0 %v5354, 64
        %v5421 = vpop.permute.xlu0 %5420
        %5422 = vrot.lane.b32.xlu0 %v5355, 64
        %v5423 = vpop.permute.xlu0 %5422
        %5424 = vrot.lane.b32.xlu0 %v5356, 64
        %v5425 = vpop.permute.xlu0 %5424
        %5426 = vrot.lane.b32.xlu0 %v5357, 64
        %v5427 = vpop.permute.xlu0 %5426
        %5428 = vrot.lane.b32.xlu0 %v5358, 64
        %v5429 = vpop.permute.xlu0 %5428
        %5430 = vrot.lane.b32.xlu0 %v5359, 64
        %v5431 = vpop.permute.xlu0 %5430
        %5432 = vrot.lane.b32.xlu0 %v5360, 64
        %v5433 = vpop.permute.xlu0 %5432
        %5434 = vrot.lane.b32.xlu0 %v5361, 64
        %v5435 = vpop.permute.xlu0 %5434
        %5436 = vrot.lane.b32.xlu0 %v5362, 64
        %v5437 = vpop.permute.xlu0 %5436
        %5438 = vrot.lane.b32.xlu0 %v5363, 64
        %v5439 = vpop.permute.xlu0 %5438
        %5440 = vrot.lane.b32.xlu0 %v5364, 64
        %v5441 = vpop.permute.xlu0 %5440
        %5442 = vrot.lane.b32.xlu0 %v5365, 64
        %v5443 = vpop.permute.xlu0 %5442
        %5444 = vrot.lane.b32.xlu0 %v5366, 64
        %v5445 = vpop.permute.xlu0 %5444
        %5446 = vrot.lane.b32.xlu0 %v5367, 64
        %v5447 = vpop.permute.xlu0 %5446
        %5448 = vrot.lane.b32.xlu0 %v5368, 64
        %v5449 = vpop.permute.xlu0 %5448
        %5450 = vrot.lane.b32.xlu0 %v5369, 64
        %v5451 = vpop.permute.xlu0 %5450
        %5452 = vrot.lane.b32.xlu0 %v5370, 64
        %v5453 = vpop.permute.xlu0 %5452
        %5454 = vrot.lane.b32.xlu0 %v5371, 64
        %v5455 = vpop.permute.xlu0 %5454
        %5456 = vrot.lane.b32.xlu0 %v5372, 64
        %v5457 = vpop.permute.xlu0 %5456
        %5458 = vrot.lane.b32.xlu0 %v5373, 64
        %v5459 = vpop.permute.xlu0 %5458
        %5460 = vrot.lane.b32.xlu0 %v5374, 64
        %v5461 = vpop.permute.xlu0 %5460
        %5462 = vrot.lane.b32.xlu0 %v5375, 64
        %v5463 = vpop.permute.xlu0 %5462
        %5464 = vrot.lane.b32.xlu0 %v5376, 64
        %v5465 = vpop.permute.xlu0 %5464
        %5466 = vrot.lane.b32.xlu0 %v5377, 64
        %v5467 = vpop.permute.xlu0 %5466
        %5468 = vrot.lane.b32.xlu0 %v5378, 64
        %v5469 = vpop.permute.xlu0 %5468
        %5470 = vrot.lane.b32.xlu0 %v5379, 64
        %v5471 = vpop.permute.xlu0 %5470
        %5472 = vrot.lane.b32.xlu0 %v5380, 64
        %v5473 = vpop.permute.xlu0 %5472
        %5474 = vrot.lane.b32.xlu0 %v5381, 64
        %v5475 = vpop.permute.xlu0 %5474
        %5476 = vrot.lane.b32.xlu0 %v5382, 64
        %v5477 = vpop.permute.xlu0 %5476
        %5478 = vrot.lane.b32.xlu0 %v5383, 64
        %v5479 = vpop.permute.xlu0 %5478
        %5512 = vst.msk [vmem:[#allocation3 + $0x18] sm:$0xff] %vm514, %v5417
        %5513 = vst.msk [vmem:[#allocation3 + $0x40] sm:$0xff] %vm514, %v5419
        %5514 = vst.msk [vmem:[#allocation3 + $0x68] sm:$0xff] %vm514, %v5421
        %5515 = vst.msk [vmem:[#allocation3 + $0x90] sm:$0xff] %vm514, %v5423
        %5516 = vst.msk [vmem:[#allocation3 + $0xb8] sm:$0xff] %vm514, %v5425
        %5517 = vst.msk [vmem:[#allocation3 + $0xe0] sm:$0xff] %vm514, %v5427
        %5518 = vst.msk [vmem:[#allocation3 + $0x108] sm:$0xff] %vm514, %v5429
        %5519 = vst.msk [vmem:[#allocation3 + $0x130] sm:$0xff] %vm514, %v5431
        %5520 = vst.msk [vmem:[#allocation3 + $0x158] sm:$0xff] %vm514, %v5433
        %5521 = vst.msk [vmem:[#allocation3 + $0x180] sm:$0xff] %vm514, %v5435
        %5522 = vst.msk [vmem:[#allocation3 + $0x1a8] sm:$0xff] %vm514, %v5437
        %5523 = vst.msk [vmem:[#allocation3 + $0x1d0] sm:$0xff] %vm514, %v5439
        %5524 = vst.msk [vmem:[#allocation3 + $0x1f8] sm:$0xff] %vm514, %v5441
        %5525 = vst.msk [vmem:[#allocation3 + $0x220] sm:$0xff] %vm514, %v5443
        %5526 = vst.msk [vmem:[#allocation3 + $0x248] sm:$0xff] %vm514, %v5445
        %5527 = vst.msk [vmem:[#allocation3 + $0x270] sm:$0xff] %vm514, %v5447
        %5528 = vst.msk [vmem:[#allocation3 + $0x298] sm:$0xff] %vm514, %v5449
        %5529 = vst.msk [vmem:[#allocation3 + $0x2c0] sm:$0xff] %vm514, %v5451
        %5530 = vst.msk [vmem:[#allocation3 + $0x2e8] sm:$0xff] %vm514, %v5453
        %5531 = vst.msk [vmem:[#allocation3 + $0x310] sm:$0xff] %vm514, %v5455
        %5532 = vst.msk [vmem:[#allocation3 + $0x338] sm:$0xff] %vm514, %v5457
        %5533 = vst.msk [vmem:[#allocation3 + $0x360] sm:$0xff] %vm514, %v5459
        %5534 = vst.msk [vmem:[#allocation3 + $0x388] sm:$0xff] %vm514, %v5461
        %5535 = vst.msk [vmem:[#allocation3 + $0x3b0] sm:$0xff] %vm514, %v5463
        %5536 = vst.msk [vmem:[#allocation3 + $0x3d8] sm:$0xff] %vm514, %v5465
        %5537 = vst.msk [vmem:[#allocation3 + $0x400] sm:$0xff] %vm514, %v5467
        %5538 = vst.msk [vmem:[#allocation3 + $0x428] sm:$0xff] %vm514, %v5469
        %5539 = vst.msk [vmem:[#allocation3 + $0x450] sm:$0xff] %vm514, %v5471
        %5540 = vst.msk [vmem:[#allocation3 + $0x478] sm:$0xff] %vm514, %v5473
        %5541 = vst.msk [vmem:[#allocation3 + $0x4a0] sm:$0xff] %vm514, %v5475
        %5542 = vst.msk [vmem:[#allocation3 + $0x4c8] sm:$0xff] %vm514, %v5477
        %5543 = vst.msk [vmem:[#allocation3 + $0x4f0] sm:$0xff] %vm514, %v5479
        %v5544 = vld [vmem:[%s1059 + $0x2] sm:$0xff]
        %v5545 = vld [vmem:[%s1059 + $0xa] sm:$0xff]
        %v5546 = vld [vmem:[%s1059 + $0x1a] sm:$0xff]
        %v5547 = vld [vmem:[%s1059 + $0x22] sm:$0xff]
        %v5548 = vld [vmem:[%s1059 + $0x32] sm:$0xff]
        %v5549 = vld [vmem:[%s1059 + $0x3a] sm:$0xff]
        %v5550 = vld [vmem:[%s1059 + $0x4a] sm:$0xff]
        %v5551 = vld [vmem:[%s1059 + $0x52] sm:$0xff]
        %v5552 = vld [vmem:[%s1059 + $0x62] sm:$0xff]
        %v5553 = vld [vmem:[%s1059 + $0x6a] sm:$0xff]
        %v5554 = vld [vmem:[%s1059 + $0x7a] sm:$0xff]
        %v5555 = vld [vmem:[%s1059 + $0x82] sm:$0xff]
        %v5556 = vld [vmem:[%s1059 + $0x92] sm:$0xff]
        %v5557 = vld [vmem:[%s1059 + $0x9a] sm:$0xff]
        %v5558 = vld [vmem:[%s1059 + $0xaa] sm:$0xff]
        %v5559 = vld [vmem:[%s1059 + $0xb2] sm:$0xff]
        %v5560 = vld [vmem:[%s1059 + $0xc2] sm:$0xff]
        %v5561 = vld [vmem:[%s1059 + $0xca] sm:$0xff]
        %v5562 = vld [vmem:[%s1059 + $0xda] sm:$0xff]
        %v5563 = vld [vmem:[%s1059 + $0xe2] sm:$0xff]
        %v5564 = vld [vmem:[%s1059 + $0xf2] sm:$0xff]
        %v5565 = vld [vmem:[%s1059 + $0xfa] sm:$0xff]
        %v5566 = vld [vmem:[%s1059 + $0x10a] sm:$0xff]
        %v5567 = vld [vmem:[%s1059 + $0x112] sm:$0xff]
        %v5568 = vld [vmem:[%s1059 + $0x122] sm:$0xff]
        %v5569 = vld [vmem:[%s1059 + $0x12a] sm:$0xff]
        %v5570 = vld [vmem:[%s1059 + $0x13a] sm:$0xff]
        %v5571 = vld [vmem:[%s1059 + $0x142] sm:$0xff]
        %v5572 = vld [vmem:[%s1059 + $0x152] sm:$0xff]
        %v5573 = vld [vmem:[%s1059 + $0x15a] sm:$0xff]
        %v5574 = vld [vmem:[%s1059 + $0x16a] sm:$0xff]
        %v5575 = vld [vmem:[%s1059 + $0x172] sm:$0xff]
        %5576 = vst.msk [vmem:[#allocation3 + $0x20] sm:$0xff] %vm169, %v5544
        %5577 = vst.msk [vmem:[#allocation3 + $0x48] sm:$0xff] %vm169, %v5545
        %5578 = vst.msk [vmem:[#allocation3 + $0x70] sm:$0xff] %vm169, %v5546
        %5579 = vst.msk [vmem:[#allocation3 + $0x98] sm:$0xff] %vm169, %v5547
        %5580 = vst.msk [vmem:[#allocation3 + $0xc0] sm:$0xff] %vm169, %v5548
        %5581 = vst.msk [vmem:[#allocation3 + $0xe8] sm:$0xff] %vm169, %v5549
        %5582 = vst.msk [vmem:[#allocation3 + $0x110] sm:$0xff] %vm169, %v5550
        %5583 = vst.msk [vmem:[#allocation3 + $0x138] sm:$0xff] %vm169, %v5551
        %5584 = vst.msk [vmem:[#allocation3 + $0x160] sm:$0xff] %vm169, %v5552
        %5585 = vst.msk [vmem:[#allocation3 + $0x188] sm:$0xff] %vm169, %v5553
        %5586 = vst.msk [vmem:[#allocation3 + $0x1b0] sm:$0xff] %vm169, %v5554
        %5587 = vst.msk [vmem:[#allocation3 + $0x1d8] sm:$0xff] %vm169, %v5555
        %5588 = vst.msk [vmem:[#allocation3 + $0x200] sm:$0xff] %vm169, %v5556
        %5589 = vst.msk [vmem:[#allocation3 + $0x228] sm:$0xff] %vm169, %v5557
        %5590 = vst.msk [vmem:[#allocation3 + $0x250] sm:$0xff] %vm169, %v5558
        %5591 = vst.msk [vmem:[#allocation3 + $0x278] sm:$0xff] %vm169, %v5559
        %5592 = vst.msk [vmem:[#allocation3 + $0x2a0] sm:$0xff] %vm169, %v5560
        %5593 = vst.msk [vmem:[#allocation3 + $0x2c8] sm:$0xff] %vm169, %v5561
        %5594 = vst.msk [vmem:[#allocation3 + $0x2f0] sm:$0xff] %vm169, %v5562
        %5595 = vst.msk [vmem:[#allocation3 + $0x318] sm:$0xff] %vm169, %v5563
        %5596 = vst.msk [vmem:[#allocation3 + $0x340] sm:$0xff] %vm169, %v5564
        %5597 = vst.msk [vmem:[#allocation3 + $0x368] sm:$0xff] %vm169, %v5565
        %5598 = vst.msk [vmem:[#allocation3 + $0x390] sm:$0xff] %vm169, %v5566
        %5599 = vst.msk [vmem:[#allocation3 + $0x3b8] sm:$0xff] %vm169, %v5567
        %5600 = vst.msk [vmem:[#allocation3 + $0x3e0] sm:$0xff] %vm169, %v5568
        %5601 = vst.msk [vmem:[#allocation3 + $0x408] sm:$0xff] %vm169, %v5569
        %5602 = vst.msk [vmem:[#allocation3 + $0x430] sm:$0xff] %vm169, %v5570
        %5603 = vst.msk [vmem:[#allocation3 + $0x458] sm:$0xff] %vm169, %v5571
        %5604 = vst.msk [vmem:[#allocation3 + $0x480] sm:$0xff] %vm169, %v5572
        %5605 = vst.msk [vmem:[#allocation3 + $0x4a8] sm:$0xff] %vm169, %v5573
        %5606 = vst.msk [vmem:[#allocation3 + $0x4d0] sm:$0xff] %vm169, %v5574
        %5607 = vst.msk [vmem:[#allocation3 + $0x4f8] sm:$0xff] %vm169, %v5575
        %v5608 = vld [vmem:[#allocation3] sm:$0xff]
        %v5609 = vld [vmem:[#allocation3 + $0x8] sm:$0xff]
        %v5610 = vld [vmem:[#allocation3 + $0x10] sm:$0xff]
        %v5611 = vld [vmem:[#allocation3 + $0x18] sm:$0xff]
        %v5612 = vld [vmem:[#allocation3 + $0x20] sm:$0xff]
        %v5613 = vld [vmem:[#allocation3 + $0x28] sm:$0xff]
        %v5614 = vld [vmem:[#allocation3 + $0x30] sm:$0xff]
        %v5615 = vld [vmem:[#allocation3 + $0x38] sm:$0xff]
        %v5616 = vld [vmem:[#allocation3 + $0x40] sm:$0xff]
        %v5617 = vld [vmem:[#allocation3 + $0x48] sm:$0xff]
        %v5618 = vld [vmem:[#allocation3 + $0x50] sm:$0xff]
        %v5619 = vld [vmem:[#allocation3 + $0x58] sm:$0xff]
        %v5620 = vld [vmem:[#allocation3 + $0x60] sm:$0xff]
        %v5621 = vld [vmem:[#allocation3 + $0x68] sm:$0xff]
        %v5622 = vld [vmem:[#allocation3 + $0x70] sm:$0xff]
        %v5623 = vld [vmem:[#allocation3 + $0x78] sm:$0xff]
        %v5624 = vld [vmem:[#allocation3 + $0x80] sm:$0xff]
        %v5625 = vld [vmem:[#allocation3 + $0x88] sm:$0xff]
        %v5626 = vld [vmem:[#allocation3 + $0x90] sm:$0xff]
        %v5627 = vld [vmem:[#allocation3 + $0x98] sm:$0xff]
        %v5628 = vld [vmem:[#allocation3 + $0xa0] sm:$0xff]
        %v5629 = vld [vmem:[#allocation3 + $0xa8] sm:$0xff]
        %v5630 = vld [vmem:[#allocation3 + $0xb0] sm:$0xff]
        %v5631 = vld [vmem:[#allocation3 + $0xb8] sm:$0xff]
        %v5632 = vld [vmem:[#allocation3 + $0xc0] sm:$0xff]
        %v5633 = vld [vmem:[#allocation3 + $0xc8] sm:$0xff]
        %v5634 = vld [vmem:[#allocation3 + $0xd0] sm:$0xff]
        %v5635 = vld [vmem:[#allocation3 + $0xd8] sm:$0xff]
        %v5636 = vld [vmem:[#allocation3 + $0xe0] sm:$0xff]
        %v5637 = vld [vmem:[#allocation3 + $0xe8] sm:$0xff]
        %v5638 = vld [vmem:[#allocation3 + $0xf0] sm:$0xff]
        %v5639 = vld [vmem:[#allocation3 + $0xf8] sm:$0xff]
        %v5640 = vld [vmem:[#allocation3 + $0x100] sm:$0xff]
        %v5641 = vld [vmem:[#allocation3 + $0x108] sm:$0xff]
        %v5642 = vld [vmem:[#allocation3 + $0x110] sm:$0xff]
        %v5643 = vld [vmem:[#allocation3 + $0x118] sm:$0xff]
        %v5644 = vld [vmem:[#allocation3 + $0x120] sm:$0xff]
        %v5645 = vld [vmem:[#allocation3 + $0x128] sm:$0xff]
        %v5646 = vld [vmem:[#allocation3 + $0x130] sm:$0xff]
        %v5647 = vld [vmem:[#allocation3 + $0x138] sm:$0xff]
        %v5648 = vld [vmem:[#allocation3 + $0x140] sm:$0xff]
        %v5649 = vld [vmem:[#allocation3 + $0x148] sm:$0xff]
        %v5650 = vld [vmem:[#allocation3 + $0x150] sm:$0xff]
        %v5651 = vld [vmem:[#allocation3 + $0x158] sm:$0xff]
        %v5652 = vld [vmem:[#allocation3 + $0x160] sm:$0xff]
        %v5653 = vld [vmem:[#allocation3 + $0x168] sm:$0xff]
        %v5654 = vld [vmem:[#allocation3 + $0x170] sm:$0xff]
        %v5655 = vld [vmem:[#allocation3 + $0x178] sm:$0xff]
        %v5656 = vld [vmem:[#allocation3 + $0x180] sm:$0xff]
        %v5657 = vld [vmem:[#allocation3 + $0x188] sm:$0xff]
        %v5658 = vld [vmem:[#allocation3 + $0x190] sm:$0xff]
        %v5659 = vld [vmem:[#allocation3 + $0x198] sm:$0xff]
        %v5660 = vld [vmem:[#allocation3 + $0x1a0] sm:$0xff]
        %v5661 = vld [vmem:[#allocation3 + $0x1a8] sm:$0xff]
        %v5662 = vld [vmem:[#allocation3 + $0x1b0] sm:$0xff]
        %v5663 = vld [vmem:[#allocation3 + $0x1b8] sm:$0xff]
        %v5664 = vld [vmem:[#allocation3 + $0x1c0] sm:$0xff]
        %v5665 = vld [vmem:[#allocation3 + $0x1c8] sm:$0xff]
        %v5666 = vld [vmem:[#allocation3 + $0x1d0] sm:$0xff]
        %v5667 = vld [vmem:[#allocation3 + $0x1d8] sm:$0xff]
        %v5668 = vld [vmem:[#allocation3 + $0x1e0] sm:$0xff]
        %v5669 = vld [vmem:[#allocation3 + $0x1e8] sm:$0xff]
        %v5670 = vld [vmem:[#allocation3 + $0x1f0] sm:$0xff]
        %v5671 = vld [vmem:[#allocation3 + $0x1f8] sm:$0xff]
        %v5672 = vld [vmem:[#allocation3 + $0x200] sm:$0xff]
        %v5673 = vld [vmem:[#allocation3 + $0x208] sm:$0xff]
        %v5674 = vld [vmem:[#allocation3 + $0x210] sm:$0xff]
        %v5675 = vld [vmem:[#allocation3 + $0x218] sm:$0xff]
        %v5676 = vld [vmem:[#allocation3 + $0x220] sm:$0xff]
        %v5677 = vld [vmem:[#allocation3 + $0x228] sm:$0xff]
        %v5678 = vld [vmem:[#allocation3 + $0x230] sm:$0xff]
        %v5679 = vld [vmem:[#allocation3 + $0x238] sm:$0xff]
        %v5680 = vld [vmem:[#allocation3 + $0x240] sm:$0xff]
        %v5681 = vld [vmem:[#allocation3 + $0x248] sm:$0xff]
        %v5682 = vld [vmem:[#allocation3 + $0x250] sm:$0xff]
        %v5683 = vld [vmem:[#allocation3 + $0x258] sm:$0xff]
        %v5684 = vld [vmem:[#allocation3 + $0x260] sm:$0xff]
        %v5685 = vld [vmem:[#allocation3 + $0x268] sm:$0xff]
        %v5686 = vld [vmem:[#allocation3 + $0x270] sm:$0xff]
        %v5687 = vld [vmem:[#allocation3 + $0x278] sm:$0xff]
        %v5688 = vld [vmem:[#allocation3 + $0x280] sm:$0xff]
        %v5689 = vld [vmem:[#allocation3 + $0x288] sm:$0xff]
        %v5690 = vld [vmem:[#allocation3 + $0x290] sm:$0xff]
        %v5691 = vld [vmem:[#allocation3 + $0x298] sm:$0xff]
        %v5692 = vld [vmem:[#allocation3 + $0x2a0] sm:$0xff]
        %v5693 = vld [vmem:[#allocation3 + $0x2a8] sm:$0xff]
        %v5694 = vld [vmem:[#allocation3 + $0x2b0] sm:$0xff]
        %v5695 = vld [vmem:[#allocation3 + $0x2b8] sm:$0xff]
        %v5696 = vld [vmem:[#allocation3 + $0x2c0] sm:$0xff]
        %v5697 = vld [vmem:[#allocation3 + $0x2c8] sm:$0xff]
        %v5698 = vld [vmem:[#allocation3 + $0x2d0] sm:$0xff]
        %v5699 = vld [vmem:[#allocation3 + $0x2d8] sm:$0xff]
        %v5700 = vld [vmem:[#allocation3 + $0x2e0] sm:$0xff]
        %v5701 = vld [vmem:[#allocation3 + $0x2e8] sm:$0xff]
        %v5702 = vld [vmem:[#allocation3 + $0x2f0] sm:$0xff]
        %v5703 = vld [vmem:[#allocation3 + $0x2f8] sm:$0xff]
        %v5704 = vld [vmem:[#allocation3 + $0x300] sm:$0xff]
        %v5705 = vld [vmem:[#allocation3 + $0x308] sm:$0xff]
        %v5706 = vld [vmem:[#allocation3 + $0x310] sm:$0xff]
        %v5707 = vld [vmem:[#allocation3 + $0x318] sm:$0xff]
        %v5708 = vld [vmem:[#allocation3 + $0x320] sm:$0xff]
        %v5709 = vld [vmem:[#allocation3 + $0x328] sm:$0xff]
        %v5710 = vld [vmem:[#allocation3 + $0x330] sm:$0xff]
        %v5711 = vld [vmem:[#allocation3 + $0x338] sm:$0xff]
        %v5712 = vld [vmem:[#allocation3 + $0x340] sm:$0xff]
        %v5713 = vld [vmem:[#allocation3 + $0x348] sm:$0xff]
        %v5714 = vld [vmem:[#allocation3 + $0x350] sm:$0xff]
        %v5715 = vld [vmem:[#allocation3 + $0x358] sm:$0xff]
        %v5716 = vld [vmem:[#allocation3 + $0x360] sm:$0xff]
        %v5717 = vld [vmem:[#allocation3 + $0x368] sm:$0xff]
        %v5718 = vld [vmem:[#allocation3 + $0x370] sm:$0xff]
        %v5719 = vld [vmem:[#allocation3 + $0x378] sm:$0xff]
        %v5720 = vld [vmem:[#allocation3 + $0x380] sm:$0xff]
        %v5721 = vld [vmem:[#allocation3 + $0x388] sm:$0xff]
        %v5722 = vld [vmem:[#allocation3 + $0x390] sm:$0xff]
        %v5723 = vld [vmem:[#allocation3 + $0x398] sm:$0xff]
        %v5724 = vld [vmem:[#allocation3 + $0x3a0] sm:$0xff]
        %v5725 = vld [vmem:[#allocation3 + $0x3a8] sm:$0xff]
        %v5726 = vld [vmem:[#allocation3 + $0x3b0] sm:$0xff]
        %v5727 = vld [vmem:[#allocation3 + $0x3b8] sm:$0xff]
        %v5728 = vld [vmem:[#allocation3 + $0x3c0] sm:$0xff]
        %v5729 = vld [vmem:[#allocation3 + $0x3c8] sm:$0xff]
        %v5730 = vld [vmem:[#allocation3 + $0x3d0] sm:$0xff]
        %v5731 = vld [vmem:[#allocation3 + $0x3d8] sm:$0xff]
        %v5732 = vld [vmem:[#allocation3 + $0x3e0] sm:$0xff]
        %v5733 = vld [vmem:[#allocation3 + $0x3e8] sm:$0xff]
        %v5734 = vld [vmem:[#allocation3 + $0x3f0] sm:$0xff]
        %v5735 = vld [vmem:[#allocation3 + $0x3f8] sm:$0xff]
        %v5736 = vld [vmem:[#allocation3 + $0x400] sm:$0xff]
        %v5737 = vld [vmem:[#allocation3 + $0x408] sm:$0xff]
        %v5738 = vld [vmem:[#allocation3 + $0x410] sm:$0xff]
        %v5739 = vld [vmem:[#allocation3 + $0x418] sm:$0xff]
        %v5740 = vld [vmem:[#allocation3 + $0x420] sm:$0xff]
        %v5741 = vld [vmem:[#allocation3 + $0x428] sm:$0xff]
        %v5742 = vld [vmem:[#allocation3 + $0x430] sm:$0xff]
        %v5743 = vld [vmem:[#allocation3 + $0x438] sm:$0xff]
        %v5744 = vld [vmem:[#allocation3 + $0x440] sm:$0xff]
        %v5745 = vld [vmem:[#allocation3 + $0x448] sm:$0xff]
        %v5746 = vld [vmem:[#allocation3 + $0x450] sm:$0xff]
        %v5747 = vld [vmem:[#allocation3 + $0x458] sm:$0xff]
        %v5748 = vld [vmem:[#allocation3 + $0x460] sm:$0xff]
        %v5749 = vld [vmem:[#allocation3 + $0x468] sm:$0xff]
        %v5750 = vld [vmem:[#allocation3 + $0x470] sm:$0xff]
        %v5751 = vld [vmem:[#allocation3 + $0x478] sm:$0xff]
        %v5752 = vld [vmem:[#allocation3 + $0x480] sm:$0xff]
        %v5753 = vld [vmem:[#allocation3 + $0x488] sm:$0xff]
        %v5754 = vld [vmem:[#allocation3 + $0x490] sm:$0xff]
        %v5755 = vld [vmem:[#allocation3 + $0x498] sm:$0xff]
        %v5756 = vld [vmem:[#allocation3 + $0x4a0] sm:$0xff]
        %v5757 = vld [vmem:[#allocation3 + $0x4a8] sm:$0xff]
        %v5758 = vld [vmem:[#allocation3 + $0x4b0] sm:$0xff]
        %v5759 = vld [vmem:[#allocation3 + $0x4b8] sm:$0xff]
        %v5760 = vld [vmem:[#allocation3 + $0x4c0] sm:$0xff]
        %v5761 = vld [vmem:[#allocation3 + $0x4c8] sm:$0xff]
        %v5762 = vld [vmem:[#allocation3 + $0x4d0] sm:$0xff]
        %v5763 = vld [vmem:[#allocation3 + $0x4d8] sm:$0xff]
        %v5764 = vld [vmem:[#allocation3 + $0x4e0] sm:$0xff]
        %v5765 = vld [vmem:[#allocation3 + $0x4e8] sm:$0xff]
        %v5766 = vld [vmem:[#allocation3 + $0x4f0] sm:$0xff]
        %v5767 = vld [vmem:[#allocation3 + $0x4f8] sm:$0xff]
        %s5768 = scalar_lea.vmem %s1, 1152
        %v5769 = vld [vmem:[%s5768] sm:$0xff]
        %v5770 = vld [vmem:[%s5768 + $0x8] sm:$0xff]
        %v5771 = vld [vmem:[%s5768 + $0x10] sm:$0xff]
        %v5772 = vld [vmem:[%s5768 + $0x18] sm:$0xff]
        %v5773 = vld [vmem:[%s5768 + $0x20] sm:$0xff]
        %v5774 = vld [vmem:[%s5768 + $0x28] sm:$0xff]
        %v5775 = vld [vmem:[%s5768 + $0x30] sm:$0xff]
        %v5776 = vld [vmem:[%s5768 + $0x38] sm:$0xff]
        %v5777 = vld [vmem:[%s5768 + $0x40] sm:$0xff]
        %v5778 = vld [vmem:[%s5768 + $0x48] sm:$0xff]
        %v5779 = vld [vmem:[%s5768 + $0x50] sm:$0xff]
        %v5780 = vld [vmem:[%s5768 + $0x58] sm:$0xff]
        %v5781 = vld [vmem:[%s5768 + $0x60] sm:$0xff]
        %v5782 = vld [vmem:[%s5768 + $0x68] sm:$0xff]
        %v5783 = vld [vmem:[%s5768 + $0x70] sm:$0xff]
        %v5784 = vld [vmem:[%s5768 + $0x78] sm:$0xff]
        %v5785 = vld [vmem:[%s5768 + $0x80] sm:$0xff]
        %v5786 = vld [vmem:[%s5768 + $0x88] sm:$0xff]
        %v5787 = vld [vmem:[%s5768 + $0x90] sm:$0xff]
        %v5788 = vld [vmem:[%s5768 + $0x98] sm:$0xff]
        %v5789 = vld [vmem:[%s5768 + $0xa0] sm:$0xff]
        %v5790 = vld [vmem:[%s5768 + $0xa8] sm:$0xff]
        %v5791 = vld [vmem:[%s5768 + $0xb0] sm:$0xff]
        %v5792 = vld [vmem:[%s5768 + $0xb8] sm:$0xff]
        %v5793 = vld [vmem:[%s5768 + $0xc0] sm:$0xff]
        %v5794 = vld [vmem:[%s5768 + $0xc8] sm:$0xff]
        %v5795 = vld [vmem:[%s5768 + $0xd0] sm:$0xff]
        %v5796 = vld [vmem:[%s5768 + $0xd8] sm:$0xff]
        %v5797 = vld [vmem:[%s5768 + $0xe0] sm:$0xff]
        %v5798 = vld [vmem:[%s5768 + $0xe8] sm:$0xff]
        %v5799 = vld [vmem:[%s5768 + $0xf0] sm:$0xff]
        %v5800 = vld [vmem:[%s5768 + $0xf8] sm:$0xff]
        %v5801 = vld [vmem:[%s5768 + $0x100] sm:$0xff]
        %v5802 = vld [vmem:[%s5768 + $0x108] sm:$0xff]
        %v5803 = vld [vmem:[%s5768 + $0x110] sm:$0xff]
        %v5804 = vld [vmem:[%s5768 + $0x118] sm:$0xff]
        %v5805 = vld [vmem:[%s5768 + $0x120] sm:$0xff]
        %v5806 = vld [vmem:[%s5768 + $0x128] sm:$0xff]
        %v5807 = vld [vmem:[%s5768 + $0x130] sm:$0xff]
        %v5808 = vld [vmem:[%s5768 + $0x138] sm:$0xff]
        %v5809 = vld [vmem:[%s5768 + $0x140] sm:$0xff]
        %v5810 = vld [vmem:[%s5768 + $0x148] sm:$0xff]
        %v5811 = vld [vmem:[%s5768 + $0x150] sm:$0xff]
        %v5812 = vld [vmem:[%s5768 + $0x158] sm:$0xff]
        %v5813 = vld [vmem:[%s5768 + $0x160] sm:$0xff]
        %v5814 = vld [vmem:[%s5768 + $0x168] sm:$0xff]
        %v5815 = vld [vmem:[%s5768 + $0x170] sm:$0xff]
        %v5816 = vld [vmem:[%s5768 + $0x178] sm:$0xff]
        %v5817 = vld [vmem:[%s5768 + $0x180] sm:$0xff]
        %v5818 = vld [vmem:[%s5768 + $0x188] sm:$0xff]
        %v5819 = vld [vmem:[%s5768 + $0x190] sm:$0xff]
        %v5820 = vld [vmem:[%s5768 + $0x198] sm:$0xff]
        %v5821 = vld [vmem:[%s5768 + $0x1a0] sm:$0xff]
        %v5822 = vld [vmem:[%s5768 + $0x1a8] sm:$0xff]
        %v5823 = vld [vmem:[%s5768 + $0x1b0] sm:$0xff]
        %v5824 = vld [vmem:[%s5768 + $0x1b8] sm:$0xff]
        %v5825 = vld [vmem:[%s5768 + $0x1c0] sm:$0xff]
        %v5826 = vld [vmem:[%s5768 + $0x1c8] sm:$0xff]
        %v5827 = vld [vmem:[%s5768 + $0x1d0] sm:$0xff]
        %v5828 = vld [vmem:[%s5768 + $0x1d8] sm:$0xff]
        %v5829 = vld [vmem:[%s5768 + $0x1e0] sm:$0xff]
        %v5830 = vld [vmem:[%s5768 + $0x1e8] sm:$0xff]
        %v5831 = vld [vmem:[%s5768 + $0x1f0] sm:$0xff]
        %v5832 = vld [vmem:[%s5768 + $0x1f8] sm:$0xff]
        %v5833 = vld [vmem:[%s5768 + $0x200] sm:$0xff]
        %v5834 = vld [vmem:[%s5768 + $0x208] sm:$0xff]
        %v5835 = vld [vmem:[%s5768 + $0x210] sm:$0xff]
        %v5836 = vld [vmem:[%s5768 + $0x218] sm:$0xff]
        %v5837 = vld [vmem:[%s5768 + $0x220] sm:$0xff]
        %v5838 = vld [vmem:[%s5768 + $0x228] sm:$0xff]
        %v5839 = vld [vmem:[%s5768 + $0x230] sm:$0xff]
        %v5840 = vld [vmem:[%s5768 + $0x238] sm:$0xff]
        %s5841 = scalar_lea.vmem %s2, 2
        %v5842 = vld [vmem:[%s5841] sm:$0x1]
        %v5844 = vperm.slane %v5842, 0
        %v5847 = vsel %vm169, %v5612, 0
        %v5850 = vsel %vm169, %v5617, 0
        %v5853 = vsel %vm169, %v5622, 0
        %v5856 = vsel %vm169, %v5627, 0
        %v5859 = vsel %vm169, %v5632, 0
        %v5862 = vsel %vm169, %v5637, 0
        %v5865 = vsel %vm169, %v5642, 0
        %v5868 = vsel %vm169, %v5647, 0
        %v5871 = vsel %vm169, %v5652, 0
        %v5874 = vsel %vm169, %v5657, 0
        %v5877 = vsel %vm169, %v5662, 0
        %v5880 = vsel %vm169, %v5667, 0
        %v5883 = vsel %vm169, %v5672, 0
        %v5886 = vsel %vm169, %v5677, 0
        %v5889 = vsel %vm169, %v5682, 0
        %v5892 = vsel %vm169, %v5687, 0
        %v5895 = vsel %vm169, %v5692, 0
        %v5898 = vsel %vm169, %v5697, 0
        %v5901 = vsel %vm169, %v5702, 0
        %v5904 = vsel %vm169, %v5707, 0
        %v5907 = vsel %vm169, %v5712, 0
        %v5910 = vsel %vm169, %v5717, 0
        %v5913 = vsel %vm169, %v5722, 0
        %v5916 = vsel %vm169, %v5727, 0
        %v5919 = vsel %vm169, %v5732, 0
        %v5922 = vsel %vm169, %v5737, 0
        %v5925 = vsel %vm169, %v5742, 0
        %v5928 = vsel %vm169, %v5747, 0
        %v5931 = vsel %vm169, %v5752, 0
        %v5934 = vsel %vm169, %v5757, 0
        %v5937 = vsel %vm169, %v5762, 0
        %v5940 = vsel %vm169, %v5767, 0
        %5942 = vmatpush.msra.mxu0 %v5784
        %5943 = vmatpush.msra.mxu0 %v5783
        %5944 = vmatpush.msra.mxu0 %v5782
        %5945 = vmatpush.msra.mxu0 %v5781
        %5946 = vmatpush.msra.mxu0 %v5780
        %5947 = vmatpush.msra.mxu0 %v5779
        %5948 = vmatpush.msra.mxu0 %v5778
        %5949 = vmatpush.msra.mxu0 %v5777
        %5950 = vmatpush.msra.mxu0 %v5776
        %5951 = vmatpush.msra.mxu0 %v5775
        %5952 = vmatpush.msra.mxu0 %v5774
        %5953 = vmatpush.msra.mxu0 %v5773
        %5954 = vmatpush.msra.mxu0 %v5772
        %5955 = vmatpush.msra.mxu0 %v5771
        %5956 = vmatpush.msra.mxu0 %v5770
        %5957 = vmatpush.msra.mxu0 %v5769
        %5958 = vmatmul.f32.gmra.mxu0 %v5608
        %v5959 = vpop.f32.mrf.mxu0
        %v5960 = vadd.f32 %v5844, %v5959
        %5961 = vmatmul.f32.gmra.mxu0 %v5613
        %v5962 = vpop.f32.mrf.mxu0
        %v5963 = vadd.f32 %v5844, %v5962
        %5964 = vmatmul.f32.gmra.mxu0 %v5618
        %v5965 = vpop.f32.mrf.mxu0
        %v5966 = vadd.f32 %v5844, %v5965
        %5967 = vmatmul.f32.gmra.mxu0 %v5623
        %v5968 = vpop.f32.mrf.mxu0
        %v5969 = vadd.f32 %v5844, %v5968
        %5970 = vmatmul.f32.gmra.mxu0 %v5628
        %v5971 = vpop.f32.mrf.mxu0
        %v5972 = vadd.f32 %v5844, %v5971
        %5973 = vmatmul.f32.gmra.mxu0 %v5633
        %v5974 = vpop.f32.mrf.mxu0
        %v5975 = vadd.f32 %v5844, %v5974
        %5976 = vmatmul.f32.gmra.mxu0 %v5638
        %v5977 = vpop.f32.mrf.mxu0
        %v5978 = vadd.f32 %v5844, %v5977
        %5979 = vmatmul.f32.gmra.mxu0 %v5643
        %v5980 = vpop.f32.mrf.mxu0
        %v5981 = vadd.f32 %v5844, %v5980
        %5982 = vmatmul.f32.gmra.mxu0 %v5648
        %v5983 = vpop.f32.mrf.mxu0
        %v5984 = vadd.f32 %v5844, %v5983
        %5985 = vmatmul.f32.gmra.mxu0 %v5653
        %v5986 = vpop.f32.mrf.mxu0
        %v5987 = vadd.f32 %v5844, %v5986
        %5988 = vmatmul.f32.gmra.mxu0 %v5658
        %v5989 = vpop.f32.mrf.mxu0
        %v5990 = vadd.f32 %v5844, %v5989
        %5991 = vmatmul.f32.gmra.mxu0 %v5663
        %v5992 = vpop.f32.mrf.mxu0
        %v5993 = vadd.f32 %v5844, %v5992
        %5994 = vmatmul.f32.gmra.mxu0 %v5668
        %v5995 = vpop.f32.mrf.mxu0
        %v5996 = vadd.f32 %v5844, %v5995
        %5997 = vmatmul.f32.gmra.mxu0 %v5673
        %v5998 = vpop.f32.mrf.mxu0
        %v5999 = vadd.f32 %v5844, %v5998
        %6000 = vmatmul.f32.gmra.mxu0 %v5678
        %v6001 = vpop.f32.mrf.mxu0
        %v6002 = vadd.f32 %v5844, %v6001
        %6003 = vmatmul.f32.gmra.mxu0 %v5683
        %v6004 = vpop.f32.mrf.mxu0
        %v6005 = vadd.f32 %v5844, %v6004
        %6006 = vmatmul.f32.gmra.mxu0 %v5688
        %v6007 = vpop.f32.mrf.mxu0
        %v6008 = vadd.f32 %v5844, %v6007
        %6009 = vmatmul.f32.gmra.mxu0 %v5693
        %v6010 = vpop.f32.mrf.mxu0
        %v6011 = vadd.f32 %v5844, %v6010
        %6012 = vmatmul.f32.gmra.mxu0 %v5698
        %v6013 = vpop.f32.mrf.mxu0
        %v6014 = vadd.f32 %v5844, %v6013
        %6015 = vmatmul.f32.gmra.mxu0 %v5703
        %v6016 = vpop.f32.mrf.mxu0
        %v6017 = vadd.f32 %v5844, %v6016
        %6018 = vmatmul.f32.gmra.mxu0 %v5708
        %v6019 = vpop.f32.mrf.mxu0
        %v6020 = vadd.f32 %v5844, %v6019
        %6021 = vmatmul.f32.gmra.mxu0 %v5713
        %v6022 = vpop.f32.mrf.mxu0
        %v6023 = vadd.f32 %v5844, %v6022
        %6024 = vmatmul.f32.gmra.mxu0 %v5718
        %v6025 = vpop.f32.mrf.mxu0
        %v6026 = vadd.f32 %v5844, %v6025
        %6027 = vmatmul.f32.gmra.mxu0 %v5723
        %v6028 = vpop.f32.mrf.mxu0
        %v6029 = vadd.f32 %v5844, %v6028
        %6030 = vmatmul.f32.gmra.mxu0 %v5728
        %v6031 = vpop.f32.mrf.mxu0
        %v6032 = vadd.f32 %v5844, %v6031
        %6033 = vmatmul.f32.gmra.mxu0 %v5733
        %v6034 = vpop.f32.mrf.mxu0
        %v6035 = vadd.f32 %v5844, %v6034
        %6036 = vmatmul.f32.gmra.mxu0 %v5738
        %v6037 = vpop.f32.mrf.mxu0
        %v6038 = vadd.f32 %v5844, %v6037
        %6039 = vmatmul.f32.gmra.mxu0 %v5743
        %v6040 = vpop.f32.mrf.mxu0
        %v6041 = vadd.f32 %v5844, %v6040
        %6042 = vmatmul.f32.gmra.mxu0 %v5748
        %v6043 = vpop.f32.mrf.mxu0
        %v6044 = vadd.f32 %v5844, %v6043
        %6045 = vmatmul.f32.gmra.mxu0 %v5753
        %v6046 = vpop.f32.mrf.mxu0
        %v6047 = vadd.f32 %v5844, %v6046
        %6048 = vmatmul.f32.gmra.mxu0 %v5758
        %v6049 = vpop.f32.mrf.mxu0
        %v6050 = vadd.f32 %v5844, %v6049
        %6051 = vmatmul.f32.gmra.mxu0 %v5763
        %v6052 = vpop.f32.mrf.mxu0
        %v6053 = vadd.f32 %v5844, %v6052
        %6054 = vdwg.mxu0
        %6055 = vmatpush.msra.mxu0 %v5800
        %6056 = vmatpush.msra.mxu0 %v5799
        %6057 = vmatpush.msra.mxu0 %v5798
        %6058 = vmatpush.msra.mxu0 %v5797
        %6059 = vmatpush.msra.mxu0 %v5796
        %6060 = vmatpush.msra.mxu0 %v5795
        %6061 = vmatpush.msra.mxu0 %v5794
        %6062 = vmatpush.msra.mxu0 %v5793
        %6063 = vmatpush.msra.mxu0 %v5792
        %6064 = vmatpush.msra.mxu0 %v5791
        %6065 = vmatpush.msra.mxu0 %v5790
        %6066 = vmatpush.msra.mxu0 %v5789
        %6067 = vmatpush.msra.mxu0 %v5788
        %6068 = vmatpush.msra.mxu0 %v5787
        %6069 = vmatpush.msra.mxu0 %v5786
        %6070 = vmatpush.msra.mxu0 %v5785
        %6071 = vmatmul.f32.gmra.mxu0 %v5609
        %v6072 = vpop.f32.mrf.mxu0
        %v6073 = vadd.f32 %v5960, %v6072
        %6074 = vmatmul.f32.gmra.mxu0 %v5614
        %v6075 = vpop.f32.mrf.mxu0
        %v6076 = vadd.f32 %v5963, %v6075
        %6077 = vmatmul.f32.gmra.mxu0 %v5619
        %v6078 = vpop.f32.mrf.mxu0
        %v6079 = vadd.f32 %v5966, %v6078
        %6080 = vmatmul.f32.gmra.mxu0 %v5624
        %v6081 = vpop.f32.mrf.mxu0
        %v6082 = vadd.f32 %v5969, %v6081
        %6083 = vmatmul.f32.gmra.mxu0 %v5629
        %v6084 = vpop.f32.mrf.mxu0
        %v6085 = vadd.f32 %v5972, %v6084
        %6086 = vmatmul.f32.gmra.mxu0 %v5634
        %v6087 = vpop.f32.mrf.mxu0
        %v6088 = vadd.f32 %v5975, %v6087
        %6089 = vmatmul.f32.gmra.mxu0 %v5639
        %v6090 = vpop.f32.mrf.mxu0
        %v6091 = vadd.f32 %v5978, %v6090
        %6092 = vmatmul.f32.gmra.mxu0 %v5644
        %v6093 = vpop.f32.mrf.mxu0
        %v6094 = vadd.f32 %v5981, %v6093
        %6095 = vmatmul.f32.gmra.mxu0 %v5649
        %v6096 = vpop.f32.mrf.mxu0
        %v6097 = vadd.f32 %v5984, %v6096
        %6098 = vmatmul.f32.gmra.mxu0 %v5654
        %v6099 = vpop.f32.mrf.mxu0
        %v6100 = vadd.f32 %v5987, %v6099
        %6101 = vmatmul.f32.gmra.mxu0 %v5659
        %v6102 = vpop.f32.mrf.mxu0
        %v6103 = vadd.f32 %v5990, %v6102
        %6104 = vmatmul.f32.gmra.mxu0 %v5664
        %v6105 = vpop.f32.mrf.mxu0
        %v6106 = vadd.f32 %v5993, %v6105
        %6107 = vmatmul.f32.gmra.mxu0 %v5669
        %v6108 = vpop.f32.mrf.mxu0
        %v6109 = vadd.f32 %v5996, %v6108
        %6110 = vmatmul.f32.gmra.mxu0 %v5674
        %v6111 = vpop.f32.mrf.mxu0
        %v6112 = vadd.f32 %v5999, %v6111
        %6113 = vmatmul.f32.gmra.mxu0 %v5679
        %v6114 = vpop.f32.mrf.mxu0
        %v6115 = vadd.f32 %v6002, %v6114
        %6116 = vmatmul.f32.gmra.mxu0 %v5684
        %v6117 = vpop.f32.mrf.mxu0
        %v6118 = vadd.f32 %v6005, %v6117
        %6119 = vmatmul.f32.gmra.mxu0 %v5689
        %v6120 = vpop.f32.mrf.mxu0
        %v6121 = vadd.f32 %v6008, %v6120
        %6122 = vmatmul.f32.gmra.mxu0 %v5694
        %v6123 = vpop.f32.mrf.mxu0
        %v6124 = vadd.f32 %v6011, %v6123
        %6125 = vmatmul.f32.gmra.mxu0 %v5699
        %v6126 = vpop.f32.mrf.mxu0
        %v6127 = vadd.f32 %v6014, %v6126
        %6128 = vmatmul.f32.gmra.mxu0 %v5704
        %v6129 = vpop.f32.mrf.mxu0
        %v6130 = vadd.f32 %v6017, %v6129
        %6131 = vmatmul.f32.gmra.mxu0 %v5709
        %v6132 = vpop.f32.mrf.mxu0
        %v6133 = vadd.f32 %v6020, %v6132
        %6134 = vmatmul.f32.gmra.mxu0 %v5714
        %v6135 = vpop.f32.mrf.mxu0
        %v6136 = vadd.f32 %v6023, %v6135
        %6137 = vmatmul.f32.gmra.mxu0 %v5719
        %v6138 = vpop.f32.mrf.mxu0
        %v6139 = vadd.f32 %v6026, %v6138
        %6140 = vmatmul.f32.gmra.mxu0 %v5724
        %v6141 = vpop.f32.mrf.mxu0
        %v6142 = vadd.f32 %v6029, %v6141
        %6143 = vmatmul.f32.gmra.mxu0 %v5729
        %v6144 = vpop.f32.mrf.mxu0
        %v6145 = vadd.f32 %v6032, %v6144
        %6146 = vmatmul.f32.gmra.mxu0 %v5734
        %v6147 = vpop.f32.mrf.mxu0
        %v6148 = vadd.f32 %v6035, %v6147
        %6149 = vmatmul.f32.gmra.mxu0 %v5739
        %v6150 = vpop.f32.mrf.mxu0
        %v6151 = vadd.f32 %v6038, %v6150
        %6152 = vmatmul.f32.gmra.mxu0 %v5744
        %v6153 = vpop.f32.mrf.mxu0
        %v6154 = vadd.f32 %v6041, %v6153
        %6155 = vmatmul.f32.gmra.mxu0 %v5749
        %v6156 = vpop.f32.mrf.mxu0
        %v6157 = vadd.f32 %v6044, %v6156
        %6158 = vmatmul.f32.gmra.mxu0 %v5754
        %v6159 = vpop.f32.mrf.mxu0
        %v6160 = vadd.f32 %v6047, %v6159
        %6161 = vmatmul.f32.gmra.mxu0 %v5759
        %v6162 = vpop.f32.mrf.mxu0
        %v6163 = vadd.f32 %v6050, %v6162
        %6164 = vmatmul.f32.gmra.mxu0 %v5764
        %v6165 = vpop.f32.mrf.mxu0
        %v6166 = vadd.f32 %v6053, %v6165
        %6167 = vdwg.mxu0
        %6168 = vmatpush.msra.mxu0 %v5816
        %6169 = vmatpush.msra.mxu0 %v5815
        %6170 = vmatpush.msra.mxu0 %v5814
        %6171 = vmatpush.msra.mxu0 %v5813
        %6172 = vmatpush.msra.mxu0 %v5812
        %6173 = vmatpush.msra.mxu0 %v5811
        %6174 = vmatpush.msra.mxu0 %v5810
        %6175 = vmatpush.msra.mxu0 %v5809
        %6176 = vmatpush.msra.mxu0 %v5808
        %6177 = vmatpush.msra.mxu0 %v5807
        %6178 = vmatpush.msra.mxu0 %v5806
        %6179 = vmatpush.msra.mxu0 %v5805
        %6180 = vmatpush.msra.mxu0 %v5804
        %6181 = vmatpush.msra.mxu0 %v5803
        %6182 = vmatpush.msra.mxu0 %v5802
        %6183 = vmatpush.msra.mxu0 %v5801
        %6184 = vmatmul.f32.gmra.mxu0 %v5610
        %v6185 = vpop.f32.mrf.mxu0
        %v6186 = vadd.f32 %v6073, %v6185
        %6187 = vmatmul.f32.gmra.mxu0 %v5615
        %v6188 = vpop.f32.mrf.mxu0
        %v6189 = vadd.f32 %v6076, %v6188
        %6190 = vmatmul.f32.gmra.mxu0 %v5620
        %v6191 = vpop.f32.mrf.mxu0
        %v6192 = vadd.f32 %v6079, %v6191
        %6193 = vmatmul.f32.gmra.mxu0 %v5625
        %v6194 = vpop.f32.mrf.mxu0
        %v6195 = vadd.f32 %v6082, %v6194
        %6196 = vmatmul.f32.gmra.mxu0 %v5630
        %v6197 = vpop.f32.mrf.mxu0
        %v6198 = vadd.f32 %v6085, %v6197
        %6199 = vmatmul.f32.gmra.mxu0 %v5635
        %v6200 = vpop.f32.mrf.mxu0
        %v6201 = vadd.f32 %v6088, %v6200
        %6202 = vmatmul.f32.gmra.mxu0 %v5640
        %v6203 = vpop.f32.mrf.mxu0
        %v6204 = vadd.f32 %v6091, %v6203
        %6205 = vmatmul.f32.gmra.mxu0 %v5645
        %v6206 = vpop.f32.mrf.mxu0
        %v6207 = vadd.f32 %v6094, %v6206
        %6208 = vmatmul.f32.gmra.mxu0 %v5650
        %v6209 = vpop.f32.mrf.mxu0
        %v6210 = vadd.f32 %v6097, %v6209
        %6211 = vmatmul.f32.gmra.mxu0 %v5655
        %v6212 = vpop.f32.mrf.mxu0
        %v6213 = vadd.f32 %v6100, %v6212
        %6214 = vmatmul.f32.gmra.mxu0 %v5660
        %v6215 = vpop.f32.mrf.mxu0
        %v6216 = vadd.f32 %v6103, %v6215
        %6217 = vmatmul.f32.gmra.mxu0 %v5665
        %v6218 = vpop.f32.mrf.mxu0
        %v6219 = vadd.f32 %v6106, %v6218
        %6220 = vmatmul.f32.gmra.mxu0 %v5670
        %v6221 = vpop.f32.mrf.mxu0
        %v6222 = vadd.f32 %v6109, %v6221
        %6223 = vmatmul.f32.gmra.mxu0 %v5675
        %v6224 = vpop.f32.mrf.mxu0
        %v6225 = vadd.f32 %v6112, %v6224
        %6226 = vmatmul.f32.gmra.mxu0 %v5680
        %v6227 = vpop.f32.mrf.mxu0
        %v6228 = vadd.f32 %v6115, %v6227
        %6229 = vmatmul.f32.gmra.mxu0 %v5685
        %v6230 = vpop.f32.mrf.mxu0
        %v6231 = vadd.f32 %v6118, %v6230
        %6232 = vmatmul.f32.gmra.mxu0 %v5690
        %v6233 = vpop.f32.mrf.mxu0
        %v6234 = vadd.f32 %v6121, %v6233
        %6235 = vmatmul.f32.gmra.mxu0 %v5695
        %v6236 = vpop.f32.mrf.mxu0
        %v6237 = vadd.f32 %v6124, %v6236
        %6238 = vmatmul.f32.gmra.mxu0 %v5700
        %v6239 = vpop.f32.mrf.mxu0
        %v6240 = vadd.f32 %v6127, %v6239
        %6241 = vmatmul.f32.gmra.mxu0 %v5705
        %v6242 = vpop.f32.mrf.mxu0
        %v6243 = vadd.f32 %v6130, %v6242
        %6244 = vmatmul.f32.gmra.mxu0 %v5710
        %v6245 = vpop.f32.mrf.mxu0
        %v6246 = vadd.f32 %v6133, %v6245
        %6247 = vmatmul.f32.gmra.mxu0 %v5715
        %v6248 = vpop.f32.mrf.mxu0
        %v6249 = vadd.f32 %v6136, %v6248
        %6250 = vmatmul.f32.gmra.mxu0 %v5720
        %v6251 = vpop.f32.mrf.mxu0
        %v6252 = vadd.f32 %v6139, %v6251
        %6253 = vmatmul.f32.gmra.mxu0 %v5725
        %v6254 = vpop.f32.mrf.mxu0
        %v6255 = vadd.f32 %v6142, %v6254
        %6256 = vmatmul.f32.gmra.mxu0 %v5730
        %v6257 = vpop.f32.mrf.mxu0
        %v6258 = vadd.f32 %v6145, %v6257
        %6259 = vmatmul.f32.gmra.mxu0 %v5735
        %v6260 = vpop.f32.mrf.mxu0
        %v6261 = vadd.f32 %v6148, %v6260
        %6262 = vmatmul.f32.gmra.mxu0 %v5740
        %v6263 = vpop.f32.mrf.mxu0
        %v6264 = vadd.f32 %v6151, %v6263
        %6265 = vmatmul.f32.gmra.mxu0 %v5745
        %v6266 = vpop.f32.mrf.mxu0
        %v6267 = vadd.f32 %v6154, %v6266
        %6268 = vmatmul.f32.gmra.mxu0 %v5750
        %v6269 = vpop.f32.mrf.mxu0
        %v6270 = vadd.f32 %v6157, %v6269
        %6271 = vmatmul.f32.gmra.mxu0 %v5755
        %v6272 = vpop.f32.mrf.mxu0
        %v6273 = vadd.f32 %v6160, %v6272
        %6274 = vmatmul.f32.gmra.mxu0 %v5760
        %v6275 = vpop.f32.mrf.mxu0
        %v6276 = vadd.f32 %v6163, %v6275
        %6277 = vmatmul.f32.gmra.mxu0 %v5765
        %v6278 = vpop.f32.mrf.mxu0
        %v6279 = vadd.f32 %v6166, %v6278
        %6280 = vdwg.mxu0
        %6281 = vmatpush.msra.mxu0 %v5832
        %6282 = vmatpush.msra.mxu0 %v5831
        %6283 = vmatpush.msra.mxu0 %v5830
        %6284 = vmatpush.msra.mxu0 %v5829
        %6285 = vmatpush.msra.mxu0 %v5828
        %6286 = vmatpush.msra.mxu0 %v5827
        %6287 = vmatpush.msra.mxu0 %v5826
        %6288 = vmatpush.msra.mxu0 %v5825
        %6289 = vmatpush.msra.mxu0 %v5824
        %6290 = vmatpush.msra.mxu0 %v5823
        %6291 = vmatpush.msra.mxu0 %v5822
        %6292 = vmatpush.msra.mxu0 %v5821
        %6293 = vmatpush.msra.mxu0 %v5820
        %6294 = vmatpush.msra.mxu0 %v5819
        %6295 = vmatpush.msra.mxu0 %v5818
        %6296 = vmatpush.msra.mxu0 %v5817
        %6297 = vmatmul.f32.gmra.mxu0 %v5611
        %v6298 = vpop.f32.mrf.mxu0
        %v6299 = vadd.f32 %v6186, %v6298
        %6300 = vmatmul.f32.gmra.mxu0 %v5616
        %v6301 = vpop.f32.mrf.mxu0
        %v6302 = vadd.f32 %v6189, %v6301
        %6303 = vmatmul.f32.gmra.mxu0 %v5621
        %v6304 = vpop.f32.mrf.mxu0
        %v6305 = vadd.f32 %v6192, %v6304
        %6306 = vmatmul.f32.gmra.mxu0 %v5626
        %v6307 = vpop.f32.mrf.mxu0
        %v6308 = vadd.f32 %v6195, %v6307
        %6309 = vmatmul.f32.gmra.mxu0 %v5631
        %v6310 = vpop.f32.mrf.mxu0
        %v6311 = vadd.f32 %v6198, %v6310
        %6312 = vmatmul.f32.gmra.mxu0 %v5636
        %v6313 = vpop.f32.mrf.mxu0
        %v6314 = vadd.f32 %v6201, %v6313
        %6315 = vmatmul.f32.gmra.mxu0 %v5641
        %v6316 = vpop.f32.mrf.mxu0
        %v6317 = vadd.f32 %v6204, %v6316
        %6318 = vmatmul.f32.gmra.mxu0 %v5646
        %v6319 = vpop.f32.mrf.mxu0
        %v6320 = vadd.f32 %v6207, %v6319
        %6321 = vmatmul.f32.gmra.mxu0 %v5651
        %v6322 = vpop.f32.mrf.mxu0
        %v6323 = vadd.f32 %v6210, %v6322
        %6324 = vmatmul.f32.gmra.mxu0 %v5656
        %v6325 = vpop.f32.mrf.mxu0
        %v6326 = vadd.f32 %v6213, %v6325
        %6327 = vmatmul.f32.gmra.mxu0 %v5661
        %v6328 = vpop.f32.mrf.mxu0
        %v6329 = vadd.f32 %v6216, %v6328
        %6330 = vmatmul.f32.gmra.mxu0 %v5666
        %v6331 = vpop.f32.mrf.mxu0
        %v6332 = vadd.f32 %v6219, %v6331
        %6333 = vmatmul.f32.gmra.mxu0 %v5671
        %v6334 = vpop.f32.mrf.mxu0
        %v6335 = vadd.f32 %v6222, %v6334
        %6336 = vmatmul.f32.gmra.mxu0 %v5676
        %v6337 = vpop.f32.mrf.mxu0
        %v6338 = vadd.f32 %v6225, %v6337
        %6339 = vmatmul.f32.gmra.mxu0 %v5681
        %v6340 = vpop.f32.mrf.mxu0
        %v6341 = vadd.f32 %v6228, %v6340
        %6342 = vmatmul.f32.gmra.mxu0 %v5686
        %v6343 = vpop.f32.mrf.mxu0
        %v6344 = vadd.f32 %v6231, %v6343
        %6345 = vmatmul.f32.gmra.mxu0 %v5691
        %v6346 = vpop.f32.mrf.mxu0
        %v6347 = vadd.f32 %v6234, %v6346
        %6348 = vmatmul.f32.gmra.mxu0 %v5696
        %v6349 = vpop.f32.mrf.mxu0
        %v6350 = vadd.f32 %v6237, %v6349
        %6351 = vmatmul.f32.gmra.mxu0 %v5701
        %v6352 = vpop.f32.mrf.mxu0
        %v6353 = vadd.f32 %v6240, %v6352
        %6354 = vmatmul.f32.gmra.mxu0 %v5706
        %v6355 = vpop.f32.mrf.mxu0
        %v6356 = vadd.f32 %v6243, %v6355
        %6357 = vmatmul.f32.gmra.mxu0 %v5711
        %v6358 = vpop.f32.mrf.mxu0
        %v6359 = vadd.f32 %v6246, %v6358
        %6360 = vmatmul.f32.gmra.mxu0 %v5716
        %v6361 = vpop.f32.mrf.mxu0
        %v6362 = vadd.f32 %v6249, %v6361
        %6363 = vmatmul.f32.gmra.mxu0 %v5721
        %v6364 = vpop.f32.mrf.mxu0
        %v6365 = vadd.f32 %v6252, %v6364
        %6366 = vmatmul.f32.gmra.mxu0 %v5726
        %v6367 = vpop.f32.mrf.mxu0
        %v6368 = vadd.f32 %v6255, %v6367
        %6369 = vmatmul.f32.gmra.mxu0 %v5731
        %v6370 = vpop.f32.mrf.mxu0
        %v6371 = vadd.f32 %v6258, %v6370
        %6372 = vmatmul.f32.gmra.mxu0 %v5736
        %v6373 = vpop.f32.mrf.mxu0
        %v6374 = vadd.f32 %v6261, %v6373
        %6375 = vmatmul.f32.gmra.mxu0 %v5741
        %v6376 = vpop.f32.mrf.mxu0
        %v6377 = vadd.f32 %v6264, %v6376
        %6378 = vmatmul.f32.gmra.mxu0 %v5746
        %v6379 = vpop.f32.mrf.mxu0
        %v6380 = vadd.f32 %v6267, %v6379
        %6381 = vmatmul.f32.gmra.mxu0 %v5751
        %v6382 = vpop.f32.mrf.mxu0
        %v6383 = vadd.f32 %v6270, %v6382
        %6384 = vmatmul.f32.gmra.mxu0 %v5756
        %v6385 = vpop.f32.mrf.mxu0
        %v6386 = vadd.f32 %v6273, %v6385
        %6387 = vmatmul.f32.gmra.mxu0 %v5761
        %v6388 = vpop.f32.mrf.mxu0
        %v6389 = vadd.f32 %v6276, %v6388
        %6390 = vmatmul.f32.gmra.mxu0 %v5766
        %v6391 = vpop.f32.mrf.mxu0
        %v6392 = vadd.f32 %v6279, %v6391
        %6393 = vdwg.mxu0
        %6394 = vmatpush.msra.mxu0 0.0
        %6395 = vmatpush.msra.mxu0 0.0
        %6396 = vmatpush.msra.mxu0 0.0
        %6397 = vmatpush.msra.mxu0 0.0
        %6398 = vmatpush.msra.mxu0 0.0
        %6399 = vmatpush.msra.mxu0 0.0
        %6400 = vmatpush.msra.mxu0 0.0
        %6401 = vmatpush.msra.mxu0 0.0
        %6402 = vmatpush.msra.mxu0 %v5840
        %6403 = vmatpush.msra.mxu0 %v5839
        %6404 = vmatpush.msra.mxu0 %v5838
        %6405 = vmatpush.msra.mxu0 %v5837
        %6406 = vmatpush.msra.mxu0 %v5836
        %6407 = vmatpush.msra.mxu0 %v5835
        %6408 = vmatpush.msra.mxu0 %v5834
        %6409 = vmatpush.msra.mxu0 %v5833
        %6410 = vmatmul.f32.gmra.mxu0 %v5847
        %v6411 = vpop.f32.mrf.mxu0
        %v6412 = vadd.f32 %v6299, %v6411
        %6413 = vmatmul.f32.gmra.mxu0 %v5850
        %v6414 = vpop.f32.mrf.mxu0
        %v6415 = vadd.f32 %v6302, %v6414
        %6416 = vmatmul.f32.gmra.mxu0 %v5853
        %v6417 = vpop.f32.mrf.mxu0
        %v6418 = vadd.f32 %v6305, %v6417
        %6419 = vmatmul.f32.gmra.mxu0 %v5856
        %v6420 = vpop.f32.mrf.mxu0
        %v6421 = vadd.f32 %v6308, %v6420
        %6422 = vmatmul.f32.gmra.mxu0 %v5859
        %v6423 = vpop.f32.mrf.mxu0
        %v6424 = vadd.f32 %v6311, %v6423
        %6425 = vmatmul.f32.gmra.mxu0 %v5862
        %v6426 = vpop.f32.mrf.mxu0
        %v6427 = vadd.f32 %v6314, %v6426
        %6428 = vmatmul.f32.gmra.mxu0 %v5865
        %v6429 = vpop.f32.mrf.mxu0
        %v6430 = vadd.f32 %v6317, %v6429
        %6431 = vmatmul.f32.gmra.mxu0 %v5868
        %v6432 = vpop.f32.mrf.mxu0
        %v6433 = vadd.f32 %v6320, %v6432
        %6434 = vmatmul.f32.gmra.mxu0 %v5871
        %v6435 = vpop.f32.mrf.mxu0
        %v6436 = vadd.f32 %v6323, %v6435
        %6437 = vmatmul.f32.gmra.mxu0 %v5874
        %v6438 = vpop.f32.mrf.mxu0
        %v6439 = vadd.f32 %v6326, %v6438
        %6440 = vmatmul.f32.gmra.mxu0 %v5877
        %v6441 = vpop.f32.mrf.mxu0
        %v6442 = vadd.f32 %v6329, %v6441
        %6443 = vmatmul.f32.gmra.mxu0 %v5880
        %v6444 = vpop.f32.mrf.mxu0
        %v6445 = vadd.f32 %v6332, %v6444
        %6446 = vmatmul.f32.gmra.mxu0 %v5883
        %v6447 = vpop.f32.mrf.mxu0
        %v6448 = vadd.f32 %v6335, %v6447
        %6449 = vmatmul.f32.gmra.mxu0 %v5886
        %v6450 = vpop.f32.mrf.mxu0
        %v6451 = vadd.f32 %v6338, %v6450
        %6452 = vmatmul.f32.gmra.mxu0 %v5889
        %v6453 = vpop.f32.mrf.mxu0
        %v6454 = vadd.f32 %v6341, %v6453
        %6455 = vmatmul.f32.gmra.mxu0 %v5892
        %v6456 = vpop.f32.mrf.mxu0
        %v6457 = vadd.f32 %v6344, %v6456
        %6458 = vmatmul.f32.gmra.mxu0 %v5895
        %v6459 = vpop.f32.mrf.mxu0
        %v6460 = vadd.f32 %v6347, %v6459
        %6461 = vmatmul.f32.gmra.mxu0 %v5898
        %v6462 = vpop.f32.mrf.mxu0
        %v6463 = vadd.f32 %v6350, %v6462
        %6464 = vmatmul.f32.gmra.mxu0 %v5901
        %v6465 = vpop.f32.mrf.mxu0
        %v6466 = vadd.f32 %v6353, %v6465
        %6467 = vmatmul.f32.gmra.mxu0 %v5904
        %v6468 = vpop.f32.mrf.mxu0
        %v6469 = vadd.f32 %v6356, %v6468
        %6470 = vmatmul.f32.gmra.mxu0 %v5907
        %v6471 = vpop.f32.mrf.mxu0
        %v6472 = vadd.f32 %v6359, %v6471
        %6473 = vmatmul.f32.gmra.mxu0 %v5910
        %v6474 = vpop.f32.mrf.mxu0
        %v6475 = vadd.f32 %v6362, %v6474
        %6476 = vmatmul.f32.gmra.mxu0 %v5913
        %v6477 = vpop.f32.mrf.mxu0
        %v6478 = vadd.f32 %v6365, %v6477
        %6479 = vmatmul.f32.gmra.mxu0 %v5916
        %v6480 = vpop.f32.mrf.mxu0
        %v6481 = vadd.f32 %v6368, %v6480
        %6482 = vmatmul.f32.gmra.mxu0 %v5919
        %v6483 = vpop.f32.mrf.mxu0
        %v6484 = vadd.f32 %v6371, %v6483
        %6485 = vmatmul.f32.gmra.mxu0 %v5922
        %v6486 = vpop.f32.mrf.mxu0
        %v6487 = vadd.f32 %v6374, %v6486
        %6488 = vmatmul.f32.gmra.mxu0 %v5925
        %v6489 = vpop.f32.mrf.mxu0
        %v6490 = vadd.f32 %v6377, %v6489
        %6491 = vmatmul.f32.gmra.mxu0 %v5928
        %v6492 = vpop.f32.mrf.mxu0
        %v6493 = vadd.f32 %v6380, %v6492
        %6494 = vmatmul.f32.gmra.mxu0 %v5931
        %v6495 = vpop.f32.mrf.mxu0
        %v6496 = vadd.f32 %v6383, %v6495
        %6497 = vmatmul.f32.gmra.mxu0 %v5934
        %v6498 = vpop.f32.mrf.mxu0
        %v6499 = vadd.f32 %v6386, %v6498
        %6500 = vmatmul.f32.gmra.mxu0 %v5937
        %v6501 = vpop.f32.mrf.mxu0
        %v6502 = vadd.f32 %v6389, %v6501
        %6503 = vmatmul.f32.gmra.mxu0 %v5940
        %v6504 = vpop.f32.mrf.mxu0
        %v6505 = vadd.f32 %v6392, %v6504
        %6506 = vdwg.mxu0
        %v6507 = vld [vmem:[%s168] sm:$0xff]
        %v6508 = vld [vmem:[%s168 + $0x8] sm:$0xff]
        %v6509 = vld [vmem:[%s168 + $0x10] sm:$0xff]
        %v6510 = vld [vmem:[%s168 + $0x18] sm:$0xff]
        %v6511 = vld [vmem:[%s168 + $0x20] sm:$0xff]
        %v6512 = vld [vmem:[%s168 + $0x28] sm:$0xff]
        %v6513 = vld [vmem:[%s168 + $0x30] sm:$0xff]
        %v6514 = vld [vmem:[%s168 + $0x38] sm:$0xff]
        %v6515 = vld [vmem:[%s168 + $0x40] sm:$0xff]
        %v6516 = vld [vmem:[%s168 + $0x48] sm:$0xff]
        %v6517 = vld [vmem:[%s168 + $0x50] sm:$0xff]
        %v6518 = vld [vmem:[%s168 + $0x58] sm:$0xff]
        %v6519 = vld [vmem:[%s168 + $0x60] sm:$0xff]
        %v6520 = vld [vmem:[%s168 + $0x68] sm:$0xff]
        %v6521 = vld [vmem:[%s168 + $0x70] sm:$0xff]
        %v6522 = vld [vmem:[%s168 + $0x78] sm:$0xff]
        %v6523 = vld [vmem:[%s168 + $0x80] sm:$0xff]
        %v6524 = vld [vmem:[%s168 + $0x88] sm:$0xff]
        %v6525 = vld [vmem:[%s168 + $0x90] sm:$0xff]
        %v6526 = vld [vmem:[%s168 + $0x98] sm:$0xff]
        %v6527 = vld [vmem:[%s168 + $0xa0] sm:$0xff]
        %v6528 = vld [vmem:[%s168 + $0xa8] sm:$0xff]
        %v6529 = vld [vmem:[%s168 + $0xb0] sm:$0xff]
        %v6530 = vld [vmem:[%s168 + $0xb8] sm:$0xff]
        %v6531 = vld [vmem:[%s168 + $0xc0] sm:$0xff]
        %v6532 = vld [vmem:[%s168 + $0xc8] sm:$0xff]
        %v6533 = vld [vmem:[%s168 + $0xd0] sm:$0xff]
        %v6534 = vld [vmem:[%s168 + $0xd8] sm:$0xff]
        %v6535 = vld [vmem:[%s168 + $0xe0] sm:$0xff]
        %v6536 = vld [vmem:[%s168 + $0xe8] sm:$0xff]
        %v6537 = vld [vmem:[%s168 + $0xf0] sm:$0xff]
        %v6538 = vld [vmem:[%s168 + $0xf8] sm:$0xff]
        %v6539 = vadd.f32 %v6412, %v6507
        %v6540 = vadd.f32 %v6415, %v6508
        %v6541 = vadd.f32 %v6418, %v6509
        %v6542 = vadd.f32 %v6421, %v6510
        %v6543 = vadd.f32 %v6424, %v6511
        %v6544 = vadd.f32 %v6427, %v6512
        %v6545 = vadd.f32 %v6430, %v6513
        %v6546 = vadd.f32 %v6433, %v6514
        %v6547 = vadd.f32 %v6436, %v6515
        %v6548 = vadd.f32 %v6439, %v6516
        %v6549 = vadd.f32 %v6442, %v6517
        %v6550 = vadd.f32 %v6445, %v6518
        %v6551 = vadd.f32 %v6448, %v6519
        %v6552 = vadd.f32 %v6451, %v6520
        %v6553 = vadd.f32 %v6454, %v6521
        %v6554 = vadd.f32 %v6457, %v6522
        %v6555 = vadd.f32 %v6460, %v6523
        %v6556 = vadd.f32 %v6463, %v6524
        %v6557 = vadd.f32 %v6466, %v6525
        %v6558 = vadd.f32 %v6469, %v6526
        %v6559 = vadd.f32 %v6472, %v6527
        %v6560 = vadd.f32 %v6475, %v6528
        %v6561 = vadd.f32 %v6478, %v6529
        %v6562 = vadd.f32 %v6481, %v6530
        %v6563 = vadd.f32 %v6484, %v6531
        %v6564 = vadd.f32 %v6487, %v6532
        %v6565 = vadd.f32 %v6490, %v6533
        %v6566 = vadd.f32 %v6493, %v6534
        %v6567 = vadd.f32 %v6496, %v6535
        %v6568 = vadd.f32 %v6499, %v6536
        %v6569 = vadd.f32 %v6502, %v6537
        %v6570 = vadd.f32 %v6505, %v6538
        %6571 = vst.msk [vmem:[%s163] sm:$0xff] %vm169, %v6539
        %6572 = vst.msk [vmem:[%s163 + $0x8] sm:$0xff] %vm169, %v6540
        %6573 = vst.msk [vmem:[%s163 + $0x10] sm:$0xff] %vm169, %v6541
        %6574 = vst.msk [vmem:[%s163 + $0x18] sm:$0xff] %vm169, %v6542
        %6575 = vst.msk [vmem:[%s163 + $0x20] sm:$0xff] %vm169, %v6543
        %6576 = vst.msk [vmem:[%s163 + $0x28] sm:$0xff] %vm169, %v6544
        %6577 = vst.msk [vmem:[%s163 + $0x30] sm:$0xff] %vm169, %v6545
        %6578 = vst.msk [vmem:[%s163 + $0x38] sm:$0xff] %vm169, %v6546
        %6579 = vst.msk [vmem:[%s163 + $0x40] sm:$0xff] %vm169, %v6547
        %6580 = vst.msk [vmem:[%s163 + $0x48] sm:$0xff] %vm169, %v6548
        %6581 = vst.msk [vmem:[%s163 + $0x50] sm:$0xff] %vm169, %v6549
        %6582 = vst.msk [vmem:[%s163 + $0x58] sm:$0xff] %vm169, %v6550
        %6583 = vst.msk [vmem:[%s163 + $0x60] sm:$0xff] %vm169, %v6551
        %6584 = vst.msk [vmem:[%s163 + $0x68] sm:$0xff] %vm169, %v6552
        %6585 = vst.msk [vmem:[%s163 + $0x70] sm:$0xff] %vm169, %v6553
        %6586 = vst.msk [vmem:[%s163 + $0x78] sm:$0xff] %vm169, %v6554
        %6587 = vst.msk [vmem:[%s163 + $0x80] sm:$0xff] %vm169, %v6555
        %6588 = vst.msk [vmem:[%s163 + $0x88] sm:$0xff] %vm169, %v6556
        %6589 = vst.msk [vmem:[%s163 + $0x90] sm:$0xff] %vm169, %v6557
        %6590 = vst.msk [vmem:[%s163 + $0x98] sm:$0xff] %vm169, %v6558
        %6591 = vst.msk [vmem:[%s163 + $0xa0] sm:$0xff] %vm169, %v6559
        %6592 = vst.msk [vmem:[%s163 + $0xa8] sm:$0xff] %vm169, %v6560
        %6593 = vst.msk [vmem:[%s163 + $0xb0] sm:$0xff] %vm169, %v6561
        %6594 = vst.msk [vmem:[%s163 + $0xb8] sm:$0xff] %vm169, %v6562
        %6595 = vst.msk [vmem:[%s163 + $0xc0] sm:$0xff] %vm169, %v6563
        %6596 = vst.msk [vmem:[%s163 + $0xc8] sm:$0xff] %vm169, %v6564
        %6597 = vst.msk [vmem:[%s163 + $0xd0] sm:$0xff] %vm169, %v6565
        %6598 = vst.msk [vmem:[%s163 + $0xd8] sm:$0xff] %vm169, %v6566
        %6599 = vst.msk [vmem:[%s163 + $0xe0] sm:$0xff] %vm169, %v6567
        %6600 = vst.msk [vmem:[%s163 + $0xe8] sm:$0xff] %vm169, %v6568
        %6601 = vst.msk [vmem:[%s163 + $0xf0] sm:$0xff] %vm169, %v6569
        %6602 = vst.msk [vmem:[%s163 + $0xf8] sm:$0xff] %vm169, %v6570
        %s6603 = sand.u32 %s93, 1
        %s6604 = scalar_lea.sflag [#allocation5], %s6603
        %s6605 = sand.u32 %s93, 1
        %s6606 = smul.addr %s6605, 256
        %s6607 = scalar_lea.vmem [#allocation4], %s6606
        // Predicated region
        $region33: #{rrdb_forward.1} parent=31 // pred_check
          %p6608 = pneg %p103
        $region34: #{rrdb_forward.1} parent=31 // pred_check_branch
          %6610 = sbr.rel (%p6608) target = $region36
        $region35: #{rrdb_forward.1} parent=31 // pred_region
          %6612 = vsyncadd %s6604, 0
          %s6613 = smul.addr %s17, 32
          %s6614 = smul.addr %s6613, 8
          %s6615 = scalar_lea.hbm %s3, %s6614
          %s6616 = sshll.u32 %s6607, 4
          %s6617 = int_to_ptr.vmem [resolvable:$true] %s6616
          %s6618 = sshll.u32 %s6615, 4
          %s6619 = int_to_ptr.hbm [resolvable:$true] %s6618
          %6624 = dma.vmem_to_hbm [thread:$0]  %s6617, 4096, %s6619, %s6604, 128, 128, 8
        $region36: #{rrdb_forward.1} parent=31 // pred_fallthru
          _
      $region32: #{rrdb_forward.1} parent=5 // pred_fallthru
        _
      %p6625 = scmp.le.s32.totalorder 2, %s12
      // Predicated region
      $region37: #{rrdb_forward.1} parent=5 // pred_check
        %p6626 = pneg %p6625
      $region38: #{rrdb_forward.1} parent=5 // pred_check_branch
        %6628 = sbr.rel (%p6626) target = $region40
      $region39: #{rrdb_forward.1} parent=5 // pred_region
        %s6629 = ssub.s32 %s12, 2
        // Predicated region
        $region41: #{rrdb_forward.1} parent=39 // pred_check
          %p6630 = pneg %p109
        $region42: #{rrdb_forward.1} parent=39 // pred_check_branch
          %6632 = sbr.rel (%p6630) target = $region44
        $region43: #{rrdb_forward.1} parent=39 // pred_region
          %s6633 = sand.u32 %s94, 1
          %s6634 = scalar_lea.sflag [#allocation5], %s6633
          %s6635 = sand.u32 %s94, 1
          %s6636 = smul.addr %s6635, 256
          %s6637 = scalar_lea.vmem [#allocation4], %s6636
          %6639 = dma.done %s6634, 4096
        $region44: #{rrdb_forward.1} parent=39 // pred_fallthru
          _
      $region40: #{rrdb_forward.1} parent=5 // pred_fallthru
        _
    $region6: #{rrdb_forward.1} parent=1 // loop_footer
      %s16 = sadd.s32 1, %s12
    $region7: #{rrdb_forward.1} parent=1 // loop_footer_branch
      %11 = sbr.rel target = $region3
    $region8: #{rrdb_forward.1} parent=1 // loop_exit
      _
    %6640 = vsyncpa [#allocation5], 1
    %s6641 = scalar_lea.sflag [#allocation5], 1
    %6642 = vsyncpa %s6641, 1

</llo_original>
